<compile_context>
chip_gen: v6e
topology: v6e:2x2x1
jax: 0.10.0
libtpu: 0.0.40
codegen_flags: <defaults>
</compile_context>

<pallas_src>
import functools

import jax
import jax.numpy as jnp
import numpy as np
from jax.experimental import pallas as pl
from jax.experimental.pallas import tpu as pltpu


def _resblock_kernel(x_ref, w1_ref, w2_ref, out_ref,
                     xpad_ref, col_ref, raw_ref,
                     *, H, W, C, TR, Bt, eps):
    """One fused ResBlock for `Bt` batch images (channels-last NHWC).

    x_ref   : (Bt, H, W, C)       input block (VMEM) — also the residual
    w*_ref  : (9*C, C)  bf16      conv weights, im2col layout ((kh*3+kw)*C+ci, co)
    out_ref : (Bt, H, W, C)
    xpad_ref: (H+2, W+2, C) bf16  reflection-padded plane (conv1 input, then the
                                  normalized+ReLU'd intermediate for conv2)
    col_ref : (TR, W, 9*C) bf16   im2col staging buffer for one row strip
    raw_ref : (H*W, C)   f32      raw (pre-norm) output of the current conv
    """
    nstrips = H // TR
    inv_hw = 1.0 / float(H * W)
    cdt = xpad_ref.dtype  # bf16 MXU operand dtype

    def fill_pad_borders():
        # ReflectionPad2d(1): pad[0]=src[1], pad[H+1]=src[H-2]; same for cols.
        # Corners come for free: column copies read already-reflected rows.
        xpad_ref[0:1, 1:W + 1, :] = xpad_ref[2:3, 1:W + 1, :]
        xpad_ref[H + 1:H + 2, 1:W + 1, :] = xpad_ref[H - 1:H, 1:W + 1, :]
        xpad_ref[:, 0:1, :] = xpad_ref[:, 2:3, :]
        xpad_ref[:, W + 1:W + 2, :] = xpad_ref[:, W - 1:W, :]

    def conv_pass(w_ref):
        # 3x3 conv of the padded plane as ONE (TR*W, 9C) x (9C, C) bf16 MXU
        # matmul per row strip (f32 accumulation).  Raw output is streamed into
        # raw_ref; per-channel sum / sum-of-squares accumulate the InstanceNorm
        # statistics in the same pass (one-pass E[x^2]-m^2 variance).
        s = jnp.zeros((1, C), jnp.float32)
        ss = jnp.zeros((1, C), jnp.float32)
        for i in range(nstrips):
            r0 = i * TR
            for kh in range(3):
                for kw in range(3):
                    t = kh * 3 + kw
                    col_ref[:, :, t * C:(t + 1) * C] = (
                        xpad_ref[r0 + kh:r0 + kh + TR, kw:kw + W, :])
            col = col_ref[...].reshape(TR * W, 9 * C)
            y = jnp.dot(col, w_ref[...], preferred_element_type=jnp.float32)
            raw_ref[r0 * W:(r0 + TR) * W, :] = y
            s = s + jnp.sum(y, axis=0, keepdims=True)
            ss = ss + jnp.sum(y * y, axis=0, keepdims=True)
        m = s * inv_hw
        v = ss * inv_hw - m * m                 # biased variance (InstanceNorm2d)
        return m, jax.lax.rsqrt(v + eps)

    for n in range(Bt):
        # ------------- Conv2dBlock #1: pad -> conv -> IN -> ReLU -------------
        for i in range(nstrips):
            r0 = i * TR
            xpad_ref[1 + r0:1 + r0 + TR, 1:W + 1, :] = (
                x_ref[n, r0:r0 + TR, :, :].astype(cdt))
        fill_pad_borders()
        m1, rs1 = conv_pass(w1_ref)
        for i in range(nstrips):
            r0 = i * TR
            h = (raw_ref[r0 * W:(r0 + TR) * W, :] - m1) * rs1
            h = jnp.maximum(h, 0.0)
            xpad_ref[1 + r0:1 + r0 + TR, 1:W + 1, :] = (
                h.reshape(TR, W, C).astype(cdt))
        fill_pad_borders()

        # --------- Conv2dBlock #2: pad -> conv -> IN, then + residual --------
        m2, rs2 = conv_pass(w2_ref)
        for i in range(nstrips):
            r0 = i * TR
            y = (raw_ref[r0 * W:(r0 + TR) * W, :] - m2) * rs2
            # residual re-loaded just-in-time from the resident input block
            res = x_ref[n, r0:r0 + TR, :, :].astype(jnp.float32)
            out_ref[n, r0:r0 + TR, :, :] = (
                (y.reshape(TR, W, C) + res).astype(out_ref.dtype))


def _pick_row_strip(H, W, C, max_col_bytes=2 * 1024 * 1024):
    """Largest divisor of H whose im2col strip buffer stays under the cap."""
    tr = 1
    for cand in range(1, H + 1):
        if H % cand == 0 and cand * W * 9 * C * 2 <= max_col_bytes:
            tr = cand
    return tr


def resblock_pallas(x_nhwc, w1_mat, w2_mat, *, row_strip=None,
                    images_per_step=1, eps=1e-5):
    """One ResBlock (two Conv2dBlocks + residual) in a single pallas_call."""
    B, H, W, C = x_nhwc.shape
    assert H >= 2 and W >= 2, "reflection pad(1) requires H, W >= 2"
    assert w1_mat.shape == (9 * C, C) and w2_mat.shape == (9 * C, C)
    Bt = images_per_step
    assert B % Bt == 0
    TR = row_strip if row_strip is not None else _pick_row_strip(H, W, C)
    assert H % TR == 0

    kernel = functools.partial(_resblock_kernel,
                               H=H, W=W, C=C, TR=TR, Bt=Bt, eps=eps)

    # Explicit VMEM accounting (double-buffered I/O blocks, resident bf16
    # weights, scratch) so the scoped limit is set deliberately.
    itm = x_nhwc.dtype.itemsize
    bytes_io = 2 * (Bt * H * W * C) * itm * 2          # in + out, double-buffered
    bytes_w = 2 * 2 * (9 * C * C) * 2                  # 2 convs, double-buffered, bf16
    bytes_scratch = ((H + 2) * (W + 2) * C * 2         # bf16 padded plane
                     + TR * W * 9 * C * 2              # bf16 im2col strip
                     + H * W * C * 4)                  # f32 raw conv output
    est = bytes_io + bytes_w + bytes_scratch
    vmem_limit = int(min(128 * 1024 * 1024,
                         max(16 * 1024 * 1024, 1.25 * est + (4 << 20))))

    return pl.pallas_call(
        kernel,
        out_shape=jax.ShapeDtypeStruct((B, H, W, C), x_nhwc.dtype),
        grid=(B // Bt,),
        in_specs=[
            pl.BlockSpec((Bt, H, W, C), lambda b: (b, 0, 0, 0)),
            # grid-invariant index_map -> weights stay resident in VMEM
            pl.BlockSpec((9 * C, C), lambda b: (0, 0)),
            pl.BlockSpec((9 * C, C), lambda b: (0, 0)),
        ],
        out_specs=pl.BlockSpec((Bt, H, W, C), lambda b: (b, 0, 0, 0)),
        scratch_shapes=[
            pltpu.VMEM((H + 2, W + 2, C), jnp.bfloat16),
            pltpu.VMEM((TR, W, 9 * C), jnp.bfloat16),
            pltpu.VMEM((H * W, C), jnp.float32),
        ],
        compiler_params=pltpu.CompilerParams(
            dimension_semantics=("parallel",),
            vmem_limit_bytes=vmem_limit),
    )(x_nhwc, w1_mat, w2_mat)


def resblocks_forward(x_nchw, params, *, row_strip=None, images_per_step=1,
                      eps=1e-5):
    """ResBlocks.forward (norm='in', activation='relu', reflection pad).

    params: list of (w1_hwio, b1, w2_hwio, b2) per block; w* shaped (3,3,C,C)
    HWIO, b* shaped (C,).  Biases are accepted for parity with
    nn.Conv2d(bias=True) but dropped inside the kernel: with
    InstanceNorm2d(affine=False) a per-channel bias cancels exactly.
    """
    x = jnp.transpose(x_nchw, (0, 2, 3, 1))      # NCHW -> NHWC (channels on lanes)
    C = x.shape[-1]
    for (w1, _b1, w2, _b2) in params:
        w1_mat = w1.reshape(9 * C, C).astype(jnp.bfloat16)   # im2col layout, bf16
        w2_mat = w2.reshape(9 * C, C).astype(jnp.bfloat16)
        x = resblock_pallas(x, w1_mat, w2_mat, row_strip=row_strip,
                            images_per_step=images_per_step, eps=eps)
    return jnp.transpose(x, (0, 3, 1, 2))        # NHWC -> NCHW


# --------------------- pure-JAX references (for checking) ---------------------
def _ref_conv_in_block(x, w_hwio, bias, apply_relu, eps=1e-5,
                       mxu_dtype=jnp.bfloat16):
    xp = jnp.pad(x, ((0, 0), (0, 0), (1, 1), (1, 1)), mode="reflect")
    w_oihw = jnp.transpose(w_hwio, (3, 2, 0, 1))
    y = jax.lax.conv_general_dilated(
        xp.astype(mxu_dtype), w_oihw.astype(mxu_dtype),
        window_strides=(1, 1), padding="VALID",
        dimension_numbers=("NCHW", "OIHW", "NCHW"),
        preferred_element_type=jnp.float32)
    y = y + bias[None, :, None, None]            # cancels under InstanceNorm
    m = jnp.mean(y, axis=(2, 3), keepdims=True)
    v = jnp.mean((y - m) ** 2, axis=(2, 3), keepdims=True)
    y = (y - m) * jax.lax.rsqrt(v + eps)
    if apply_relu:
        y = jnp.maximum(y, 0.0)
    return y


def _ref_resblocks(x, params, eps=1e-5, mxu_dtype=jnp.bfloat16):
    for (w1, b1, w2, b2) in params:
        r = x
        h = _ref_conv_in_block(x, w1, b1, True, eps, mxu_dtype)
        x = _ref_conv_in_block(h, w2, b2, False, eps, mxu_dtype) + r
    return x


# ------------------------------------ main ------------------------------------
if __name__ == "__main__":
    num_blocks = 2
    dim = 4            # channels
    B, H, W = 2, 16, 16

    key = jax.random.PRNGKey(0)
    key, xkey = jax.random.split(key)
    x = jax.random.normal(xkey, (B, dim, H, W), dtype=jnp.float32)

    # Deterministic parameter init (PyTorch Conv2d-like uniform bounds).
    bound = 1.0 / np.sqrt(dim * 3 * 3)
    params = []
    for _ in range(num_blocks):
        blk = []
        for _ in range(2):
            key, wk, bk = jax.random.split(key, 3)
            w = jax.random.uniform(wk, (3, 3, dim, dim), jnp.float32,
                                   minval=-bound, maxval=bound)
            b = jax.random.uniform(bk, (dim,), jnp.float32,
                                   minval=-bound, maxval=bound)
            blk += [w, b]
        params.append(tuple(blk))

    fwd = jax.jit(functools.partial(resblocks_forward, row_strip=8))
    out = jax.block_until_ready(fwd(x, params))

    # Tight check vs a reference that mirrors the kernel numerics
    # (bf16 MXU operands, f32 accumulation).
    ref_bf16 = jax.block_until_ready(
        _ref_resblocks(x, params, mxu_dtype=jnp.bfloat16))
    np.testing.assert_allclose(np.asarray(out), np.asarray(ref_bf16),
                               rtol=1e-3, atol=1e-3)

    # Loose sanity check vs the pure-f32 PyTorch-equivalent semantics
    # (differences bounded by bf16 operand quantization).
    ref_f32 = jax.block_until_ready(
        _ref_resblocks(x, params, mxu_dtype=jnp.float32))
    np.testing.assert_allclose(np.asarray(out), np.asarray(ref_f32),
                               rtol=1e-1, atol=1e-1)

    print("KERNEL_OK")
</pallas_src>

<mosaic_0001>
module attributes {stable_mosaic.version = 11 : i64} {
  func.func @_resblock_kernel(%arg0: i32, %arg1: memref<1x16x16x4xf32, #tpu.memory_space<vmem>>, %arg2: memref<36x4xbf16, #tpu.memory_space<vmem>>, %arg3: memref<36x4xbf16, #tpu.memory_space<vmem>>, %arg4: memref<1x16x16x4xf32, #tpu.memory_space<vmem>>, %arg5: memref<18x18x4xbf16, #tpu.memory_space<vmem>>, %arg6: memref<8x16x36xbf16, #tpu.memory_space<vmem>>, %arg7: memref<256x4xf32, #tpu.memory_space<vmem>>) attributes {dimension_semantics = [#tpu.dimension_semantics<parallel>], iteration_bounds = array<i64: 2>, scalar_prefetch = 0 : i64, scratch_operands = 3 : i64, tpu.core_type = #tpu.core_type<tc>, window_params = [{transform_indices = @transform_0, window_bounds = array<i64: 1, 16, 16, 4>}, {pipeline_mode = #tpu.pipeline_mode<synchronous>, transform_indices = @transform_1, window_bounds = array<i64: 36, 4>}, {pipeline_mode = #tpu.pipeline_mode<synchronous>, transform_indices = @transform_2, window_bounds = array<i64: 36, 4>}, {transform_indices = @transform_3, window_bounds = array<i64: 1, 16, 16, 4>}]} {
    %c0 = arith.constant 0 : index
    %c0_0 = arith.constant 0 : index
    %c0_1 = arith.constant 0 : index
    %c0_2 = arith.constant 0 : index
    %0 = vector.load %arg1[%c0, %c0_0, %c0_1, %c0_2] : memref<1x16x16x4xf32, #tpu.memory_space<vmem>>, vector<1x8x16x4xf32>
    %1 = vector.shape_cast %0 : vector<1x8x16x4xf32> to vector<8x16x4xf32>
    %2 = arith.truncf %1 : vector<8x16x4xf32> to vector<8x16x4xbf16>
    %c1 = arith.constant 1 : index
    %c1_3 = arith.constant 1 : index
    %c0_4 = arith.constant 0 : index
    %3 = vector.load %arg5[%c1, %c1_3, %c0_4] : memref<18x18x4xbf16, #tpu.memory_space<vmem>>, vector<8x16x4xbf16>
    tpu.vector_store %arg5[%c1, %c1_3, %c0_4], %2 {strides = array<i32>} : memref<18x18x4xbf16, #tpu.memory_space<vmem>>, vector<8x16x4xbf16>,
    %c0_5 = arith.constant 0 : index
    %c8 = arith.constant 8 : index
    %c0_6 = arith.constant 0 : index
    %c0_7 = arith.constant 0 : index
    %4 = vector.load %arg1[%c0_5, %c8, %c0_6, %c0_7] : memref<1x16x16x4xf32, #tpu.memory_space<vmem>>, vector<1x8x16x4xf32>
    %5 = vector.shape_cast %4 : vector<1x8x16x4xf32> to vector<8x16x4xf32>
    %6 = arith.truncf %5 : vector<8x16x4xf32> to vector<8x16x4xbf16>
    %c9 = arith.constant 9 : index
    %c1_8 = arith.constant 1 : index
    %c0_9 = arith.constant 0 : index
    %7 = vector.load %arg5[%c9, %c1_8, %c0_9] : memref<18x18x4xbf16, #tpu.memory_space<vmem>>, vector<8x16x4xbf16>
    tpu.vector_store %arg5[%c9, %c1_8, %c0_9], %6 {strides = array<i32>} : memref<18x18x4xbf16, #tpu.memory_space<vmem>>, vector<8x16x4xbf16>,
    %c2 = arith.constant 2 : index
    %c1_10 = arith.constant 1 : index
    %c0_11 = arith.constant 0 : index
    %8 = vector.load %arg5[%c2, %c1_10, %c0_11] : memref<18x18x4xbf16, #tpu.memory_space<vmem>>, vector<1x16x4xbf16>
    %c0_12 = arith.constant 0 : index
    %c1_13 = arith.constant 1 : index
    %c0_14 = arith.constant 0 : index
    %9 = vector.load %arg5[%c0_12, %c1_13, %c0_14] : memref<18x18x4xbf16, #tpu.memory_space<vmem>>, vector<1x16x4xbf16>
    tpu.vector_store %arg5[%c0_12, %c1_13, %c0_14], %8 {strides = array<i32>} : memref<18x18x4xbf16, #tpu.memory_space<vmem>>, vector<1x16x4xbf16>,
    %c15 = arith.constant 15 : index
    %c1_15 = arith.constant 1 : index
    %c0_16 = arith.constant 0 : index
    %10 = vector.load %arg5[%c15, %c1_15, %c0_16] : memref<18x18x4xbf16, #tpu.memory_space<vmem>>, vector<1x16x4xbf16>
    %c17 = arith.constant 17 : index
    %c1_17 = arith.constant 1 : index
    %c0_18 = arith.constant 0 : index
    %11 = vector.load %arg5[%c17, %c1_17, %c0_18] : memref<18x18x4xbf16, #tpu.memory_space<vmem>>, vector<1x16x4xbf16>
    tpu.vector_store %arg5[%c17, %c1_17, %c0_18], %10 {strides = array<i32>} : memref<18x18x4xbf16, #tpu.memory_space<vmem>>, vector<1x16x4xbf16>,
    %c0_19 = arith.constant 0 : index
    %c2_20 = arith.constant 2 : index
    %c0_21 = arith.constant 0 : index
    %12 = vector.load %arg5[%c0_19, %c2_20, %c0_21] : memref<18x18x4xbf16, #tpu.memory_space<vmem>>, vector<18x1x4xbf16>
    %c0_22 = arith.constant 0 : index
    %c0_23 = arith.constant 0 : index
    %c0_24 = arith.constant 0 : index
    %13 = vector.load %arg5[%c0_22, %c0_23, %c0_24] : memref<18x18x4xbf16, #tpu.memory_space<vmem>>, vector<18x1x4xbf16>
    tpu.vector_store %arg5[%c0_22, %c0_23, %c0_24], %12 {strides = array<i32>} : memref<18x18x4xbf16, #tpu.memory_space<vmem>>, vector<18x1x4xbf16>,
    %c0_25 = arith.constant 0 : index
    %c15_26 = arith.constant 15 : index
    %c0_27 = arith.constant 0 : index
    %14 = vector.load %arg5[%c0_25, %c15_26, %c0_27] : memref<18x18x4xbf16, #tpu.memory_space<vmem>>, vector<18x1x4xbf16>
    %c0_28 = arith.constant 0 : index
    %c17_29 = arith.constant 17 : index
    %c0_30 = arith.constant 0 : index
    %15 = vector.load %arg5[%c0_28, %c17_29, %c0_30] : memref<18x18x4xbf16, #tpu.memory_space<vmem>>, vector<18x1x4xbf16>
    tpu.vector_store %arg5[%c0_28, %c17_29, %c0_30], %14 {strides = array<i32>} : memref<18x18x4xbf16, #tpu.memory_space<vmem>>, vector<18x1x4xbf16>,
    %cst = arith.constant 0.000000e+00 : f32
    %16 = vector.broadcast %cst : f32 to vector<1x4xf32>
    %cst_31 = arith.constant 0.000000e+00 : f32
    %17 = vector.broadcast %cst_31 : f32 to vector<1x4xf32>
    %c0_32 = arith.constant 0 : index
    %c0_33 = arith.constant 0 : index
    %c0_34 = arith.constant 0 : index
    %18 = vector.load %arg5[%c0_32, %c0_33, %c0_34] : memref<18x18x4xbf16, #tpu.memory_space<vmem>>, vector<8x16x4xbf16>
    %c0_35 = arith.constant 0 : index
    %c0_36 = arith.constant 0 : index
    %c0_37 = arith.constant 0 : index
    %19 = vector.load %arg6[%c0_35, %c0_36, %c0_37] : memref<8x16x36xbf16, #tpu.memory_space<vmem>>, vector<8x16x4xbf16>
    tpu.vector_store %arg6[%c0_35, %c0_36, %c0_37], %18 {strides = array<i32>} : memref<8x16x36xbf16, #tpu.memory_space<vmem>>, vector<8x16x4xbf16>,
    %c0_38 = arith.constant 0 : index
    %c1_39 = arith.constant 1 : index
    %c0_40 = arith.constant 0 : index
    %20 = vector.load %arg5[%c0_38, %c1_39, %c0_40] : memref<18x18x4xbf16, #tpu.memory_space<vmem>>, vector<8x16x4xbf16>
    %c0_41 = arith.constant 0 : index
    %c0_42 = arith.constant 0 : index
    %c4 = arith.constant 4 : index
    %21 = vector.load %arg6[%c0_41, %c0_42, %c4] : memref<8x16x36xbf16, #tpu.memory_space<vmem>>, vector<8x16x4xbf16>
    tpu.vector_store %arg6[%c0_41, %c0_42, %c4], %20 {strides = array<i32>} : memref<8x16x36xbf16, #tpu.memory_space<vmem>>, vector<8x16x4xbf16>,
    %c0_43 = arith.constant 0 : index
    %c2_44 = arith.constant 2 : index
    %c0_45 = arith.constant 0 : index
    %22 = vector.load %arg5[%c0_43, %c2_44, %c0_45] : memref<18x18x4xbf16, #tpu.memory_space<vmem>>, vector<8x16x4xbf16>
    %c0_46 = arith.constant 0 : index
    %c0_47 = arith.constant 0 : index
    %c8_48 = arith.constant 8 : index
    %23 = vector.load %arg6[%c0_46, %c0_47, %c8_48] : memref<8x16x36xbf16, #tpu.memory_space<vmem>>, vector<8x16x4xbf16>
    tpu.vector_store %arg6[%c0_46, %c0_47, %c8_48], %22 {strides = array<i32>} : memref<8x16x36xbf16, #tpu.memory_space<vmem>>, vector<8x16x4xbf16>,
    %c1_49 = arith.constant 1 : index
    %c0_50 = arith.constant 0 : index
    %c0_51 = arith.constant 0 : index
    %24 = vector.load %arg5[%c1_49, %c0_50, %c0_51] : memref<18x18x4xbf16, #tpu.memory_space<vmem>>, vector<8x16x4xbf16>
    %c0_52 = arith.constant 0 : index
    %c0_53 = arith.constant 0 : index
    %c12 = arith.constant 12 : index
    %25 = vector.load %arg6[%c0_52, %c0_53, %c12] : memref<8x16x36xbf16, #tpu.memory_space<vmem>>, vector<8x16x4xbf16>
    tpu.vector_store %arg6[%c0_52, %c0_53, %c12], %24 {strides = array<i32>} : memref<8x16x36xbf16, #tpu.memory_space<vmem>>, vector<8x16x4xbf16>,
    %c1_54 = arith.constant 1 : index
    %c1_55 = arith.constant 1 : index
    %c0_56 = arith.constant 0 : index
    %26 = vector.load %arg5[%c1_54, %c1_55, %c0_56] : memref<18x18x4xbf16, #tpu.memory_space<vmem>>, vector<8x16x4xbf16>
    %c0_57 = arith.constant 0 : index
    %c0_58 = arith.constant 0 : index
    %c16 = arith.constant 16 : index
    %27 = vector.load %arg6[%c0_57, %c0_58, %c16] : memref<8x16x36xbf16, #tpu.memory_space<vmem>>, vector<8x16x4xbf16>
    tpu.vector_store %arg6[%c0_57, %c0_58, %c16], %26 {strides = array<i32>} : memref<8x16x36xbf16, #tpu.memory_space<vmem>>, vector<8x16x4xbf16>,
    %c1_59 = arith.constant 1 : index
    %c2_60 = arith.constant 2 : index
    %c0_61 = arith.constant 0 : index
    %28 = vector.load %arg5[%c1_59, %c2_60, %c0_61] : memref<18x18x4xbf16, #tpu.memory_space<vmem>>, vector<8x16x4xbf16>
    %c0_62 = arith.constant 0 : index
    %c0_63 = arith.constant 0 : index
    %c20 = arith.constant 20 : index
    %29 = vector.load %arg6[%c0_62, %c0_63, %c20] : memref<8x16x36xbf16, #tpu.memory_space<vmem>>, vector<8x16x4xbf16>
    tpu.vector_store %arg6[%c0_62, %c0_63, %c20], %28 {strides = array<i32>} : memref<8x16x36xbf16, #tpu.memory_space<vmem>>, vector<8x16x4xbf16>,
    %c2_64 = arith.constant 2 : index
    %c0_65 = arith.constant 0 : index
    %c0_66 = arith.constant 0 : index
    %30 = vector.load %arg5[%c2_64, %c0_65, %c0_66] : memref<18x18x4xbf16, #tpu.memory_space<vmem>>, vector<8x16x4xbf16>
    %c0_67 = arith.constant 0 : index
    %c0_68 = arith.constant 0 : index
    %c24 = arith.constant 24 : index
    %31 = vector.load %arg6[%c0_67, %c0_68, %c24] : memref<8x16x36xbf16, #tpu.memory_space<vmem>>, vector<8x16x4xbf16>
    tpu.vector_store %arg6[%c0_67, %c0_68, %c24], %30 {strides = array<i32>} : memref<8x16x36xbf16, #tpu.memory_space<vmem>>, vector<8x16x4xbf16>,
    %c2_69 = arith.constant 2 : index
    %c1_70 = arith.constant 1 : index
    %c0_71 = arith.constant 0 : index
    %32 = vector.load %arg5[%c2_69, %c1_70, %c0_71] : memref<18x18x4xbf16, #tpu.memory_space<vmem>>, vector<8x16x4xbf16>
    %c0_72 = arith.constant 0 : index
    %c0_73 = arith.constant 0 : index
    %c28 = arith.constant 28 : index
    %33 = vector.load %arg6[%c0_72, %c0_73, %c28] : memref<8x16x36xbf16, #tpu.memory_space<vmem>>, vector<8x16x4xbf16>
    tpu.vector_store %arg6[%c0_72, %c0_73, %c28], %32 {strides = array<i32>} : memref<8x16x36xbf16, #tpu.memory_space<vmem>>, vector<8x16x4xbf16>,
    %c2_74 = arith.constant 2 : index
    %c2_75 = arith.constant 2 : index
    %c0_76 = arith.constant 0 : index
    %34 = vector.load %arg5[%c2_74, %c2_75, %c0_76] : memref<18x18x4xbf16, #tpu.memory_space<vmem>>, vector<8x16x4xbf16>
    %c0_77 = arith.constant 0 : index
    %c0_78 = arith.constant 0 : index
    %c32 = arith.constant 32 : index
    %35 = vector.load %arg6[%c0_77, %c0_78, %c32] : memref<8x16x36xbf16, #tpu.memory_space<vmem>>, vector<8x16x4xbf16>
    tpu.vector_store %arg6[%c0_77, %c0_78, %c32], %34 {strides = array<i32>} : memref<8x16x36xbf16, #tpu.memory_space<vmem>>, vector<8x16x4xbf16>,
    %c0_79 = arith.constant 0 : index
    %c0_80 = arith.constant 0 : index
    %c0_81 = arith.constant 0 : index
    %36 = vector.load %arg6[%c0_79, %c0_80, %c0_81] : memref<8x16x36xbf16, #tpu.memory_space<vmem>>, vector<8x16x36xbf16>
    %37 = vector.shape_cast %36 : vector<8x16x36xbf16> to vector<128x36xbf16>
    %c0_82 = arith.constant 0 : index
    %c0_83 = arith.constant 0 : index
    %38 = vector.load %arg2[%c0_82, %c0_83] : memref<36x4xbf16, #tpu.memory_space<vmem>>, vector<36x4xbf16>
    %cst_84 = arith.constant dense<0.000000e+00> : vector<128x4xf32>
    %39 = tpu.matmul %37, %38, %cst_84 {dimension_numbers = #tpu.dot_dimension_numbers<[1], [0], [0], [1], [0, 0, 1, 1], [], []>} : vector<128x36xbf16>, vector<36x4xbf16>, vector<128x4xf32> -> vector<128x4xf32>
    %c0_85 = arith.constant 0 : index
    %c0_86 = arith.constant 0 : index
    %40 = vector.load %arg7[%c0_85, %c0_86] : memref<256x4xf32, #tpu.memory_space<vmem>>, vector<128x4xf32>
    tpu.vector_store %arg7[%c0_85, %c0_86], %39 {strides = array<i32>} : memref<256x4xf32, #tpu.memory_space<vmem>>, vector<128x4xf32>,
    %cst_87 = arith.constant dense<0.000000e+00> : vector<4xf32>
    %41 = vector.multi_reduction <add>, %39, %cst_87 [0] : vector<128x4xf32> to vector<4xf32>
    %42 = vector.shape_cast %41 : vector<4xf32> to vector<1x4xf32>
    %43 = arith.addf %16, %42 : vector<1x4xf32>
    %44 = arith.mulf %39, %39 : vector<128x4xf32>
    %cst_88 = arith.constant dense<0.000000e+00> : vector<4xf32>
    %45 = vector.multi_reduction <add>, %44, %cst_88 [0] : vector<128x4xf32> to vector<4xf32>
    %46 = vector.shape_cast %45 : vector<4xf32> to vector<1x4xf32>
    %47 = arith.addf %17, %46 : vector<1x4xf32>
    %c8_89 = arith.constant 8 : index
    %c0_90 = arith.constant 0 : index
    %c0_91 = arith.constant 0 : index
    %48 = vector.load %arg5[%c8_89, %c0_90, %c0_91] : memref<18x18x4xbf16, #tpu.memory_space<vmem>>, vector<8x16x4xbf16>
    %c0_92 = arith.constant 0 : index
    %c0_93 = arith.constant 0 : index
    %c0_94 = arith.constant 0 : index
    %49 = vector.load %arg6[%c0_92, %c0_93, %c0_94] : memref<8x16x36xbf16, #tpu.memory_space<vmem>>, vector<8x16x4xbf16>
    tpu.vector_store %arg6[%c0_92, %c0_93, %c0_94], %48 {strides = array<i32>} : memref<8x16x36xbf16, #tpu.memory_space<vmem>>, vector<8x16x4xbf16>,
    %c8_95 = arith.constant 8 : index
    %c1_96 = arith.constant 1 : index
    %c0_97 = arith.constant 0 : index
    %50 = vector.load %arg5[%c8_95, %c1_96, %c0_97] : memref<18x18x4xbf16, #tpu.memory_space<vmem>>, vector<8x16x4xbf16>
    %c0_98 = arith.constant 0 : index
    %c0_99 = arith.constant 0 : index
    %c4_100 = arith.constant 4 : index
    %51 = vector.load %arg6[%c0_98, %c0_99, %c4_100] : memref<8x16x36xbf16, #tpu.memory_space<vmem>>, vector<8x16x4xbf16>
    tpu.vector_store %arg6[%c0_98, %c0_99, %c4_100], %50 {strides = array<i32>} : memref<8x16x36xbf16, #tpu.memory_space<vmem>>, vector<8x16x4xbf16>,
    %c8_101 = arith.constant 8 : index
    %c2_102 = arith.constant 2 : index
    %c0_103 = arith.constant 0 : index
    %52 = vector.load %arg5[%c8_101, %c2_102, %c0_103] : memref<18x18x4xbf16, #tpu.memory_space<vmem>>, vector<8x16x4xbf16>
    %c0_104 = arith.constant 0 : index
    %c0_105 = arith.constant 0 : index
    %c8_106 = arith.constant 8 : index
    %53 = vector.load %arg6[%c0_104, %c0_105, %c8_106] : memref<8x16x36xbf16, #tpu.memory_space<vmem>>, vector<8x16x4xbf16>
    tpu.vector_store %arg6[%c0_104, %c0_105, %c8_106], %52 {strides = array<i32>} : memref<8x16x36xbf16, #tpu.memory_space<vmem>>, vector<8x16x4xbf16>,
    %c9_107 = arith.constant 9 : index
    %c0_108 = arith.constant 0 : index
    %c0_109 = arith.constant 0 : index
    %54 = vector.load %arg5[%c9_107, %c0_108, %c0_109] : memref<18x18x4xbf16, #tpu.memory_space<vmem>>, vector<8x16x4xbf16>
    %c0_110 = arith.constant 0 : index
    %c0_111 = arith.constant 0 : index
    %c12_112 = arith.constant 12 : index
    %55 = vector.load %arg6[%c0_110, %c0_111, %c12_112] : memref<8x16x36xbf16, #tpu.memory_space<vmem>>, vector<8x16x4xbf16>
    tpu.vector_store %arg6[%c0_110, %c0_111, %c12_112], %54 {strides = array<i32>} : memref<8x16x36xbf16, #tpu.memory_space<vmem>>, vector<8x16x4xbf16>,
    %c9_113 = arith.constant 9 : index
    %c1_114 = arith.constant 1 : index
    %c0_115 = arith.constant 0 : index
    %56 = vector.load %arg5[%c9_113, %c1_114, %c0_115] : memref<18x18x4xbf16, #tpu.memory_space<vmem>>, vector<8x16x4xbf16>
    %c0_116 = arith.constant 0 : index
    %c0_117 = arith.constant 0 : index
    %c16_118 = arith.constant 16 : index
    %57 = vector.load %arg6[%c0_116, %c0_117, %c16_118] : memref<8x16x36xbf16, #tpu.memory_space<vmem>>, vector<8x16x4xbf16>
    tpu.vector_store %arg6[%c0_116, %c0_117, %c16_118], %56 {strides = array<i32>} : memref<8x16x36xbf16, #tpu.memory_space<vmem>>, vector<8x16x4xbf16>,
    %c9_119 = arith.constant 9 : index
    %c2_120 = arith.constant 2 : index
    %c0_121 = arith.constant 0 : index
    %58 = vector.load %arg5[%c9_119, %c2_120, %c0_121] : memref<18x18x4xbf16, #tpu.memory_space<vmem>>, vector<8x16x4xbf16>
    %c0_122 = arith.constant 0 : index
    %c0_123 = arith.constant 0 : index
    %c20_124 = arith.constant 20 : index
    %59 = vector.load %arg6[%c0_122, %c0_123, %c20_124] : memref<8x16x36xbf16, #tpu.memory_space<vmem>>, vector<8x16x4xbf16>
    tpu.vector_store %arg6[%c0_122, %c0_123, %c20_124], %58 {strides = array<i32>} : memref<8x16x36xbf16, #tpu.memory_space<vmem>>, vector<8x16x4xbf16>,
    %c10 = arith.constant 10 : index
    %c0_125 = arith.constant 0 : index
    %c0_126 = arith.constant 0 : index
    %60 = vector.load %arg5[%c10, %c0_125, %c0_126] : memref<18x18x4xbf16, #tpu.memory_space<vmem>>, vector<8x16x4xbf16>
    %c0_127 = arith.constant 0 : index
    %c0_128 = arith.constant 0 : index
    %c24_129 = arith.constant 24 : index
    %61 = vector.load %arg6[%c0_127, %c0_128, %c24_129] : memref<8x16x36xbf16, #tpu.memory_space<vmem>>, vector<8x16x4xbf16>
    tpu.vector_store %arg6[%c0_127, %c0_128, %c24_129], %60 {strides = array<i32>} : memref<8x16x36xbf16, #tpu.memory_space<vmem>>, vector<8x16x4xbf16>,
    %c10_130 = arith.constant 10 : index
    %c1_131 = arith.constant 1 : index
    %c0_132 = arith.constant 0 : index
    %62 = vector.load %arg5[%c10_130, %c1_131, %c0_132] : memref<18x18x4xbf16, #tpu.memory_space<vmem>>, vector<8x16x4xbf16>
    %c0_133 = arith.constant 0 : index
    %c0_134 = arith.constant 0 : index
    %c28_135 = arith.constant 28 : index
    %63 = vector.load %arg6[%c0_133, %c0_134, %c28_135] : memref<8x16x36xbf16, #tpu.memory_space<vmem>>, vector<8x16x4xbf16>
    tpu.vector_store %arg6[%c0_133, %c0_134, %c28_135], %62 {strides = array<i32>} : memref<8x16x36xbf16, #tpu.memory_space<vmem>>, vector<8x16x4xbf16>,
    %c10_136 = arith.constant 10 : index
    %c2_137 = arith.constant 2 : index
    %c0_138 = arith.constant 0 : index
    %64 = vector.load %arg5[%c10_136, %c2_137, %c0_138] : memref<18x18x4xbf16, #tpu.memory_space<vmem>>, vector<8x16x4xbf16>
    %c0_139 = arith.constant 0 : index
    %c0_140 = arith.constant 0 : index
    %c32_141 = arith.constant 32 : index
    %65 = vector.load %arg6[%c0_139, %c0_140, %c32_141] : memref<8x16x36xbf16, #tpu.memory_space<vmem>>, vector<8x16x4xbf16>
    tpu.vector_store %arg6[%c0_139, %c0_140, %c32_141], %64 {strides = array<i32>} : memref<8x16x36xbf16, #tpu.memory_space<vmem>>, vector<8x16x4xbf16>,
    %c0_142 = arith.constant 0 : index
    %c0_143 = arith.constant 0 : index
    %c0_144 = arith.constant 0 : index
    %66 = vector.load %arg6[%c0_142, %c0_143, %c0_144] : memref<8x16x36xbf16, #tpu.memory_space<vmem>>, vector<8x16x36xbf16>
    %67 = vector.shape_cast %66 : vector<8x16x36xbf16> to vector<128x36xbf16>
    %c0_145 = arith.constant 0 : index
    %c0_146 = arith.constant 0 : index
    %68 = vector.load %arg2[%c0_145, %c0_146] : memref<36x4xbf16, #tpu.memory_space<vmem>>, vector<36x4xbf16>
    %cst_147 = arith.constant dense<0.000000e+00> : vector<128x4xf32>
    %69 = tpu.matmul %67, %68, %cst_147 {dimension_numbers = #tpu.dot_dimension_numbers<[1], [0], [0], [1], [0, 0, 1, 1], [], []>} : vector<128x36xbf16>, vector<36x4xbf16>, vector<128x4xf32> -> vector<128x4xf32>
    %c128 = arith.constant 128 : index
    %c0_148 = arith.constant 0 : index
    %70 = vector.load %arg7[%c128, %c0_148] : memref<256x4xf32, #tpu.memory_space<vmem>>, vector<128x4xf32>
    tpu.vector_store %arg7[%c128, %c0_148], %69 {strides = array<i32>} : memref<256x4xf32, #tpu.memory_space<vmem>>, vector<128x4xf32>,
    %cst_149 = arith.constant dense<0.000000e+00> : vector<4xf32>
    %71 = vector.multi_reduction <add>, %69, %cst_149 [0] : vector<128x4xf32> to vector<4xf32>
    %72 = vector.shape_cast %71 : vector<4xf32> to vector<1x4xf32>
    %73 = arith.addf %43, %72 : vector<1x4xf32>
    %74 = arith.mulf %69, %69 : vector<128x4xf32>
    %cst_150 = arith.constant dense<0.000000e+00> : vector<4xf32>
    %75 = vector.multi_reduction <add>, %74, %cst_150 [0] : vector<128x4xf32> to vector<4xf32>
    %76 = vector.shape_cast %75 : vector<4xf32> to vector<1x4xf32>
    %77 = arith.addf %47, %76 : vector<1x4xf32>
    %cst_151 = arith.constant 3.906250e-03 : f32
    %78 = vector.broadcast %cst_151 : f32 to vector<1x4xf32>
    %79 = arith.mulf %73, %78 : vector<1x4xf32>
    %cst_152 = arith.constant 3.906250e-03 : f32
    %80 = vector.broadcast %cst_152 : f32 to vector<1x4xf32>
    %81 = arith.mulf %77, %80 : vector<1x4xf32>
    %82 = arith.mulf %79, %79 : vector<1x4xf32>
    %83 = arith.subf %81, %82 : vector<1x4xf32>
    %cst_153 = arith.constant 9.99999974E-6 : f32
    %84 = vector.broadcast %cst_153 : f32 to vector<1x4xf32>
    %85 = arith.addf %83, %84 : vector<1x4xf32>
    %86 = math.rsqrt %85 : vector<1x4xf32>
    %c0_154 = arith.constant 0 : index
    %c0_155 = arith.constant 0 : index
    %87 = vector.load %arg7[%c0_154, %c0_155] : memref<256x4xf32, #tpu.memory_space<vmem>>, vector<128x4xf32>
    %88 = vector.broadcast %79 : vector<1x4xf32> to vector<128x4xf32>
    %89 = arith.subf %87, %88 : vector<128x4xf32>
    %90 = vector.broadcast %86 : vector<1x4xf32> to vector<128x4xf32>
    %91 = arith.mulf %89, %90 : vector<128x4xf32>
    %cst_156 = arith.constant 0.000000e+00 : f32
    %92 = vector.broadcast %cst_156 : f32 to vector<128x4xf32>
    %93 = arith.maximumf %91, %92 : vector<128x4xf32>
    %94 = vector.shape_cast %93 : vector<128x4xf32> to vector<8x16x4xf32>
    %95 = arith.truncf %94 : vector<8x16x4xf32> to vector<8x16x4xbf16>
    %c1_157 = arith.constant 1 : index
    %c1_158 = arith.constant 1 : index
    %c0_159 = arith.constant 0 : index
    %96 = vector.load %arg5[%c1_157, %c1_158, %c0_159] : memref<18x18x4xbf16, #tpu.memory_space<vmem>>, vector<8x16x4xbf16>
    tpu.vector_store %arg5[%c1_157, %c1_158, %c0_159], %95 {strides = array<i32>} : memref<18x18x4xbf16, #tpu.memory_space<vmem>>, vector<8x16x4xbf16>,
    %c128_160 = arith.constant 128 : index
    %c0_161 = arith.constant 0 : index
    %97 = vector.load %arg7[%c128_160, %c0_161] : memref<256x4xf32, #tpu.memory_space<vmem>>, vector<128x4xf32>
    %98 = vector.broadcast %79 : vector<1x4xf32> to vector<128x4xf32>
    %99 = arith.subf %97, %98 : vector<128x4xf32>
    %100 = vector.broadcast %86 : vector<1x4xf32> to vector<128x4xf32>
    %101 = arith.mulf %99, %100 : vector<128x4xf32>
    %cst_162 = arith.constant 0.000000e+00 : f32
    %102 = vector.broadcast %cst_162 : f32 to vector<128x4xf32>
    %103 = arith.maximumf %101, %102 : vector<128x4xf32>
    %104 = vector.shape_cast %103 : vector<128x4xf32> to vector<8x16x4xf32>
    %105 = arith.truncf %104 : vector<8x16x4xf32> to vector<8x16x4xbf16>
    %c9_163 = arith.constant 9 : index
    %c1_164 = arith.constant 1 : index
    %c0_165 = arith.constant 0 : index
    %106 = vector.load %arg5[%c9_163, %c1_164, %c0_165] : memref<18x18x4xbf16, #tpu.memory_space<vmem>>, vector<8x16x4xbf16>
    tpu.vector_store %arg5[%c9_163, %c1_164, %c0_165], %105 {strides = array<i32>} : memref<18x18x4xbf16, #tpu.memory_space<vmem>>, vector<8x16x4xbf16>,
    %c2_166 = arith.constant 2 : index
    %c1_167 = arith.constant 1 : index
    %c0_168 = arith.constant 0 : index
    %107 = vector.load %arg5[%c2_166, %c1_167, %c0_168] : memref<18x18x4xbf16, #tpu.memory_space<vmem>>, vector<1x16x4xbf16>
    %c0_169 = arith.constant 0 : index
    %c1_170 = arith.constant 1 : index
    %c0_171 = arith.constant 0 : index
    %108 = vector.load %arg5[%c0_169, %c1_170, %c0_171] : memref<18x18x4xbf16, #tpu.memory_space<vmem>>, vector<1x16x4xbf16>
    tpu.vector_store %arg5[%c0_169, %c1_170, %c0_171], %107 {strides = array<i32>} : memref<18x18x4xbf16, #tpu.memory_space<vmem>>, vector<1x16x4xbf16>,
    %c15_172 = arith.constant 15 : index
    %c1_173 = arith.constant 1 : index
    %c0_174 = arith.constant 0 : index
    %109 = vector.load %arg5[%c15_172, %c1_173, %c0_174] : memref<18x18x4xbf16, #tpu.memory_space<vmem>>, vector<1x16x4xbf16>
    %c17_175 = arith.constant 17 : index
    %c1_176 = arith.constant 1 : index
    %c0_177 = arith.constant 0 : index
    %110 = vector.load %arg5[%c17_175, %c1_176, %c0_177] : memref<18x18x4xbf16, #tpu.memory_space<vmem>>, vector<1x16x4xbf16>
    tpu.vector_store %arg5[%c17_175, %c1_176, %c0_177], %109 {strides = array<i32>} : memref<18x18x4xbf16, #tpu.memory_space<vmem>>, vector<1x16x4xbf16>,
    %c0_178 = arith.constant 0 : index
    %c2_179 = arith.constant 2 : index
    %c0_180 = arith.constant 0 : index
    %111 = vector.load %arg5[%c0_178, %c2_179, %c0_180] : memref<18x18x4xbf16, #tpu.memory_space<vmem>>, vector<18x1x4xbf16>
    %c0_181 = arith.constant 0 : index
    %c0_182 = arith.constant 0 : index
    %c0_183 = arith.constant 0 : index
    %112 = vector.load %arg5[%c0_181, %c0_182, %c0_183] : memref<18x18x4xbf16, #tpu.memory_space<vmem>>, vector<18x1x4xbf16>
    tpu.vector_store %arg5[%c0_181, %c0_182, %c0_183], %111 {strides = array<i32>} : memref<18x18x4xbf16, #tpu.memory_space<vmem>>, vector<18x1x4xbf16>,
    %c0_184 = arith.constant 0 : index
    %c15_185 = arith.constant 15 : index
    %c0_186 = arith.constant 0 : index
    %113 = vector.load %arg5[%c0_184, %c15_185, %c0_186] : memref<18x18x4xbf16, #tpu.memory_space<vmem>>, vector<18x1x4xbf16>
    %c0_187 = arith.constant 0 : index
    %c17_188 = arith.constant 17 : index
    %c0_189 = arith.constant 0 : index
    %114 = vector.load %arg5[%c0_187, %c17_188, %c0_189] : memref<18x18x4xbf16, #tpu.memory_space<vmem>>, vector<18x1x4xbf16>
    tpu.vector_store %arg5[%c0_187, %c17_188, %c0_189], %113 {strides = array<i32>} : memref<18x18x4xbf16, #tpu.memory_space<vmem>>, vector<18x1x4xbf16>,
    %cst_190 = arith.constant 0.000000e+00 : f32
    %115 = vector.broadcast %cst_190 : f32 to vector<1x4xf32>
    %cst_191 = arith.constant 0.000000e+00 : f32
    %116 = vector.broadcast %cst_191 : f32 to vector<1x4xf32>
    %c0_192 = arith.constant 0 : index
    %c0_193 = arith.constant 0 : index
    %c0_194 = arith.constant 0 : index
    %117 = vector.load %arg5[%c0_192, %c0_193, %c0_194] : memref<18x18x4xbf16, #tpu.memory_space<vmem>>, vector<8x16x4xbf16>
    %c0_195 = arith.constant 0 : index
    %c0_196 = arith.constant 0 : index
    %c0_197 = arith.constant 0 : index
    %118 = vector.load %arg6[%c0_195, %c0_196, %c0_197] : memref<8x16x36xbf16, #tpu.memory_space<vmem>>, vector<8x16x4xbf16>
    tpu.vector_store %arg6[%c0_195, %c0_196, %c0_197], %117 {strides = array<i32>} : memref<8x16x36xbf16, #tpu.memory_space<vmem>>, vector<8x16x4xbf16>,
    %c0_198 = arith.constant 0 : index
    %c1_199 = arith.constant 1 : index
    %c0_200 = arith.constant 0 : index
    %119 = vector.load %arg5[%c0_198, %c1_199, %c0_200] : memref<18x18x4xbf16, #tpu.memory_space<vmem>>, vector<8x16x4xbf16>
    %c0_201 = arith.constant 0 : index
    %c0_202 = arith.constant 0 : index
    %c4_203 = arith.constant 4 : index
    %120 = vector.load %arg6[%c0_201, %c0_202, %c4_203] : memref<8x16x36xbf16, #tpu.memory_space<vmem>>, vector<8x16x4xbf16>
    tpu.vector_store %arg6[%c0_201, %c0_202, %c4_203], %119 {strides = array<i32>} : memref<8x16x36xbf16, #tpu.memory_space<vmem>>, vector<8x16x4xbf16>,
    %c0_204 = arith.constant 0 : index
    %c2_205 = arith.constant 2 : index
    %c0_206 = arith.constant 0 : index
    %121 = vector.load %arg5[%c0_204, %c2_205, %c0_206] : memref<18x18x4xbf16, #tpu.memory_space<vmem>>, vector<8x16x4xbf16>
    %c0_207 = arith.constant 0 : index
    %c0_208 = arith.constant 0 : index
    %c8_209 = arith.constant 8 : index
    %122 = vector.load %arg6[%c0_207, %c0_208, %c8_209] : memref<8x16x36xbf16, #tpu.memory_space<vmem>>, vector<8x16x4xbf16>
    tpu.vector_store %arg6[%c0_207, %c0_208, %c8_209], %121 {strides = array<i32>} : memref<8x16x36xbf16, #tpu.memory_space<vmem>>, vector<8x16x4xbf16>,
    %c1_210 = arith.constant 1 : index
    %c0_211 = arith.constant 0 : index
    %c0_212 = arith.constant 0 : index
    %123 = vector.load %arg5[%c1_210, %c0_211, %c0_212] : memref<18x18x4xbf16, #tpu.memory_space<vmem>>, vector<8x16x4xbf16>
    %c0_213 = arith.constant 0 : index
    %c0_214 = arith.constant 0 : index
    %c12_215 = arith.constant 12 : index
    %124 = vector.load %arg6[%c0_213, %c0_214, %c12_215] : memref<8x16x36xbf16, #tpu.memory_space<vmem>>, vector<8x16x4xbf16>
    tpu.vector_store %arg6[%c0_213, %c0_214, %c12_215], %123 {strides = array<i32>} : memref<8x16x36xbf16, #tpu.memory_space<vmem>>, vector<8x16x4xbf16>,
    %c1_216 = arith.constant 1 : index
    %c1_217 = arith.constant 1 : index
    %c0_218 = arith.constant 0 : index
    %125 = vector.load %arg5[%c1_216, %c1_217, %c0_218] : memref<18x18x4xbf16, #tpu.memory_space<vmem>>, vector<8x16x4xbf16>
    %c0_219 = arith.constant 0 : index
    %c0_220 = arith.constant 0 : index
    %c16_221 = arith.constant 16 : index
    %126 = vector.load %arg6[%c0_219, %c0_220, %c16_221] : memref<8x16x36xbf16, #tpu.memory_space<vmem>>, vector<8x16x4xbf16>
    tpu.vector_store %arg6[%c0_219, %c0_220, %c16_221], %125 {strides = array<i32>} : memref<8x16x36xbf16, #tpu.memory_space<vmem>>, vector<8x16x4xbf16>,
    %c1_222 = arith.constant 1 : index
    %c2_223 = arith.constant 2 : index
    %c0_224 = arith.constant 0 : index
    %127 = vector.load %arg5[%c1_222, %c2_223, %c0_224] : memref<18x18x4xbf16, #tpu.memory_space<vmem>>, vector<8x16x4xbf16>
    %c0_225 = arith.constant 0 : index
    %c0_226 = arith.constant 0 : index
    %c20_227 = arith.constant 20 : index
    %128 = vector.load %arg6[%c0_225, %c0_226, %c20_227] : memref<8x16x36xbf16, #tpu.memory_space<vmem>>, vector<8x16x4xbf16>
    tpu.vector_store %arg6[%c0_225, %c0_226, %c20_227], %127 {strides = array<i32>} : memref<8x16x36xbf16, #tpu.memory_space<vmem>>, vector<8x16x4xbf16>,
    %c2_228 = arith.constant 2 : index
    %c0_229 = arith.constant 0 : index
    %c0_230 = arith.constant 0 : index
    %129 = vector.load %arg5[%c2_228, %c0_229, %c0_230] : memref<18x18x4xbf16, #tpu.memory_space<vmem>>, vector<8x16x4xbf16>
    %c0_231 = arith.constant 0 : index
    %c0_232 = arith.constant 0 : index
    %c24_233 = arith.constant 24 : index
    %130 = vector.load %arg6[%c0_231, %c0_232, %c24_233] : memref<8x16x36xbf16, #tpu.memory_space<vmem>>, vector<8x16x4xbf16>
    tpu.vector_store %arg6[%c0_231, %c0_232, %c24_233], %129 {strides = array<i32>} : memref<8x16x36xbf16, #tpu.memory_space<vmem>>, vector<8x16x4xbf16>,
    %c2_234 = arith.constant 2 : index
    %c1_235 = arith.constant 1 : index
    %c0_236 = arith.constant 0 : index
    %131 = vector.load %arg5[%c2_234, %c1_235, %c0_236] : memref<18x18x4xbf16, #tpu.memory_space<vmem>>, vector<8x16x4xbf16>
    %c0_237 = arith.constant 0 : index
    %c0_238 = arith.constant 0 : index
    %c28_239 = arith.constant 28 : index
    %132 = vector.load %arg6[%c0_237, %c0_238, %c28_239] : memref<8x16x36xbf16, #tpu.memory_space<vmem>>, vector<8x16x4xbf16>
    tpu.vector_store %arg6[%c0_237, %c0_238, %c28_239], %131 {strides = array<i32>} : memref<8x16x36xbf16, #tpu.memory_space<vmem>>, vector<8x16x4xbf16>,
    %c2_240 = arith.constant 2 : index
    %c2_241 = arith.constant 2 : index
    %c0_242 = arith.constant 0 : index
    %133 = vector.load %arg5[%c2_240, %c2_241, %c0_242] : memref<18x18x4xbf16, #tpu.memory_space<vmem>>, vector<8x16x4xbf16>
    %c0_243 = arith.constant 0 : index
    %c0_244 = arith.constant 0 : index
    %c32_245 = arith.constant 32 : index
    %134 = vector.load %arg6[%c0_243, %c0_244, %c32_245] : memref<8x16x36xbf16, #tpu.memory_space<vmem>>, vector<8x16x4xbf16>
    tpu.vector_store %arg6[%c0_243, %c0_244, %c32_245], %133 {strides = array<i32>} : memref<8x16x36xbf16, #tpu.memory_space<vmem>>, vector<8x16x4xbf16>,
    %c0_246 = arith.constant 0 : index
    %c0_247 = arith.constant 0 : index
    %c0_248 = arith.constant 0 : index
    %135 = vector.load %arg6[%c0_246, %c0_247, %c0_248] : memref<8x16x36xbf16, #tpu.memory_space<vmem>>, vector<8x16x36xbf16>
    %136 = vector.shape_cast %135 : vector<8x16x36xbf16> to vector<128x36xbf16>
    %c0_249 = arith.constant 0 : index
    %c0_250 = arith.constant 0 : index
    %137 = vector.load %arg3[%c0_249, %c0_250] : memref<36x4xbf16, #tpu.memory_space<vmem>>, vector<36x4xbf16>
    %cst_251 = arith.constant dense<0.000000e+00> : vector<128x4xf32>
    %138 = tpu.matmul %136, %137, %cst_251 {dimension_numbers = #tpu.dot_dimension_numbers<[1], [0], [0], [1], [0, 0, 1, 1], [], []>} : vector<128x36xbf16>, vector<36x4xbf16>, vector<128x4xf32> -> vector<128x4xf32>
    %c0_252 = arith.constant 0 : index
    %c0_253 = arith.constant 0 : index
    %139 = vector.load %arg7[%c0_252, %c0_253] : memref<256x4xf32, #tpu.memory_space<vmem>>, vector<128x4xf32>
    tpu.vector_store %arg7[%c0_252, %c0_253], %138 {strides = array<i32>} : memref<256x4xf32, #tpu.memory_space<vmem>>, vector<128x4xf32>,
    %cst_254 = arith.constant dense<0.000000e+00> : vector<4xf32>
    %140 = vector.multi_reduction <add>, %138, %cst_254 [0] : vector<128x4xf32> to vector<4xf32>
    %141 = vector.shape_cast %140 : vector<4xf32> to vector<1x4xf32>
    %142 = arith.addf %115, %141 : vector<1x4xf32>
    %143 = arith.mulf %138, %138 : vector<128x4xf32>
    %cst_255 = arith.constant dense<0.000000e+00> : vector<4xf32>
    %144 = vector.multi_reduction <add>, %143, %cst_255 [0] : vector<128x4xf32> to vector<4xf32>
    %145 = vector.shape_cast %144 : vector<4xf32> to vector<1x4xf32>
    %146 = arith.addf %116, %145 : vector<1x4xf32>
    %c8_256 = arith.constant 8 : index
    %c0_257 = arith.constant 0 : index
    %c0_258 = arith.constant 0 : index
    %147 = vector.load %arg5[%c8_256, %c0_257, %c0_258] : memref<18x18x4xbf16, #tpu.memory_space<vmem>>, vector<8x16x4xbf16>
    %c0_259 = arith.constant 0 : index
    %c0_260 = arith.constant 0 : index
    %c0_261 = arith.constant 0 : index
    %148 = vector.load %arg6[%c0_259, %c0_260, %c0_261] : memref<8x16x36xbf16, #tpu.memory_space<vmem>>, vector<8x16x4xbf16>
    tpu.vector_store %arg6[%c0_259, %c0_260, %c0_261], %147 {strides = array<i32>} : memref<8x16x36xbf16, #tpu.memory_space<vmem>>, vector<8x16x4xbf16>,
    %c8_262 = arith.constant 8 : index
    %c1_263 = arith.constant 1 : index
    %c0_264 = arith.constant 0 : index
    %149 = vector.load %arg5[%c8_262, %c1_263, %c0_264] : memref<18x18x4xbf16, #tpu.memory_space<vmem>>, vector<8x16x4xbf16>
    %c0_265 = arith.constant 0 : index
    %c0_266 = arith.constant 0 : index
    %c4_267 = arith.constant 4 : index
    %150 = vector.load %arg6[%c0_265, %c0_266, %c4_267] : memref<8x16x36xbf16, #tpu.memory_space<vmem>>, vector<8x16x4xbf16>
    tpu.vector_store %arg6[%c0_265, %c0_266, %c4_267], %149 {strides = array<i32>} : memref<8x16x36xbf16, #tpu.memory_space<vmem>>, vector<8x16x4xbf16>,
    %c8_268 = arith.constant 8 : index
    %c2_269 = arith.constant 2 : index
    %c0_270 = arith.constant 0 : index
    %151 = vector.load %arg5[%c8_268, %c2_269, %c0_270] : memref<18x18x4xbf16, #tpu.memory_space<vmem>>, vector<8x16x4xbf16>
    %c0_271 = arith.constant 0 : index
    %c0_272 = arith.constant 0 : index
    %c8_273 = arith.constant 8 : index
    %152 = vector.load %arg6[%c0_271, %c0_272, %c8_273] : memref<8x16x36xbf16, #tpu.memory_space<vmem>>, vector<8x16x4xbf16>
    tpu.vector_store %arg6[%c0_271, %c0_272, %c8_273], %151 {strides = array<i32>} : memref<8x16x36xbf16, #tpu.memory_space<vmem>>, vector<8x16x4xbf16>,
    %c9_274 = arith.constant 9 : index
    %c0_275 = arith.constant 0 : index
    %c0_276 = arith.constant 0 : index
    %153 = vector.load %arg5[%c9_274, %c0_275, %c0_276] : memref<18x18x4xbf16, #tpu.memory_space<vmem>>, vector<8x16x4xbf16>
    %c0_277 = arith.constant 0 : index
    %c0_278 = arith.constant 0 : index
    %c12_279 = arith.constant 12 : index
    %154 = vector.load %arg6[%c0_277, %c0_278, %c12_279] : memref<8x16x36xbf16, #tpu.memory_space<vmem>>, vector<8x16x4xbf16>
    tpu.vector_store %arg6[%c0_277, %c0_278, %c12_279], %153 {strides = array<i32>} : memref<8x16x36xbf16, #tpu.memory_space<vmem>>, vector<8x16x4xbf16>,
    %c9_280 = arith.constant 9 : index
    %c1_281 = arith.constant 1 : index
    %c0_282 = arith.constant 0 : index
    %155 = vector.load %arg5[%c9_280, %c1_281, %c0_282] : memref<18x18x4xbf16, #tpu.memory_space<vmem>>, vector<8x16x4xbf16>
    %c0_283 = arith.constant 0 : index
    %c0_284 = arith.constant 0 : index
    %c16_285 = arith.constant 16 : index
    %156 = vector.load %arg6[%c0_283, %c0_284, %c16_285] : memref<8x16x36xbf16, #tpu.memory_space<vmem>>, vector<8x16x4xbf16>
    tpu.vector_store %arg6[%c0_283, %c0_284, %c16_285], %155 {strides = array<i32>} : memref<8x16x36xbf16, #tpu.memory_space<vmem>>, vector<8x16x4xbf16>,
    %c9_286 = arith.constant 9 : index
    %c2_287 = arith.constant 2 : index
    %c0_288 = arith.constant 0 : index
    %157 = vector.load %arg5[%c9_286, %c2_287, %c0_288] : memref<18x18x4xbf16, #tpu.memory_space<vmem>>, vector<8x16x4xbf16>
    %c0_289 = arith.constant 0 : index
    %c0_290 = arith.constant 0 : index
    %c20_291 = arith.constant 20 : index
    %158 = vector.load %arg6[%c0_289, %c0_290, %c20_291] : memref<8x16x36xbf16, #tpu.memory_space<vmem>>, vector<8x16x4xbf16>
    tpu.vector_store %arg6[%c0_289, %c0_290, %c20_291], %157 {strides = array<i32>} : memref<8x16x36xbf16, #tpu.memory_space<vmem>>, vector<8x16x4xbf16>,
    %c10_292 = arith.constant 10 : index
    %c0_293 = arith.constant 0 : index
    %c0_294 = arith.constant 0 : index
    %159 = vector.load %arg5[%c10_292, %c0_293, %c0_294] : memref<18x18x4xbf16, #tpu.memory_space<vmem>>, vector<8x16x4xbf16>
    %c0_295 = arith.constant 0 : index
    %c0_296 = arith.constant 0 : index
    %c24_297 = arith.constant 24 : index
    %160 = vector.load %arg6[%c0_295, %c0_296, %c24_297] : memref<8x16x36xbf16, #tpu.memory_space<vmem>>, vector<8x16x4xbf16>
    tpu.vector_store %arg6[%c0_295, %c0_296, %c24_297], %159 {strides = array<i32>} : memref<8x16x36xbf16, #tpu.memory_space<vmem>>, vector<8x16x4xbf16>,
    %c10_298 = arith.constant 10 : index
    %c1_299 = arith.constant 1 : index
    %c0_300 = arith.constant 0 : index
    %161 = vector.load %arg5[%c10_298, %c1_299, %c0_300] : memref<18x18x4xbf16, #tpu.memory_space<vmem>>, vector<8x16x4xbf16>
    %c0_301 = arith.constant 0 : index
    %c0_302 = arith.constant 0 : index
    %c28_303 = arith.constant 28 : index
    %162 = vector.load %arg6[%c0_301, %c0_302, %c28_303] : memref<8x16x36xbf16, #tpu.memory_space<vmem>>, vector<8x16x4xbf16>
    tpu.vector_store %arg6[%c0_301, %c0_302, %c28_303], %161 {strides = array<i32>} : memref<8x16x36xbf16, #tpu.memory_space<vmem>>, vector<8x16x4xbf16>,
    %c10_304 = arith.constant 10 : index
    %c2_305 = arith.constant 2 : index
    %c0_306 = arith.constant 0 : index
    %163 = vector.load %arg5[%c10_304, %c2_305, %c0_306] : memref<18x18x4xbf16, #tpu.memory_space<vmem>>, vector<8x16x4xbf16>
    %c0_307 = arith.constant 0 : index
    %c0_308 = arith.constant 0 : index
    %c32_309 = arith.constant 32 : index
    %164 = vector.load %arg6[%c0_307, %c0_308, %c32_309] : memref<8x16x36xbf16, #tpu.memory_space<vmem>>, vector<8x16x4xbf16>
    tpu.vector_store %arg6[%c0_307, %c0_308, %c32_309], %163 {strides = array<i32>} : memref<8x16x36xbf16, #tpu.memory_space<vmem>>, vector<8x16x4xbf16>,
    %c0_310 = arith.constant 0 : index
    %c0_311 = arith.constant 0 : index
    %c0_312 = arith.constant 0 : index
    %165 = vector.load %arg6[%c0_310, %c0_311, %c0_312] : memref<8x16x36xbf16, #tpu.memory_space<vmem>>, vector<8x16x36xbf16>
    %166 = vector.shape_cast %165 : vector<8x16x36xbf16> to vector<128x36xbf16>
    %c0_313 = arith.constant 0 : index
    %c0_314 = arith.constant 0 : index
    %167 = vector.load %arg3[%c0_313, %c0_314] : memref<36x4xbf16, #tpu.memory_space<vmem>>, vector<36x4xbf16>
    %cst_315 = arith.constant dense<0.000000e+00> : vector<128x4xf32>
    %168 = tpu.matmul %166, %167, %cst_315 {dimension_numbers = #tpu.dot_dimension_numbers<[1], [0], [0], [1], [0, 0, 1, 1], [], []>} : vector<128x36xbf16>, vector<36x4xbf16>, vector<128x4xf32> -> vector<128x4xf32>
    %c128_316 = arith.constant 128 : index
    %c0_317 = arith.constant 0 : index
    %169 = vector.load %arg7[%c128_316, %c0_317] : memref<256x4xf32, #tpu.memory_space<vmem>>, vector<128x4xf32>
    tpu.vector_store %arg7[%c128_316, %c0_317], %168 {strides = array<i32>} : memref<256x4xf32, #tpu.memory_space<vmem>>, vector<128x4xf32>,
    %cst_318 = arith.constant dense<0.000000e+00> : vector<4xf32>
    %170 = vector.multi_reduction <add>, %168, %cst_318 [0] : vector<128x4xf32> to vector<4xf32>
    %171 = vector.shape_cast %170 : vector<4xf32> to vector<1x4xf32>
    %172 = arith.addf %142, %171 : vector<1x4xf32>
    %173 = arith.mulf %168, %168 : vector<128x4xf32>
    %cst_319 = arith.constant dense<0.000000e+00> : vector<4xf32>
    %174 = vector.multi_reduction <add>, %173, %cst_319 [0] : vector<128x4xf32> to vector<4xf32>
    %175 = vector.shape_cast %174 : vector<4xf32> to vector<1x4xf32>
    %176 = arith.addf %146, %175 : vector<1x4xf32>
    %cst_320 = arith.constant 3.906250e-03 : f32
    %177 = vector.broadcast %cst_320 : f32 to vector<1x4xf32>
    %178 = arith.mulf %172, %177 : vector<1x4xf32>
    %cst_321 = arith.constant 3.906250e-03 : f32
    %179 = vector.broadcast %cst_321 : f32 to vector<1x4xf32>
    %180 = arith.mulf %176, %179 : vector<1x4xf32>
    %181 = arith.mulf %178, %178 : vector<1x4xf32>
    %182 = arith.subf %180, %181 : vector<1x4xf32>
    %cst_322 = arith.constant 9.99999974E-6 : f32
    %183 = vector.broadcast %cst_322 : f32 to vector<1x4xf32>
    %184 = arith.addf %182, %183 : vector<1x4xf32>
    %185 = math.rsqrt %184 : vector<1x4xf32>
    %c0_323 = arith.constant 0 : index
    %c0_324 = arith.constant 0 : index
    %186 = vector.load %arg7[%c0_323, %c0_324] : memref<256x4xf32, #tpu.memory_space<vmem>>, vector<128x4xf32>
    %187 = vector.broadcast %178 : vector<1x4xf32> to vector<128x4xf32>
    %188 = arith.subf %186, %187 : vector<128x4xf32>
    %189 = vector.broadcast %185 : vector<1x4xf32> to vector<128x4xf32>
    %190 = arith.mulf %188, %189 : vector<128x4xf32>
    %c0_325 = arith.constant 0 : index
    %c0_326 = arith.constant 0 : index
    %c0_327 = arith.constant 0 : index
    %c0_328 = arith.constant 0 : index
    %191 = vector.load %arg1[%c0_325, %c0_326, %c0_327, %c0_328] : memref<1x16x16x4xf32, #tpu.memory_space<vmem>>, vector<1x8x16x4xf32>
    %192 = vector.shape_cast %191 : vector<1x8x16x4xf32> to vector<8x16x4xf32>
    %193 = vector.shape_cast %190 : vector<128x4xf32> to vector<8x16x4xf32>
    %194 = arith.addf %193, %192 : vector<8x16x4xf32>
    %c0_329 = arith.constant 0 : index
    %c0_330 = arith.constant 0 : index
    %c0_331 = arith.constant 0 : index
    %c0_332 = arith.constant 0 : index
    %195 = vector.load %arg4[%c0_329, %c0_330, %c0_331, %c0_332] : memref<1x16x16x4xf32, #tpu.memory_space<vmem>>, vector<1x8x16x4xf32>
    %196 = vector.shape_cast %195 : vector<1x8x16x4xf32> to vector<8x16x4xf32>
    %197 = vector.shape_cast %194 : vector<8x16x4xf32> to vector<1x8x16x4xf32>
    tpu.vector_store %arg4[%c0_329, %c0_330, %c0_331, %c0_332], %197 {strides = array<i32>} : memref<1x16x16x4xf32, #tpu.memory_space<vmem>>, vector<1x8x16x4xf32>,
    %c128_333 = arith.constant 128 : index
    %c0_334 = arith.constant 0 : index
    %198 = vector.load %arg7[%c128_333, %c0_334] : memref<256x4xf32, #tpu.memory_space<vmem>>, vector<128x4xf32>
    %199 = vector.broadcast %178 : vector<1x4xf32> to vector<128x4xf32>
    %200 = arith.subf %198, %199 : vector<128x4xf32>
    %201 = vector.broadcast %185 : vector<1x4xf32> to vector<128x4xf32>
    %202 = arith.mulf %200, %201 : vector<128x4xf32>
    %c0_335 = arith.constant 0 : index
    %c8_336 = arith.constant 8 : index
    %c0_337 = arith.constant 0 : index
    %c0_338 = arith.constant 0 : index
    %203 = vector.load %arg1[%c0_335, %c8_336, %c0_337, %c0_338] : memref<1x16x16x4xf32, #tpu.memory_space<vmem>>, vector<1x8x16x4xf32>
    %204 = vector.shape_cast %203 : vector<1x8x16x4xf32> to vector<8x16x4xf32>
    %205 = vector.shape_cast %202 : vector<128x4xf32> to vector<8x16x4xf32>
    %206 = arith.addf %205, %204 : vector<8x16x4xf32>
    %c0_339 = arith.constant 0 : index
    %c8_340 = arith.constant 8 : index
    %c0_341 = arith.constant 0 : index
    %c0_342 = arith.constant 0 : index
    %207 = vector.load %arg4[%c0_339, %c8_340, %c0_341, %c0_342] : memref<1x16x16x4xf32, #tpu.memory_space<vmem>>, vector<1x8x16x4xf32>
    %208 = vector.shape_cast %207 : vector<1x8x16x4xf32> to vector<8x16x4xf32>
    %209 = vector.shape_cast %206 : vector<8x16x4xf32> to vector<1x8x16x4xf32>
    tpu.vector_store %arg4[%c0_339, %c8_340, %c0_341, %c0_342], %209 {strides = array<i32>} : memref<1x16x16x4xf32, #tpu.memory_space<vmem>>, vector<1x8x16x4xf32>,
    return
  }
  func.func @transform_0(%arg0: i32) -> (i32, i32, i32, i32) {
    %c0_i32 = arith.constant 0 : i32
    %c0_i32_0 = arith.constant 0 : i32
    %c0_i32_1 = arith.constant 0 : i32
    %c0_i32_2 = arith.constant 0 : i32
    return %arg0, %c0_i32, %c0_i32_0, %c0_i32_1 : i32, i32, i32, i32
  }
  func.func @transform_1(%arg0: i32) -> (i32, i32) {
    %c0_i32 = arith.constant 0 : i32
    %c0_i32_0 = arith.constant 0 : i32
    %c0_i32_1 = arith.constant 0 : i32
    return %c0_i32, %c0_i32_0 : i32, i32
  }
  func.func @transform_2(%arg0: i32) -> (i32, i32) {
    %c0_i32 = arith.constant 0 : i32
    %c0_i32_0 = arith.constant 0 : i32
    %c0_i32_1 = arith.constant 0 : i32
    return %c0_i32, %c0_i32_0 : i32, i32
  }
  func.func @transform_3(%arg0: i32) -> (i32, i32, i32, i32) {
    %c0_i32 = arith.constant 0 : i32
    %c0_i32_0 = arith.constant 0 : i32
    %c0_i32_1 = arith.constant 0 : i32
    %c0_i32_2 = arith.constant 0 : i32
    return %arg0, %c0_i32, %c0_i32_0, %c0_i32_1 : i32, i32, i32, i32
  }
}

</mosaic_0001>

<llo_original>
// kernel: resblocks_forward.2
$region0: #{resblocks_forward.2}
  #allocation0 [shape = 'u32[]', space=smem, size = 0x4, offset = 0x4, fixed_abs, tag = 'smem constant byte address 0x4 - core index']
  #allocation1 [shape = 'u32[144,128]{1,0:T(1,128)}', space=vmem, size = 0x12000, scoped, tag = 'internal scratch']
  #allocation2 [shape = 'bf16[18,18,4]{2,1,0:T(8,128)(2,1)}', space=vmem, size = 0x1b000, scoped, tag = 'scratch operand']
  #allocation3 [shape = 'bf16[8,16,36]{2,1,0:T(8,128)(2,1)}', space=vmem, size = 0x8000, scoped, tag = 'scratch operand']
  #allocation4 [shape = 'f32[256,4]{1,0:T(8,128)}', space=vmem, size = 0x20000, scoped, tag = 'scratch operand']
  %s0 = inlined_call_operand.vmem [shape: f32[2,16,16,4], index: 0, kind: input, shape index: {}]
  %s1 = inlined_call_operand.vmem [shape: bf16[36,4], index: 1, kind: input, shape index: {}]
  %s2 = inlined_call_operand.vmem [shape: bf16[36,4], index: 2, kind: input, shape index: {}]
  %s3 = inlined_call_operand.vmem [shape: f32[2,16,16,4], index: 3, kind: output, shape index: {}]
  %s4 = sld [smem:[#allocation0]]
  $region45: #{resblocks_forward.2} parent=0
    _
  %s6 = ssub.s32 1, %s4
  %s7 = scalar_select 0, %s6, %s4
  loop: start=0, step=1, limit=4
  $region2: #{resblocks_forward.2} parent=0 // loop_pre_header
    _
  $region3: #{resblocks_forward.2} parent=0 // loop_header
    %s9 = sphi 0, %s13
    %p10 = scmp.ge.s32.totalorder %s9, 4
    %s19 = sphi 0, %s21
    %s22 = sphi 0, %s19
    %s23 = sphi 0, %s22
    %s39 = sphi 0, %s23
    %s43 = sphi 0, %s43
    %s45 = sphi 0, %s43
    %s46 = sphi 0, %s45
    %s60 = sphi 0, %s46
    %s64 = sphi 0, %s64
    %s66 = sphi 0, %s64
    %s67 = sphi 0, %s66
    %s81 = sphi 0, %s67
    %s87 = sphi 0, %s89
    %s90 = sphi 0, %s87
    %s91 = sphi 0, %s90
    %s107 = sphi 0, %s91
  $region4: #{resblocks_forward.2} parent=0 // loop_header_branch
    %12 = sbr.rel (%p10) target = $region8
  $region5: #{resblocks_forward.2} parent=0 // loop_body
    %s14 = ssub.s32 %s9, 1
    %s15 = ssub.s32 %s9, 2
    %s16 = sadd.s32 %s9, 1
    %s17 = ssub.s32 %s9, %s16
    %p18 = scmp.eq.s32.totalorder %s17, 0
    %s20 = sadd.s32 %s19, 1
    %s21 = scalar_select %p18, %s19, %s20
    %p24 = pneg %p18
    %p25 = scmp.eq.s32.totalorder %s9, 1
    %p26 = por %p24, %p25
    %p27 = scmp.ne.s32.totalorder %s19, %s22
    %p28 = scmp.eq.s32.totalorder %s9, 0
    %p29 = por %p27, %p28
    %p30 = scmp.ne.s32.totalorder %s19, %s22
    %p31 = scmp.eq.s32.totalorder %s14, 1
    %p32 = por %p30, %p31
    %p33 = scmp.ne.s32.totalorder %s22, %s23
    %p34 = scmp.eq.s32.totalorder %s14, 0
    %p35 = por %p33, %p34
    %p36 = scmp.ne.s32.totalorder %s22, %s23
    %p37 = scmp.eq.s32.totalorder %s15, 1
    %p38 = por %p36, %p37
    %p40 = scmp.ne.s32.totalorder %s23, %s39
    %p41 = scmp.eq.s32.totalorder %s15, 0
    %p42 = por %p40, %p41
    %s44 = sadd.s32 %s43, 1
    %p47 = scmp.eq.s32.totalorder %s9, 1
    %p48 = scmp.ne.s32.totalorder %s43, %s45
    %p49 = scmp.eq.s32.totalorder %s9, 0
    %p50 = por %p48, %p49
    %p51 = scmp.ne.s32.totalorder %s43, %s45
    %p52 = scmp.eq.s32.totalorder %s14, 1
    %p53 = por %p51, %p52
    %p54 = scmp.ne.s32.totalorder %s45, %s46
    %p55 = scmp.eq.s32.totalorder %s14, 0
    %p56 = por %p54, %p55
    %p57 = scmp.ne.s32.totalorder %s45, %s46
    %p58 = scmp.eq.s32.totalorder %s15, 1
    %p59 = por %p57, %p58
    %p61 = scmp.ne.s32.totalorder %s46, %s60
    %p62 = scmp.eq.s32.totalorder %s15, 0
    %p63 = por %p61, %p62
    %s65 = sadd.s32 %s64, 1
    %p68 = scmp.eq.s32.totalorder %s9, 1
    %p69 = scmp.ne.s32.totalorder %s64, %s66
    %p70 = scmp.eq.s32.totalorder %s9, 0
    %p71 = por %p69, %p70
    %p72 = scmp.ne.s32.totalorder %s64, %s66
    %p73 = scmp.eq.s32.totalorder %s14, 1
    %p74 = por %p72, %p73
    %p75 = scmp.ne.s32.totalorder %s66, %s67
    %p76 = scmp.eq.s32.totalorder %s14, 0
    %p77 = por %p75, %p76
    %p78 = scmp.ne.s32.totalorder %s66, %s67
    %p79 = scmp.eq.s32.totalorder %s15, 1
    %p80 = por %p78, %p79
    %p82 = scmp.ne.s32.totalorder %s67, %s81
    %p83 = scmp.eq.s32.totalorder %s15, 0
    %p84 = por %p82, %p83
    %s85 = ssub.s32 %s9, %s16
    %p86 = scmp.eq.s32.totalorder %s85, 0
    %s88 = sadd.s32 %s87, 1
    %s89 = scalar_select %p86, %s87, %s88
    %p92 = pneg %p86
    %p93 = scmp.eq.s32.totalorder %s9, 1
    %p94 = por %p92, %p93
    %p95 = scmp.ne.s32.totalorder %s87, %s90
    %p96 = scmp.eq.s32.totalorder %s9, 0
    %p97 = por %p95, %p96
    %p98 = scmp.ne.s32.totalorder %s87, %s90
    %p99 = scmp.eq.s32.totalorder %s14, 1
    %p100 = por %p98, %p99
    %p101 = scmp.ne.s32.totalorder %s90, %s91
    %p102 = scmp.eq.s32.totalorder %s14, 0
    %p103 = por %p101, %p102
    %p104 = scmp.ne.s32.totalorder %s90, %s91
    %p105 = scmp.eq.s32.totalorder %s15, 1
    %p106 = por %p104, %p105
    %p108 = scmp.ne.s32.totalorder %s91, %s107
    %p109 = scmp.eq.s32.totalorder %s15, 0
    %p110 = por %p108, %p109
    %p111 = scmp.le.s32.totalorder 1, %s9
    %p112 = scmp.lt.s32.totalorder %s9, 3
    %p113 = pnand %p111, %p112
    %p114 = pneg %p113
    // Predicated region
    $region9: #{resblocks_forward.2} parent=5 // pred_check
      _
    $region10: #{resblocks_forward.2} parent=5 // pred_check_branch
      %116 = sbr.rel (%p113) target = $region12
    $region11: #{resblocks_forward.2} parent=5 // pred_region
      %s117 = ssub.s32 %s9, 1
      // Predicated region
      $region13: #{resblocks_forward.2} parent=11 // pred_check
        %p118 = pneg %p56
      $region14: #{resblocks_forward.2} parent=11 // pred_check_branch
        %120 = sbr.rel (%p118) target = $region16
      $region15: #{resblocks_forward.2} parent=11 // pred_region
        _
      $region16: #{resblocks_forward.2} parent=11 // pred_fallthru
        _
      // Predicated region
      $region17: #{resblocks_forward.2} parent=11 // pred_check
        %p121 = pneg %p77
      $region18: #{resblocks_forward.2} parent=11 // pred_check_branch
        %123 = sbr.rel (%p121) target = $region20
      $region19: #{resblocks_forward.2} parent=11 // pred_region
        _
      $region20: #{resblocks_forward.2} parent=11 // pred_fallthru
        _
    $region12: #{resblocks_forward.2} parent=5 // pred_fallthru
      _
    %p124 = scmp.lt.s32.totalorder %s9, 2
    // Predicated region
    $region21: #{resblocks_forward.2} parent=5 // pred_check
      %p125 = pneg %p124
    $region22: #{resblocks_forward.2} parent=5 // pred_check_branch
      %127 = sbr.rel (%p125) target = $region24
    $region23: #{resblocks_forward.2} parent=5 // pred_region
      // Predicated region
      $region25: #{resblocks_forward.2} parent=23 // pred_check
        %p128 = pneg %p29
      $region26: #{resblocks_forward.2} parent=23 // pred_check_branch
        %130 = sbr.rel (%p128) target = $region28
      $region27: #{resblocks_forward.2} parent=23 // pred_region
        %p131 = scmp.lt.s32.totalorder %s9, 1
        %s132 = scalar_select %p131, %s9, 1
        %s133 = smul.addr %s132, 32
        %s134 = smul.addr %s133, 8
        %s135 = scalar_lea.vmem %s0, %s134
      $region28: #{resblocks_forward.2} parent=23 // pred_fallthru
        _
    $region24: #{resblocks_forward.2} parent=5 // pred_fallthru
      _
    %p136 = scmp.le.s32.totalorder 1, %s9
    %p137 = scmp.lt.s32.totalorder %s9, 3
    %p138 = pnand %p136, %p137
    %p139 = pneg %p138
    // Predicated region
    $region29: #{resblocks_forward.2} parent=5 // pred_check
      _
    $region30: #{resblocks_forward.2} parent=5 // pred_check_branch
      %141 = sbr.rel (%p138) target = $region32
    $region31: #{resblocks_forward.2} parent=5 // pred_region
      %s142 = ssub.s32 %s9, 1
      %p143 = scmp.lt.s32.totalorder %s14, 1
      %s144 = scalar_select %p143, %s14, 1
      %s145 = smul.addr %s144, 32
      %s146 = smul.addr %s145, 8
      %s147 = scalar_lea.vmem %s0, %s146
      %p148 = pneg %p35
      %p149 = pneg %p32
      %p150 = pneg %p56
      %p151 = pneg %p53
      %p152 = pneg %p77
      %p153 = pneg %p74
      %p154 = pneg %p103
      %p155 = pneg %p100
      %p156 = scmp.lt.s32.totalorder %s14, 1
      %s157 = scalar_select %p156, %s14, 1
      %s158 = smul.addr %s157, 32
      %s159 = smul.addr %s158, 8
      %s160 = scalar_lea.vmem %s3, %s159
      %p161 = scmp.lt.s32.totalorder %s14, 1
      %s162 = scalar_select %p161, %s14, 1
      %s163 = smul.addr %s162, 32
      %s164 = smul.addr %s163, 8
      %s165 = scalar_lea.vmem %s0, %s164
      %p166 = scmp.lt.s32.totalorder %s14, 1
      %s167 = scalar_select %p166, %s14, 1
      %s168 = smul.addr %s167, 32
      %s169 = smul.addr %s168, 8
      %s170 = scalar_lea.vmem %s3, %s169
      %v172 = vld [vmem:[%s165] sm:$0xff]
      %v173 = vld [vmem:[%s165 + $0x8] sm:$0xff]
      %v174 = vld [vmem:[%s165 + $0x10] sm:$0xff]
      %v175 = vld [vmem:[%s165 + $0x18] sm:$0xff]
      %v176 = vld [vmem:[%s165 + $0x20] sm:$0xff]
      %v177 = vld [vmem:[%s165 + $0x28] sm:$0xff]
      %v178 = vld [vmem:[%s165 + $0x30] sm:$0xff]
      %v179 = vld [vmem:[%s165 + $0x38] sm:$0xff]
      %v180 = vld [vmem:[%s165 + $0x40] sm:$0xff]
      %v181 = vld [vmem:[%s165 + $0x48] sm:$0xff]
      %v182 = vld [vmem:[%s165 + $0x50] sm:$0xff]
      %v183 = vld [vmem:[%s165 + $0x58] sm:$0xff]
      %v184 = vld [vmem:[%s165 + $0x60] sm:$0xff]
      %v185 = vld [vmem:[%s165 + $0x68] sm:$0xff]
      %v186 = vld [vmem:[%s165 + $0x70] sm:$0xff]
      %v187 = vld [vmem:[%s165 + $0x78] sm:$0xff]
      %v188 = vpack.c.bf16 %v173, %v172
      %v189 = vpack.c.bf16 %v175, %v174
      %v190 = vpack.c.bf16 %v177, %v176
      %v191 = vpack.c.bf16 %v179, %v178
      %v192 = vpack.c.bf16 %v181, %v180
      %v193 = vpack.c.bf16 %v183, %v182
      %v194 = vpack.c.bf16 %v185, %v184
      %v195 = vpack.c.bf16 %v187, %v186
      %v204 = vunpack.c.l.b16 %v188
      %v205 = vunpack.c.h.b16 %v188
      %v206 = vunpack.c.l.b16 %v189
      %v207 = vunpack.c.h.b16 %v189
      %v208 = vunpack.c.l.b16 %v190
      %v209 = vunpack.c.h.b16 %v190
      %v210 = vunpack.c.l.b16 %v191
      %v211 = vunpack.c.h.b16 %v191
      %v212 = vunpack.c.l.b16 %v192
      %v213 = vunpack.c.h.b16 %v192
      %v214 = vunpack.c.l.b16 %v193
      %v215 = vunpack.c.h.b16 %v193
      %v216 = vunpack.c.l.b16 %v194
      %v217 = vunpack.c.h.b16 %v194
      %v218 = vunpack.c.l.b16 %v195
      %v219 = vunpack.c.h.b16 %v195
      %v220 = vpack.c.b16 %v204, %v204
      %v221 = vpack.c.b16 %v205, %v205
      %v222 = vpack.c.b16 %v206, %v206
      %v223 = vpack.c.b16 %v207, %v207
      %v224 = vpack.c.b16 %v208, %v208
      %v225 = vpack.c.b16 %v209, %v209
      %v226 = vpack.c.b16 %v210, %v210
      %v227 = vpack.c.b16 %v211, %v211
      %v228 = vpack.c.b16 %v212, %v212
      %v229 = vpack.c.b16 %v213, %v213
      %v230 = vpack.c.b16 %v214, %v214
      %v231 = vpack.c.b16 %v215, %v215
      %v232 = vpack.c.b16 %v216, %v216
      %v233 = vpack.c.b16 %v217, %v217
      %v234 = vpack.c.b16 %v218, %v218
      %v235 = vpack.c.b16 %v219, %v219
      %vm236 = vsmask.f32 256
      %vm237 = vsmask.f32 4368
      %vm238 = vmor %vm236, %vm237
      %v240 = vshrl.u32 %v220, 16
      %v242 = vrot.slane %v240, 7
      %v243 = vshll.u32 %v220, 16
      %v245 = vor.u32 %v242, %v243
      %v246 = vrot.slane %v242, 4
      %v248 = vshrl.u32 %v221, 16
      %v250 = vrot.slane %v248, 7
      %v251 = vshll.u32 %v221, 16
      %v253 = vor.u32 %v250, %v251
      %v254 = vsel %vm238, %v246, %v253
      %v255 = vrot.slane %v250, 4
      %v257 = vshrl.u32 %v222, 16
      %v259 = vrot.slane %v257, 7
      %v260 = vshll.u32 %v222, 16
      %v262 = vor.u32 %v259, %v260
      %v263 = vrot.slane %v259, 4
      %v265 = vshrl.u32 %v223, 16
      %v267 = vrot.slane %v265, 7
      %v268 = vshll.u32 %v223, 16
      %v270 = vor.u32 %v267, %v268
      %v271 = vsel %vm238, %v263, %v270
      %v272 = vrot.slane %v267, 4
      %v274 = vshrl.u32 %v224, 16
      %v276 = vrot.slane %v274, 7
      %v277 = vshll.u32 %v224, 16
      %v279 = vor.u32 %v276, %v277
      %v280 = vrot.slane %v276, 4
      %v282 = vshrl.u32 %v225, 16
      %v284 = vrot.slane %v282, 7
      %v285 = vshll.u32 %v225, 16
      %v287 = vor.u32 %v284, %v285
      %v288 = vsel %vm238, %v280, %v287
      %v289 = vrot.slane %v284, 4
      %v291 = vshrl.u32 %v226, 16
      %v293 = vrot.slane %v291, 7
      %v294 = vshll.u32 %v226, 16
      %v296 = vor.u32 %v293, %v294
      %v297 = vrot.slane %v293, 4
      %v299 = vshrl.u32 %v227, 16
      %v301 = vrot.slane %v299, 7
      %v302 = vshll.u32 %v227, 16
      %v304 = vor.u32 %v301, %v302
      %v305 = vsel %vm238, %v297, %v304
      %v306 = vrot.slane %v301, 4
      %v308 = vshrl.u32 %v228, 16
      %v310 = vrot.slane %v308, 7
      %v311 = vshll.u32 %v228, 16
      %v313 = vor.u32 %v310, %v311
      %v314 = vrot.slane %v310, 4
      %v316 = vshrl.u32 %v229, 16
      %v318 = vrot.slane %v316, 7
      %v319 = vshll.u32 %v229, 16
      %v321 = vor.u32 %v318, %v319
      %v322 = vsel %vm238, %v314, %v321
      %v323 = vrot.slane %v318, 4
      %v325 = vshrl.u32 %v230, 16
      %v327 = vrot.slane %v325, 7
      %v328 = vshll.u32 %v230, 16
      %v330 = vor.u32 %v327, %v328
      %v331 = vrot.slane %v327, 4
      %v333 = vshrl.u32 %v231, 16
      %v335 = vrot.slane %v333, 7
      %v336 = vshll.u32 %v231, 16
      %v338 = vor.u32 %v335, %v336
      %v339 = vsel %vm238, %v331, %v338
      %v340 = vrot.slane %v335, 4
      %v342 = vshrl.u32 %v232, 16
      %v344 = vrot.slane %v342, 7
      %v345 = vshll.u32 %v232, 16
      %v347 = vor.u32 %v344, %v345
      %v348 = vrot.slane %v344, 4
      %v350 = vshrl.u32 %v233, 16
      %v352 = vrot.slane %v350, 7
      %v353 = vshll.u32 %v233, 16
      %v355 = vor.u32 %v352, %v353
      %v356 = vsel %vm238, %v348, %v355
      %v357 = vrot.slane %v352, 4
      %v359 = vshrl.u32 %v234, 16
      %v361 = vrot.slane %v359, 7
      %v362 = vshll.u32 %v234, 16
      %v364 = vor.u32 %v361, %v362
      %v365 = vrot.slane %v361, 4
      %v367 = vshrl.u32 %v235, 16
      %v369 = vrot.slane %v367, 7
      %v370 = vshll.u32 %v235, 16
      %v372 = vor.u32 %v369, %v370
      %v373 = vsel %vm238, %v365, %v372
      %v374 = vrot.slane %v369, 4
      %s399 = scalar_lea.vmem [#allocation2], 12
      %vm400 = vcmask 27648
      %vm401 = vsmask.f32 7938
      %vm402 = vmand %vm400, %vm401
      %v403 = vld [vmem:[%s399] sm:$0xf]
      %v404 = vsel %vm402, %v245, %v403
      %405 = vst [vmem:[%s399] sm:$0xf] %v404
      %vm406 = vcmask 27648
      %407 = vst.msk [vmem:[%s399 + $0x4] sm:$0xf] %vm406, %v254
      %vm408 = vcmask 24576
      %vm409 = vmand %vm408, %vm236
      %v410 = vld [vmem:[%s399 + $0x8] sm:$0x1]
      %v411 = vsel %vm409, %v255, %v410
      %412 = vst [vmem:[%s399 + $0x8] sm:$0x1] %v411
      %v413 = vld [vmem:[%s399 + $0xc] sm:$0xf]
      %v414 = vsel %vm402, %v262, %v413
      %415 = vst [vmem:[%s399 + $0xc] sm:$0xf] %v414
      %416 = vst.msk [vmem:[%s399 + $0x10] sm:$0xf] %vm406, %v271
      %v417 = vld [vmem:[%s399 + $0x14] sm:$0x1]
      %v418 = vsel %vm409, %v272, %v417
      %419 = vst [vmem:[%s399 + $0x14] sm:$0x1] %v418
      %v420 = vld [vmem:[%s399 + $0x18] sm:$0xf]
      %v421 = vsel %vm402, %v279, %v420
      %422 = vst [vmem:[%s399 + $0x18] sm:$0xf] %v421
      %423 = vst.msk [vmem:[%s399 + $0x1c] sm:$0xf] %vm406, %v288
      %v424 = vld [vmem:[%s399 + $0x20] sm:$0x1]
      %v425 = vsel %vm409, %v289, %v424
      %426 = vst [vmem:[%s399 + $0x20] sm:$0x1] %v425
      %v427 = vld [vmem:[%s399 + $0x24] sm:$0xf]
      %v428 = vsel %vm402, %v296, %v427
      %429 = vst [vmem:[%s399 + $0x24] sm:$0xf] %v428
      %430 = vst.msk [vmem:[%s399 + $0x28] sm:$0xf] %vm406, %v305
      %v431 = vld [vmem:[%s399 + $0x2c] sm:$0x1]
      %v432 = vsel %vm409, %v306, %v431
      %433 = vst [vmem:[%s399 + $0x2c] sm:$0x1] %v432
      %v434 = vld [vmem:[%s399 + $0x30] sm:$0xf]
      %v435 = vsel %vm402, %v313, %v434
      %436 = vst [vmem:[%s399 + $0x30] sm:$0xf] %v435
      %437 = vst.msk [vmem:[%s399 + $0x34] sm:$0xf] %vm406, %v322
      %v438 = vld [vmem:[%s399 + $0x38] sm:$0x1]
      %v439 = vsel %vm409, %v323, %v438
      %440 = vst [vmem:[%s399 + $0x38] sm:$0x1] %v439
      %v441 = vld [vmem:[%s399 + $0x3c] sm:$0xf]
      %v442 = vsel %vm402, %v330, %v441
      %443 = vst [vmem:[%s399 + $0x3c] sm:$0xf] %v442
      %444 = vst.msk [vmem:[%s399 + $0x40] sm:$0xf] %vm406, %v339
      %v445 = vld [vmem:[%s399 + $0x44] sm:$0x1]
      %v446 = vsel %vm409, %v340, %v445
      %447 = vst [vmem:[%s399 + $0x44] sm:$0x1] %v446
      %v448 = vld [vmem:[%s399 + $0x48] sm:$0xf]
      %v449 = vsel %vm402, %v347, %v448
      %450 = vst [vmem:[%s399 + $0x48] sm:$0xf] %v449
      %451 = vst.msk [vmem:[%s399 + $0x4c] sm:$0xf] %vm406, %v356
      %v452 = vld [vmem:[%s399 + $0x50] sm:$0x1]
      %v453 = vsel %vm409, %v357, %v452
      %454 = vst [vmem:[%s399 + $0x50] sm:$0x1] %v453
      %v455 = vld [vmem:[%s399 + $0x54] sm:$0xf]
      %v456 = vsel %vm402, %v364, %v455
      %457 = vst [vmem:[%s399 + $0x54] sm:$0xf] %v456
      %458 = vst.msk [vmem:[%s399 + $0x58] sm:$0xf] %vm406, %v373
      %v459 = vld [vmem:[%s399 + $0x5c] sm:$0x1]
      %v460 = vsel %vm409, %v374, %v459
      %461 = vst [vmem:[%s399 + $0x5c] sm:$0x1] %v460
      %s462 = scalar_lea.vmem %s165, 128
      %v463 = vld [vmem:[%s462] sm:$0xff]
      %v464 = vld [vmem:[%s462 + $0x8] sm:$0xff]
      %v465 = vld [vmem:[%s462 + $0x10] sm:$0xff]
      %v466 = vld [vmem:[%s462 + $0x18] sm:$0xff]
      %v467 = vld [vmem:[%s462 + $0x20] sm:$0xff]
      %v468 = vld [vmem:[%s462 + $0x28] sm:$0xff]
      %v469 = vld [vmem:[%s462 + $0x30] sm:$0xff]
      %v470 = vld [vmem:[%s462 + $0x38] sm:$0xff]
      %v471 = vld [vmem:[%s462 + $0x40] sm:$0xff]
      %v472 = vld [vmem:[%s462 + $0x48] sm:$0xff]
      %v473 = vld [vmem:[%s462 + $0x50] sm:$0xff]
      %v474 = vld [vmem:[%s462 + $0x58] sm:$0xff]
      %v475 = vld [vmem:[%s462 + $0x60] sm:$0xff]
      %v476 = vld [vmem:[%s462 + $0x68] sm:$0xff]
      %v477 = vld [vmem:[%s462 + $0x70] sm:$0xff]
      %v478 = vld [vmem:[%s462 + $0x78] sm:$0xff]
      %v479 = vpack.c.bf16 %v464, %v463
      %v480 = vpack.c.bf16 %v466, %v465
      %v481 = vpack.c.bf16 %v468, %v467
      %v482 = vpack.c.bf16 %v470, %v469
      %v483 = vpack.c.bf16 %v472, %v471
      %v484 = vpack.c.bf16 %v474, %v473
      %v485 = vpack.c.bf16 %v476, %v475
      %v486 = vpack.c.bf16 %v478, %v477
      %v495 = vunpack.c.l.b16 %v479
      %v496 = vunpack.c.h.b16 %v479
      %v497 = vunpack.c.l.b16 %v480
      %v498 = vunpack.c.h.b16 %v480
      %v499 = vunpack.c.l.b16 %v481
      %v500 = vunpack.c.h.b16 %v481
      %v501 = vunpack.c.l.b16 %v482
      %v502 = vunpack.c.h.b16 %v482
      %v503 = vunpack.c.l.b16 %v483
      %v504 = vunpack.c.h.b16 %v483
      %v505 = vunpack.c.l.b16 %v484
      %v506 = vunpack.c.h.b16 %v484
      %v507 = vunpack.c.l.b16 %v485
      %v508 = vunpack.c.h.b16 %v485
      %v509 = vunpack.c.l.b16 %v486
      %v510 = vunpack.c.h.b16 %v486
      %v511 = vpack.c.b16 %v495, %v495
      %v512 = vpack.c.b16 %v496, %v496
      %v513 = vpack.c.b16 %v497, %v497
      %v514 = vpack.c.b16 %v498, %v498
      %v515 = vpack.c.b16 %v499, %v499
      %v516 = vpack.c.b16 %v500, %v500
      %v517 = vpack.c.b16 %v501, %v501
      %v518 = vpack.c.b16 %v502, %v502
      %v519 = vpack.c.b16 %v503, %v503
      %v520 = vpack.c.b16 %v504, %v504
      %v521 = vpack.c.b16 %v505, %v505
      %v522 = vpack.c.b16 %v506, %v506
      %v523 = vpack.c.b16 %v507, %v507
      %v524 = vpack.c.b16 %v508, %v508
      %v525 = vpack.c.b16 %v509, %v509
      %v526 = vpack.c.b16 %v510, %v510
      %v528 = vshrl.u32 %v511, 16
      %v530 = vrot.slane %v528, 7
      %v531 = vshll.u32 %v511, 16
      %v533 = vor.u32 %v530, %v531
      %v534 = vrot.slane %v530, 4
      %v536 = vshrl.u32 %v512, 16
      %v538 = vrot.slane %v536, 7
      %v539 = vshll.u32 %v512, 16
      %v541 = vor.u32 %v538, %v539
      %v542 = vsel %vm238, %v534, %v541
      %v543 = vrot.slane %v538, 4
      %v545 = vshrl.u32 %v513, 16
      %v547 = vrot.slane %v545, 7
      %v548 = vshll.u32 %v513, 16
      %v550 = vor.u32 %v547, %v548
      %v551 = vrot.slane %v547, 4
      %v553 = vshrl.u32 %v514, 16
      %v555 = vrot.slane %v553, 7
      %v556 = vshll.u32 %v514, 16
      %v558 = vor.u32 %v555, %v556
      %v559 = vsel %vm238, %v551, %v558
      %v560 = vrot.slane %v555, 4
      %v562 = vshrl.u32 %v515, 16
      %v564 = vrot.slane %v562, 7
      %v565 = vshll.u32 %v515, 16
      %v567 = vor.u32 %v564, %v565
      %v568 = vrot.slane %v564, 4
      %v570 = vshrl.u32 %v516, 16
      %v572 = vrot.slane %v570, 7
      %v573 = vshll.u32 %v516, 16
      %v575 = vor.u32 %v572, %v573
      %v576 = vsel %vm238, %v568, %v575
      %v577 = vrot.slane %v572, 4
      %v579 = vshrl.u32 %v517, 16
      %v581 = vrot.slane %v579, 7
      %v582 = vshll.u32 %v517, 16
      %v584 = vor.u32 %v581, %v582
      %v585 = vrot.slane %v581, 4
      %v587 = vshrl.u32 %v518, 16
      %v589 = vrot.slane %v587, 7
      %v590 = vshll.u32 %v518, 16
      %v592 = vor.u32 %v589, %v590
      %v593 = vsel %vm238, %v585, %v592
      %v594 = vrot.slane %v589, 4
      %v596 = vshrl.u32 %v519, 16
      %v598 = vrot.slane %v596, 7
      %v599 = vshll.u32 %v519, 16
      %v601 = vor.u32 %v598, %v599
      %v602 = vrot.slane %v598, 4
      %v604 = vshrl.u32 %v520, 16
      %v606 = vrot.slane %v604, 7
      %v607 = vshll.u32 %v520, 16
      %v609 = vor.u32 %v606, %v607
      %v610 = vsel %vm238, %v602, %v609
      %v611 = vrot.slane %v606, 4
      %v613 = vshrl.u32 %v521, 16
      %v615 = vrot.slane %v613, 7
      %v616 = vshll.u32 %v521, 16
      %v618 = vor.u32 %v615, %v616
      %v619 = vrot.slane %v615, 4
      %v621 = vshrl.u32 %v522, 16
      %v623 = vrot.slane %v621, 7
      %v624 = vshll.u32 %v522, 16
      %v626 = vor.u32 %v623, %v624
      %v627 = vsel %vm238, %v619, %v626
      %v628 = vrot.slane %v623, 4
      %v630 = vshrl.u32 %v523, 16
      %v632 = vrot.slane %v630, 7
      %v633 = vshll.u32 %v523, 16
      %v635 = vor.u32 %v632, %v633
      %v636 = vrot.slane %v632, 4
      %v638 = vshrl.u32 %v524, 16
      %v640 = vrot.slane %v638, 7
      %v641 = vshll.u32 %v524, 16
      %v643 = vor.u32 %v640, %v641
      %v644 = vsel %vm238, %v636, %v643
      %v645 = vrot.slane %v640, 4
      %v647 = vshrl.u32 %v525, 16
      %v649 = vrot.slane %v647, 7
      %v650 = vshll.u32 %v525, 16
      %v652 = vor.u32 %v649, %v650
      %v653 = vrot.slane %v649, 4
      %v655 = vshrl.u32 %v526, 16
      %v657 = vrot.slane %v655, 7
      %v658 = vshll.u32 %v526, 16
      %v660 = vor.u32 %v657, %v658
      %v661 = vsel %vm238, %v653, %v660
      %v662 = vrot.slane %v657, 4
      %s687 = scalar_lea.vmem [#allocation2], 108
      %v688 = vld [vmem:[%s687] sm:$0xf]
      %v689 = vsel %vm402, %v533, %v688
      %690 = vst [vmem:[%s687] sm:$0xf] %v689
      %691 = vst.msk [vmem:[%s687 + $0x4] sm:$0xf] %vm406, %v542
      %v692 = vld [vmem:[%s687 + $0x8] sm:$0x1]
      %v693 = vsel %vm409, %v543, %v692
      %694 = vst [vmem:[%s687 + $0x8] sm:$0x1] %v693
      %v695 = vld [vmem:[%s687 + $0xc] sm:$0xf]
      %v696 = vsel %vm402, %v550, %v695
      %697 = vst [vmem:[%s687 + $0xc] sm:$0xf] %v696
      %698 = vst.msk [vmem:[%s687 + $0x10] sm:$0xf] %vm406, %v559
      %v699 = vld [vmem:[%s687 + $0x14] sm:$0x1]
      %v700 = vsel %vm409, %v560, %v699
      %701 = vst [vmem:[%s687 + $0x14] sm:$0x1] %v700
      %v702 = vld [vmem:[%s687 + $0x18] sm:$0xf]
      %v703 = vsel %vm402, %v567, %v702
      %704 = vst [vmem:[%s687 + $0x18] sm:$0xf] %v703
      %705 = vst.msk [vmem:[%s687 + $0x1c] sm:$0xf] %vm406, %v576
      %v706 = vld [vmem:[%s687 + $0x20] sm:$0x1]
      %v707 = vsel %vm409, %v577, %v706
      %708 = vst [vmem:[%s687 + $0x20] sm:$0x1] %v707
      %v709 = vld [vmem:[%s687 + $0x24] sm:$0xf]
      %v710 = vsel %vm402, %v584, %v709
      %711 = vst [vmem:[%s687 + $0x24] sm:$0xf] %v710
      %712 = vst.msk [vmem:[%s687 + $0x28] sm:$0xf] %vm406, %v593
      %v713 = vld [vmem:[%s687 + $0x2c] sm:$0x1]
      %v714 = vsel %vm409, %v594, %v713
      %715 = vst [vmem:[%s687 + $0x2c] sm:$0x1] %v714
      %v716 = vld [vmem:[%s687 + $0x30] sm:$0xf]
      %v717 = vsel %vm402, %v601, %v716
      %718 = vst [vmem:[%s687 + $0x30] sm:$0xf] %v717
      %719 = vst.msk [vmem:[%s687 + $0x34] sm:$0xf] %vm406, %v610
      %v720 = vld [vmem:[%s687 + $0x38] sm:$0x1]
      %v721 = vsel %vm409, %v611, %v720
      %722 = vst [vmem:[%s687 + $0x38] sm:$0x1] %v721
      %v723 = vld [vmem:[%s687 + $0x3c] sm:$0xf]
      %v724 = vsel %vm402, %v618, %v723
      %725 = vst [vmem:[%s687 + $0x3c] sm:$0xf] %v724
      %726 = vst.msk [vmem:[%s687 + $0x40] sm:$0xf] %vm406, %v627
      %v727 = vld [vmem:[%s687 + $0x44] sm:$0x1]
      %v728 = vsel %vm409, %v628, %v727
      %729 = vst [vmem:[%s687 + $0x44] sm:$0x1] %v728
      %v730 = vld [vmem:[%s687 + $0x48] sm:$0xf]
      %v731 = vsel %vm402, %v635, %v730
      %732 = vst [vmem:[%s687 + $0x48] sm:$0xf] %v731
      %733 = vst.msk [vmem:[%s687 + $0x4c] sm:$0xf] %vm406, %v644
      %v734 = vld [vmem:[%s687 + $0x50] sm:$0x1]
      %v735 = vsel %vm409, %v645, %v734
      %736 = vst [vmem:[%s687 + $0x50] sm:$0x1] %v735
      %v737 = vld [vmem:[%s687 + $0x54] sm:$0xf]
      %v738 = vsel %vm402, %v652, %v737
      %739 = vst [vmem:[%s687 + $0x54] sm:$0xf] %v738
      %740 = vst.msk [vmem:[%s687 + $0x58] sm:$0xf] %vm406, %v661
      %v741 = vld [vmem:[%s687 + $0x5c] sm:$0x1]
      %v742 = vsel %vm409, %v662, %v741
      %743 = vst [vmem:[%s687 + $0x5c] sm:$0x1] %v742
      %s744 = scalar_lea.vmem [#allocation2], 24
      %v745 = vld [vmem:[%s744] sm:$0xf]
      %v746 = vld [vmem:[%s744 + $0x4] sm:$0xf]
      %v747 = vld [vmem:[%s744 + $0x8] sm:$0x1]
      %v748 = vld [vmem:[#allocation2] sm:$0xf]
      %v749 = vsel %vm402, %v745, %v748
      %750 = vst [vmem:[#allocation2] sm:$0xf] %v749
      %751 = vst.msk [vmem:[#allocation2 + $0x4] sm:$0xf] %vm406, %v746
      %v752 = vld [vmem:[#allocation2 + $0x8] sm:$0x1]
      %v753 = vsel %vm409, %v747, %v752
      %754 = vst [vmem:[#allocation2 + $0x8] sm:$0x1] %v753
      %s755 = scalar_lea.vmem [#allocation2], 180
      %v756 = vld [vmem:[%s755] sm:$0xf]
      %v757 = vld [vmem:[%s755 + $0x4] sm:$0xf]
      %v758 = vld [vmem:[%s755 + $0x8] sm:$0x1]
      %s759 = scalar_lea.vmem [#allocation2], 204
      %v760 = vld [vmem:[%s759] sm:$0xf]
      %v761 = vsel %vm402, %v756, %v760
      %762 = vst [vmem:[%s759] sm:$0xf] %v761
      %763 = vst.msk [vmem:[%s759 + $0x4] sm:$0xf] %vm406, %v757
      %v764 = vld [vmem:[%s759 + $0x8] sm:$0x1]
      %v765 = vsel %vm409, %v758, %v764
      %766 = vst [vmem:[%s759 + $0x8] sm:$0x1] %v765
      %v767 = vld [vmem:[#allocation2] sm:$0x2]
      %v768 = vld [vmem:[#allocation2 + $0xc] sm:$0x2]
      %v769 = vld [vmem:[#allocation2 + $0x18] sm:$0x2]
      %v770 = vld [vmem:[#allocation2 + $0x24] sm:$0x2]
      %v771 = vld [vmem:[#allocation2 + $0x30] sm:$0x2]
      %v772 = vld [vmem:[#allocation2 + $0x3c] sm:$0x2]
      %v773 = vld [vmem:[#allocation2 + $0x48] sm:$0x2]
      %v774 = vld [vmem:[#allocation2 + $0x54] sm:$0x2]
      %v775 = vld [vmem:[#allocation2 + $0x60] sm:$0x2]
      %v776 = vld [vmem:[#allocation2 + $0x6c] sm:$0x2]
      %v777 = vld [vmem:[#allocation2 + $0x78] sm:$0x2]
      %v778 = vld [vmem:[#allocation2 + $0x84] sm:$0x2]
      %v779 = vld [vmem:[#allocation2 + $0x90] sm:$0x2]
      %v780 = vld [vmem:[#allocation2 + $0x9c] sm:$0x2]
      %v781 = vld [vmem:[#allocation2 + $0xa8] sm:$0x2]
      %v782 = vld [vmem:[#allocation2 + $0xb4] sm:$0x2]
      %v783 = vld [vmem:[#allocation2 + $0xc0] sm:$0x2]
      %v784 = vld [vmem:[#allocation2 + $0xcc] sm:$0x2]
      %v803 = vrot.slane %v767, 5
      %v804 = vrot.slane %v803, 4
      %v805 = vrot.slane %v768, 5
      %v806 = vrot.slane %v805, 4
      %v807 = vrot.slane %v769, 5
      %v808 = vrot.slane %v807, 4
      %v809 = vrot.slane %v770, 5
      %v810 = vrot.slane %v809, 4
      %v811 = vrot.slane %v771, 5
      %v812 = vrot.slane %v811, 4
      %v813 = vrot.slane %v772, 5
      %v814 = vrot.slane %v813, 4
      %v815 = vrot.slane %v773, 5
      %v816 = vrot.slane %v815, 4
      %v817 = vrot.slane %v774, 5
      %v818 = vrot.slane %v817, 4
      %v819 = vrot.slane %v775, 5
      %v820 = vrot.slane %v819, 4
      %v821 = vrot.slane %v776, 5
      %v822 = vrot.slane %v821, 4
      %v823 = vrot.slane %v777, 5
      %v824 = vrot.slane %v823, 4
      %v825 = vrot.slane %v778, 5
      %v826 = vrot.slane %v825, 4
      %v827 = vrot.slane %v779, 5
      %v828 = vrot.slane %v827, 4
      %v829 = vrot.slane %v780, 5
      %v830 = vrot.slane %v829, 4
      %v831 = vrot.slane %v781, 5
      %v832 = vrot.slane %v831, 4
      %v833 = vrot.slane %v782, 5
      %v834 = vrot.slane %v833, 4
      %v835 = vrot.slane %v783, 5
      %v836 = vrot.slane %v835, 4
      %v837 = vrot.slane %v784, 5
      %v838 = vrot.slane %v837, 4
      %v857 = vld [vmem:[#allocation2] sm:$0x1]
      %v858 = vsel %vm409, %v804, %v857
      %859 = vst [vmem:[#allocation2] sm:$0x1] %v858
      %v860 = vld [vmem:[#allocation2 + $0xc] sm:$0x1]
      %v861 = vsel %vm409, %v806, %v860
      %862 = vst [vmem:[#allocation2 + $0xc] sm:$0x1] %v861
      %v863 = vld [vmem:[#allocation2 + $0x18] sm:$0x1]
      %v864 = vsel %vm409, %v808, %v863
      %865 = vst [vmem:[#allocation2 + $0x18] sm:$0x1] %v864
      %v866 = vld [vmem:[#allocation2 + $0x24] sm:$0x1]
      %v867 = vsel %vm409, %v810, %v866
      %868 = vst [vmem:[#allocation2 + $0x24] sm:$0x1] %v867
      %v869 = vld [vmem:[#allocation2 + $0x30] sm:$0x1]
      %v870 = vsel %vm409, %v812, %v869
      %871 = vst [vmem:[#allocation2 + $0x30] sm:$0x1] %v870
      %v872 = vld [vmem:[#allocation2 + $0x3c] sm:$0x1]
      %v873 = vsel %vm409, %v814, %v872
      %874 = vst [vmem:[#allocation2 + $0x3c] sm:$0x1] %v873
      %v875 = vld [vmem:[#allocation2 + $0x48] sm:$0x1]
      %v876 = vsel %vm409, %v816, %v875
      %877 = vst [vmem:[#allocation2 + $0x48] sm:$0x1] %v876
      %v878 = vld [vmem:[#allocation2 + $0x54] sm:$0x1]
      %v879 = vsel %vm409, %v818, %v878
      %880 = vst [vmem:[#allocation2 + $0x54] sm:$0x1] %v879
      %v881 = vld [vmem:[#allocation2 + $0x60] sm:$0x1]
      %v882 = vsel %vm409, %v820, %v881
      %883 = vst [vmem:[#allocation2 + $0x60] sm:$0x1] %v882
      %v884 = vld [vmem:[#allocation2 + $0x6c] sm:$0x1]
      %v885 = vsel %vm409, %v822, %v884
      %886 = vst [vmem:[#allocation2 + $0x6c] sm:$0x1] %v885
      %v887 = vld [vmem:[#allocation2 + $0x78] sm:$0x1]
      %v888 = vsel %vm409, %v824, %v887
      %889 = vst [vmem:[#allocation2 + $0x78] sm:$0x1] %v888
      %v890 = vld [vmem:[#allocation2 + $0x84] sm:$0x1]
      %v891 = vsel %vm409, %v826, %v890
      %892 = vst [vmem:[#allocation2 + $0x84] sm:$0x1] %v891
      %v893 = vld [vmem:[#allocation2 + $0x90] sm:$0x1]
      %v894 = vsel %vm409, %v828, %v893
      %895 = vst [vmem:[#allocation2 + $0x90] sm:$0x1] %v894
      %v896 = vld [vmem:[#allocation2 + $0x9c] sm:$0x1]
      %v897 = vsel %vm409, %v830, %v896
      %898 = vst [vmem:[#allocation2 + $0x9c] sm:$0x1] %v897
      %v899 = vld [vmem:[#allocation2 + $0xa8] sm:$0x1]
      %v900 = vsel %vm409, %v832, %v899
      %901 = vst [vmem:[#allocation2 + $0xa8] sm:$0x1] %v900
      %v902 = vld [vmem:[#allocation2 + $0xb4] sm:$0x1]
      %v903 = vsel %vm409, %v834, %v902
      %904 = vst [vmem:[#allocation2 + $0xb4] sm:$0x1] %v903
      %v905 = vld [vmem:[#allocation2 + $0xc0] sm:$0x1]
      %v906 = vsel %vm409, %v836, %v905
      %907 = vst [vmem:[#allocation2 + $0xc0] sm:$0x1] %v906
      %v908 = vld [vmem:[#allocation2 + $0xcc] sm:$0x1]
      %v909 = vsel %vm409, %v838, %v908
      %910 = vst [vmem:[#allocation2 + $0xcc] sm:$0x1] %v909
      %v911 = vld [vmem:[#allocation2 + $0x4] sm:$0x8]
      %v912 = vld [vmem:[#allocation2 + $0x10] sm:$0x8]
      %v913 = vld [vmem:[#allocation2 + $0x1c] sm:$0x8]
      %v914 = vld [vmem:[#allocation2 + $0x28] sm:$0x8]
      %v915 = vld [vmem:[#allocation2 + $0x34] sm:$0x8]
      %v916 = vld [vmem:[#allocation2 + $0x40] sm:$0x8]
      %v917 = vld [vmem:[#allocation2 + $0x4c] sm:$0x8]
      %v918 = vld [vmem:[#allocation2 + $0x58] sm:$0x8]
      %v919 = vld [vmem:[#allocation2 + $0x64] sm:$0x8]
      %v920 = vld [vmem:[#allocation2 + $0x70] sm:$0x8]
      %v921 = vld [vmem:[#allocation2 + $0x7c] sm:$0x8]
      %v922 = vld [vmem:[#allocation2 + $0x88] sm:$0x8]
      %v923 = vld [vmem:[#allocation2 + $0x94] sm:$0x8]
      %v924 = vld [vmem:[#allocation2 + $0xa0] sm:$0x8]
      %v925 = vld [vmem:[#allocation2 + $0xac] sm:$0x8]
      %v926 = vld [vmem:[#allocation2 + $0xb8] sm:$0x8]
      %v927 = vld [vmem:[#allocation2 + $0xc4] sm:$0x8]
      %v928 = vld [vmem:[#allocation2 + $0xd0] sm:$0x8]
      %v947 = vrot.slane %v911, 7
      %v948 = vrot.slane %v947, 4
      %v949 = vrot.slane %v912, 7
      %v950 = vrot.slane %v949, 4
      %v951 = vrot.slane %v913, 7
      %v952 = vrot.slane %v951, 4
      %v953 = vrot.slane %v914, 7
      %v954 = vrot.slane %v953, 4
      %v955 = vrot.slane %v915, 7
      %v956 = vrot.slane %v955, 4
      %v957 = vrot.slane %v916, 7
      %v958 = vrot.slane %v957, 4
      %v959 = vrot.slane %v917, 7
      %v960 = vrot.slane %v959, 4
      %v961 = vrot.slane %v918, 7
      %v962 = vrot.slane %v961, 4
      %v963 = vrot.slane %v919, 7
      %v964 = vrot.slane %v963, 4
      %v965 = vrot.slane %v920, 7
      %v966 = vrot.slane %v965, 4
      %v967 = vrot.slane %v921, 7
      %v968 = vrot.slane %v967, 4
      %v969 = vrot.slane %v922, 7
      %v970 = vrot.slane %v969, 4
      %v971 = vrot.slane %v923, 7
      %v972 = vrot.slane %v971, 4
      %v973 = vrot.slane %v924, 7
      %v974 = vrot.slane %v973, 4
      %v975 = vrot.slane %v925, 7
      %v976 = vrot.slane %v975, 4
      %v977 = vrot.slane %v926, 7
      %v978 = vrot.slane %v977, 4
      %v979 = vrot.slane %v927, 7
      %v980 = vrot.slane %v979, 4
      %v981 = vrot.slane %v928, 7
      %v982 = vrot.slane %v981, 4
      %vm1001 = vmand %vm408, %vm401
      %v1002 = vld [vmem:[#allocation2 + $0x8] sm:$0x1]
      %v1003 = vsel %vm1001, %v948, %v1002
      %1004 = vst [vmem:[#allocation2 + $0x8] sm:$0x1] %v1003
      %v1005 = vld [vmem:[#allocation2 + $0x14] sm:$0x1]
      %v1006 = vsel %vm1001, %v950, %v1005
      %1007 = vst [vmem:[#allocation2 + $0x14] sm:$0x1] %v1006
      %v1008 = vld [vmem:[#allocation2 + $0x20] sm:$0x1]
      %v1009 = vsel %vm1001, %v952, %v1008
      %1010 = vst [vmem:[#allocation2 + $0x20] sm:$0x1] %v1009
      %v1011 = vld [vmem:[#allocation2 + $0x2c] sm:$0x1]
      %v1012 = vsel %vm1001, %v954, %v1011
      %1013 = vst [vmem:[#allocation2 + $0x2c] sm:$0x1] %v1012
      %v1014 = vld [vmem:[#allocation2 + $0x38] sm:$0x1]
      %v1015 = vsel %vm1001, %v956, %v1014
      %1016 = vst [vmem:[#allocation2 + $0x38] sm:$0x1] %v1015
      %v1017 = vld [vmem:[#allocation2 + $0x44] sm:$0x1]
      %v1018 = vsel %vm1001, %v958, %v1017
      %1019 = vst [vmem:[#allocation2 + $0x44] sm:$0x1] %v1018
      %v1020 = vld [vmem:[#allocation2 + $0x50] sm:$0x1]
      %v1021 = vsel %vm1001, %v960, %v1020
      %1022 = vst [vmem:[#allocation2 + $0x50] sm:$0x1] %v1021
      %v1023 = vld [vmem:[#allocation2 + $0x5c] sm:$0x1]
      %v1024 = vsel %vm1001, %v962, %v1023
      %1025 = vst [vmem:[#allocation2 + $0x5c] sm:$0x1] %v1024
      %v1026 = vld [vmem:[#allocation2 + $0x68] sm:$0x1]
      %v1027 = vsel %vm1001, %v964, %v1026
      %1028 = vst [vmem:[#allocation2 + $0x68] sm:$0x1] %v1027
      %v1029 = vld [vmem:[#allocation2 + $0x74] sm:$0x1]
      %v1030 = vsel %vm1001, %v966, %v1029
      %1031 = vst [vmem:[#allocation2 + $0x74] sm:$0x1] %v1030
      %v1032 = vld [vmem:[#allocation2 + $0x80] sm:$0x1]
      %v1033 = vsel %vm1001, %v968, %v1032
      %1034 = vst [vmem:[#allocation2 + $0x80] sm:$0x1] %v1033
      %v1035 = vld [vmem:[#allocation2 + $0x8c] sm:$0x1]
      %v1036 = vsel %vm1001, %v970, %v1035
      %1037 = vst [vmem:[#allocation2 + $0x8c] sm:$0x1] %v1036
      %v1038 = vld [vmem:[#allocation2 + $0x98] sm:$0x1]
      %v1039 = vsel %vm1001, %v972, %v1038
      %1040 = vst [vmem:[#allocation2 + $0x98] sm:$0x1] %v1039
      %v1041 = vld [vmem:[#allocation2 + $0xa4] sm:$0x1]
      %v1042 = vsel %vm1001, %v974, %v1041
      %1043 = vst [vmem:[#allocation2 + $0xa4] sm:$0x1] %v1042
      %v1044 = vld [vmem:[#allocation2 + $0xb0] sm:$0x1]
      %v1045 = vsel %vm1001, %v976, %v1044
      %1046 = vst [vmem:[#allocation2 + $0xb0] sm:$0x1] %v1045
      %v1047 = vld [vmem:[#allocation2 + $0xbc] sm:$0x1]
      %v1048 = vsel %vm1001, %v978, %v1047
      %1049 = vst [vmem:[#allocation2 + $0xbc] sm:$0x1] %v1048
      %v1050 = vld [vmem:[#allocation2 + $0xc8] sm:$0x1]
      %v1051 = vsel %vm1001, %v980, %v1050
      %1052 = vst [vmem:[#allocation2 + $0xc8] sm:$0x1] %v1051
      %v1053 = vld [vmem:[#allocation2 + $0xd4] sm:$0x1]
      %v1054 = vsel %vm1001, %v982, %v1053
      %1055 = vst [vmem:[#allocation2 + $0xd4] sm:$0x1] %v1054
      %v1056 = vld [vmem:[#allocation2] sm:$0xf]
      %v1057 = vld [vmem:[#allocation2 + $0x4] sm:$0xf]
      %v1058 = vld [vmem:[#allocation2 + $0xc] sm:$0xf]
      %v1059 = vld [vmem:[#allocation2 + $0x10] sm:$0xf]
      %v1060 = vld [vmem:[#allocation2 + $0x18] sm:$0xf]
      %v1061 = vld [vmem:[#allocation2 + $0x1c] sm:$0xf]
      %v1062 = vld [vmem:[#allocation2 + $0x24] sm:$0xf]
      %v1063 = vld [vmem:[#allocation2 + $0x28] sm:$0xf]
      %v1064 = vld [vmem:[#allocation2 + $0x30] sm:$0xf]
      %v1065 = vld [vmem:[#allocation2 + $0x34] sm:$0xf]
      %v1066 = vld [vmem:[#allocation2 + $0x3c] sm:$0xf]
      %v1067 = vld [vmem:[#allocation2 + $0x40] sm:$0xf]
      %v1068 = vld [vmem:[#allocation2 + $0x48] sm:$0xf]
      %v1069 = vld [vmem:[#allocation2 + $0x4c] sm:$0xf]
      %v1070 = vld [vmem:[#allocation2 + $0x54] sm:$0xf]
      %v1071 = vld [vmem:[#allocation2 + $0x58] sm:$0xf]
      %1072 = vst.msk [vmem:[#allocation3] sm:$0xf] %vm406, %v1056
      %1073 = vst.msk [vmem:[#allocation3 + $0x4] sm:$0xf] %vm406, %v1057
      %1074 = vst.msk [vmem:[#allocation3 + $0x8] sm:$0xf] %vm406, %v1058
      %1075 = vst.msk [vmem:[#allocation3 + $0xc] sm:$0xf] %vm406, %v1059
      %1076 = vst.msk [vmem:[#allocation3 + $0x10] sm:$0xf] %vm406, %v1060
      %1077 = vst.msk [vmem:[#allocation3 + $0x14] sm:$0xf] %vm406, %v1061
      %1078 = vst.msk [vmem:[#allocation3 + $0x18] sm:$0xf] %vm406, %v1062
      %1079 = vst.msk [vmem:[#allocation3 + $0x1c] sm:$0xf] %vm406, %v1063
      %1080 = vst.msk [vmem:[#allocation3 + $0x20] sm:$0xf] %vm406, %v1064
      %1081 = vst.msk [vmem:[#allocation3 + $0x24] sm:$0xf] %vm406, %v1065
      %1082 = vst.msk [vmem:[#allocation3 + $0x28] sm:$0xf] %vm406, %v1066
      %1083 = vst.msk [vmem:[#allocation3 + $0x2c] sm:$0xf] %vm406, %v1067
      %1084 = vst.msk [vmem:[#allocation3 + $0x30] sm:$0xf] %vm406, %v1068
      %1085 = vst.msk [vmem:[#allocation3 + $0x34] sm:$0xf] %vm406, %v1069
      %1086 = vst.msk [vmem:[#allocation3 + $0x38] sm:$0xf] %vm406, %v1070
      %1087 = vst.msk [vmem:[#allocation3 + $0x3c] sm:$0xf] %vm406, %v1071
      %v1088 = vld [vmem:[#allocation2] sm:$0xf]
      %v1089 = vld [vmem:[#allocation2 + $0x4] sm:$0xf]
      %v1090 = vld [vmem:[#allocation2 + $0x8] sm:$0x1]
      %v1091 = vld [vmem:[#allocation2 + $0xc] sm:$0xf]
      %v1092 = vld [vmem:[#allocation2 + $0x10] sm:$0xf]
      %v1093 = vld [vmem:[#allocation2 + $0x14] sm:$0x1]
      %v1094 = vld [vmem:[#allocation2 + $0x18] sm:$0xf]
      %v1095 = vld [vmem:[#allocation2 + $0x1c] sm:$0xf]
      %v1096 = vld [vmem:[#allocation2 + $0x20] sm:$0x1]
      %v1097 = vld [vmem:[#allocation2 + $0x24] sm:$0xf]
      %v1098 = vld [vmem:[#allocation2 + $0x28] sm:$0xf]
      %v1099 = vld [vmem:[#allocation2 + $0x2c] sm:$0x1]
      %v1100 = vld [vmem:[#allocation2 + $0x30] sm:$0xf]
      %v1101 = vld [vmem:[#allocation2 + $0x34] sm:$0xf]
      %v1102 = vld [vmem:[#allocation2 + $0x38] sm:$0x1]
      %v1103 = vld [vmem:[#allocation2 + $0x3c] sm:$0xf]
      %v1104 = vld [vmem:[#allocation2 + $0x40] sm:$0xf]
      %v1105 = vld [vmem:[#allocation2 + $0x44] sm:$0x1]
      %v1106 = vld [vmem:[#allocation2 + $0x48] sm:$0xf]
      %v1107 = vld [vmem:[#allocation2 + $0x4c] sm:$0xf]
      %v1108 = vld [vmem:[#allocation2 + $0x50] sm:$0x1]
      %v1109 = vld [vmem:[#allocation2 + $0x54] sm:$0xf]
      %v1110 = vld [vmem:[#allocation2 + $0x58] sm:$0xf]
      %v1111 = vld [vmem:[#allocation2 + $0x5c] sm:$0x1]
      %vm1112 = vsmask.f32 3328
      %vm1113 = vsmask.f32 7440
      %vm1114 = vmor %vm1112, %vm1113
      %v1116 = vshrl.u32 %v1088, 16
      %v1118 = vrot.slane %v1116, 4
      %v1119 = vshll.u32 %v1088, 16
      %v1121 = vrot.slane %v1119, 5
      %v1122 = vor.u32 %v1118, %v1121
      %v1123 = vrot.slane %v1122, 4
      %v1125 = vshll.u32 %v1089, 16
      %v1127 = vrot.slane %v1125, 5
      %v1128 = vsel %vm1114, %v1123, %v1127
      %v1129 = vshrl.u32 %v1089, 16
      %v1131 = vrot.slane %v1129, 4
      %v1132 = vor.u32 %v1131, %v1127
      %v1133 = vrot.slane %v1132, 4
      %v1135 = vshll.u32 %v1090, 16
      %v1137 = vrot.slane %v1135, 5
      %v1138 = vsel %vm1114, %v1133, %v1137
      %v1140 = vshrl.u32 %v1091, 16
      %v1142 = vrot.slane %v1140, 4
      %v1143 = vshll.u32 %v1091, 16
      %v1145 = vrot.slane %v1143, 5
      %v1146 = vor.u32 %v1142, %v1145
      %v1147 = vrot.slane %v1146, 4
      %v1149 = vshll.u32 %v1092, 16
      %v1151 = vrot.slane %v1149, 5
      %v1152 = vsel %vm1114, %v1147, %v1151
      %v1153 = vshrl.u32 %v1092, 16
      %v1155 = vrot.slane %v1153, 4
      %v1156 = vor.u32 %v1155, %v1151
      %v1157 = vrot.slane %v1156, 4
      %v1159 = vshll.u32 %v1093, 16
      %v1161 = vrot.slane %v1159, 5
      %v1162 = vsel %vm1114, %v1157, %v1161
      %v1164 = vshrl.u32 %v1094, 16
      %v1166 = vrot.slane %v1164, 4
      %v1167 = vshll.u32 %v1094, 16
      %v1169 = vrot.slane %v1167, 5
      %v1170 = vor.u32 %v1166, %v1169
      %v1171 = vrot.slane %v1170, 4
      %v1173 = vshll.u32 %v1095, 16
      %v1175 = vrot.slane %v1173, 5
      %v1176 = vsel %vm1114, %v1171, %v1175
      %v1177 = vshrl.u32 %v1095, 16
      %v1179 = vrot.slane %v1177, 4
      %v1180 = vor.u32 %v1179, %v1175
      %v1181 = vrot.slane %v1180, 4
      %v1183 = vshll.u32 %v1096, 16
      %v1185 = vrot.slane %v1183, 5
      %v1186 = vsel %vm1114, %v1181, %v1185
      %v1188 = vshrl.u32 %v1097, 16
      %v1190 = vrot.slane %v1188, 4
      %v1191 = vshll.u32 %v1097, 16
      %v1193 = vrot.slane %v1191, 5
      %v1194 = vor.u32 %v1190, %v1193
      %v1195 = vrot.slane %v1194, 4
      %v1197 = vshll.u32 %v1098, 16
      %v1199 = vrot.slane %v1197, 5
      %v1200 = vsel %vm1114, %v1195, %v1199
      %v1201 = vshrl.u32 %v1098, 16
      %v1203 = vrot.slane %v1201, 4
      %v1204 = vor.u32 %v1203, %v1199
      %v1205 = vrot.slane %v1204, 4
      %v1207 = vshll.u32 %v1099, 16
      %v1209 = vrot.slane %v1207, 5
      %v1210 = vsel %vm1114, %v1205, %v1209
      %v1212 = vshrl.u32 %v1100, 16
      %v1214 = vrot.slane %v1212, 4
      %v1215 = vshll.u32 %v1100, 16
      %v1217 = vrot.slane %v1215, 5
      %v1218 = vor.u32 %v1214, %v1217
      %v1219 = vrot.slane %v1218, 4
      %v1221 = vshll.u32 %v1101, 16
      %v1223 = vrot.slane %v1221, 5
      %v1224 = vsel %vm1114, %v1219, %v1223
      %v1225 = vshrl.u32 %v1101, 16
      %v1227 = vrot.slane %v1225, 4
      %v1228 = vor.u32 %v1227, %v1223
      %v1229 = vrot.slane %v1228, 4
      %v1231 = vshll.u32 %v1102, 16
      %v1233 = vrot.slane %v1231, 5
      %v1234 = vsel %vm1114, %v1229, %v1233
      %v1236 = vshrl.u32 %v1103, 16
      %v1238 = vrot.slane %v1236, 4
      %v1239 = vshll.u32 %v1103, 16
      %v1241 = vrot.slane %v1239, 5
      %v1242 = vor.u32 %v1238, %v1241
      %v1243 = vrot.slane %v1242, 4
      %v1245 = vshll.u32 %v1104, 16
      %v1247 = vrot.slane %v1245, 5
      %v1248 = vsel %vm1114, %v1243, %v1247
      %v1249 = vshrl.u32 %v1104, 16
      %v1251 = vrot.slane %v1249, 4
      %v1252 = vor.u32 %v1251, %v1247
      %v1253 = vrot.slane %v1252, 4
      %v1255 = vshll.u32 %v1105, 16
      %v1257 = vrot.slane %v1255, 5
      %v1258 = vsel %vm1114, %v1253, %v1257
      %v1260 = vshrl.u32 %v1106, 16
      %v1262 = vrot.slane %v1260, 4
      %v1263 = vshll.u32 %v1106, 16
      %v1265 = vrot.slane %v1263, 5
      %v1266 = vor.u32 %v1262, %v1265
      %v1267 = vrot.slane %v1266, 4
      %v1269 = vshll.u32 %v1107, 16
      %v1271 = vrot.slane %v1269, 5
      %v1272 = vsel %vm1114, %v1267, %v1271
      %v1273 = vshrl.u32 %v1107, 16
      %v1275 = vrot.slane %v1273, 4
      %v1276 = vor.u32 %v1275, %v1271
      %v1277 = vrot.slane %v1276, 4
      %v1279 = vshll.u32 %v1108, 16
      %v1281 = vrot.slane %v1279, 5
      %v1282 = vsel %vm1114, %v1277, %v1281
      %v1284 = vshrl.u32 %v1109, 16
      %v1286 = vrot.slane %v1284, 4
      %v1287 = vshll.u32 %v1109, 16
      %v1289 = vrot.slane %v1287, 5
      %v1290 = vor.u32 %v1286, %v1289
      %v1291 = vrot.slane %v1290, 4
      %v1293 = vshll.u32 %v1110, 16
      %v1295 = vrot.slane %v1293, 5
      %v1296 = vsel %vm1114, %v1291, %v1295
      %v1297 = vshrl.u32 %v1110, 16
      %v1299 = vrot.slane %v1297, 4
      %v1300 = vor.u32 %v1299, %v1295
      %v1301 = vrot.slane %v1300, 4
      %v1303 = vshll.u32 %v1111, 16
      %v1305 = vrot.slane %v1303, 5
      %v1306 = vsel %vm1114, %v1301, %v1305
      %1307 = vrot.lane.b32.xlu0 %v1128, 4
      %v1308 = vpop.permute.xlu0 %1307
      %1309 = vrot.lane.b32.xlu0 %v1138, 4
      %v1310 = vpop.permute.xlu0 %1309
      %1311 = vrot.lane.b32.xlu0 %v1152, 4
      %v1312 = vpop.permute.xlu0 %1311
      %1313 = vrot.lane.b32.xlu0 %v1162, 4
      %v1314 = vpop.permute.xlu0 %1313
      %1315 = vrot.lane.b32.xlu0 %v1176, 4
      %v1316 = vpop.permute.xlu0 %1315
      %1317 = vrot.lane.b32.xlu0 %v1186, 4
      %v1318 = vpop.permute.xlu0 %1317
      %1319 = vrot.lane.b32.xlu0 %v1200, 4
      %v1320 = vpop.permute.xlu0 %1319
      %1321 = vrot.lane.b32.xlu0 %v1210, 4
      %v1322 = vpop.permute.xlu0 %1321
      %1323 = vrot.lane.b32.xlu0 %v1224, 4
      %v1324 = vpop.permute.xlu0 %1323
      %1325 = vrot.lane.b32.xlu0 %v1234, 4
      %v1326 = vpop.permute.xlu0 %1325
      %1327 = vrot.lane.b32.xlu0 %v1248, 4
      %v1328 = vpop.permute.xlu0 %1327
      %1329 = vrot.lane.b32.xlu0 %v1258, 4
      %v1330 = vpop.permute.xlu0 %1329
      %1331 = vrot.lane.b32.xlu0 %v1272, 4
      %v1332 = vpop.permute.xlu0 %1331
      %1333 = vrot.lane.b32.xlu0 %v1282, 4
      %v1334 = vpop.permute.xlu0 %1333
      %1335 = vrot.lane.b32.xlu0 %v1296, 4
      %v1336 = vpop.permute.xlu0 %1335
      %1337 = vrot.lane.b32.xlu0 %v1306, 4
      %v1338 = vpop.permute.xlu0 %1337
      %vm1355 = vcmask 60448
      %1356 = vst.msk [vmem:[#allocation3] sm:$0xf] %vm1355, %v1308
      %1357 = vst.msk [vmem:[#allocation3 + $0x4] sm:$0xf] %vm1355, %v1310
      %1358 = vst.msk [vmem:[#allocation3 + $0x8] sm:$0xf] %vm1355, %v1312
      %1359 = vst.msk [vmem:[#allocation3 + $0xc] sm:$0xf] %vm1355, %v1314
      %1360 = vst.msk [vmem:[#allocation3 + $0x10] sm:$0xf] %vm1355, %v1316
      %1361 = vst.msk [vmem:[#allocation3 + $0x14] sm:$0xf] %vm1355, %v1318
      %1362 = vst.msk [vmem:[#allocation3 + $0x18] sm:$0xf] %vm1355, %v1320
      %1363 = vst.msk [vmem:[#allocation3 + $0x1c] sm:$0xf] %vm1355, %v1322
      %1364 = vst.msk [vmem:[#allocation3 + $0x20] sm:$0xf] %vm1355, %v1324
      %1365 = vst.msk [vmem:[#allocation3 + $0x24] sm:$0xf] %vm1355, %v1326
      %1366 = vst.msk [vmem:[#allocation3 + $0x28] sm:$0xf] %vm1355, %v1328
      %1367 = vst.msk [vmem:[#allocation3 + $0x2c] sm:$0xf] %vm1355, %v1330
      %1368 = vst.msk [vmem:[#allocation3 + $0x30] sm:$0xf] %vm1355, %v1332
      %1369 = vst.msk [vmem:[#allocation3 + $0x34] sm:$0xf] %vm1355, %v1334
      %1370 = vst.msk [vmem:[#allocation3 + $0x38] sm:$0xf] %vm1355, %v1336
      %1371 = vst.msk [vmem:[#allocation3 + $0x3c] sm:$0xf] %vm1355, %v1338
      %v1372 = vld [vmem:[#allocation2] sm:$0xe]
      %v1373 = vld [vmem:[#allocation2 + $0x4] sm:$0xf]
      %v1374 = vld [vmem:[#allocation2 + $0x8] sm:$0x1]
      %v1375 = vld [vmem:[#allocation2 + $0xc] sm:$0xe]
      %v1376 = vld [vmem:[#allocation2 + $0x10] sm:$0xf]
      %v1377 = vld [vmem:[#allocation2 + $0x14] sm:$0x1]
      %v1378 = vld [vmem:[#allocation2 + $0x18] sm:$0xe]
      %v1379 = vld [vmem:[#allocation2 + $0x1c] sm:$0xf]
      %v1380 = vld [vmem:[#allocation2 + $0x20] sm:$0x1]
      %v1381 = vld [vmem:[#allocation2 + $0x24] sm:$0xe]
      %v1382 = vld [vmem:[#allocation2 + $0x28] sm:$0xf]
      %v1383 = vld [vmem:[#allocation2 + $0x2c] sm:$0x1]
      %v1384 = vld [vmem:[#allocation2 + $0x30] sm:$0xe]
      %v1385 = vld [vmem:[#allocation2 + $0x34] sm:$0xf]
      %v1386 = vld [vmem:[#allocation2 + $0x38] sm:$0x1]
      %v1387 = vld [vmem:[#allocation2 + $0x3c] sm:$0xe]
      %v1388 = vld [vmem:[#allocation2 + $0x40] sm:$0xf]
      %v1389 = vld [vmem:[#allocation2 + $0x44] sm:$0x1]
      %v1390 = vld [vmem:[#allocation2 + $0x48] sm:$0xe]
      %v1391 = vld [vmem:[#allocation2 + $0x4c] sm:$0xf]
      %v1392 = vld [vmem:[#allocation2 + $0x50] sm:$0x1]
      %v1393 = vld [vmem:[#allocation2 + $0x54] sm:$0xe]
      %v1394 = vld [vmem:[#allocation2 + $0x58] sm:$0xf]
      %v1395 = vld [vmem:[#allocation2 + $0x5c] sm:$0x1]
      %vm1420 = vcmask 1042432
      %vm1421 = vcmask 1046532
      %vm1422 = vmor %vm1420, %vm1421
      %v1423 = vrot.slane %v1372, 5
      %v1424 = vrot.slane %v1423, 4
      %v1425 = vrot.slane %v1373, 5
      %v1426 = vsel %vm1422, %v1424, %v1425
      %v1427 = vrot.slane %v1425, 4
      %v1428 = vrot.slane %v1374, 5
      %v1429 = vsel %vm1422, %v1427, %v1428
      %v1430 = vrot.slane %v1375, 5
      %v1431 = vrot.slane %v1430, 4
      %v1432 = vrot.slane %v1376, 5
      %v1433 = vsel %vm1422, %v1431, %v1432
      %v1434 = vrot.slane %v1432, 4
      %v1435 = vrot.slane %v1377, 5
      %v1436 = vsel %vm1422, %v1434, %v1435
      %v1437 = vrot.slane %v1378, 5
      %v1438 = vrot.slane %v1437, 4
      %v1439 = vrot.slane %v1379, 5
      %v1440 = vsel %vm1422, %v1438, %v1439
      %v1441 = vrot.slane %v1439, 4
      %v1442 = vrot.slane %v1380, 5
      %v1443 = vsel %vm1422, %v1441, %v1442
      %v1444 = vrot.slane %v1381, 5
      %v1445 = vrot.slane %v1444, 4
      %v1446 = vrot.slane %v1382, 5
      %v1447 = vsel %vm1422, %v1445, %v1446
      %v1448 = vrot.slane %v1446, 4
      %v1449 = vrot.slane %v1383, 5
      %v1450 = vsel %vm1422, %v1448, %v1449
      %v1451 = vrot.slane %v1384, 5
      %v1452 = vrot.slane %v1451, 4
      %v1453 = vrot.slane %v1385, 5
      %v1454 = vsel %vm1422, %v1452, %v1453
      %v1455 = vrot.slane %v1453, 4
      %v1456 = vrot.slane %v1386, 5
      %v1457 = vsel %vm1422, %v1455, %v1456
      %v1458 = vrot.slane %v1387, 5
      %v1459 = vrot.slane %v1458, 4
      %v1460 = vrot.slane %v1388, 5
      %v1461 = vsel %vm1422, %v1459, %v1460
      %v1462 = vrot.slane %v1460, 4
      %v1463 = vrot.slane %v1389, 5
      %v1464 = vsel %vm1422, %v1462, %v1463
      %v1465 = vrot.slane %v1390, 5
      %v1466 = vrot.slane %v1465, 4
      %v1467 = vrot.slane %v1391, 5
      %v1468 = vsel %vm1422, %v1466, %v1467
      %v1469 = vrot.slane %v1467, 4
      %v1470 = vrot.slane %v1392, 5
      %v1471 = vsel %vm1422, %v1469, %v1470
      %v1472 = vrot.slane %v1393, 5
      %v1473 = vrot.slane %v1472, 4
      %v1474 = vrot.slane %v1394, 5
      %v1475 = vsel %vm1422, %v1473, %v1474
      %v1476 = vrot.slane %v1474, 4
      %v1477 = vrot.slane %v1395, 5
      %v1478 = vsel %vm1422, %v1476, %v1477
      %1479 = vrot.lane.b32.xlu0 %v1426, 8
      %v1480 = vpop.permute.xlu0 %1479
      %1481 = vrot.lane.b32.xlu0 %v1429, 8
      %v1482 = vpop.permute.xlu0 %1481
      %1483 = vrot.lane.b32.xlu0 %v1433, 8
      %v1484 = vpop.permute.xlu0 %1483
      %1485 = vrot.lane.b32.xlu0 %v1436, 8
      %v1486 = vpop.permute.xlu0 %1485
      %1487 = vrot.lane.b32.xlu0 %v1440, 8
      %v1488 = vpop.permute.xlu0 %1487
      %1489 = vrot.lane.b32.xlu0 %v1443, 8
      %v1490 = vpop.permute.xlu0 %1489
      %1491 = vrot.lane.b32.xlu0 %v1447, 8
      %v1492 = vpop.permute.xlu0 %1491
      %1493 = vrot.lane.b32.xlu0 %v1450, 8
      %v1494 = vpop.permute.xlu0 %1493
      %1495 = vrot.lane.b32.xlu0 %v1454, 8
      %v1496 = vpop.permute.xlu0 %1495
      %1497 = vrot.lane.b32.xlu0 %v1457, 8
      %v1498 = vpop.permute.xlu0 %1497
      %1499 = vrot.lane.b32.xlu0 %v1461, 8
      %v1500 = vpop.permute.xlu0 %1499
      %1501 = vrot.lane.b32.xlu0 %v1464, 8
      %v1502 = vpop.permute.xlu0 %1501
      %1503 = vrot.lane.b32.xlu0 %v1468, 8
      %v1504 = vpop.permute.xlu0 %1503
      %1505 = vrot.lane.b32.xlu0 %v1471, 8
      %v1506 = vpop.permute.xlu0 %1505
      %1507 = vrot.lane.b32.xlu0 %v1475, 8
      %v1508 = vpop.permute.xlu0 %1507
      %1509 = vrot.lane.b32.xlu0 %v1478, 8
      %v1510 = vpop.permute.xlu0 %1509
      %vm1527 = vcmask 93248
      %1528 = vst.msk [vmem:[#allocation3] sm:$0xf] %vm1527, %v1480
      %1529 = vst.msk [vmem:[#allocation3 + $0x4] sm:$0xf] %vm1527, %v1482
      %1530 = vst.msk [vmem:[#allocation3 + $0x8] sm:$0xf] %vm1527, %v1484
      %1531 = vst.msk [vmem:[#allocation3 + $0xc] sm:$0xf] %vm1527, %v1486
      %1532 = vst.msk [vmem:[#allocation3 + $0x10] sm:$0xf] %vm1527, %v1488
      %1533 = vst.msk [vmem:[#allocation3 + $0x14] sm:$0xf] %vm1527, %v1490
      %1534 = vst.msk [vmem:[#allocation3 + $0x18] sm:$0xf] %vm1527, %v1492
      %1535 = vst.msk [vmem:[#allocation3 + $0x1c] sm:$0xf] %vm1527, %v1494
      %1536 = vst.msk [vmem:[#allocation3 + $0x20] sm:$0xf] %vm1527, %v1496
      %1537 = vst.msk [vmem:[#allocation3 + $0x24] sm:$0xf] %vm1527, %v1498
      %1538 = vst.msk [vmem:[#allocation3 + $0x28] sm:$0xf] %vm1527, %v1500
      %1539 = vst.msk [vmem:[#allocation3 + $0x2c] sm:$0xf] %vm1527, %v1502
      %1540 = vst.msk [vmem:[#allocation3 + $0x30] sm:$0xf] %vm1527, %v1504
      %1541 = vst.msk [vmem:[#allocation3 + $0x34] sm:$0xf] %vm1527, %v1506
      %1542 = vst.msk [vmem:[#allocation3 + $0x38] sm:$0xf] %vm1527, %v1508
      %1543 = vst.msk [vmem:[#allocation3 + $0x3c] sm:$0xf] %vm1527, %v1510
      %v1544 = vld [vmem:[%s399] sm:$0xf]
      %v1545 = vld [vmem:[%s399 + $0x4] sm:$0xf]
      %v1546 = vld [vmem:[%s399 + $0xc] sm:$0xf]
      %v1547 = vld [vmem:[%s399 + $0x10] sm:$0xf]
      %v1548 = vld [vmem:[%s399 + $0x18] sm:$0xf]
      %v1549 = vld [vmem:[%s399 + $0x1c] sm:$0xf]
      %v1550 = vld [vmem:[%s399 + $0x24] sm:$0xf]
      %v1551 = vld [vmem:[%s399 + $0x28] sm:$0xf]
      %v1552 = vld [vmem:[%s399 + $0x30] sm:$0xf]
      %v1553 = vld [vmem:[%s399 + $0x34] sm:$0xf]
      %v1554 = vld [vmem:[%s399 + $0x3c] sm:$0xf]
      %v1555 = vld [vmem:[%s399 + $0x40] sm:$0xf]
      %v1556 = vld [vmem:[%s399 + $0x48] sm:$0xf]
      %v1557 = vld [vmem:[%s399 + $0x4c] sm:$0xf]
      %v1558 = vld [vmem:[%s399 + $0x54] sm:$0xf]
      %v1559 = vld [vmem:[%s399 + $0x58] sm:$0xf]
      %1576 = vrot.lane.b32.xlu0 %v1544, 12
      %v1577 = vpop.permute.xlu0 %1576
      %1578 = vrot.lane.b32.xlu0 %v1545, 12
      %v1579 = vpop.permute.xlu0 %1578
      %1580 = vrot.lane.b32.xlu0 %v1546, 12
      %v1581 = vpop.permute.xlu0 %1580
      %1582 = vrot.lane.b32.xlu0 %v1547, 12
      %v1583 = vpop.permute.xlu0 %1582
      %1584 = vrot.lane.b32.xlu0 %v1548, 12
      %v1585 = vpop.permute.xlu0 %1584
      %1586 = vrot.lane.b32.xlu0 %v1549, 12
      %v1587 = vpop.permute.xlu0 %1586
      %1588 = vrot.lane.b32.xlu0 %v1550, 12
      %v1589 = vpop.permute.xlu0 %1588
      %1590 = vrot.lane.b32.xlu0 %v1551, 12
      %v1591 = vpop.permute.xlu0 %1590
      %1592 = vrot.lane.b32.xlu0 %v1552, 12
      %v1593 = vpop.permute.xlu0 %1592
      %1594 = vrot.lane.b32.xlu0 %v1553, 12
      %v1595 = vpop.permute.xlu0 %1594
      %1596 = vrot.lane.b32.xlu0 %v1554, 12
      %v1597 = vpop.permute.xlu0 %1596
      %1598 = vrot.lane.b32.xlu0 %v1555, 12
      %v1599 = vpop.permute.xlu0 %1598
      %1600 = vrot.lane.b32.xlu0 %v1556, 12
      %v1601 = vpop.permute.xlu0 %1600
      %1602 = vrot.lane.b32.xlu0 %v1557, 12
      %v1603 = vpop.permute.xlu0 %1602
      %1604 = vrot.lane.b32.xlu0 %v1558, 12
      %v1605 = vpop.permute.xlu0 %1604
      %1606 = vrot.lane.b32.xlu0 %v1559, 12
      %v1607 = vpop.permute.xlu0 %1606
      %vm1624 = vcmask 126048
      %1625 = vst.msk [vmem:[#allocation3] sm:$0xf] %vm1624, %v1577
      %1626 = vst.msk [vmem:[#allocation3 + $0x4] sm:$0xf] %vm1624, %v1579
      %1627 = vst.msk [vmem:[#allocation3 + $0x8] sm:$0xf] %vm1624, %v1581
      %1628 = vst.msk [vmem:[#allocation3 + $0xc] sm:$0xf] %vm1624, %v1583
      %1629 = vst.msk [vmem:[#allocation3 + $0x10] sm:$0xf] %vm1624, %v1585
      %1630 = vst.msk [vmem:[#allocation3 + $0x14] sm:$0xf] %vm1624, %v1587
      %1631 = vst.msk [vmem:[#allocation3 + $0x18] sm:$0xf] %vm1624, %v1589
      %1632 = vst.msk [vmem:[#allocation3 + $0x1c] sm:$0xf] %vm1624, %v1591
      %1633 = vst.msk [vmem:[#allocation3 + $0x20] sm:$0xf] %vm1624, %v1593
      %1634 = vst.msk [vmem:[#allocation3 + $0x24] sm:$0xf] %vm1624, %v1595
      %1635 = vst.msk [vmem:[#allocation3 + $0x28] sm:$0xf] %vm1624, %v1597
      %1636 = vst.msk [vmem:[#allocation3 + $0x2c] sm:$0xf] %vm1624, %v1599
      %1637 = vst.msk [vmem:[#allocation3 + $0x30] sm:$0xf] %vm1624, %v1601
      %1638 = vst.msk [vmem:[#allocation3 + $0x34] sm:$0xf] %vm1624, %v1603
      %1639 = vst.msk [vmem:[#allocation3 + $0x38] sm:$0xf] %vm1624, %v1605
      %1640 = vst.msk [vmem:[#allocation3 + $0x3c] sm:$0xf] %vm1624, %v1607
      %v1641 = vld [vmem:[%s399] sm:$0xf]
      %v1642 = vld [vmem:[%s399 + $0x4] sm:$0xf]
      %v1643 = vld [vmem:[%s399 + $0x8] sm:$0x1]
      %v1644 = vld [vmem:[%s399 + $0xc] sm:$0xf]
      %v1645 = vld [vmem:[%s399 + $0x10] sm:$0xf]
      %v1646 = vld [vmem:[%s399 + $0x14] sm:$0x1]
      %v1647 = vld [vmem:[%s399 + $0x18] sm:$0xf]
      %v1648 = vld [vmem:[%s399 + $0x1c] sm:$0xf]
      %v1649 = vld [vmem:[%s399 + $0x20] sm:$0x1]
      %v1650 = vld [vmem:[%s399 + $0x24] sm:$0xf]
      %v1651 = vld [vmem:[%s399 + $0x28] sm:$0xf]
      %v1652 = vld [vmem:[%s399 + $0x2c] sm:$0x1]
      %v1653 = vld [vmem:[%s399 + $0x30] sm:$0xf]
      %v1654 = vld [vmem:[%s399 + $0x34] sm:$0xf]
      %v1655 = vld [vmem:[%s399 + $0x38] sm:$0x1]
      %v1656 = vld [vmem:[%s399 + $0x3c] sm:$0xf]
      %v1657 = vld [vmem:[%s399 + $0x40] sm:$0xf]
      %v1658 = vld [vmem:[%s399 + $0x44] sm:$0x1]
      %v1659 = vld [vmem:[%s399 + $0x48] sm:$0xf]
      %v1660 = vld [vmem:[%s399 + $0x4c] sm:$0xf]
      %v1661 = vld [vmem:[%s399 + $0x50] sm:$0x1]
      %v1662 = vld [vmem:[%s399 + $0x54] sm:$0xf]
      %v1663 = vld [vmem:[%s399 + $0x58] sm:$0xf]
      %v1664 = vld [vmem:[%s399 + $0x5c] sm:$0x1]
      %v1666 = vshrl.u32 %v1641, 16
      %v1668 = vrot.slane %v1666, 4
      %v1669 = vshll.u32 %v1641, 16
      %v1671 = vrot.slane %v1669, 5
      %v1672 = vor.u32 %v1668, %v1671
      %v1673 = vrot.slane %v1672, 4
      %v1675 = vshll.u32 %v1642, 16
      %v1677 = vrot.slane %v1675, 5
      %v1678 = vsel %vm1114, %v1673, %v1677
      %v1679 = vshrl.u32 %v1642, 16
      %v1681 = vrot.slane %v1679, 4
      %v1682 = vor.u32 %v1681, %v1677
      %v1683 = vrot.slane %v1682, 4
      %v1685 = vshll.u32 %v1643, 16
      %v1687 = vrot.slane %v1685, 5
      %v1688 = vsel %vm1114, %v1683, %v1687
      %v1690 = vshrl.u32 %v1644, 16
      %v1692 = vrot.slane %v1690, 4
      %v1693 = vshll.u32 %v1644, 16
      %v1695 = vrot.slane %v1693, 5
      %v1696 = vor.u32 %v1692, %v1695
      %v1697 = vrot.slane %v1696, 4
      %v1699 = vshll.u32 %v1645, 16
      %v1701 = vrot.slane %v1699, 5
      %v1702 = vsel %vm1114, %v1697, %v1701
      %v1703 = vshrl.u32 %v1645, 16
      %v1705 = vrot.slane %v1703, 4
      %v1706 = vor.u32 %v1705, %v1701
      %v1707 = vrot.slane %v1706, 4
      %v1709 = vshll.u32 %v1646, 16
      %v1711 = vrot.slane %v1709, 5
      %v1712 = vsel %vm1114, %v1707, %v1711
      %v1714 = vshrl.u32 %v1647, 16
      %v1716 = vrot.slane %v1714, 4
      %v1717 = vshll.u32 %v1647, 16
      %v1719 = vrot.slane %v1717, 5
      %v1720 = vor.u32 %v1716, %v1719
      %v1721 = vrot.slane %v1720, 4
      %v1723 = vshll.u32 %v1648, 16
      %v1725 = vrot.slane %v1723, 5
      %v1726 = vsel %vm1114, %v1721, %v1725
      %v1727 = vshrl.u32 %v1648, 16
      %v1729 = vrot.slane %v1727, 4
      %v1730 = vor.u32 %v1729, %v1725
      %v1731 = vrot.slane %v1730, 4
      %v1733 = vshll.u32 %v1649, 16
      %v1735 = vrot.slane %v1733, 5
      %v1736 = vsel %vm1114, %v1731, %v1735
      %v1738 = vshrl.u32 %v1650, 16
      %v1740 = vrot.slane %v1738, 4
      %v1741 = vshll.u32 %v1650, 16
      %v1743 = vrot.slane %v1741, 5
      %v1744 = vor.u32 %v1740, %v1743
      %v1745 = vrot.slane %v1744, 4
      %v1747 = vshll.u32 %v1651, 16
      %v1749 = vrot.slane %v1747, 5
      %v1750 = vsel %vm1114, %v1745, %v1749
      %v1751 = vshrl.u32 %v1651, 16
      %v1753 = vrot.slane %v1751, 4
      %v1754 = vor.u32 %v1753, %v1749
      %v1755 = vrot.slane %v1754, 4
      %v1757 = vshll.u32 %v1652, 16
      %v1759 = vrot.slane %v1757, 5
      %v1760 = vsel %vm1114, %v1755, %v1759
      %v1762 = vshrl.u32 %v1653, 16
      %v1764 = vrot.slane %v1762, 4
      %v1765 = vshll.u32 %v1653, 16
      %v1767 = vrot.slane %v1765, 5
      %v1768 = vor.u32 %v1764, %v1767
      %v1769 = vrot.slane %v1768, 4
      %v1771 = vshll.u32 %v1654, 16
      %v1773 = vrot.slane %v1771, 5
      %v1774 = vsel %vm1114, %v1769, %v1773
      %v1775 = vshrl.u32 %v1654, 16
      %v1777 = vrot.slane %v1775, 4
      %v1778 = vor.u32 %v1777, %v1773
      %v1779 = vrot.slane %v1778, 4
      %v1781 = vshll.u32 %v1655, 16
      %v1783 = vrot.slane %v1781, 5
      %v1784 = vsel %vm1114, %v1779, %v1783
      %v1786 = vshrl.u32 %v1656, 16
      %v1788 = vrot.slane %v1786, 4
      %v1789 = vshll.u32 %v1656, 16
      %v1791 = vrot.slane %v1789, 5
      %v1792 = vor.u32 %v1788, %v1791
      %v1793 = vrot.slane %v1792, 4
      %v1795 = vshll.u32 %v1657, 16
      %v1797 = vrot.slane %v1795, 5
      %v1798 = vsel %vm1114, %v1793, %v1797
      %v1799 = vshrl.u32 %v1657, 16
      %v1801 = vrot.slane %v1799, 4
      %v1802 = vor.u32 %v1801, %v1797
      %v1803 = vrot.slane %v1802, 4
      %v1805 = vshll.u32 %v1658, 16
      %v1807 = vrot.slane %v1805, 5
      %v1808 = vsel %vm1114, %v1803, %v1807
      %v1810 = vshrl.u32 %v1659, 16
      %v1812 = vrot.slane %v1810, 4
      %v1813 = vshll.u32 %v1659, 16
      %v1815 = vrot.slane %v1813, 5
      %v1816 = vor.u32 %v1812, %v1815
      %v1817 = vrot.slane %v1816, 4
      %v1819 = vshll.u32 %v1660, 16
      %v1821 = vrot.slane %v1819, 5
      %v1822 = vsel %vm1114, %v1817, %v1821
      %v1823 = vshrl.u32 %v1660, 16
      %v1825 = vrot.slane %v1823, 4
      %v1826 = vor.u32 %v1825, %v1821
      %v1827 = vrot.slane %v1826, 4
      %v1829 = vshll.u32 %v1661, 16
      %v1831 = vrot.slane %v1829, 5
      %v1832 = vsel %vm1114, %v1827, %v1831
      %v1834 = vshrl.u32 %v1662, 16
      %v1836 = vrot.slane %v1834, 4
      %v1837 = vshll.u32 %v1662, 16
      %v1839 = vrot.slane %v1837, 5
      %v1840 = vor.u32 %v1836, %v1839
      %v1841 = vrot.slane %v1840, 4
      %v1843 = vshll.u32 %v1663, 16
      %v1845 = vrot.slane %v1843, 5
      %v1846 = vsel %vm1114, %v1841, %v1845
      %v1847 = vshrl.u32 %v1663, 16
      %v1849 = vrot.slane %v1847, 4
      %v1850 = vor.u32 %v1849, %v1845
      %v1851 = vrot.slane %v1850, 4
      %v1853 = vshll.u32 %v1664, 16
      %v1855 = vrot.slane %v1853, 5
      %v1856 = vsel %vm1114, %v1851, %v1855
      %1857 = vrot.lane.b32.xlu0 %v1678, 16
      %v1858 = vpop.permute.xlu0 %1857
      %1859 = vrot.lane.b32.xlu0 %v1688, 16
      %v1860 = vpop.permute.xlu0 %1859
      %1861 = vrot.lane.b32.xlu0 %v1702, 16
      %v1862 = vpop.permute.xlu0 %1861
      %1863 = vrot.lane.b32.xlu0 %v1712, 16
      %v1864 = vpop.permute.xlu0 %1863
      %1865 = vrot.lane.b32.xlu0 %v1726, 16
      %v1866 = vpop.permute.xlu0 %1865
      %1867 = vrot.lane.b32.xlu0 %v1736, 16
      %v1868 = vpop.permute.xlu0 %1867
      %1869 = vrot.lane.b32.xlu0 %v1750, 16
      %v1870 = vpop.permute.xlu0 %1869
      %1871 = vrot.lane.b32.xlu0 %v1760, 16
      %v1872 = vpop.permute.xlu0 %1871
      %1873 = vrot.lane.b32.xlu0 %v1774, 16
      %v1874 = vpop.permute.xlu0 %1873
      %1875 = vrot.lane.b32.xlu0 %v1784, 16
      %v1876 = vpop.permute.xlu0 %1875
      %1877 = vrot.lane.b32.xlu0 %v1798, 16
      %v1878 = vpop.permute.xlu0 %1877
      %1879 = vrot.lane.b32.xlu0 %v1808, 16
      %v1880 = vpop.permute.xlu0 %1879
      %1881 = vrot.lane.b32.xlu0 %v1822, 16
      %v1882 = vpop.permute.xlu0 %1881
      %1883 = vrot.lane.b32.xlu0 %v1832, 16
      %v1884 = vpop.permute.xlu0 %1883
      %1885 = vrot.lane.b32.xlu0 %v1846, 16
      %v1886 = vpop.permute.xlu0 %1885
      %1887 = vrot.lane.b32.xlu0 %v1856, 16
      %v1888 = vpop.permute.xlu0 %1887
      %vm1905 = vcmask 158848
      %1906 = vst.msk [vmem:[#allocation3] sm:$0xf] %vm1905, %v1858
      %1907 = vst.msk [vmem:[#allocation3 + $0x4] sm:$0xf] %vm1905, %v1860
      %1908 = vst.msk [vmem:[#allocation3 + $0x8] sm:$0xf] %vm1905, %v1862
      %1909 = vst.msk [vmem:[#allocation3 + $0xc] sm:$0xf] %vm1905, %v1864
      %1910 = vst.msk [vmem:[#allocation3 + $0x10] sm:$0xf] %vm1905, %v1866
      %1911 = vst.msk [vmem:[#allocation3 + $0x14] sm:$0xf] %vm1905, %v1868
      %1912 = vst.msk [vmem:[#allocation3 + $0x18] sm:$0xf] %vm1905, %v1870
      %1913 = vst.msk [vmem:[#allocation3 + $0x1c] sm:$0xf] %vm1905, %v1872
      %1914 = vst.msk [vmem:[#allocation3 + $0x20] sm:$0xf] %vm1905, %v1874
      %1915 = vst.msk [vmem:[#allocation3 + $0x24] sm:$0xf] %vm1905, %v1876
      %1916 = vst.msk [vmem:[#allocation3 + $0x28] sm:$0xf] %vm1905, %v1878
      %1917 = vst.msk [vmem:[#allocation3 + $0x2c] sm:$0xf] %vm1905, %v1880
      %1918 = vst.msk [vmem:[#allocation3 + $0x30] sm:$0xf] %vm1905, %v1882
      %1919 = vst.msk [vmem:[#allocation3 + $0x34] sm:$0xf] %vm1905, %v1884
      %1920 = vst.msk [vmem:[#allocation3 + $0x38] sm:$0xf] %vm1905, %v1886
      %1921 = vst.msk [vmem:[#allocation3 + $0x3c] sm:$0xf] %vm1905, %v1888
      %v1922 = vld [vmem:[%s399] sm:$0xe]
      %v1923 = vld [vmem:[%s399 + $0x4] sm:$0xf]
      %v1924 = vld [vmem:[%s399 + $0x8] sm:$0x1]
      %v1925 = vld [vmem:[%s399 + $0xc] sm:$0xe]
      %v1926 = vld [vmem:[%s399 + $0x10] sm:$0xf]
      %v1927 = vld [vmem:[%s399 + $0x14] sm:$0x1]
      %v1928 = vld [vmem:[%s399 + $0x18] sm:$0xe]
      %v1929 = vld [vmem:[%s399 + $0x1c] sm:$0xf]
      %v1930 = vld [vmem:[%s399 + $0x20] sm:$0x1]
      %v1931 = vld [vmem:[%s399 + $0x24] sm:$0xe]
      %v1932 = vld [vmem:[%s399 + $0x28] sm:$0xf]
      %v1933 = vld [vmem:[%s399 + $0x2c] sm:$0x1]
      %v1934 = vld [vmem:[%s399 + $0x30] sm:$0xe]
      %v1935 = vld [vmem:[%s399 + $0x34] sm:$0xf]
      %v1936 = vld [vmem:[%s399 + $0x38] sm:$0x1]
      %v1937 = vld [vmem:[%s399 + $0x3c] sm:$0xe]
      %v1938 = vld [vmem:[%s399 + $0x40] sm:$0xf]
      %v1939 = vld [vmem:[%s399 + $0x44] sm:$0x1]
      %v1940 = vld [vmem:[%s399 + $0x48] sm:$0xe]
      %v1941 = vld [vmem:[%s399 + $0x4c] sm:$0xf]
      %v1942 = vld [vmem:[%s399 + $0x50] sm:$0x1]
      %v1943 = vld [vmem:[%s399 + $0x54] sm:$0xe]
      %v1944 = vld [vmem:[%s399 + $0x58] sm:$0xf]
      %v1945 = vld [vmem:[%s399 + $0x5c] sm:$0x1]
      %v1970 = vrot.slane %v1922, 5
      %v1971 = vrot.slane %v1970, 4
      %v1972 = vrot.slane %v1923, 5
      %v1973 = vsel %vm1422, %v1971, %v1972
      %v1974 = vrot.slane %v1972, 4
      %v1975 = vrot.slane %v1924, 5
      %v1976 = vsel %vm1422, %v1974, %v1975
      %v1977 = vrot.slane %v1925, 5
      %v1978 = vrot.slane %v1977, 4
      %v1979 = vrot.slane %v1926, 5
      %v1980 = vsel %vm1422, %v1978, %v1979
      %v1981 = vrot.slane %v1979, 4
      %v1982 = vrot.slane %v1927, 5
      %v1983 = vsel %vm1422, %v1981, %v1982
      %v1984 = vrot.slane %v1928, 5
      %v1985 = vrot.slane %v1984, 4
      %v1986 = vrot.slane %v1929, 5
      %v1987 = vsel %vm1422, %v1985, %v1986
      %v1988 = vrot.slane %v1986, 4
      %v1989 = vrot.slane %v1930, 5
      %v1990 = vsel %vm1422, %v1988, %v1989
      %v1991 = vrot.slane %v1931, 5
      %v1992 = vrot.slane %v1991, 4
      %v1993 = vrot.slane %v1932, 5
      %v1994 = vsel %vm1422, %v1992, %v1993
      %v1995 = vrot.slane %v1993, 4
      %v1996 = vrot.slane %v1933, 5
      %v1997 = vsel %vm1422, %v1995, %v1996
      %v1998 = vrot.slane %v1934, 5
      %v1999 = vrot.slane %v1998, 4
      %v2000 = vrot.slane %v1935, 5
      %v2001 = vsel %vm1422, %v1999, %v2000
      %v2002 = vrot.slane %v2000, 4
      %v2003 = vrot.slane %v1936, 5
      %v2004 = vsel %vm1422, %v2002, %v2003
      %v2005 = vrot.slane %v1937, 5
      %v2006 = vrot.slane %v2005, 4
      %v2007 = vrot.slane %v1938, 5
      %v2008 = vsel %vm1422, %v2006, %v2007
      %v2009 = vrot.slane %v2007, 4
      %v2010 = vrot.slane %v1939, 5
      %v2011 = vsel %vm1422, %v2009, %v2010
      %v2012 = vrot.slane %v1940, 5
      %v2013 = vrot.slane %v2012, 4
      %v2014 = vrot.slane %v1941, 5
      %v2015 = vsel %vm1422, %v2013, %v2014
      %v2016 = vrot.slane %v2014, 4
      %v2017 = vrot.slane %v1942, 5
      %v2018 = vsel %vm1422, %v2016, %v2017
      %v2019 = vrot.slane %v1943, 5
      %v2020 = vrot.slane %v2019, 4
      %v2021 = vrot.slane %v1944, 5
      %v2022 = vsel %vm1422, %v2020, %v2021
      %v2023 = vrot.slane %v2021, 4
      %v2024 = vrot.slane %v1945, 5
      %v2025 = vsel %vm1422, %v2023, %v2024
      %2026 = vrot.lane.b32.xlu0 %v1973, 20
      %v2027 = vpop.permute.xlu0 %2026
      %2028 = vrot.lane.b32.xlu0 %v1976, 20
      %v2029 = vpop.permute.xlu0 %2028
      %2030 = vrot.lane.b32.xlu0 %v1980, 20
      %v2031 = vpop.permute.xlu0 %2030
      %2032 = vrot.lane.b32.xlu0 %v1983, 20
      %v2033 = vpop.permute.xlu0 %2032
      %2034 = vrot.lane.b32.xlu0 %v1987, 20
      %v2035 = vpop.permute.xlu0 %2034
      %2036 = vrot.lane.b32.xlu0 %v1990, 20
      %v2037 = vpop.permute.xlu0 %2036
      %2038 = vrot.lane.b32.xlu0 %v1994, 20
      %v2039 = vpop.permute.xlu0 %2038
      %2040 = vrot.lane.b32.xlu0 %v1997, 20
      %v2041 = vpop.permute.xlu0 %2040
      %2042 = vrot.lane.b32.xlu0 %v2001, 20
      %v2043 = vpop.permute.xlu0 %2042
      %2044 = vrot.lane.b32.xlu0 %v2004, 20
      %v2045 = vpop.permute.xlu0 %2044
      %2046 = vrot.lane.b32.xlu0 %v2008, 20
      %v2047 = vpop.permute.xlu0 %2046
      %2048 = vrot.lane.b32.xlu0 %v2011, 20
      %v2049 = vpop.permute.xlu0 %2048
      %2050 = vrot.lane.b32.xlu0 %v2015, 20
      %v2051 = vpop.permute.xlu0 %2050
      %2052 = vrot.lane.b32.xlu0 %v2018, 20
      %v2053 = vpop.permute.xlu0 %2052
      %2054 = vrot.lane.b32.xlu0 %v2022, 20
      %v2055 = vpop.permute.xlu0 %2054
      %2056 = vrot.lane.b32.xlu0 %v2025, 20
      %v2057 = vpop.permute.xlu0 %2056
      %vm2074 = vcmask 191648
      %2075 = vst.msk [vmem:[#allocation3] sm:$0xf] %vm2074, %v2027
      %2076 = vst.msk [vmem:[#allocation3 + $0x4] sm:$0xf] %vm2074, %v2029
      %2077 = vst.msk [vmem:[#allocation3 + $0x8] sm:$0xf] %vm2074, %v2031
      %2078 = vst.msk [vmem:[#allocation3 + $0xc] sm:$0xf] %vm2074, %v2033
      %2079 = vst.msk [vmem:[#allocation3 + $0x10] sm:$0xf] %vm2074, %v2035
      %2080 = vst.msk [vmem:[#allocation3 + $0x14] sm:$0xf] %vm2074, %v2037
      %2081 = vst.msk [vmem:[#allocation3 + $0x18] sm:$0xf] %vm2074, %v2039
      %2082 = vst.msk [vmem:[#allocation3 + $0x1c] sm:$0xf] %vm2074, %v2041
      %2083 = vst.msk [vmem:[#allocation3 + $0x20] sm:$0xf] %vm2074, %v2043
      %2084 = vst.msk [vmem:[#allocation3 + $0x24] sm:$0xf] %vm2074, %v2045
      %2085 = vst.msk [vmem:[#allocation3 + $0x28] sm:$0xf] %vm2074, %v2047
      %2086 = vst.msk [vmem:[#allocation3 + $0x2c] sm:$0xf] %vm2074, %v2049
      %2087 = vst.msk [vmem:[#allocation3 + $0x30] sm:$0xf] %vm2074, %v2051
      %2088 = vst.msk [vmem:[#allocation3 + $0x34] sm:$0xf] %vm2074, %v2053
      %2089 = vst.msk [vmem:[#allocation3 + $0x38] sm:$0xf] %vm2074, %v2055
      %2090 = vst.msk [vmem:[#allocation3 + $0x3c] sm:$0xf] %vm2074, %v2057
      %v2091 = vld [vmem:[%s744] sm:$0xf]
      %v2092 = vld [vmem:[%s744 + $0x4] sm:$0xf]
      %v2093 = vld [vmem:[%s744 + $0xc] sm:$0xf]
      %v2094 = vld [vmem:[%s744 + $0x10] sm:$0xf]
      %v2095 = vld [vmem:[%s744 + $0x18] sm:$0xf]
      %v2096 = vld [vmem:[%s744 + $0x1c] sm:$0xf]
      %v2097 = vld [vmem:[%s744 + $0x24] sm:$0xf]
      %v2098 = vld [vmem:[%s744 + $0x28] sm:$0xf]
      %v2099 = vld [vmem:[%s744 + $0x30] sm:$0xf]
      %v2100 = vld [vmem:[%s744 + $0x34] sm:$0xf]
      %v2101 = vld [vmem:[%s744 + $0x3c] sm:$0xf]
      %v2102 = vld [vmem:[%s744 + $0x40] sm:$0xf]
      %v2103 = vld [vmem:[%s744 + $0x48] sm:$0xf]
      %v2104 = vld [vmem:[%s744 + $0x4c] sm:$0xf]
      %v2105 = vld [vmem:[%s744 + $0x54] sm:$0xf]
      %v2106 = vld [vmem:[%s744 + $0x58] sm:$0xf]
      %2123 = vrot.lane.b32.xlu0 %v2091, 24
      %v2124 = vpop.permute.xlu0 %2123
      %2125 = vrot.lane.b32.xlu0 %v2092, 24
      %v2126 = vpop.permute.xlu0 %2125
      %2127 = vrot.lane.b32.xlu0 %v2093, 24
      %v2128 = vpop.permute.xlu0 %2127
      %2129 = vrot.lane.b32.xlu0 %v2094, 24
      %v2130 = vpop.permute.xlu0 %2129
      %2131 = vrot.lane.b32.xlu0 %v2095, 24
      %v2132 = vpop.permute.xlu0 %2131
      %2133 = vrot.lane.b32.xlu0 %v2096, 24
      %v2134 = vpop.permute.xlu0 %2133
      %2135 = vrot.lane.b32.xlu0 %v2097, 24
      %v2136 = vpop.permute.xlu0 %2135
      %2137 = vrot.lane.b32.xlu0 %v2098, 24
      %v2138 = vpop.permute.xlu0 %2137
      %2139 = vrot.lane.b32.xlu0 %v2099, 24
      %v2140 = vpop.permute.xlu0 %2139
      %2141 = vrot.lane.b32.xlu0 %v2100, 24
      %v2142 = vpop.permute.xlu0 %2141
      %2143 = vrot.lane.b32.xlu0 %v2101, 24
      %v2144 = vpop.permute.xlu0 %2143
      %2145 = vrot.lane.b32.xlu0 %v2102, 24
      %v2146 = vpop.permute.xlu0 %2145
      %2147 = vrot.lane.b32.xlu0 %v2103, 24
      %v2148 = vpop.permute.xlu0 %2147
      %2149 = vrot.lane.b32.xlu0 %v2104, 24
      %v2150 = vpop.permute.xlu0 %2149
      %2151 = vrot.lane.b32.xlu0 %v2105, 24
      %v2152 = vpop.permute.xlu0 %2151
      %2153 = vrot.lane.b32.xlu0 %v2106, 24
      %v2154 = vpop.permute.xlu0 %2153
      %vm2171 = vcmask 224448
      %2172 = vst.msk [vmem:[#allocation3] sm:$0xf] %vm2171, %v2124
      %2173 = vst.msk [vmem:[#allocation3 + $0x4] sm:$0xf] %vm2171, %v2126
      %2174 = vst.msk [vmem:[#allocation3 + $0x8] sm:$0xf] %vm2171, %v2128
      %2175 = vst.msk [vmem:[#allocation3 + $0xc] sm:$0xf] %vm2171, %v2130
      %2176 = vst.msk [vmem:[#allocation3 + $0x10] sm:$0xf] %vm2171, %v2132
      %2177 = vst.msk [vmem:[#allocation3 + $0x14] sm:$0xf] %vm2171, %v2134
      %2178 = vst.msk [vmem:[#allocation3 + $0x18] sm:$0xf] %vm2171, %v2136
      %2179 = vst.msk [vmem:[#allocation3 + $0x1c] sm:$0xf] %vm2171, %v2138
      %2180 = vst.msk [vmem:[#allocation3 + $0x20] sm:$0xf] %vm2171, %v2140
      %2181 = vst.msk [vmem:[#allocation3 + $0x24] sm:$0xf] %vm2171, %v2142
      %2182 = vst.msk [vmem:[#allocation3 + $0x28] sm:$0xf] %vm2171, %v2144
      %2183 = vst.msk [vmem:[#allocation3 + $0x2c] sm:$0xf] %vm2171, %v2146
      %2184 = vst.msk [vmem:[#allocation3 + $0x30] sm:$0xf] %vm2171, %v2148
      %2185 = vst.msk [vmem:[#allocation3 + $0x34] sm:$0xf] %vm2171, %v2150
      %2186 = vst.msk [vmem:[#allocation3 + $0x38] sm:$0xf] %vm2171, %v2152
      %2187 = vst.msk [vmem:[#allocation3 + $0x3c] sm:$0xf] %vm2171, %v2154
      %v2188 = vld [vmem:[%s744] sm:$0xf]
      %v2189 = vld [vmem:[%s744 + $0x4] sm:$0xf]
      %v2190 = vld [vmem:[%s744 + $0x8] sm:$0x1]
      %v2191 = vld [vmem:[%s744 + $0xc] sm:$0xf]
      %v2192 = vld [vmem:[%s744 + $0x10] sm:$0xf]
      %v2193 = vld [vmem:[%s744 + $0x14] sm:$0x1]
      %v2194 = vld [vmem:[%s744 + $0x18] sm:$0xf]
      %v2195 = vld [vmem:[%s744 + $0x1c] sm:$0xf]
      %v2196 = vld [vmem:[%s744 + $0x20] sm:$0x1]
      %v2197 = vld [vmem:[%s744 + $0x24] sm:$0xf]
      %v2198 = vld [vmem:[%s744 + $0x28] sm:$0xf]
      %v2199 = vld [vmem:[%s744 + $0x2c] sm:$0x1]
      %v2200 = vld [vmem:[%s744 + $0x30] sm:$0xf]
      %v2201 = vld [vmem:[%s744 + $0x34] sm:$0xf]
      %v2202 = vld [vmem:[%s744 + $0x38] sm:$0x1]
      %v2203 = vld [vmem:[%s744 + $0x3c] sm:$0xf]
      %v2204 = vld [vmem:[%s744 + $0x40] sm:$0xf]
      %v2205 = vld [vmem:[%s744 + $0x44] sm:$0x1]
      %v2206 = vld [vmem:[%s744 + $0x48] sm:$0xf]
      %v2207 = vld [vmem:[%s744 + $0x4c] sm:$0xf]
      %v2208 = vld [vmem:[%s744 + $0x50] sm:$0x1]
      %v2209 = vld [vmem:[%s744 + $0x54] sm:$0xf]
      %v2210 = vld [vmem:[%s744 + $0x58] sm:$0xf]
      %v2211 = vld [vmem:[%s744 + $0x5c] sm:$0x1]
      %v2213 = vshrl.u32 %v2188, 16
      %v2215 = vrot.slane %v2213, 4
      %v2216 = vshll.u32 %v2188, 16
      %v2218 = vrot.slane %v2216, 5
      %v2219 = vor.u32 %v2215, %v2218
      %v2220 = vrot.slane %v2219, 4
      %v2222 = vshll.u32 %v2189, 16
      %v2224 = vrot.slane %v2222, 5
      %v2225 = vsel %vm1114, %v2220, %v2224
      %v2226 = vshrl.u32 %v2189, 16
      %v2228 = vrot.slane %v2226, 4
      %v2229 = vor.u32 %v2228, %v2224
      %v2230 = vrot.slane %v2229, 4
      %v2232 = vshll.u32 %v2190, 16
      %v2234 = vrot.slane %v2232, 5
      %v2235 = vsel %vm1114, %v2230, %v2234
      %v2237 = vshrl.u32 %v2191, 16
      %v2239 = vrot.slane %v2237, 4
      %v2240 = vshll.u32 %v2191, 16
      %v2242 = vrot.slane %v2240, 5
      %v2243 = vor.u32 %v2239, %v2242
      %v2244 = vrot.slane %v2243, 4
      %v2246 = vshll.u32 %v2192, 16
      %v2248 = vrot.slane %v2246, 5
      %v2249 = vsel %vm1114, %v2244, %v2248
      %v2250 = vshrl.u32 %v2192, 16
      %v2252 = vrot.slane %v2250, 4
      %v2253 = vor.u32 %v2252, %v2248
      %v2254 = vrot.slane %v2253, 4
      %v2256 = vshll.u32 %v2193, 16
      %v2258 = vrot.slane %v2256, 5
      %v2259 = vsel %vm1114, %v2254, %v2258
      %v2261 = vshrl.u32 %v2194, 16
      %v2263 = vrot.slane %v2261, 4
      %v2264 = vshll.u32 %v2194, 16
      %v2266 = vrot.slane %v2264, 5
      %v2267 = vor.u32 %v2263, %v2266
      %v2268 = vrot.slane %v2267, 4
      %v2270 = vshll.u32 %v2195, 16
      %v2272 = vrot.slane %v2270, 5
      %v2273 = vsel %vm1114, %v2268, %v2272
      %v2274 = vshrl.u32 %v2195, 16
      %v2276 = vrot.slane %v2274, 4
      %v2277 = vor.u32 %v2276, %v2272
      %v2278 = vrot.slane %v2277, 4
      %v2280 = vshll.u32 %v2196, 16
      %v2282 = vrot.slane %v2280, 5
      %v2283 = vsel %vm1114, %v2278, %v2282
      %v2285 = vshrl.u32 %v2197, 16
      %v2287 = vrot.slane %v2285, 4
      %v2288 = vshll.u32 %v2197, 16
      %v2290 = vrot.slane %v2288, 5
      %v2291 = vor.u32 %v2287, %v2290
      %v2292 = vrot.slane %v2291, 4
      %v2294 = vshll.u32 %v2198, 16
      %v2296 = vrot.slane %v2294, 5
      %v2297 = vsel %vm1114, %v2292, %v2296
      %v2298 = vshrl.u32 %v2198, 16
      %v2300 = vrot.slane %v2298, 4
      %v2301 = vor.u32 %v2300, %v2296
      %v2302 = vrot.slane %v2301, 4
      %v2304 = vshll.u32 %v2199, 16
      %v2306 = vrot.slane %v2304, 5
      %v2307 = vsel %vm1114, %v2302, %v2306
      %v2309 = vshrl.u32 %v2200, 16
      %v2311 = vrot.slane %v2309, 4
      %v2312 = vshll.u32 %v2200, 16
      %v2314 = vrot.slane %v2312, 5
      %v2315 = vor.u32 %v2311, %v2314
      %v2316 = vrot.slane %v2315, 4
      %v2318 = vshll.u32 %v2201, 16
      %v2320 = vrot.slane %v2318, 5
      %v2321 = vsel %vm1114, %v2316, %v2320
      %v2322 = vshrl.u32 %v2201, 16
      %v2324 = vrot.slane %v2322, 4
      %v2325 = vor.u32 %v2324, %v2320
      %v2326 = vrot.slane %v2325, 4
      %v2328 = vshll.u32 %v2202, 16
      %v2330 = vrot.slane %v2328, 5
      %v2331 = vsel %vm1114, %v2326, %v2330
      %v2333 = vshrl.u32 %v2203, 16
      %v2335 = vrot.slane %v2333, 4
      %v2336 = vshll.u32 %v2203, 16
      %v2338 = vrot.slane %v2336, 5
      %v2339 = vor.u32 %v2335, %v2338
      %v2340 = vrot.slane %v2339, 4
      %v2342 = vshll.u32 %v2204, 16
      %v2344 = vrot.slane %v2342, 5
      %v2345 = vsel %vm1114, %v2340, %v2344
      %v2346 = vshrl.u32 %v2204, 16
      %v2348 = vrot.slane %v2346, 4
      %v2349 = vor.u32 %v2348, %v2344
      %v2350 = vrot.slane %v2349, 4
      %v2352 = vshll.u32 %v2205, 16
      %v2354 = vrot.slane %v2352, 5
      %v2355 = vsel %vm1114, %v2350, %v2354
      %v2357 = vshrl.u32 %v2206, 16
      %v2359 = vrot.slane %v2357, 4
      %v2360 = vshll.u32 %v2206, 16
      %v2362 = vrot.slane %v2360, 5
      %v2363 = vor.u32 %v2359, %v2362
      %v2364 = vrot.slane %v2363, 4
      %v2366 = vshll.u32 %v2207, 16
      %v2368 = vrot.slane %v2366, 5
      %v2369 = vsel %vm1114, %v2364, %v2368
      %v2370 = vshrl.u32 %v2207, 16
      %v2372 = vrot.slane %v2370, 4
      %v2373 = vor.u32 %v2372, %v2368
      %v2374 = vrot.slane %v2373, 4
      %v2376 = vshll.u32 %v2208, 16
      %v2378 = vrot.slane %v2376, 5
      %v2379 = vsel %vm1114, %v2374, %v2378
      %v2381 = vshrl.u32 %v2209, 16
      %v2383 = vrot.slane %v2381, 4
      %v2384 = vshll.u32 %v2209, 16
      %v2386 = vrot.slane %v2384, 5
      %v2387 = vor.u32 %v2383, %v2386
      %v2388 = vrot.slane %v2387, 4
      %v2390 = vshll.u32 %v2210, 16
      %v2392 = vrot.slane %v2390, 5
      %v2393 = vsel %vm1114, %v2388, %v2392
      %v2394 = vshrl.u32 %v2210, 16
      %v2396 = vrot.slane %v2394, 4
      %v2397 = vor.u32 %v2396, %v2392
      %v2398 = vrot.slane %v2397, 4
      %v2400 = vshll.u32 %v2211, 16
      %v2402 = vrot.slane %v2400, 5
      %v2403 = vsel %vm1114, %v2398, %v2402
      %2404 = vrot.lane.b32.xlu0 %v2225, 28
      %v2405 = vpop.permute.xlu0 %2404
      %2406 = vrot.lane.b32.xlu0 %v2235, 28
      %v2407 = vpop.permute.xlu0 %2406
      %2408 = vrot.lane.b32.xlu0 %v2249, 28
      %v2409 = vpop.permute.xlu0 %2408
      %2410 = vrot.lane.b32.xlu0 %v2259, 28
      %v2411 = vpop.permute.xlu0 %2410
      %2412 = vrot.lane.b32.xlu0 %v2273, 28
      %v2413 = vpop.permute.xlu0 %2412
      %2414 = vrot.lane.b32.xlu0 %v2283, 28
      %v2415 = vpop.permute.xlu0 %2414
      %2416 = vrot.lane.b32.xlu0 %v2297, 28
      %v2417 = vpop.permute.xlu0 %2416
      %2418 = vrot.lane.b32.xlu0 %v2307, 28
      %v2419 = vpop.permute.xlu0 %2418
      %2420 = vrot.lane.b32.xlu0 %v2321, 28
      %v2421 = vpop.permute.xlu0 %2420
      %2422 = vrot.lane.b32.xlu0 %v2331, 28
      %v2423 = vpop.permute.xlu0 %2422
      %2424 = vrot.lane.b32.xlu0 %v2345, 28
      %v2425 = vpop.permute.xlu0 %2424
      %2426 = vrot.lane.b32.xlu0 %v2355, 28
      %v2427 = vpop.permute.xlu0 %2426
      %2428 = vrot.lane.b32.xlu0 %v2369, 28
      %v2429 = vpop.permute.xlu0 %2428
      %2430 = vrot.lane.b32.xlu0 %v2379, 28
      %v2431 = vpop.permute.xlu0 %2430
      %2432 = vrot.lane.b32.xlu0 %v2393, 28
      %v2433 = vpop.permute.xlu0 %2432
      %2434 = vrot.lane.b32.xlu0 %v2403, 28
      %v2435 = vpop.permute.xlu0 %2434
      %vm2452 = vcmask 257248
      %2453 = vst.msk [vmem:[#allocation3] sm:$0xf] %vm2452, %v2405
      %2454 = vst.msk [vmem:[#allocation3 + $0x4] sm:$0xf] %vm2452, %v2407
      %2455 = vst.msk [vmem:[#allocation3 + $0x8] sm:$0xf] %vm2452, %v2409
      %2456 = vst.msk [vmem:[#allocation3 + $0xc] sm:$0xf] %vm2452, %v2411
      %2457 = vst.msk [vmem:[#allocation3 + $0x10] sm:$0xf] %vm2452, %v2413
      %2458 = vst.msk [vmem:[#allocation3 + $0x14] sm:$0xf] %vm2452, %v2415
      %2459 = vst.msk [vmem:[#allocation3 + $0x18] sm:$0xf] %vm2452, %v2417
      %2460 = vst.msk [vmem:[#allocation3 + $0x1c] sm:$0xf] %vm2452, %v2419
      %2461 = vst.msk [vmem:[#allocation3 + $0x20] sm:$0xf] %vm2452, %v2421
      %2462 = vst.msk [vmem:[#allocation3 + $0x24] sm:$0xf] %vm2452, %v2423
      %2463 = vst.msk [vmem:[#allocation3 + $0x28] sm:$0xf] %vm2452, %v2425
      %2464 = vst.msk [vmem:[#allocation3 + $0x2c] sm:$0xf] %vm2452, %v2427
      %2465 = vst.msk [vmem:[#allocation3 + $0x30] sm:$0xf] %vm2452, %v2429
      %2466 = vst.msk [vmem:[#allocation3 + $0x34] sm:$0xf] %vm2452, %v2431
      %2467 = vst.msk [vmem:[#allocation3 + $0x38] sm:$0xf] %vm2452, %v2433
      %2468 = vst.msk [vmem:[#allocation3 + $0x3c] sm:$0xf] %vm2452, %v2435
      %v2469 = vld [vmem:[%s744] sm:$0xe]
      %v2470 = vld [vmem:[%s744 + $0x4] sm:$0xf]
      %v2471 = vld [vmem:[%s744 + $0x8] sm:$0x1]
      %v2472 = vld [vmem:[%s744 + $0xc] sm:$0xe]
      %v2473 = vld [vmem:[%s744 + $0x10] sm:$0xf]
      %v2474 = vld [vmem:[%s744 + $0x14] sm:$0x1]
      %v2475 = vld [vmem:[%s744 + $0x18] sm:$0xe]
      %v2476 = vld [vmem:[%s744 + $0x1c] sm:$0xf]
      %v2477 = vld [vmem:[%s744 + $0x20] sm:$0x1]
      %v2478 = vld [vmem:[%s744 + $0x24] sm:$0xe]
      %v2479 = vld [vmem:[%s744 + $0x28] sm:$0xf]
      %v2480 = vld [vmem:[%s744 + $0x2c] sm:$0x1]
      %v2481 = vld [vmem:[%s744 + $0x30] sm:$0xe]
      %v2482 = vld [vmem:[%s744 + $0x34] sm:$0xf]
      %v2483 = vld [vmem:[%s744 + $0x38] sm:$0x1]
      %v2484 = vld [vmem:[%s744 + $0x3c] sm:$0xe]
      %v2485 = vld [vmem:[%s744 + $0x40] sm:$0xf]
      %v2486 = vld [vmem:[%s744 + $0x44] sm:$0x1]
      %v2487 = vld [vmem:[%s744 + $0x48] sm:$0xe]
      %v2488 = vld [vmem:[%s744 + $0x4c] sm:$0xf]
      %v2489 = vld [vmem:[%s744 + $0x50] sm:$0x1]
      %v2490 = vld [vmem:[%s744 + $0x54] sm:$0xe]
      %v2491 = vld [vmem:[%s744 + $0x58] sm:$0xf]
      %v2492 = vld [vmem:[%s744 + $0x5c] sm:$0x1]
      %v2517 = vrot.slane %v2469, 5
      %v2518 = vrot.slane %v2517, 4
      %v2519 = vrot.slane %v2470, 5
      %v2520 = vsel %vm1422, %v2518, %v2519
      %v2521 = vrot.slane %v2519, 4
      %v2522 = vrot.slane %v2471, 5
      %v2523 = vsel %vm1422, %v2521, %v2522
      %v2524 = vrot.slane %v2472, 5
      %v2525 = vrot.slane %v2524, 4
      %v2526 = vrot.slane %v2473, 5
      %v2527 = vsel %vm1422, %v2525, %v2526
      %v2528 = vrot.slane %v2526, 4
      %v2529 = vrot.slane %v2474, 5
      %v2530 = vsel %vm1422, %v2528, %v2529
      %v2531 = vrot.slane %v2475, 5
      %v2532 = vrot.slane %v2531, 4
      %v2533 = vrot.slane %v2476, 5
      %v2534 = vsel %vm1422, %v2532, %v2533
      %v2535 = vrot.slane %v2533, 4
      %v2536 = vrot.slane %v2477, 5
      %v2537 = vsel %vm1422, %v2535, %v2536
      %v2538 = vrot.slane %v2478, 5
      %v2539 = vrot.slane %v2538, 4
      %v2540 = vrot.slane %v2479, 5
      %v2541 = vsel %vm1422, %v2539, %v2540
      %v2542 = vrot.slane %v2540, 4
      %v2543 = vrot.slane %v2480, 5
      %v2544 = vsel %vm1422, %v2542, %v2543
      %v2545 = vrot.slane %v2481, 5
      %v2546 = vrot.slane %v2545, 4
      %v2547 = vrot.slane %v2482, 5
      %v2548 = vsel %vm1422, %v2546, %v2547
      %v2549 = vrot.slane %v2547, 4
      %v2550 = vrot.slane %v2483, 5
      %v2551 = vsel %vm1422, %v2549, %v2550
      %v2552 = vrot.slane %v2484, 5
      %v2553 = vrot.slane %v2552, 4
      %v2554 = vrot.slane %v2485, 5
      %v2555 = vsel %vm1422, %v2553, %v2554
      %v2556 = vrot.slane %v2554, 4
      %v2557 = vrot.slane %v2486, 5
      %v2558 = vsel %vm1422, %v2556, %v2557
      %v2559 = vrot.slane %v2487, 5
      %v2560 = vrot.slane %v2559, 4
      %v2561 = vrot.slane %v2488, 5
      %v2562 = vsel %vm1422, %v2560, %v2561
      %v2563 = vrot.slane %v2561, 4
      %v2564 = vrot.slane %v2489, 5
      %v2565 = vsel %vm1422, %v2563, %v2564
      %v2566 = vrot.slane %v2490, 5
      %v2567 = vrot.slane %v2566, 4
      %v2568 = vrot.slane %v2491, 5
      %v2569 = vsel %vm1422, %v2567, %v2568
      %v2570 = vrot.slane %v2568, 4
      %v2571 = vrot.slane %v2492, 5
      %v2572 = vsel %vm1422, %v2570, %v2571
      %2573 = vrot.lane.b32.xlu0 %v2520, 32
      %v2574 = vpop.permute.xlu0 %2573
      %2575 = vrot.lane.b32.xlu0 %v2523, 32
      %v2576 = vpop.permute.xlu0 %2575
      %2577 = vrot.lane.b32.xlu0 %v2527, 32
      %v2578 = vpop.permute.xlu0 %2577
      %2579 = vrot.lane.b32.xlu0 %v2530, 32
      %v2580 = vpop.permute.xlu0 %2579
      %2581 = vrot.lane.b32.xlu0 %v2534, 32
      %v2582 = vpop.permute.xlu0 %2581
      %2583 = vrot.lane.b32.xlu0 %v2537, 32
      %v2584 = vpop.permute.xlu0 %2583
      %2585 = vrot.lane.b32.xlu0 %v2541, 32
      %v2586 = vpop.permute.xlu0 %2585
      %2587 = vrot.lane.b32.xlu0 %v2544, 32
      %v2588 = vpop.permute.xlu0 %2587
      %2589 = vrot.lane.b32.xlu0 %v2548, 32
      %v2590 = vpop.permute.xlu0 %2589
      %2591 = vrot.lane.b32.xlu0 %v2551, 32
      %v2592 = vpop.permute.xlu0 %2591
      %2593 = vrot.lane.b32.xlu0 %v2555, 32
      %v2594 = vpop.permute.xlu0 %2593
      %2595 = vrot.lane.b32.xlu0 %v2558, 32
      %v2596 = vpop.permute.xlu0 %2595
      %2597 = vrot.lane.b32.xlu0 %v2562, 32
      %v2598 = vpop.permute.xlu0 %2597
      %2599 = vrot.lane.b32.xlu0 %v2565, 32
      %v2600 = vpop.permute.xlu0 %2599
      %2601 = vrot.lane.b32.xlu0 %v2569, 32
      %v2602 = vpop.permute.xlu0 %2601
      %2603 = vrot.lane.b32.xlu0 %v2572, 32
      %v2604 = vpop.permute.xlu0 %2603
      %vm2621 = vcmask 290048
      %2622 = vst.msk [vmem:[#allocation3] sm:$0xf] %vm2621, %v2574
      %2623 = vst.msk [vmem:[#allocation3 + $0x4] sm:$0xf] %vm2621, %v2576
      %2624 = vst.msk [vmem:[#allocation3 + $0x8] sm:$0xf] %vm2621, %v2578
      %2625 = vst.msk [vmem:[#allocation3 + $0xc] sm:$0xf] %vm2621, %v2580
      %2626 = vst.msk [vmem:[#allocation3 + $0x10] sm:$0xf] %vm2621, %v2582
      %2627 = vst.msk [vmem:[#allocation3 + $0x14] sm:$0xf] %vm2621, %v2584
      %2628 = vst.msk [vmem:[#allocation3 + $0x18] sm:$0xf] %vm2621, %v2586
      %2629 = vst.msk [vmem:[#allocation3 + $0x1c] sm:$0xf] %vm2621, %v2588
      %2630 = vst.msk [vmem:[#allocation3 + $0x20] sm:$0xf] %vm2621, %v2590
      %2631 = vst.msk [vmem:[#allocation3 + $0x24] sm:$0xf] %vm2621, %v2592
      %2632 = vst.msk [vmem:[#allocation3 + $0x28] sm:$0xf] %vm2621, %v2594
      %2633 = vst.msk [vmem:[#allocation3 + $0x2c] sm:$0xf] %vm2621, %v2596
      %2634 = vst.msk [vmem:[#allocation3 + $0x30] sm:$0xf] %vm2621, %v2598
      %2635 = vst.msk [vmem:[#allocation3 + $0x34] sm:$0xf] %vm2621, %v2600
      %2636 = vst.msk [vmem:[#allocation3 + $0x38] sm:$0xf] %vm2621, %v2602
      %2637 = vst.msk [vmem:[#allocation3 + $0x3c] sm:$0xf] %vm2621, %v2604
      %v2638 = vld [vmem:[#allocation3] sm:$0xf]
      %v2639 = vld [vmem:[#allocation3 + $0x4] sm:$0xf]
      %v2640 = vld [vmem:[#allocation3 + $0x8] sm:$0xf]
      %v2641 = vld [vmem:[#allocation3 + $0xc] sm:$0xf]
      %v2642 = vld [vmem:[#allocation3 + $0x10] sm:$0xf]
      %v2643 = vld [vmem:[#allocation3 + $0x14] sm:$0xf]
      %v2644 = vld [vmem:[#allocation3 + $0x18] sm:$0xf]
      %v2645 = vld [vmem:[#allocation3 + $0x1c] sm:$0xf]
      %v2646 = vld [vmem:[#allocation3 + $0x20] sm:$0xf]
      %v2647 = vld [vmem:[#allocation3 + $0x24] sm:$0xf]
      %v2648 = vld [vmem:[#allocation3 + $0x28] sm:$0xf]
      %v2649 = vld [vmem:[#allocation3 + $0x2c] sm:$0xf]
      %v2650 = vld [vmem:[#allocation3 + $0x30] sm:$0xf]
      %v2651 = vld [vmem:[#allocation3 + $0x34] sm:$0xf]
      %v2652 = vld [vmem:[#allocation3 + $0x38] sm:$0xf]
      %v2653 = vld [vmem:[#allocation3 + $0x3c] sm:$0xf]
      %v2654 = vld [vmem:[%s1] sm:$0xf]
      %v2655 = vld [vmem:[%s1 + $0x4] sm:$0xf]
      %v2656 = vld [vmem:[%s1 + $0x8] sm:$0xf]
      %v2657 = vld [vmem:[%s1 + $0xc] sm:$0xf]
      %v2658 = vld [vmem:[%s1 + $0x10] sm:$0x3]
      %v2675 = vunpack.c.l.b16 %v2638
      %v2676 = vunpack.c.l.b16 %v2639
      %v2677 = vunpack.c.l.b16 %v2640
      %v2678 = vunpack.c.l.b16 %v2641
      %v2679 = vunpack.c.l.b16 %v2642
      %v2680 = vunpack.c.l.b16 %v2643
      %v2681 = vunpack.c.l.b16 %v2644
      %v2682 = vunpack.c.l.b16 %v2645
      %v2683 = vunpack.c.l.b16 %v2646
      %v2684 = vunpack.c.l.b16 %v2647
      %v2685 = vunpack.c.l.b16 %v2648
      %v2686 = vunpack.c.l.b16 %v2649
      %v2687 = vunpack.c.l.b16 %v2650
      %v2688 = vunpack.c.l.b16 %v2651
      %v2689 = vunpack.c.l.b16 %v2652
      %v2690 = vunpack.c.l.b16 %v2653
      %v2691 = vpack.c.b16 %v2676, %v2675
      %v2692 = vpack.c.b16 %v2678, %v2677
      %v2693 = vpack.c.b16 %v2680, %v2679
      %v2694 = vpack.c.b16 %v2682, %v2681
      %v2695 = vpack.c.b16 %v2684, %v2683
      %v2696 = vpack.c.b16 %v2686, %v2685
      %v2697 = vpack.c.b16 %v2688, %v2687
      %v2698 = vpack.c.b16 %v2690, %v2689
      %v2704 = vunpack.c.l.b16 %v2654
      %v2705 = vunpack.c.l.b16 %v2655
      %v2706 = vunpack.c.l.b16 %v2656
      %v2707 = vunpack.c.l.b16 %v2657
      %v2708 = vunpack.c.l.b16 %v2658
      %v2709 = vpack.c.b16 %v2705, %v2704
      %v2710 = vpack.c.b16 %v2707, %v2706
      %v2711 = vpack.c.b16 %v2708, %v2708
      %vm2714 = vcmask 293888
      %v2716 = vsel %vm2714, %v2691, 0
      %v2719 = vsel %vm2714, %v2692, 0
      %v2722 = vsel %vm2714, %v2693, 0
      %v2725 = vsel %vm2714, %v2694, 0
      %v2728 = vsel %vm2714, %v2695, 0
      %v2731 = vsel %vm2714, %v2696, 0
      %v2734 = vsel %vm2714, %v2697, 0
      %v2737 = vsel %vm2714, %v2698, 0
      %vm2739 = vcmask 1041408
      %v2741 = vsel %vm2739, %v2711, 0
      %2743 = vmatprep.subr.bf16.mxu0 0
      %2744 = vmatpush1.bf16.msra.mxu0 0
      %2745 = vmatprep.subr.bf16.mxu0 0
      %2746 = vmatpush1.bf16.msra.mxu0 0
      %2747 = vmatprep.subr.bf16.mxu0 0
      %2748 = vmatpush1.bf16.msra.mxu0 0
      %2749 = vmatprep.subr.bf16.mxu0 0
      %2750 = vmatpush1.bf16.msra.mxu0 0
      %2751 = vmatprep.subr.bf16.mxu0 0
      %2752 = vmatpush1.bf16.msra.mxu0 0
      %2753 = vmatprep.subr.bf16.mxu0 0
      %2754 = vmatpush1.bf16.msra.mxu0 %v2741
      %2755 = vmatprep.subr.bf16.mxu0 0
      %2756 = vmatpush1.bf16.msra.mxu0 %v2710
      %2757 = vmatprep.subr.bf16.mxu0 0
      %2758 = vmatpush1.bf16.msra.mxu0 %v2709
      %2759 = vmatprep.subr.bf16.mxu0 0
      %2760 = vmatpush2.bf16.msra.mxu0 0
      %2761 = vmatprep.subr.bf16.mxu0 0
      %2762 = vmatpush2.bf16.msra.mxu0 0
      %2763 = vmatprep.subr.bf16.mxu0 0
      %2764 = vmatpush2.bf16.msra.mxu0 0
      %2765 = vmatprep.subr.bf16.mxu0 0
      %2766 = vmatpush2.bf16.msra.mxu0 0
      %2767 = vmatprep.subr.bf16.mxu0 0
      %2768 = vmatpush2.bf16.msra.mxu0 0
      %2769 = vmatprep.subr.bf16.mxu0 0
      %2770 = vmatpush2.bf16.msra.mxu0 0
      %2771 = vmatprep.subr.bf16.mxu0 0
      %2772 = vmatpush2.bf16.msra.mxu0 0
      %2773 = vmatprep.subr.bf16.mxu0 0
      %2774 = vmatpush2.bf16.msra.mxu0 0
      %2775 = vmatprep.mubr.bf16.mxu0 0
      %2776 = vmatmul.mubr.bf16.gmra.mxu0 %v2716
      %v2777 = vpop.f32.mrf.mxu0
      %v2778 = vadd.f32 0.0, %v2777
      %v2779 = vpop.f32.mrf.mxu0
      %v2780 = vpop.f32.mrf.mxu0
      %v2781 = vadd.f32 0.0, %v2780
      %v2782 = vpop.f32.mrf.mxu0
      %2783 = vmatprep.mubr.bf16.mxu0 0
      %2784 = vmatmul.mubr.bf16.gmra.mxu0 %v2719
      %v2785 = vpop.f32.mrf.mxu0
      %v2786 = vadd.f32 0.0, %v2785
      %v2787 = vpop.f32.mrf.mxu0
      %v2788 = vpop.f32.mrf.mxu0
      %v2789 = vadd.f32 0.0, %v2788
      %v2790 = vpop.f32.mrf.mxu0
      %2791 = vmatprep.mubr.bf16.mxu0 0
      %2792 = vmatmul.mubr.bf16.gmra.mxu0 %v2722
      %v2793 = vpop.f32.mrf.mxu0
      %v2794 = vadd.f32 0.0, %v2793
      %v2795 = vpop.f32.mrf.mxu0
      %v2796 = vpop.f32.mrf.mxu0
      %v2797 = vadd.f32 0.0, %v2796
      %v2798 = vpop.f32.mrf.mxu0
      %2799 = vmatprep.mubr.bf16.mxu0 0
      %2800 = vmatmul.mubr.bf16.gmra.mxu0 %v2725
      %v2801 = vpop.f32.mrf.mxu0
      %v2802 = vadd.f32 0.0, %v2801
      %v2803 = vpop.f32.mrf.mxu0
      %v2804 = vpop.f32.mrf.mxu0
      %v2805 = vadd.f32 0.0, %v2804
      %v2806 = vpop.f32.mrf.mxu0
      %2807 = vmatprep.mubr.bf16.mxu0 0
      %2808 = vmatmul.mubr.bf16.gmra.mxu0 %v2728
      %v2809 = vpop.f32.mrf.mxu0
      %v2810 = vadd.f32 0.0, %v2809
      %v2811 = vpop.f32.mrf.mxu0
      %v2812 = vpop.f32.mrf.mxu0
      %v2813 = vadd.f32 0.0, %v2812
      %v2814 = vpop.f32.mrf.mxu0
      %2815 = vmatprep.mubr.bf16.mxu0 0
      %2816 = vmatmul.mubr.bf16.gmra.mxu0 %v2731
      %v2817 = vpop.f32.mrf.mxu0
      %v2818 = vadd.f32 0.0, %v2817
      %v2819 = vpop.f32.mrf.mxu0
      %v2820 = vpop.f32.mrf.mxu0
      %v2821 = vadd.f32 0.0, %v2820
      %v2822 = vpop.f32.mrf.mxu0
      %2823 = vmatprep.mubr.bf16.mxu0 0
      %2824 = vmatmul.mubr.bf16.gmra.mxu0 %v2734
      %v2825 = vpop.f32.mrf.mxu0
      %v2826 = vadd.f32 0.0, %v2825
      %v2827 = vpop.f32.mrf.mxu0
      %v2828 = vpop.f32.mrf.mxu0
      %v2829 = vadd.f32 0.0, %v2828
      %v2830 = vpop.f32.mrf.mxu0
      %2831 = vmatprep.mubr.bf16.mxu0 0
      %2832 = vmatmul.mubr.bf16.gmra.mxu0 %v2737
      %v2833 = vpop.f32.mrf.mxu0
      %v2834 = vadd.f32 0.0, %v2833
      %v2835 = vpop.f32.mrf.mxu0
      %v2836 = vpop.f32.mrf.mxu0
      %v2837 = vadd.f32 0.0, %v2836
      %v2838 = vpop.f32.mrf.mxu0
      %2839 = vdwg.mxu0
      %vm2840 = vcmask 31744
      %2841 = vst.msk [vmem:[#allocation4] sm:$0xff] %vm2840, %v2778
      %2842 = vst.msk [vmem:[#allocation4 + $0x8] sm:$0xff] %vm2840, %v2781
      %2843 = vst.msk [vmem:[#allocation4 + $0x10] sm:$0xff] %vm2840, %v2786
      %2844 = vst.msk [vmem:[#allocation4 + $0x18] sm:$0xff] %vm2840, %v2789
      %2845 = vst.msk [vmem:[#allocation4 + $0x20] sm:$0xff] %vm2840, %v2794
      %2846 = vst.msk [vmem:[#allocation4 + $0x28] sm:$0xff] %vm2840, %v2797
      %2847 = vst.msk [vmem:[#allocation4 + $0x30] sm:$0xff] %vm2840, %v2802
      %2848 = vst.msk [vmem:[#allocation4 + $0x38] sm:$0xff] %vm2840, %v2805
      %2849 = vst.msk [vmem:[#allocation4 + $0x40] sm:$0xff] %vm2840, %v2810
      %2850 = vst.msk [vmem:[#allocation4 + $0x48] sm:$0xff] %vm2840, %v2813
      %2851 = vst.msk [vmem:[#allocation4 + $0x50] sm:$0xff] %vm2840, %v2818
      %2852 = vst.msk [vmem:[#allocation4 + $0x58] sm:$0xff] %vm2840, %v2821
      %2853 = vst.msk [vmem:[#allocation4 + $0x60] sm:$0xff] %vm2840, %v2826
      %2854 = vst.msk [vmem:[#allocation4 + $0x68] sm:$0xff] %vm2840, %v2829
      %2855 = vst.msk [vmem:[#allocation4 + $0x70] sm:$0xff] %vm2840, %v2834
      %2856 = vst.msk [vmem:[#allocation4 + $0x78] sm:$0xff] %vm2840, %v2837
      %v2857 = vsel %vm2840, %v2778, 0.0
      %v2858 = vsel %vm2840, %v2781, 0.0
      %v2859 = vadd.f32 %v2857, %v2858
      %v2860 = vsel %vm2840, %v2786, 0.0
      %v2861 = vadd.f32 %v2859, %v2860
      %v2862 = vsel %vm2840, %v2789, 0.0
      %v2863 = vadd.f32 %v2861, %v2862
      %v2864 = vsel %vm2840, %v2794, 0.0
      %v2865 = vadd.f32 %v2863, %v2864
      %v2866 = vsel %vm2840, %v2797, 0.0
      %v2867 = vadd.f32 %v2865, %v2866
      %v2868 = vsel %vm2840, %v2802, 0.0
      %v2869 = vadd.f32 %v2867, %v2868
      %v2870 = vsel %vm2840, %v2805, 0.0
      %v2871 = vadd.f32 %v2869, %v2870
      %v2872 = vsel %vm2840, %v2810, 0.0
      %v2873 = vadd.f32 %v2871, %v2872
      %v2874 = vsel %vm2840, %v2813, 0.0
      %v2875 = vadd.f32 %v2873, %v2874
      %v2876 = vsel %vm2840, %v2818, 0.0
      %v2877 = vadd.f32 %v2875, %v2876
      %v2878 = vsel %vm2840, %v2821, 0.0
      %v2879 = vadd.f32 %v2877, %v2878
      %v2880 = vsel %vm2840, %v2826, 0.0
      %v2881 = vadd.f32 %v2879, %v2880
      %v2882 = vsel %vm2840, %v2829, 0.0
      %v2883 = vadd.f32 %v2881, %v2882
      %v2884 = vsel %vm2840, %v2834, 0.0
      %v2885 = vadd.f32 %v2883, %v2884
      %v2886 = vsel %vm2840, %v2837, 0.0
      %v2887 = vadd.f32 %v2885, %v2886
      %v2888 = vrot.slane %v2887, 4
      %v2889 = vadd.f32 %v2887, %v2888
      %v2890 = vrot.slane %v2889, 2
      %v2891 = vadd.f32 %v2889, %v2890
      %v2892 = vrot.slane %v2891, 1
      %v2893 = vadd.f32 %v2891, %v2892
      %v2894 = vadd.f32 %v2893, 0.0
      %v2895 = vmul.f32 %v2778, %v2778
      %v2896 = vmul.f32 %v2781, %v2781
      %v2897 = vmul.f32 %v2786, %v2786
      %v2898 = vmul.f32 %v2789, %v2789
      %v2899 = vmul.f32 %v2794, %v2794
      %v2900 = vmul.f32 %v2797, %v2797
      %v2901 = vmul.f32 %v2802, %v2802
      %v2902 = vmul.f32 %v2805, %v2805
      %v2903 = vmul.f32 %v2810, %v2810
      %v2904 = vmul.f32 %v2813, %v2813
      %v2905 = vmul.f32 %v2818, %v2818
      %v2906 = vmul.f32 %v2821, %v2821
      %v2907 = vmul.f32 %v2826, %v2826
      %v2908 = vmul.f32 %v2829, %v2829
      %v2909 = vmul.f32 %v2834, %v2834
      %v2910 = vmul.f32 %v2837, %v2837
      %v2911 = vsel %vm2840, %v2895, 0.0
      %v2912 = vsel %vm2840, %v2896, 0.0
      %v2913 = vadd.f32 %v2911, %v2912
      %v2914 = vsel %vm2840, %v2897, 0.0
      %v2915 = vadd.f32 %v2913, %v2914
      %v2916 = vsel %vm2840, %v2898, 0.0
      %v2917 = vadd.f32 %v2915, %v2916
      %v2918 = vsel %vm2840, %v2899, 0.0
      %v2919 = vadd.f32 %v2917, %v2918
      %v2920 = vsel %vm2840, %v2900, 0.0
      %v2921 = vadd.f32 %v2919, %v2920
      %v2922 = vsel %vm2840, %v2901, 0.0
      %v2923 = vadd.f32 %v2921, %v2922
      %v2924 = vsel %vm2840, %v2902, 0.0
      %v2925 = vadd.f32 %v2923, %v2924
      %v2926 = vsel %vm2840, %v2903, 0.0
      %v2927 = vadd.f32 %v2925, %v2926
      %v2928 = vsel %vm2840, %v2904, 0.0
      %v2929 = vadd.f32 %v2927, %v2928
      %v2930 = vsel %vm2840, %v2905, 0.0
      %v2931 = vadd.f32 %v2929, %v2930
      %v2932 = vsel %vm2840, %v2906, 0.0
      %v2933 = vadd.f32 %v2931, %v2932
      %v2934 = vsel %vm2840, %v2907, 0.0
      %v2935 = vadd.f32 %v2933, %v2934
      %v2936 = vsel %vm2840, %v2908, 0.0
      %v2937 = vadd.f32 %v2935, %v2936
      %v2938 = vsel %vm2840, %v2909, 0.0
      %v2939 = vadd.f32 %v2937, %v2938
      %v2940 = vsel %vm2840, %v2910, 0.0
      %v2941 = vadd.f32 %v2939, %v2940
      %v2942 = vrot.slane %v2941, 4
      %v2943 = vadd.f32 %v2941, %v2942
      %v2944 = vrot.slane %v2943, 2
      %v2945 = vadd.f32 %v2943, %v2944
      %v2946 = vrot.slane %v2945, 1
      %v2947 = vadd.f32 %v2945, %v2946
      %v2948 = vadd.f32 %v2947, 0.0
      %s2949 = scalar_lea.vmem [#allocation2], 96
      %v2950 = vld [vmem:[%s2949] sm:$0xf]
      %v2951 = vld [vmem:[%s2949 + $0x4] sm:$0xf]
      %v2952 = vld [vmem:[%s2949 + $0xc] sm:$0xf]
      %v2953 = vld [vmem:[%s2949 + $0x10] sm:$0xf]
      %v2954 = vld [vmem:[%s2949 + $0x18] sm:$0xf]
      %v2955 = vld [vmem:[%s2949 + $0x1c] sm:$0xf]
      %v2956 = vld [vmem:[%s2949 + $0x24] sm:$0xf]
      %v2957 = vld [vmem:[%s2949 + $0x28] sm:$0xf]
      %v2958 = vld [vmem:[%s2949 + $0x30] sm:$0xf]
      %v2959 = vld [vmem:[%s2949 + $0x34] sm:$0xf]
      %v2960 = vld [vmem:[%s2949 + $0x3c] sm:$0xf]
      %v2961 = vld [vmem:[%s2949 + $0x40] sm:$0xf]
      %v2962 = vld [vmem:[%s2949 + $0x48] sm:$0xf]
      %v2963 = vld [vmem:[%s2949 + $0x4c] sm:$0xf]
      %v2964 = vld [vmem:[%s2949 + $0x54] sm:$0xf]
      %v2965 = vld [vmem:[%s2949 + $0x58] sm:$0xf]
      %2966 = vst.msk [vmem:[#allocation3] sm:$0xf] %vm406, %v2950
      %2967 = vst.msk [vmem:[#allocation3 + $0x4] sm:$0xf] %vm406, %v2951
      %2968 = vst.msk [vmem:[#allocation3 + $0x8] sm:$0xf] %vm406, %v2952
      %2969 = vst.msk [vmem:[#allocation3 + $0xc] sm:$0xf] %vm406, %v2953
      %2970 = vst.msk [vmem:[#allocation3 + $0x10] sm:$0xf] %vm406, %v2954
      %2971 = vst.msk [vmem:[#allocation3 + $0x14] sm:$0xf] %vm406, %v2955
      %2972 = vst.msk [vmem:[#allocation3 + $0x18] sm:$0xf] %vm406, %v2956
      %2973 = vst.msk [vmem:[#allocation3 + $0x1c] sm:$0xf] %vm406, %v2957
      %2974 = vst.msk [vmem:[#allocation3 + $0x20] sm:$0xf] %vm406, %v2958
      %2975 = vst.msk [vmem:[#allocation3 + $0x24] sm:$0xf] %vm406, %v2959
      %2976 = vst.msk [vmem:[#allocation3 + $0x28] sm:$0xf] %vm406, %v2960
      %2977 = vst.msk [vmem:[#allocation3 + $0x2c] sm:$0xf] %vm406, %v2961
      %2978 = vst.msk [vmem:[#allocation3 + $0x30] sm:$0xf] %vm406, %v2962
      %2979 = vst.msk [vmem:[#allocation3 + $0x34] sm:$0xf] %vm406, %v2963
      %2980 = vst.msk [vmem:[#allocation3 + $0x38] sm:$0xf] %vm406, %v2964
      %2981 = vst.msk [vmem:[#allocation3 + $0x3c] sm:$0xf] %vm406, %v2965
      %v2982 = vld [vmem:[%s2949] sm:$0xf]
      %v2983 = vld [vmem:[%s2949 + $0x4] sm:$0xf]
      %v2984 = vld [vmem:[%s2949 + $0x8] sm:$0x1]
      %v2985 = vld [vmem:[%s2949 + $0xc] sm:$0xf]
      %v2986 = vld [vmem:[%s2949 + $0x10] sm:$0xf]
      %v2987 = vld [vmem:[%s2949 + $0x14] sm:$0x1]
      %v2988 = vld [vmem:[%s2949 + $0x18] sm:$0xf]
      %v2989 = vld [vmem:[%s2949 + $0x1c] sm:$0xf]
      %v2990 = vld [vmem:[%s2949 + $0x20] sm:$0x1]
      %v2991 = vld [vmem:[%s2949 + $0x24] sm:$0xf]
      %v2992 = vld [vmem:[%s2949 + $0x28] sm:$0xf]
      %v2993 = vld [vmem:[%s2949 + $0x2c] sm:$0x1]
      %v2994 = vld [vmem:[%s2949 + $0x30] sm:$0xf]
      %v2995 = vld [vmem:[%s2949 + $0x34] sm:$0xf]
      %v2996 = vld [vmem:[%s2949 + $0x38] sm:$0x1]
      %v2997 = vld [vmem:[%s2949 + $0x3c] sm:$0xf]
      %v2998 = vld [vmem:[%s2949 + $0x40] sm:$0xf]
      %v2999 = vld [vmem:[%s2949 + $0x44] sm:$0x1]
      %v3000 = vld [vmem:[%s2949 + $0x48] sm:$0xf]
      %v3001 = vld [vmem:[%s2949 + $0x4c] sm:$0xf]
      %v3002 = vld [vmem:[%s2949 + $0x50] sm:$0x1]
      %v3003 = vld [vmem:[%s2949 + $0x54] sm:$0xf]
      %v3004 = vld [vmem:[%s2949 + $0x58] sm:$0xf]
      %v3005 = vld [vmem:[%s2949 + $0x5c] sm:$0x1]
      %v3007 = vshrl.u32 %v2982, 16
      %v3009 = vrot.slane %v3007, 4
      %v3010 = vshll.u32 %v2982, 16
      %v3012 = vrot.slane %v3010, 5
      %v3013 = vor.u32 %v3009, %v3012
      %v3014 = vrot.slane %v3013, 4
      %v3016 = vshll.u32 %v2983, 16
      %v3018 = vrot.slane %v3016, 5
      %v3019 = vsel %vm1114, %v3014, %v3018
      %v3020 = vshrl.u32 %v2983, 16
      %v3022 = vrot.slane %v3020, 4
      %v3023 = vor.u32 %v3022, %v3018
      %v3024 = vrot.slane %v3023, 4
      %v3026 = vshll.u32 %v2984, 16
      %v3028 = vrot.slane %v3026, 5
      %v3029 = vsel %vm1114, %v3024, %v3028
      %v3031 = vshrl.u32 %v2985, 16
      %v3033 = vrot.slane %v3031, 4
      %v3034 = vshll.u32 %v2985, 16
      %v3036 = vrot.slane %v3034, 5
      %v3037 = vor.u32 %v3033, %v3036
      %v3038 = vrot.slane %v3037, 4
      %v3040 = vshll.u32 %v2986, 16
      %v3042 = vrot.slane %v3040, 5
      %v3043 = vsel %vm1114, %v3038, %v3042
      %v3044 = vshrl.u32 %v2986, 16
      %v3046 = vrot.slane %v3044, 4
      %v3047 = vor.u32 %v3046, %v3042
      %v3048 = vrot.slane %v3047, 4
      %v3050 = vshll.u32 %v2987, 16
      %v3052 = vrot.slane %v3050, 5
      %v3053 = vsel %vm1114, %v3048, %v3052
      %v3055 = vshrl.u32 %v2988, 16
      %v3057 = vrot.slane %v3055, 4
      %v3058 = vshll.u32 %v2988, 16
      %v3060 = vrot.slane %v3058, 5
      %v3061 = vor.u32 %v3057, %v3060
      %v3062 = vrot.slane %v3061, 4
      %v3064 = vshll.u32 %v2989, 16
      %v3066 = vrot.slane %v3064, 5
      %v3067 = vsel %vm1114, %v3062, %v3066
      %v3068 = vshrl.u32 %v2989, 16
      %v3070 = vrot.slane %v3068, 4
      %v3071 = vor.u32 %v3070, %v3066
      %v3072 = vrot.slane %v3071, 4
      %v3074 = vshll.u32 %v2990, 16
      %v3076 = vrot.slane %v3074, 5
      %v3077 = vsel %vm1114, %v3072, %v3076
      %v3079 = vshrl.u32 %v2991, 16
      %v3081 = vrot.slane %v3079, 4
      %v3082 = vshll.u32 %v2991, 16
      %v3084 = vrot.slane %v3082, 5
      %v3085 = vor.u32 %v3081, %v3084
      %v3086 = vrot.slane %v3085, 4
      %v3088 = vshll.u32 %v2992, 16
      %v3090 = vrot.slane %v3088, 5
      %v3091 = vsel %vm1114, %v3086, %v3090
      %v3092 = vshrl.u32 %v2992, 16
      %v3094 = vrot.slane %v3092, 4
      %v3095 = vor.u32 %v3094, %v3090
      %v3096 = vrot.slane %v3095, 4
      %v3098 = vshll.u32 %v2993, 16
      %v3100 = vrot.slane %v3098, 5
      %v3101 = vsel %vm1114, %v3096, %v3100
      %v3103 = vshrl.u32 %v2994, 16
      %v3105 = vrot.slane %v3103, 4
      %v3106 = vshll.u32 %v2994, 16
      %v3108 = vrot.slane %v3106, 5
      %v3109 = vor.u32 %v3105, %v3108
      %v3110 = vrot.slane %v3109, 4
      %v3112 = vshll.u32 %v2995, 16
      %v3114 = vrot.slane %v3112, 5
      %v3115 = vsel %vm1114, %v3110, %v3114
      %v3116 = vshrl.u32 %v2995, 16
      %v3118 = vrot.slane %v3116, 4
      %v3119 = vor.u32 %v3118, %v3114
      %v3120 = vrot.slane %v3119, 4
      %v3122 = vshll.u32 %v2996, 16
      %v3124 = vrot.slane %v3122, 5
      %v3125 = vsel %vm1114, %v3120, %v3124
      %v3127 = vshrl.u32 %v2997, 16
      %v3129 = vrot.slane %v3127, 4
      %v3130 = vshll.u32 %v2997, 16
      %v3132 = vrot.slane %v3130, 5
      %v3133 = vor.u32 %v3129, %v3132
      %v3134 = vrot.slane %v3133, 4
      %v3136 = vshll.u32 %v2998, 16
      %v3138 = vrot.slane %v3136, 5
      %v3139 = vsel %vm1114, %v3134, %v3138
      %v3140 = vshrl.u32 %v2998, 16
      %v3142 = vrot.slane %v3140, 4
      %v3143 = vor.u32 %v3142, %v3138
      %v3144 = vrot.slane %v3143, 4
      %v3146 = vshll.u32 %v2999, 16
      %v3148 = vrot.slane %v3146, 5
      %v3149 = vsel %vm1114, %v3144, %v3148
      %v3151 = vshrl.u32 %v3000, 16
      %v3153 = vrot.slane %v3151, 4
      %v3154 = vshll.u32 %v3000, 16
      %v3156 = vrot.slane %v3154, 5
      %v3157 = vor.u32 %v3153, %v3156
      %v3158 = vrot.slane %v3157, 4
      %v3160 = vshll.u32 %v3001, 16
      %v3162 = vrot.slane %v3160, 5
      %v3163 = vsel %vm1114, %v3158, %v3162
      %v3164 = vshrl.u32 %v3001, 16
      %v3166 = vrot.slane %v3164, 4
      %v3167 = vor.u32 %v3166, %v3162
      %v3168 = vrot.slane %v3167, 4
      %v3170 = vshll.u32 %v3002, 16
      %v3172 = vrot.slane %v3170, 5
      %v3173 = vsel %vm1114, %v3168, %v3172
      %v3175 = vshrl.u32 %v3003, 16
      %v3177 = vrot.slane %v3175, 4
      %v3178 = vshll.u32 %v3003, 16
      %v3180 = vrot.slane %v3178, 5
      %v3181 = vor.u32 %v3177, %v3180
      %v3182 = vrot.slane %v3181, 4
      %v3184 = vshll.u32 %v3004, 16
      %v3186 = vrot.slane %v3184, 5
      %v3187 = vsel %vm1114, %v3182, %v3186
      %v3188 = vshrl.u32 %v3004, 16
      %v3190 = vrot.slane %v3188, 4
      %v3191 = vor.u32 %v3190, %v3186
      %v3192 = vrot.slane %v3191, 4
      %v3194 = vshll.u32 %v3005, 16
      %v3196 = vrot.slane %v3194, 5
      %v3197 = vsel %vm1114, %v3192, %v3196
      %3198 = vrot.lane.b32.xlu0 %v3019, 4
      %v3199 = vpop.permute.xlu0 %3198
      %3200 = vrot.lane.b32.xlu0 %v3029, 4
      %v3201 = vpop.permute.xlu0 %3200
      %3202 = vrot.lane.b32.xlu0 %v3043, 4
      %v3203 = vpop.permute.xlu0 %3202
      %3204 = vrot.lane.b32.xlu0 %v3053, 4
      %v3205 = vpop.permute.xlu0 %3204
      %3206 = vrot.lane.b32.xlu0 %v3067, 4
      %v3207 = vpop.permute.xlu0 %3206
      %3208 = vrot.lane.b32.xlu0 %v3077, 4
      %v3209 = vpop.permute.xlu0 %3208
      %3210 = vrot.lane.b32.xlu0 %v3091, 4
      %v3211 = vpop.permute.xlu0 %3210
      %3212 = vrot.lane.b32.xlu0 %v3101, 4
      %v3213 = vpop.permute.xlu0 %3212
      %3214 = vrot.lane.b32.xlu0 %v3115, 4
      %v3215 = vpop.permute.xlu0 %3214
      %3216 = vrot.lane.b32.xlu0 %v3125, 4
      %v3217 = vpop.permute.xlu0 %3216
      %3218 = vrot.lane.b32.xlu0 %v3139, 4
      %v3219 = vpop.permute.xlu0 %3218
      %3220 = vrot.lane.b32.xlu0 %v3149, 4
      %v3221 = vpop.permute.xlu0 %3220
      %3222 = vrot.lane.b32.xlu0 %v3163, 4
      %v3223 = vpop.permute.xlu0 %3222
      %3224 = vrot.lane.b32.xlu0 %v3173, 4
      %v3225 = vpop.permute.xlu0 %3224
      %3226 = vrot.lane.b32.xlu0 %v3187, 4
      %v3227 = vpop.permute.xlu0 %3226
      %3228 = vrot.lane.b32.xlu0 %v3197, 4
      %v3229 = vpop.permute.xlu0 %3228
      %3246 = vst.msk [vmem:[#allocation3] sm:$0xf] %vm1355, %v3199
      %3247 = vst.msk [vmem:[#allocation3 + $0x4] sm:$0xf] %vm1355, %v3201
      %3248 = vst.msk [vmem:[#allocation3 + $0x8] sm:$0xf] %vm1355, %v3203
      %3249 = vst.msk [vmem:[#allocation3 + $0xc] sm:$0xf] %vm1355, %v3205
      %3250 = vst.msk [vmem:[#allocation3 + $0x10] sm:$0xf] %vm1355, %v3207
      %3251 = vst.msk [vmem:[#allocation3 + $0x14] sm:$0xf] %vm1355, %v3209
      %3252 = vst.msk [vmem:[#allocation3 + $0x18] sm:$0xf] %vm1355, %v3211
      %3253 = vst.msk [vmem:[#allocation3 + $0x1c] sm:$0xf] %vm1355, %v3213
      %3254 = vst.msk [vmem:[#allocation3 + $0x20] sm:$0xf] %vm1355, %v3215
      %3255 = vst.msk [vmem:[#allocation3 + $0x24] sm:$0xf] %vm1355, %v3217
      %3256 = vst.msk [vmem:[#allocation3 + $0x28] sm:$0xf] %vm1355, %v3219
      %3257 = vst.msk [vmem:[#allocation3 + $0x2c] sm:$0xf] %vm1355, %v3221
      %3258 = vst.msk [vmem:[#allocation3 + $0x30] sm:$0xf] %vm1355, %v3223
      %3259 = vst.msk [vmem:[#allocation3 + $0x34] sm:$0xf] %vm1355, %v3225
      %3260 = vst.msk [vmem:[#allocation3 + $0x38] sm:$0xf] %vm1355, %v3227
      %3261 = vst.msk [vmem:[#allocation3 + $0x3c] sm:$0xf] %vm1355, %v3229
      %v3262 = vld [vmem:[%s2949] sm:$0xe]
      %v3263 = vld [vmem:[%s2949 + $0x4] sm:$0xf]
      %v3264 = vld [vmem:[%s2949 + $0x8] sm:$0x1]
      %v3265 = vld [vmem:[%s2949 + $0xc] sm:$0xe]
      %v3266 = vld [vmem:[%s2949 + $0x10] sm:$0xf]
      %v3267 = vld [vmem:[%s2949 + $0x14] sm:$0x1]
      %v3268 = vld [vmem:[%s2949 + $0x18] sm:$0xe]
      %v3269 = vld [vmem:[%s2949 + $0x1c] sm:$0xf]
      %v3270 = vld [vmem:[%s2949 + $0x20] sm:$0x1]
      %v3271 = vld [vmem:[%s2949 + $0x24] sm:$0xe]
      %v3272 = vld [vmem:[%s2949 + $0x28] sm:$0xf]
      %v3273 = vld [vmem:[%s2949 + $0x2c] sm:$0x1]
      %v3274 = vld [vmem:[%s2949 + $0x30] sm:$0xe]
      %v3275 = vld [vmem:[%s2949 + $0x34] sm:$0xf]
      %v3276 = vld [vmem:[%s2949 + $0x38] sm:$0x1]
      %v3277 = vld [vmem:[%s2949 + $0x3c] sm:$0xe]
      %v3278 = vld [vmem:[%s2949 + $0x40] sm:$0xf]
      %v3279 = vld [vmem:[%s2949 + $0x44] sm:$0x1]
      %v3280 = vld [vmem:[%s2949 + $0x48] sm:$0xe]
      %v3281 = vld [vmem:[%s2949 + $0x4c] sm:$0xf]
      %v3282 = vld [vmem:[%s2949 + $0x50] sm:$0x1]
      %v3283 = vld [vmem:[%s2949 + $0x54] sm:$0xe]
      %v3284 = vld [vmem:[%s2949 + $0x58] sm:$0xf]
      %v3285 = vld [vmem:[%s2949 + $0x5c] sm:$0x1]
      %v3310 = vrot.slane %v3262, 5
      %v3311 = vrot.slane %v3310, 4
      %v3312 = vrot.slane %v3263, 5
      %v3313 = vsel %vm1422, %v3311, %v3312
      %v3314 = vrot.slane %v3312, 4
      %v3315 = vrot.slane %v3264, 5
      %v3316 = vsel %vm1422, %v3314, %v3315
      %v3317 = vrot.slane %v3265, 5
      %v3318 = vrot.slane %v3317, 4
      %v3319 = vrot.slane %v3266, 5
      %v3320 = vsel %vm1422, %v3318, %v3319
      %v3321 = vrot.slane %v3319, 4
      %v3322 = vrot.slane %v3267, 5
      %v3323 = vsel %vm1422, %v3321, %v3322
      %v3324 = vrot.slane %v3268, 5
      %v3325 = vrot.slane %v3324, 4
      %v3326 = vrot.slane %v3269, 5
      %v3327 = vsel %vm1422, %v3325, %v3326
      %v3328 = vrot.slane %v3326, 4
      %v3329 = vrot.slane %v3270, 5
      %v3330 = vsel %vm1422, %v3328, %v3329
      %v3331 = vrot.slane %v3271, 5
      %v3332 = vrot.slane %v3331, 4
      %v3333 = vrot.slane %v3272, 5
      %v3334 = vsel %vm1422, %v3332, %v3333
      %v3335 = vrot.slane %v3333, 4
      %v3336 = vrot.slane %v3273, 5
      %v3337 = vsel %vm1422, %v3335, %v3336
      %v3338 = vrot.slane %v3274, 5
      %v3339 = vrot.slane %v3338, 4
      %v3340 = vrot.slane %v3275, 5
      %v3341 = vsel %vm1422, %v3339, %v3340
      %v3342 = vrot.slane %v3340, 4
      %v3343 = vrot.slane %v3276, 5
      %v3344 = vsel %vm1422, %v3342, %v3343
      %v3345 = vrot.slane %v3277, 5
      %v3346 = vrot.slane %v3345, 4
      %v3347 = vrot.slane %v3278, 5
      %v3348 = vsel %vm1422, %v3346, %v3347
      %v3349 = vrot.slane %v3347, 4
      %v3350 = vrot.slane %v3279, 5
      %v3351 = vsel %vm1422, %v3349, %v3350
      %v3352 = vrot.slane %v3280, 5
      %v3353 = vrot.slane %v3352, 4
      %v3354 = vrot.slane %v3281, 5
      %v3355 = vsel %vm1422, %v3353, %v3354
      %v3356 = vrot.slane %v3354, 4
      %v3357 = vrot.slane %v3282, 5
      %v3358 = vsel %vm1422, %v3356, %v3357
      %v3359 = vrot.slane %v3283, 5
      %v3360 = vrot.slane %v3359, 4
      %v3361 = vrot.slane %v3284, 5
      %v3362 = vsel %vm1422, %v3360, %v3361
      %v3363 = vrot.slane %v3361, 4
      %v3364 = vrot.slane %v3285, 5
      %v3365 = vsel %vm1422, %v3363, %v3364
      %3366 = vrot.lane.b32.xlu0 %v3313, 8
      %v3367 = vpop.permute.xlu0 %3366
      %3368 = vrot.lane.b32.xlu0 %v3316, 8
      %v3369 = vpop.permute.xlu0 %3368
      %3370 = vrot.lane.b32.xlu0 %v3320, 8
      %v3371 = vpop.permute.xlu0 %3370
      %3372 = vrot.lane.b32.xlu0 %v3323, 8
      %v3373 = vpop.permute.xlu0 %3372
      %3374 = vrot.lane.b32.xlu0 %v3327, 8
      %v3375 = vpop.permute.xlu0 %3374
      %3376 = vrot.lane.b32.xlu0 %v3330, 8
      %v3377 = vpop.permute.xlu0 %3376
      %3378 = vrot.lane.b32.xlu0 %v3334, 8
      %v3379 = vpop.permute.xlu0 %3378
      %3380 = vrot.lane.b32.xlu0 %v3337, 8
      %v3381 = vpop.permute.xlu0 %3380
      %3382 = vrot.lane.b32.xlu0 %v3341, 8
      %v3383 = vpop.permute.xlu0 %3382
      %3384 = vrot.lane.b32.xlu0 %v3344, 8
      %v3385 = vpop.permute.xlu0 %3384
      %3386 = vrot.lane.b32.xlu0 %v3348, 8
      %v3387 = vpop.permute.xlu0 %3386
      %3388 = vrot.lane.b32.xlu0 %v3351, 8
      %v3389 = vpop.permute.xlu0 %3388
      %3390 = vrot.lane.b32.xlu0 %v3355, 8
      %v3391 = vpop.permute.xlu0 %3390
      %3392 = vrot.lane.b32.xlu0 %v3358, 8
      %v3393 = vpop.permute.xlu0 %3392
      %3394 = vrot.lane.b32.xlu0 %v3362, 8
      %v3395 = vpop.permute.xlu0 %3394
      %3396 = vrot.lane.b32.xlu0 %v3365, 8
      %v3397 = vpop.permute.xlu0 %3396
      %3414 = vst.msk [vmem:[#allocation3] sm:$0xf] %vm1527, %v3367
      %3415 = vst.msk [vmem:[#allocation3 + $0x4] sm:$0xf] %vm1527, %v3369
      %3416 = vst.msk [vmem:[#allocation3 + $0x8] sm:$0xf] %vm1527, %v3371
      %3417 = vst.msk [vmem:[#allocation3 + $0xc] sm:$0xf] %vm1527, %v3373
      %3418 = vst.msk [vmem:[#allocation3 + $0x10] sm:$0xf] %vm1527, %v3375
      %3419 = vst.msk [vmem:[#allocation3 + $0x14] sm:$0xf] %vm1527, %v3377
      %3420 = vst.msk [vmem:[#allocation3 + $0x18] sm:$0xf] %vm1527, %v3379
      %3421 = vst.msk [vmem:[#allocation3 + $0x1c] sm:$0xf] %vm1527, %v3381
      %3422 = vst.msk [vmem:[#allocation3 + $0x20] sm:$0xf] %vm1527, %v3383
      %3423 = vst.msk [vmem:[#allocation3 + $0x24] sm:$0xf] %vm1527, %v3385
      %3424 = vst.msk [vmem:[#allocation3 + $0x28] sm:$0xf] %vm1527, %v3387
      %3425 = vst.msk [vmem:[#allocation3 + $0x2c] sm:$0xf] %vm1527, %v3389
      %3426 = vst.msk [vmem:[#allocation3 + $0x30] sm:$0xf] %vm1527, %v3391
      %3427 = vst.msk [vmem:[#allocation3 + $0x34] sm:$0xf] %vm1527, %v3393
      %3428 = vst.msk [vmem:[#allocation3 + $0x38] sm:$0xf] %vm1527, %v3395
      %3429 = vst.msk [vmem:[#allocation3 + $0x3c] sm:$0xf] %vm1527, %v3397
      %v3430 = vld [vmem:[%s687] sm:$0xf]
      %v3431 = vld [vmem:[%s687 + $0x4] sm:$0xf]
      %v3432 = vld [vmem:[%s687 + $0xc] sm:$0xf]
      %v3433 = vld [vmem:[%s687 + $0x10] sm:$0xf]
      %v3434 = vld [vmem:[%s687 + $0x18] sm:$0xf]
      %v3435 = vld [vmem:[%s687 + $0x1c] sm:$0xf]
      %v3436 = vld [vmem:[%s687 + $0x24] sm:$0xf]
      %v3437 = vld [vmem:[%s687 + $0x28] sm:$0xf]
      %v3438 = vld [vmem:[%s687 + $0x30] sm:$0xf]
      %v3439 = vld [vmem:[%s687 + $0x34] sm:$0xf]
      %v3440 = vld [vmem:[%s687 + $0x3c] sm:$0xf]
      %v3441 = vld [vmem:[%s687 + $0x40] sm:$0xf]
      %v3442 = vld [vmem:[%s687 + $0x48] sm:$0xf]
      %v3443 = vld [vmem:[%s687 + $0x4c] sm:$0xf]
      %v3444 = vld [vmem:[%s687 + $0x54] sm:$0xf]
      %v3445 = vld [vmem:[%s687 + $0x58] sm:$0xf]
      %3462 = vrot.lane.b32.xlu0 %v3430, 12
      %v3463 = vpop.permute.xlu0 %3462
      %3464 = vrot.lane.b32.xlu0 %v3431, 12
      %v3465 = vpop.permute.xlu0 %3464
      %3466 = vrot.lane.b32.xlu0 %v3432, 12
      %v3467 = vpop.permute.xlu0 %3466
      %3468 = vrot.lane.b32.xlu0 %v3433, 12
      %v3469 = vpop.permute.xlu0 %3468
      %3470 = vrot.lane.b32.xlu0 %v3434, 12
      %v3471 = vpop.permute.xlu0 %3470
      %3472 = vrot.lane.b32.xlu0 %v3435, 12
      %v3473 = vpop.permute.xlu0 %3472
      %3474 = vrot.lane.b32.xlu0 %v3436, 12
      %v3475 = vpop.permute.xlu0 %3474
      %3476 = vrot.lane.b32.xlu0 %v3437, 12
      %v3477 = vpop.permute.xlu0 %3476
      %3478 = vrot.lane.b32.xlu0 %v3438, 12
      %v3479 = vpop.permute.xlu0 %3478
      %3480 = vrot.lane.b32.xlu0 %v3439, 12
      %v3481 = vpop.permute.xlu0 %3480
      %3482 = vrot.lane.b32.xlu0 %v3440, 12
      %v3483 = vpop.permute.xlu0 %3482
      %3484 = vrot.lane.b32.xlu0 %v3441, 12
      %v3485 = vpop.permute.xlu0 %3484
      %3486 = vrot.lane.b32.xlu0 %v3442, 12
      %v3487 = vpop.permute.xlu0 %3486
      %3488 = vrot.lane.b32.xlu0 %v3443, 12
      %v3489 = vpop.permute.xlu0 %3488
      %3490 = vrot.lane.b32.xlu0 %v3444, 12
      %v3491 = vpop.permute.xlu0 %3490
      %3492 = vrot.lane.b32.xlu0 %v3445, 12
      %v3493 = vpop.permute.xlu0 %3492
      %3510 = vst.msk [vmem:[#allocation3] sm:$0xf] %vm1624, %v3463
      %3511 = vst.msk [vmem:[#allocation3 + $0x4] sm:$0xf] %vm1624, %v3465
      %3512 = vst.msk [vmem:[#allocation3 + $0x8] sm:$0xf] %vm1624, %v3467
      %3513 = vst.msk [vmem:[#allocation3 + $0xc] sm:$0xf] %vm1624, %v3469
      %3514 = vst.msk [vmem:[#allocation3 + $0x10] sm:$0xf] %vm1624, %v3471
      %3515 = vst.msk [vmem:[#allocation3 + $0x14] sm:$0xf] %vm1624, %v3473
      %3516 = vst.msk [vmem:[#allocation3 + $0x18] sm:$0xf] %vm1624, %v3475
      %3517 = vst.msk [vmem:[#allocation3 + $0x1c] sm:$0xf] %vm1624, %v3477
      %3518 = vst.msk [vmem:[#allocation3 + $0x20] sm:$0xf] %vm1624, %v3479
      %3519 = vst.msk [vmem:[#allocation3 + $0x24] sm:$0xf] %vm1624, %v3481
      %3520 = vst.msk [vmem:[#allocation3 + $0x28] sm:$0xf] %vm1624, %v3483
      %3521 = vst.msk [vmem:[#allocation3 + $0x2c] sm:$0xf] %vm1624, %v3485
      %3522 = vst.msk [vmem:[#allocation3 + $0x30] sm:$0xf] %vm1624, %v3487
      %3523 = vst.msk [vmem:[#allocation3 + $0x34] sm:$0xf] %vm1624, %v3489
      %3524 = vst.msk [vmem:[#allocation3 + $0x38] sm:$0xf] %vm1624, %v3491
      %3525 = vst.msk [vmem:[#allocation3 + $0x3c] sm:$0xf] %vm1624, %v3493
      %v3526 = vld [vmem:[%s687] sm:$0xf]
      %v3527 = vld [vmem:[%s687 + $0x4] sm:$0xf]
      %v3528 = vld [vmem:[%s687 + $0x8] sm:$0x1]
      %v3529 = vld [vmem:[%s687 + $0xc] sm:$0xf]
      %v3530 = vld [vmem:[%s687 + $0x10] sm:$0xf]
      %v3531 = vld [vmem:[%s687 + $0x14] sm:$0x1]
      %v3532 = vld [vmem:[%s687 + $0x18] sm:$0xf]
      %v3533 = vld [vmem:[%s687 + $0x1c] sm:$0xf]
      %v3534 = vld [vmem:[%s687 + $0x20] sm:$0x1]
      %v3535 = vld [vmem:[%s687 + $0x24] sm:$0xf]
      %v3536 = vld [vmem:[%s687 + $0x28] sm:$0xf]
      %v3537 = vld [vmem:[%s687 + $0x2c] sm:$0x1]
      %v3538 = vld [vmem:[%s687 + $0x30] sm:$0xf]
      %v3539 = vld [vmem:[%s687 + $0x34] sm:$0xf]
      %v3540 = vld [vmem:[%s687 + $0x38] sm:$0x1]
      %v3541 = vld [vmem:[%s687 + $0x3c] sm:$0xf]
      %v3542 = vld [vmem:[%s687 + $0x40] sm:$0xf]
      %v3543 = vld [vmem:[%s687 + $0x44] sm:$0x1]
      %v3544 = vld [vmem:[%s687 + $0x48] sm:$0xf]
      %v3545 = vld [vmem:[%s687 + $0x4c] sm:$0xf]
      %v3546 = vld [vmem:[%s687 + $0x50] sm:$0x1]
      %v3547 = vld [vmem:[%s687 + $0x54] sm:$0xf]
      %v3548 = vld [vmem:[%s687 + $0x58] sm:$0xf]
      %v3549 = vld [vmem:[%s687 + $0x5c] sm:$0x1]
      %v3551 = vshrl.u32 %v3526, 16
      %v3553 = vrot.slane %v3551, 4
      %v3554 = vshll.u32 %v3526, 16
      %v3556 = vrot.slane %v3554, 5
      %v3557 = vor.u32 %v3553, %v3556
      %v3558 = vrot.slane %v3557, 4
      %v3560 = vshll.u32 %v3527, 16
      %v3562 = vrot.slane %v3560, 5
      %v3563 = vsel %vm1114, %v3558, %v3562
      %v3564 = vshrl.u32 %v3527, 16
      %v3566 = vrot.slane %v3564, 4
      %v3567 = vor.u32 %v3566, %v3562
      %v3568 = vrot.slane %v3567, 4
      %v3570 = vshll.u32 %v3528, 16
      %v3572 = vrot.slane %v3570, 5
      %v3573 = vsel %vm1114, %v3568, %v3572
      %v3575 = vshrl.u32 %v3529, 16
      %v3577 = vrot.slane %v3575, 4
      %v3578 = vshll.u32 %v3529, 16
      %v3580 = vrot.slane %v3578, 5
      %v3581 = vor.u32 %v3577, %v3580
      %v3582 = vrot.slane %v3581, 4
      %v3584 = vshll.u32 %v3530, 16
      %v3586 = vrot.slane %v3584, 5
      %v3587 = vsel %vm1114, %v3582, %v3586
      %v3588 = vshrl.u32 %v3530, 16
      %v3590 = vrot.slane %v3588, 4
      %v3591 = vor.u32 %v3590, %v3586
      %v3592 = vrot.slane %v3591, 4
      %v3594 = vshll.u32 %v3531, 16
      %v3596 = vrot.slane %v3594, 5
      %v3597 = vsel %vm1114, %v3592, %v3596
      %v3599 = vshrl.u32 %v3532, 16
      %v3601 = vrot.slane %v3599, 4
      %v3602 = vshll.u32 %v3532, 16
      %v3604 = vrot.slane %v3602, 5
      %v3605 = vor.u32 %v3601, %v3604
      %v3606 = vrot.slane %v3605, 4
      %v3608 = vshll.u32 %v3533, 16
      %v3610 = vrot.slane %v3608, 5
      %v3611 = vsel %vm1114, %v3606, %v3610
      %v3612 = vshrl.u32 %v3533, 16
      %v3614 = vrot.slane %v3612, 4
      %v3615 = vor.u32 %v3614, %v3610
      %v3616 = vrot.slane %v3615, 4
      %v3618 = vshll.u32 %v3534, 16
      %v3620 = vrot.slane %v3618, 5
      %v3621 = vsel %vm1114, %v3616, %v3620
      %v3623 = vshrl.u32 %v3535, 16
      %v3625 = vrot.slane %v3623, 4
      %v3626 = vshll.u32 %v3535, 16
      %v3628 = vrot.slane %v3626, 5
      %v3629 = vor.u32 %v3625, %v3628
      %v3630 = vrot.slane %v3629, 4
      %v3632 = vshll.u32 %v3536, 16
      %v3634 = vrot.slane %v3632, 5
      %v3635 = vsel %vm1114, %v3630, %v3634
      %v3636 = vshrl.u32 %v3536, 16
      %v3638 = vrot.slane %v3636, 4
      %v3639 = vor.u32 %v3638, %v3634
      %v3640 = vrot.slane %v3639, 4
      %v3642 = vshll.u32 %v3537, 16
      %v3644 = vrot.slane %v3642, 5
      %v3645 = vsel %vm1114, %v3640, %v3644
      %v3647 = vshrl.u32 %v3538, 16
      %v3649 = vrot.slane %v3647, 4
      %v3650 = vshll.u32 %v3538, 16
      %v3652 = vrot.slane %v3650, 5
      %v3653 = vor.u32 %v3649, %v3652
      %v3654 = vrot.slane %v3653, 4
      %v3656 = vshll.u32 %v3539, 16
      %v3658 = vrot.slane %v3656, 5
      %v3659 = vsel %vm1114, %v3654, %v3658
      %v3660 = vshrl.u32 %v3539, 16
      %v3662 = vrot.slane %v3660, 4
      %v3663 = vor.u32 %v3662, %v3658
      %v3664 = vrot.slane %v3663, 4
      %v3666 = vshll.u32 %v3540, 16
      %v3668 = vrot.slane %v3666, 5
      %v3669 = vsel %vm1114, %v3664, %v3668
      %v3671 = vshrl.u32 %v3541, 16
      %v3673 = vrot.slane %v3671, 4
      %v3674 = vshll.u32 %v3541, 16
      %v3676 = vrot.slane %v3674, 5
      %v3677 = vor.u32 %v3673, %v3676
      %v3678 = vrot.slane %v3677, 4
      %v3680 = vshll.u32 %v3542, 16
      %v3682 = vrot.slane %v3680, 5
      %v3683 = vsel %vm1114, %v3678, %v3682
      %v3684 = vshrl.u32 %v3542, 16
      %v3686 = vrot.slane %v3684, 4
      %v3687 = vor.u32 %v3686, %v3682
      %v3688 = vrot.slane %v3687, 4
      %v3690 = vshll.u32 %v3543, 16
      %v3692 = vrot.slane %v3690, 5
      %v3693 = vsel %vm1114, %v3688, %v3692
      %v3695 = vshrl.u32 %v3544, 16
      %v3697 = vrot.slane %v3695, 4
      %v3698 = vshll.u32 %v3544, 16
      %v3700 = vrot.slane %v3698, 5
      %v3701 = vor.u32 %v3697, %v3700
      %v3702 = vrot.slane %v3701, 4
      %v3704 = vshll.u32 %v3545, 16
      %v3706 = vrot.slane %v3704, 5
      %v3707 = vsel %vm1114, %v3702, %v3706
      %v3708 = vshrl.u32 %v3545, 16
      %v3710 = vrot.slane %v3708, 4
      %v3711 = vor.u32 %v3710, %v3706
      %v3712 = vrot.slane %v3711, 4
      %v3714 = vshll.u32 %v3546, 16
      %v3716 = vrot.slane %v3714, 5
      %v3717 = vsel %vm1114, %v3712, %v3716
      %v3719 = vshrl.u32 %v3547, 16
      %v3721 = vrot.slane %v3719, 4
      %v3722 = vshll.u32 %v3547, 16
      %v3724 = vrot.slane %v3722, 5
      %v3725 = vor.u32 %v3721, %v3724
      %v3726 = vrot.slane %v3725, 4
      %v3728 = vshll.u32 %v3548, 16
      %v3730 = vrot.slane %v3728, 5
      %v3731 = vsel %vm1114, %v3726, %v3730
      %v3732 = vshrl.u32 %v3548, 16
      %v3734 = vrot.slane %v3732, 4
      %v3735 = vor.u32 %v3734, %v3730
      %v3736 = vrot.slane %v3735, 4
      %v3738 = vshll.u32 %v3549, 16
      %v3740 = vrot.slane %v3738, 5
      %v3741 = vsel %vm1114, %v3736, %v3740
      %3742 = vrot.lane.b32.xlu0 %v3563, 16
      %v3743 = vpop.permute.xlu0 %3742
      %3744 = vrot.lane.b32.xlu0 %v3573, 16
      %v3745 = vpop.permute.xlu0 %3744
      %3746 = vrot.lane.b32.xlu0 %v3587, 16
      %v3747 = vpop.permute.xlu0 %3746
      %3748 = vrot.lane.b32.xlu0 %v3597, 16
      %v3749 = vpop.permute.xlu0 %3748
      %3750 = vrot.lane.b32.xlu0 %v3611, 16
      %v3751 = vpop.permute.xlu0 %3750
      %3752 = vrot.lane.b32.xlu0 %v3621, 16
      %v3753 = vpop.permute.xlu0 %3752
      %3754 = vrot.lane.b32.xlu0 %v3635, 16
      %v3755 = vpop.permute.xlu0 %3754
      %3756 = vrot.lane.b32.xlu0 %v3645, 16
      %v3757 = vpop.permute.xlu0 %3756
      %3758 = vrot.lane.b32.xlu0 %v3659, 16
      %v3759 = vpop.permute.xlu0 %3758
      %3760 = vrot.lane.b32.xlu0 %v3669, 16
      %v3761 = vpop.permute.xlu0 %3760
      %3762 = vrot.lane.b32.xlu0 %v3683, 16
      %v3763 = vpop.permute.xlu0 %3762
      %3764 = vrot.lane.b32.xlu0 %v3693, 16
      %v3765 = vpop.permute.xlu0 %3764
      %3766 = vrot.lane.b32.xlu0 %v3707, 16
      %v3767 = vpop.permute.xlu0 %3766
      %3768 = vrot.lane.b32.xlu0 %v3717, 16
      %v3769 = vpop.permute.xlu0 %3768
      %3770 = vrot.lane.b32.xlu0 %v3731, 16
      %v3771 = vpop.permute.xlu0 %3770
      %3772 = vrot.lane.b32.xlu0 %v3741, 16
      %v3773 = vpop.permute.xlu0 %3772
      %3790 = vst.msk [vmem:[#allocation3] sm:$0xf] %vm1905, %v3743
      %3791 = vst.msk [vmem:[#allocation3 + $0x4] sm:$0xf] %vm1905, %v3745
      %3792 = vst.msk [vmem:[#allocation3 + $0x8] sm:$0xf] %vm1905, %v3747
      %3793 = vst.msk [vmem:[#allocation3 + $0xc] sm:$0xf] %vm1905, %v3749
      %3794 = vst.msk [vmem:[#allocation3 + $0x10] sm:$0xf] %vm1905, %v3751
      %3795 = vst.msk [vmem:[#allocation3 + $0x14] sm:$0xf] %vm1905, %v3753
      %3796 = vst.msk [vmem:[#allocation3 + $0x18] sm:$0xf] %vm1905, %v3755
      %3797 = vst.msk [vmem:[#allocation3 + $0x1c] sm:$0xf] %vm1905, %v3757
      %3798 = vst.msk [vmem:[#allocation3 + $0x20] sm:$0xf] %vm1905, %v3759
      %3799 = vst.msk [vmem:[#allocation3 + $0x24] sm:$0xf] %vm1905, %v3761
      %3800 = vst.msk [vmem:[#allocation3 + $0x28] sm:$0xf] %vm1905, %v3763
      %3801 = vst.msk [vmem:[#allocation3 + $0x2c] sm:$0xf] %vm1905, %v3765
      %3802 = vst.msk [vmem:[#allocation3 + $0x30] sm:$0xf] %vm1905, %v3767
      %3803 = vst.msk [vmem:[#allocation3 + $0x34] sm:$0xf] %vm1905, %v3769
      %3804 = vst.msk [vmem:[#allocation3 + $0x38] sm:$0xf] %vm1905, %v3771
      %3805 = vst.msk [vmem:[#allocation3 + $0x3c] sm:$0xf] %vm1905, %v3773
      %v3806 = vld [vmem:[%s687] sm:$0xe]
      %v3807 = vld [vmem:[%s687 + $0x4] sm:$0xf]
      %v3808 = vld [vmem:[%s687 + $0x8] sm:$0x1]
      %v3809 = vld [vmem:[%s687 + $0xc] sm:$0xe]
      %v3810 = vld [vmem:[%s687 + $0x10] sm:$0xf]
      %v3811 = vld [vmem:[%s687 + $0x14] sm:$0x1]
      %v3812 = vld [vmem:[%s687 + $0x18] sm:$0xe]
      %v3813 = vld [vmem:[%s687 + $0x1c] sm:$0xf]
      %v3814 = vld [vmem:[%s687 + $0x20] sm:$0x1]
      %v3815 = vld [vmem:[%s687 + $0x24] sm:$0xe]
      %v3816 = vld [vmem:[%s687 + $0x28] sm:$0xf]
      %v3817 = vld [vmem:[%s687 + $0x2c] sm:$0x1]
      %v3818 = vld [vmem:[%s687 + $0x30] sm:$0xe]
      %v3819 = vld [vmem:[%s687 + $0x34] sm:$0xf]
      %v3820 = vld [vmem:[%s687 + $0x38] sm:$0x1]
      %v3821 = vld [vmem:[%s687 + $0x3c] sm:$0xe]
      %v3822 = vld [vmem:[%s687 + $0x40] sm:$0xf]
      %v3823 = vld [vmem:[%s687 + $0x44] sm:$0x1]
      %v3824 = vld [vmem:[%s687 + $0x48] sm:$0xe]
      %v3825 = vld [vmem:[%s687 + $0x4c] sm:$0xf]
      %v3826 = vld [vmem:[%s687 + $0x50] sm:$0x1]
      %v3827 = vld [vmem:[%s687 + $0x54] sm:$0xe]
      %v3828 = vld [vmem:[%s687 + $0x58] sm:$0xf]
      %v3829 = vld [vmem:[%s687 + $0x5c] sm:$0x1]
      %v3854 = vrot.slane %v3806, 5
      %v3855 = vrot.slane %v3854, 4
      %v3856 = vrot.slane %v3807, 5
      %v3857 = vsel %vm1422, %v3855, %v3856
      %v3858 = vrot.slane %v3856, 4
      %v3859 = vrot.slane %v3808, 5
      %v3860 = vsel %vm1422, %v3858, %v3859
      %v3861 = vrot.slane %v3809, 5
      %v3862 = vrot.slane %v3861, 4
      %v3863 = vrot.slane %v3810, 5
      %v3864 = vsel %vm1422, %v3862, %v3863
      %v3865 = vrot.slane %v3863, 4
      %v3866 = vrot.slane %v3811, 5
      %v3867 = vsel %vm1422, %v3865, %v3866
      %v3868 = vrot.slane %v3812, 5
      %v3869 = vrot.slane %v3868, 4
      %v3870 = vrot.slane %v3813, 5
      %v3871 = vsel %vm1422, %v3869, %v3870
      %v3872 = vrot.slane %v3870, 4
      %v3873 = vrot.slane %v3814, 5
      %v3874 = vsel %vm1422, %v3872, %v3873
      %v3875 = vrot.slane %v3815, 5
      %v3876 = vrot.slane %v3875, 4
      %v3877 = vrot.slane %v3816, 5
      %v3878 = vsel %vm1422, %v3876, %v3877
      %v3879 = vrot.slane %v3877, 4
      %v3880 = vrot.slane %v3817, 5
      %v3881 = vsel %vm1422, %v3879, %v3880
      %v3882 = vrot.slane %v3818, 5
      %v3883 = vrot.slane %v3882, 4
      %v3884 = vrot.slane %v3819, 5
      %v3885 = vsel %vm1422, %v3883, %v3884
      %v3886 = vrot.slane %v3884, 4
      %v3887 = vrot.slane %v3820, 5
      %v3888 = vsel %vm1422, %v3886, %v3887
      %v3889 = vrot.slane %v3821, 5
      %v3890 = vrot.slane %v3889, 4
      %v3891 = vrot.slane %v3822, 5
      %v3892 = vsel %vm1422, %v3890, %v3891
      %v3893 = vrot.slane %v3891, 4
      %v3894 = vrot.slane %v3823, 5
      %v3895 = vsel %vm1422, %v3893, %v3894
      %v3896 = vrot.slane %v3824, 5
      %v3897 = vrot.slane %v3896, 4
      %v3898 = vrot.slane %v3825, 5
      %v3899 = vsel %vm1422, %v3897, %v3898
      %v3900 = vrot.slane %v3898, 4
      %v3901 = vrot.slane %v3826, 5
      %v3902 = vsel %vm1422, %v3900, %v3901
      %v3903 = vrot.slane %v3827, 5
      %v3904 = vrot.slane %v3903, 4
      %v3905 = vrot.slane %v3828, 5
      %v3906 = vsel %vm1422, %v3904, %v3905
      %v3907 = vrot.slane %v3905, 4
      %v3908 = vrot.slane %v3829, 5
      %v3909 = vsel %vm1422, %v3907, %v3908
      %3910 = vrot.lane.b32.xlu0 %v3857, 20
      %v3911 = vpop.permute.xlu0 %3910
      %3912 = vrot.lane.b32.xlu0 %v3860, 20
      %v3913 = vpop.permute.xlu0 %3912
      %3914 = vrot.lane.b32.xlu0 %v3864, 20
      %v3915 = vpop.permute.xlu0 %3914
      %3916 = vrot.lane.b32.xlu0 %v3867, 20
      %v3917 = vpop.permute.xlu0 %3916
      %3918 = vrot.lane.b32.xlu0 %v3871, 20
      %v3919 = vpop.permute.xlu0 %3918
      %3920 = vrot.lane.b32.xlu0 %v3874, 20
      %v3921 = vpop.permute.xlu0 %3920
      %3922 = vrot.lane.b32.xlu0 %v3878, 20
      %v3923 = vpop.permute.xlu0 %3922
      %3924 = vrot.lane.b32.xlu0 %v3881, 20
      %v3925 = vpop.permute.xlu0 %3924
      %3926 = vrot.lane.b32.xlu0 %v3885, 20
      %v3927 = vpop.permute.xlu0 %3926
      %3928 = vrot.lane.b32.xlu0 %v3888, 20
      %v3929 = vpop.permute.xlu0 %3928
      %3930 = vrot.lane.b32.xlu0 %v3892, 20
      %v3931 = vpop.permute.xlu0 %3930
      %3932 = vrot.lane.b32.xlu0 %v3895, 20
      %v3933 = vpop.permute.xlu0 %3932
      %3934 = vrot.lane.b32.xlu0 %v3899, 20
      %v3935 = vpop.permute.xlu0 %3934
      %3936 = vrot.lane.b32.xlu0 %v3902, 20
      %v3937 = vpop.permute.xlu0 %3936
      %3938 = vrot.lane.b32.xlu0 %v3906, 20
      %v3939 = vpop.permute.xlu0 %3938
      %3940 = vrot.lane.b32.xlu0 %v3909, 20
      %v3941 = vpop.permute.xlu0 %3940
      %3958 = vst.msk [vmem:[#allocation3] sm:$0xf] %vm2074, %v3911
      %3959 = vst.msk [vmem:[#allocation3 + $0x4] sm:$0xf] %vm2074, %v3913
      %3960 = vst.msk [vmem:[#allocation3 + $0x8] sm:$0xf] %vm2074, %v3915
      %3961 = vst.msk [vmem:[#allocation3 + $0xc] sm:$0xf] %vm2074, %v3917
      %3962 = vst.msk [vmem:[#allocation3 + $0x10] sm:$0xf] %vm2074, %v3919
      %3963 = vst.msk [vmem:[#allocation3 + $0x14] sm:$0xf] %vm2074, %v3921
      %3964 = vst.msk [vmem:[#allocation3 + $0x18] sm:$0xf] %vm2074, %v3923
      %3965 = vst.msk [vmem:[#allocation3 + $0x1c] sm:$0xf] %vm2074, %v3925
      %3966 = vst.msk [vmem:[#allocation3 + $0x20] sm:$0xf] %vm2074, %v3927
      %3967 = vst.msk [vmem:[#allocation3 + $0x24] sm:$0xf] %vm2074, %v3929
      %3968 = vst.msk [vmem:[#allocation3 + $0x28] sm:$0xf] %vm2074, %v3931
      %3969 = vst.msk [vmem:[#allocation3 + $0x2c] sm:$0xf] %vm2074, %v3933
      %3970 = vst.msk [vmem:[#allocation3 + $0x30] sm:$0xf] %vm2074, %v3935
      %3971 = vst.msk [vmem:[#allocation3 + $0x34] sm:$0xf] %vm2074, %v3937
      %3972 = vst.msk [vmem:[#allocation3 + $0x38] sm:$0xf] %vm2074, %v3939
      %3973 = vst.msk [vmem:[#allocation3 + $0x3c] sm:$0xf] %vm2074, %v3941
      %s3974 = scalar_lea.vmem [#allocation2], 120
      %v3975 = vld [vmem:[%s3974] sm:$0xf]
      %v3976 = vld [vmem:[%s3974 + $0x4] sm:$0xf]
      %v3977 = vld [vmem:[%s3974 + $0xc] sm:$0xf]
      %v3978 = vld [vmem:[%s3974 + $0x10] sm:$0xf]
      %v3979 = vld [vmem:[%s3974 + $0x18] sm:$0xf]
      %v3980 = vld [vmem:[%s3974 + $0x1c] sm:$0xf]
      %v3981 = vld [vmem:[%s3974 + $0x24] sm:$0xf]
      %v3982 = vld [vmem:[%s3974 + $0x28] sm:$0xf]
      %v3983 = vld [vmem:[%s3974 + $0x30] sm:$0xf]
      %v3984 = vld [vmem:[%s3974 + $0x34] sm:$0xf]
      %v3985 = vld [vmem:[%s3974 + $0x3c] sm:$0xf]
      %v3986 = vld [vmem:[%s3974 + $0x40] sm:$0xf]
      %v3987 = vld [vmem:[%s3974 + $0x48] sm:$0xf]
      %v3988 = vld [vmem:[%s3974 + $0x4c] sm:$0xf]
      %v3989 = vld [vmem:[%s3974 + $0x54] sm:$0xf]
      %v3990 = vld [vmem:[%s3974 + $0x58] sm:$0xf]
      %4007 = vrot.lane.b32.xlu0 %v3975, 24
      %v4008 = vpop.permute.xlu0 %4007
      %4009 = vrot.lane.b32.xlu0 %v3976, 24
      %v4010 = vpop.permute.xlu0 %4009
      %4011 = vrot.lane.b32.xlu0 %v3977, 24
      %v4012 = vpop.permute.xlu0 %4011
      %4013 = vrot.lane.b32.xlu0 %v3978, 24
      %v4014 = vpop.permute.xlu0 %4013
      %4015 = vrot.lane.b32.xlu0 %v3979, 24
      %v4016 = vpop.permute.xlu0 %4015
      %4017 = vrot.lane.b32.xlu0 %v3980, 24
      %v4018 = vpop.permute.xlu0 %4017
      %4019 = vrot.lane.b32.xlu0 %v3981, 24
      %v4020 = vpop.permute.xlu0 %4019
      %4021 = vrot.lane.b32.xlu0 %v3982, 24
      %v4022 = vpop.permute.xlu0 %4021
      %4023 = vrot.lane.b32.xlu0 %v3983, 24
      %v4024 = vpop.permute.xlu0 %4023
      %4025 = vrot.lane.b32.xlu0 %v3984, 24
      %v4026 = vpop.permute.xlu0 %4025
      %4027 = vrot.lane.b32.xlu0 %v3985, 24
      %v4028 = vpop.permute.xlu0 %4027
      %4029 = vrot.lane.b32.xlu0 %v3986, 24
      %v4030 = vpop.permute.xlu0 %4029
      %4031 = vrot.lane.b32.xlu0 %v3987, 24
      %v4032 = vpop.permute.xlu0 %4031
      %4033 = vrot.lane.b32.xlu0 %v3988, 24
      %v4034 = vpop.permute.xlu0 %4033
      %4035 = vrot.lane.b32.xlu0 %v3989, 24
      %v4036 = vpop.permute.xlu0 %4035
      %4037 = vrot.lane.b32.xlu0 %v3990, 24
      %v4038 = vpop.permute.xlu0 %4037
      %4055 = vst.msk [vmem:[#allocation3] sm:$0xf] %vm2171, %v4008
      %4056 = vst.msk [vmem:[#allocation3 + $0x4] sm:$0xf] %vm2171, %v4010
      %4057 = vst.msk [vmem:[#allocation3 + $0x8] sm:$0xf] %vm2171, %v4012
      %4058 = vst.msk [vmem:[#allocation3 + $0xc] sm:$0xf] %vm2171, %v4014
      %4059 = vst.msk [vmem:[#allocation3 + $0x10] sm:$0xf] %vm2171, %v4016
      %4060 = vst.msk [vmem:[#allocation3 + $0x14] sm:$0xf] %vm2171, %v4018
      %4061 = vst.msk [vmem:[#allocation3 + $0x18] sm:$0xf] %vm2171, %v4020
      %4062 = vst.msk [vmem:[#allocation3 + $0x1c] sm:$0xf] %vm2171, %v4022
      %4063 = vst.msk [vmem:[#allocation3 + $0x20] sm:$0xf] %vm2171, %v4024
      %4064 = vst.msk [vmem:[#allocation3 + $0x24] sm:$0xf] %vm2171, %v4026
      %4065 = vst.msk [vmem:[#allocation3 + $0x28] sm:$0xf] %vm2171, %v4028
      %4066 = vst.msk [vmem:[#allocation3 + $0x2c] sm:$0xf] %vm2171, %v4030
      %4067 = vst.msk [vmem:[#allocation3 + $0x30] sm:$0xf] %vm2171, %v4032
      %4068 = vst.msk [vmem:[#allocation3 + $0x34] sm:$0xf] %vm2171, %v4034
      %4069 = vst.msk [vmem:[#allocation3 + $0x38] sm:$0xf] %vm2171, %v4036
      %4070 = vst.msk [vmem:[#allocation3 + $0x3c] sm:$0xf] %vm2171, %v4038
      %v4071 = vld [vmem:[%s3974] sm:$0xf]
      %v4072 = vld [vmem:[%s3974 + $0x4] sm:$0xf]
      %v4073 = vld [vmem:[%s3974 + $0x8] sm:$0x1]
      %v4074 = vld [vmem:[%s3974 + $0xc] sm:$0xf]
      %v4075 = vld [vmem:[%s3974 + $0x10] sm:$0xf]
      %v4076 = vld [vmem:[%s3974 + $0x14] sm:$0x1]
      %v4077 = vld [vmem:[%s3974 + $0x18] sm:$0xf]
      %v4078 = vld [vmem:[%s3974 + $0x1c] sm:$0xf]
      %v4079 = vld [vmem:[%s3974 + $0x20] sm:$0x1]
      %v4080 = vld [vmem:[%s3974 + $0x24] sm:$0xf]
      %v4081 = vld [vmem:[%s3974 + $0x28] sm:$0xf]
      %v4082 = vld [vmem:[%s3974 + $0x2c] sm:$0x1]
      %v4083 = vld [vmem:[%s3974 + $0x30] sm:$0xf]
      %v4084 = vld [vmem:[%s3974 + $0x34] sm:$0xf]
      %v4085 = vld [vmem:[%s3974 + $0x38] sm:$0x1]
      %v4086 = vld [vmem:[%s3974 + $0x3c] sm:$0xf]
      %v4087 = vld [vmem:[%s3974 + $0x40] sm:$0xf]
      %v4088 = vld [vmem:[%s3974 + $0x44] sm:$0x1]
      %v4089 = vld [vmem:[%s3974 + $0x48] sm:$0xf]
      %v4090 = vld [vmem:[%s3974 + $0x4c] sm:$0xf]
      %v4091 = vld [vmem:[%s3974 + $0x50] sm:$0x1]
      %v4092 = vld [vmem:[%s3974 + $0x54] sm:$0xf]
      %v4093 = vld [vmem:[%s3974 + $0x58] sm:$0xf]
      %v4094 = vld [vmem:[%s3974 + $0x5c] sm:$0x1]
      %v4096 = vshrl.u32 %v4071, 16
      %v4098 = vrot.slane %v4096, 4
      %v4099 = vshll.u32 %v4071, 16
      %v4101 = vrot.slane %v4099, 5
      %v4102 = vor.u32 %v4098, %v4101
      %v4103 = vrot.slane %v4102, 4
      %v4105 = vshll.u32 %v4072, 16
      %v4107 = vrot.slane %v4105, 5
      %v4108 = vsel %vm1114, %v4103, %v4107
      %v4109 = vshrl.u32 %v4072, 16
      %v4111 = vrot.slane %v4109, 4
      %v4112 = vor.u32 %v4111, %v4107
      %v4113 = vrot.slane %v4112, 4
      %v4115 = vshll.u32 %v4073, 16
      %v4117 = vrot.slane %v4115, 5
      %v4118 = vsel %vm1114, %v4113, %v4117
      %v4120 = vshrl.u32 %v4074, 16
      %v4122 = vrot.slane %v4120, 4
      %v4123 = vshll.u32 %v4074, 16
      %v4125 = vrot.slane %v4123, 5
      %v4126 = vor.u32 %v4122, %v4125
      %v4127 = vrot.slane %v4126, 4
      %v4129 = vshll.u32 %v4075, 16
      %v4131 = vrot.slane %v4129, 5
      %v4132 = vsel %vm1114, %v4127, %v4131
      %v4133 = vshrl.u32 %v4075, 16
      %v4135 = vrot.slane %v4133, 4
      %v4136 = vor.u32 %v4135, %v4131
      %v4137 = vrot.slane %v4136, 4
      %v4139 = vshll.u32 %v4076, 16
      %v4141 = vrot.slane %v4139, 5
      %v4142 = vsel %vm1114, %v4137, %v4141
      %v4144 = vshrl.u32 %v4077, 16
      %v4146 = vrot.slane %v4144, 4
      %v4147 = vshll.u32 %v4077, 16
      %v4149 = vrot.slane %v4147, 5
      %v4150 = vor.u32 %v4146, %v4149
      %v4151 = vrot.slane %v4150, 4
      %v4153 = vshll.u32 %v4078, 16
      %v4155 = vrot.slane %v4153, 5
      %v4156 = vsel %vm1114, %v4151, %v4155
      %v4157 = vshrl.u32 %v4078, 16
      %v4159 = vrot.slane %v4157, 4
      %v4160 = vor.u32 %v4159, %v4155
      %v4161 = vrot.slane %v4160, 4
      %v4163 = vshll.u32 %v4079, 16
      %v4165 = vrot.slane %v4163, 5
      %v4166 = vsel %vm1114, %v4161, %v4165
      %v4168 = vshrl.u32 %v4080, 16
      %v4170 = vrot.slane %v4168, 4
      %v4171 = vshll.u32 %v4080, 16
      %v4173 = vrot.slane %v4171, 5
      %v4174 = vor.u32 %v4170, %v4173
      %v4175 = vrot.slane %v4174, 4
      %v4177 = vshll.u32 %v4081, 16
      %v4179 = vrot.slane %v4177, 5
      %v4180 = vsel %vm1114, %v4175, %v4179
      %v4181 = vshrl.u32 %v4081, 16
      %v4183 = vrot.slane %v4181, 4
      %v4184 = vor.u32 %v4183, %v4179
      %v4185 = vrot.slane %v4184, 4
      %v4187 = vshll.u32 %v4082, 16
      %v4189 = vrot.slane %v4187, 5
      %v4190 = vsel %vm1114, %v4185, %v4189
      %v4192 = vshrl.u32 %v4083, 16
      %v4194 = vrot.slane %v4192, 4
      %v4195 = vshll.u32 %v4083, 16
      %v4197 = vrot.slane %v4195, 5
      %v4198 = vor.u32 %v4194, %v4197
      %v4199 = vrot.slane %v4198, 4
      %v4201 = vshll.u32 %v4084, 16
      %v4203 = vrot.slane %v4201, 5
      %v4204 = vsel %vm1114, %v4199, %v4203
      %v4205 = vshrl.u32 %v4084, 16
      %v4207 = vrot.slane %v4205, 4
      %v4208 = vor.u32 %v4207, %v4203
      %v4209 = vrot.slane %v4208, 4
      %v4211 = vshll.u32 %v4085, 16
      %v4213 = vrot.slane %v4211, 5
      %v4214 = vsel %vm1114, %v4209, %v4213
      %v4216 = vshrl.u32 %v4086, 16
      %v4218 = vrot.slane %v4216, 4
      %v4219 = vshll.u32 %v4086, 16
      %v4221 = vrot.slane %v4219, 5
      %v4222 = vor.u32 %v4218, %v4221
      %v4223 = vrot.slane %v4222, 4
      %v4225 = vshll.u32 %v4087, 16
      %v4227 = vrot.slane %v4225, 5
      %v4228 = vsel %vm1114, %v4223, %v4227
      %v4229 = vshrl.u32 %v4087, 16
      %v4231 = vrot.slane %v4229, 4
      %v4232 = vor.u32 %v4231, %v4227
      %v4233 = vrot.slane %v4232, 4
      %v4235 = vshll.u32 %v4088, 16
      %v4237 = vrot.slane %v4235, 5
      %v4238 = vsel %vm1114, %v4233, %v4237
      %v4240 = vshrl.u32 %v4089, 16
      %v4242 = vrot.slane %v4240, 4
      %v4243 = vshll.u32 %v4089, 16
      %v4245 = vrot.slane %v4243, 5
      %v4246 = vor.u32 %v4242, %v4245
      %v4247 = vrot.slane %v4246, 4
      %v4249 = vshll.u32 %v4090, 16
      %v4251 = vrot.slane %v4249, 5
      %v4252 = vsel %vm1114, %v4247, %v4251
      %v4253 = vshrl.u32 %v4090, 16
      %v4255 = vrot.slane %v4253, 4
      %v4256 = vor.u32 %v4255, %v4251
      %v4257 = vrot.slane %v4256, 4
      %v4259 = vshll.u32 %v4091, 16
      %v4261 = vrot.slane %v4259, 5
      %v4262 = vsel %vm1114, %v4257, %v4261
      %v4264 = vshrl.u32 %v4092, 16
      %v4266 = vrot.slane %v4264, 4
      %v4267 = vshll.u32 %v4092, 16
      %v4269 = vrot.slane %v4267, 5
      %v4270 = vor.u32 %v4266, %v4269
      %v4271 = vrot.slane %v4270, 4
      %v4273 = vshll.u32 %v4093, 16
      %v4275 = vrot.slane %v4273, 5
      %v4276 = vsel %vm1114, %v4271, %v4275
      %v4277 = vshrl.u32 %v4093, 16
      %v4279 = vrot.slane %v4277, 4
      %v4280 = vor.u32 %v4279, %v4275
      %v4281 = vrot.slane %v4280, 4
      %v4283 = vshll.u32 %v4094, 16
      %v4285 = vrot.slane %v4283, 5
      %v4286 = vsel %vm1114, %v4281, %v4285
      %4287 = vrot.lane.b32.xlu0 %v4108, 28
      %v4288 = vpop.permute.xlu0 %4287
      %4289 = vrot.lane.b32.xlu0 %v4118, 28
      %v4290 = vpop.permute.xlu0 %4289
      %4291 = vrot.lane.b32.xlu0 %v4132, 28
      %v4292 = vpop.permute.xlu0 %4291
      %4293 = vrot.lane.b32.xlu0 %v4142, 28
      %v4294 = vpop.permute.xlu0 %4293
      %4295 = vrot.lane.b32.xlu0 %v4156, 28
      %v4296 = vpop.permute.xlu0 %4295
      %4297 = vrot.lane.b32.xlu0 %v4166, 28
      %v4298 = vpop.permute.xlu0 %4297
      %4299 = vrot.lane.b32.xlu0 %v4180, 28
      %v4300 = vpop.permute.xlu0 %4299
      %4301 = vrot.lane.b32.xlu0 %v4190, 28
      %v4302 = vpop.permute.xlu0 %4301
      %4303 = vrot.lane.b32.xlu0 %v4204, 28
      %v4304 = vpop.permute.xlu0 %4303
      %4305 = vrot.lane.b32.xlu0 %v4214, 28
      %v4306 = vpop.permute.xlu0 %4305
      %4307 = vrot.lane.b32.xlu0 %v4228, 28
      %v4308 = vpop.permute.xlu0 %4307
      %4309 = vrot.lane.b32.xlu0 %v4238, 28
      %v4310 = vpop.permute.xlu0 %4309
      %4311 = vrot.lane.b32.xlu0 %v4252, 28
      %v4312 = vpop.permute.xlu0 %4311
      %4313 = vrot.lane.b32.xlu0 %v4262, 28
      %v4314 = vpop.permute.xlu0 %4313
      %4315 = vrot.lane.b32.xlu0 %v4276, 28
      %v4316 = vpop.permute.xlu0 %4315
      %4317 = vrot.lane.b32.xlu0 %v4286, 28
      %v4318 = vpop.permute.xlu0 %4317
      %4335 = vst.msk [vmem:[#allocation3] sm:$0xf] %vm2452, %v4288
      %4336 = vst.msk [vmem:[#allocation3 + $0x4] sm:$0xf] %vm2452, %v4290
      %4337 = vst.msk [vmem:[#allocation3 + $0x8] sm:$0xf] %vm2452, %v4292
      %4338 = vst.msk [vmem:[#allocation3 + $0xc] sm:$0xf] %vm2452, %v4294
      %4339 = vst.msk [vmem:[#allocation3 + $0x10] sm:$0xf] %vm2452, %v4296
      %4340 = vst.msk [vmem:[#allocation3 + $0x14] sm:$0xf] %vm2452, %v4298
      %4341 = vst.msk [vmem:[#allocation3 + $0x18] sm:$0xf] %vm2452, %v4300
      %4342 = vst.msk [vmem:[#allocation3 + $0x1c] sm:$0xf] %vm2452, %v4302
      %4343 = vst.msk [vmem:[#allocation3 + $0x20] sm:$0xf] %vm2452, %v4304
      %4344 = vst.msk [vmem:[#allocation3 + $0x24] sm:$0xf] %vm2452, %v4306
      %4345 = vst.msk [vmem:[#allocation3 + $0x28] sm:$0xf] %vm2452, %v4308
      %4346 = vst.msk [vmem:[#allocation3 + $0x2c] sm:$0xf] %vm2452, %v4310
      %4347 = vst.msk [vmem:[#allocation3 + $0x30] sm:$0xf] %vm2452, %v4312
      %4348 = vst.msk [vmem:[#allocation3 + $0x34] sm:$0xf] %vm2452, %v4314
      %4349 = vst.msk [vmem:[#allocation3 + $0x38] sm:$0xf] %vm2452, %v4316
      %4350 = vst.msk [vmem:[#allocation3 + $0x3c] sm:$0xf] %vm2452, %v4318
      %v4351 = vld [vmem:[%s3974] sm:$0xe]
      %v4352 = vld [vmem:[%s3974 + $0x4] sm:$0xf]
      %v4353 = vld [vmem:[%s3974 + $0x8] sm:$0x1]
      %v4354 = vld [vmem:[%s3974 + $0xc] sm:$0xe]
      %v4355 = vld [vmem:[%s3974 + $0x10] sm:$0xf]
      %v4356 = vld [vmem:[%s3974 + $0x14] sm:$0x1]
      %v4357 = vld [vmem:[%s3974 + $0x18] sm:$0xe]
      %v4358 = vld [vmem:[%s3974 + $0x1c] sm:$0xf]
      %v4359 = vld [vmem:[%s3974 + $0x20] sm:$0x1]
      %v4360 = vld [vmem:[%s3974 + $0x24] sm:$0xe]
      %v4361 = vld [vmem:[%s3974 + $0x28] sm:$0xf]
      %v4362 = vld [vmem:[%s3974 + $0x2c] sm:$0x1]
      %v4363 = vld [vmem:[%s3974 + $0x30] sm:$0xe]
      %v4364 = vld [vmem:[%s3974 + $0x34] sm:$0xf]
      %v4365 = vld [vmem:[%s3974 + $0x38] sm:$0x1]
      %v4366 = vld [vmem:[%s3974 + $0x3c] sm:$0xe]
      %v4367 = vld [vmem:[%s3974 + $0x40] sm:$0xf]
      %v4368 = vld [vmem:[%s3974 + $0x44] sm:$0x1]
      %v4369 = vld [vmem:[%s3974 + $0x48] sm:$0xe]
      %v4370 = vld [vmem:[%s3974 + $0x4c] sm:$0xf]
      %v4371 = vld [vmem:[%s3974 + $0x50] sm:$0x1]
      %v4372 = vld [vmem:[%s3974 + $0x54] sm:$0xe]
      %v4373 = vld [vmem:[%s3974 + $0x58] sm:$0xf]
      %v4374 = vld [vmem:[%s3974 + $0x5c] sm:$0x1]
      %v4399 = vrot.slane %v4351, 5
      %v4400 = vrot.slane %v4399, 4
      %v4401 = vrot.slane %v4352, 5
      %v4402 = vsel %vm1422, %v4400, %v4401
      %v4403 = vrot.slane %v4401, 4
      %v4404 = vrot.slane %v4353, 5
      %v4405 = vsel %vm1422, %v4403, %v4404
      %v4406 = vrot.slane %v4354, 5
      %v4407 = vrot.slane %v4406, 4
      %v4408 = vrot.slane %v4355, 5
      %v4409 = vsel %vm1422, %v4407, %v4408
      %v4410 = vrot.slane %v4408, 4
      %v4411 = vrot.slane %v4356, 5
      %v4412 = vsel %vm1422, %v4410, %v4411
      %v4413 = vrot.slane %v4357, 5
      %v4414 = vrot.slane %v4413, 4
      %v4415 = vrot.slane %v4358, 5
      %v4416 = vsel %vm1422, %v4414, %v4415
      %v4417 = vrot.slane %v4415, 4
      %v4418 = vrot.slane %v4359, 5
      %v4419 = vsel %vm1422, %v4417, %v4418
      %v4420 = vrot.slane %v4360, 5
      %v4421 = vrot.slane %v4420, 4
      %v4422 = vrot.slane %v4361, 5
      %v4423 = vsel %vm1422, %v4421, %v4422
      %v4424 = vrot.slane %v4422, 4
      %v4425 = vrot.slane %v4362, 5
      %v4426 = vsel %vm1422, %v4424, %v4425
      %v4427 = vrot.slane %v4363, 5
      %v4428 = vrot.slane %v4427, 4
      %v4429 = vrot.slane %v4364, 5
      %v4430 = vsel %vm1422, %v4428, %v4429
      %v4431 = vrot.slane %v4429, 4
      %v4432 = vrot.slane %v4365, 5
      %v4433 = vsel %vm1422, %v4431, %v4432
      %v4434 = vrot.slane %v4366, 5
      %v4435 = vrot.slane %v4434, 4
      %v4436 = vrot.slane %v4367, 5
      %v4437 = vsel %vm1422, %v4435, %v4436
      %v4438 = vrot.slane %v4436, 4
      %v4439 = vrot.slane %v4368, 5
      %v4440 = vsel %vm1422, %v4438, %v4439
      %v4441 = vrot.slane %v4369, 5
      %v4442 = vrot.slane %v4441, 4
      %v4443 = vrot.slane %v4370, 5
      %v4444 = vsel %vm1422, %v4442, %v4443
      %v4445 = vrot.slane %v4443, 4
      %v4446 = vrot.slane %v4371, 5
      %v4447 = vsel %vm1422, %v4445, %v4446
      %v4448 = vrot.slane %v4372, 5
      %v4449 = vrot.slane %v4448, 4
      %v4450 = vrot.slane %v4373, 5
      %v4451 = vsel %vm1422, %v4449, %v4450
      %v4452 = vrot.slane %v4450, 4
      %v4453 = vrot.slane %v4374, 5
      %v4454 = vsel %vm1422, %v4452, %v4453
      %4455 = vrot.lane.b32.xlu0 %v4402, 32
      %v4456 = vpop.permute.xlu0 %4455
      %4457 = vrot.lane.b32.xlu0 %v4405, 32
      %v4458 = vpop.permute.xlu0 %4457
      %4459 = vrot.lane.b32.xlu0 %v4409, 32
      %v4460 = vpop.permute.xlu0 %4459
      %4461 = vrot.lane.b32.xlu0 %v4412, 32
      %v4462 = vpop.permute.xlu0 %4461
      %4463 = vrot.lane.b32.xlu0 %v4416, 32
      %v4464 = vpop.permute.xlu0 %4463
      %4465 = vrot.lane.b32.xlu0 %v4419, 32
      %v4466 = vpop.permute.xlu0 %4465
      %4467 = vrot.lane.b32.xlu0 %v4423, 32
      %v4468 = vpop.permute.xlu0 %4467
      %4469 = vrot.lane.b32.xlu0 %v4426, 32
      %v4470 = vpop.permute.xlu0 %4469
      %4471 = vrot.lane.b32.xlu0 %v4430, 32
      %v4472 = vpop.permute.xlu0 %4471
      %4473 = vrot.lane.b32.xlu0 %v4433, 32
      %v4474 = vpop.permute.xlu0 %4473
      %4475 = vrot.lane.b32.xlu0 %v4437, 32
      %v4476 = vpop.permute.xlu0 %4475
      %4477 = vrot.lane.b32.xlu0 %v4440, 32
      %v4478 = vpop.permute.xlu0 %4477
      %4479 = vrot.lane.b32.xlu0 %v4444, 32
      %v4480 = vpop.permute.xlu0 %4479
      %4481 = vrot.lane.b32.xlu0 %v4447, 32
      %v4482 = vpop.permute.xlu0 %4481
      %4483 = vrot.lane.b32.xlu0 %v4451, 32
      %v4484 = vpop.permute.xlu0 %4483
      %4485 = vrot.lane.b32.xlu0 %v4454, 32
      %v4486 = vpop.permute.xlu0 %4485
      %4503 = vst.msk [vmem:[#allocation3] sm:$0xf] %vm2621, %v4456
      %4504 = vst.msk [vmem:[#allocation3 + $0x4] sm:$0xf] %vm2621, %v4458
      %4505 = vst.msk [vmem:[#allocation3 + $0x8] sm:$0xf] %vm2621, %v4460
      %4506 = vst.msk [vmem:[#allocation3 + $0xc] sm:$0xf] %vm2621, %v4462
      %4507 = vst.msk [vmem:[#allocation3 + $0x10] sm:$0xf] %vm2621, %v4464
      %4508 = vst.msk [vmem:[#allocation3 + $0x14] sm:$0xf] %vm2621, %v4466
      %4509 = vst.msk [vmem:[#allocation3 + $0x18] sm:$0xf] %vm2621, %v4468
      %4510 = vst.msk [vmem:[#allocation3 + $0x1c] sm:$0xf] %vm2621, %v4470
      %4511 = vst.msk [vmem:[#allocation3 + $0x20] sm:$0xf] %vm2621, %v4472
      %4512 = vst.msk [vmem:[#allocation3 + $0x24] sm:$0xf] %vm2621, %v4474
      %4513 = vst.msk [vmem:[#allocation3 + $0x28] sm:$0xf] %vm2621, %v4476
      %4514 = vst.msk [vmem:[#allocation3 + $0x2c] sm:$0xf] %vm2621, %v4478
      %4515 = vst.msk [vmem:[#allocation3 + $0x30] sm:$0xf] %vm2621, %v4480
      %4516 = vst.msk [vmem:[#allocation3 + $0x34] sm:$0xf] %vm2621, %v4482
      %4517 = vst.msk [vmem:[#allocation3 + $0x38] sm:$0xf] %vm2621, %v4484
      %4518 = vst.msk [vmem:[#allocation3 + $0x3c] sm:$0xf] %vm2621, %v4486
      %v4519 = vld [vmem:[#allocation3] sm:$0xf]
      %v4520 = vld [vmem:[#allocation3 + $0x4] sm:$0xf]
      %v4521 = vld [vmem:[#allocation3 + $0x8] sm:$0xf]
      %v4522 = vld [vmem:[#allocation3 + $0xc] sm:$0xf]
      %v4523 = vld [vmem:[#allocation3 + $0x10] sm:$0xf]
      %v4524 = vld [vmem:[#allocation3 + $0x14] sm:$0xf]
      %v4525 = vld [vmem:[#allocation3 + $0x18] sm:$0xf]
      %v4526 = vld [vmem:[#allocation3 + $0x1c] sm:$0xf]
      %v4527 = vld [vmem:[#allocation3 + $0x20] sm:$0xf]
      %v4528 = vld [vmem:[#allocation3 + $0x24] sm:$0xf]
      %v4529 = vld [vmem:[#allocation3 + $0x28] sm:$0xf]
      %v4530 = vld [vmem:[#allocation3 + $0x2c] sm:$0xf]
      %v4531 = vld [vmem:[#allocation3 + $0x30] sm:$0xf]
      %v4532 = vld [vmem:[#allocation3 + $0x34] sm:$0xf]
      %v4533 = vld [vmem:[#allocation3 + $0x38] sm:$0xf]
      %v4534 = vld [vmem:[#allocation3 + $0x3c] sm:$0xf]
      %v4535 = vld [vmem:[%s1] sm:$0xf]
      %v4536 = vld [vmem:[%s1 + $0x4] sm:$0xf]
      %v4537 = vld [vmem:[%s1 + $0x8] sm:$0xf]
      %v4538 = vld [vmem:[%s1 + $0xc] sm:$0xf]
      %v4539 = vld [vmem:[%s1 + $0x10] sm:$0x3]
      %v4556 = vunpack.c.l.b16 %v4519
      %v4557 = vunpack.c.l.b16 %v4520
      %v4558 = vunpack.c.l.b16 %v4521
      %v4559 = vunpack.c.l.b16 %v4522
      %v4560 = vunpack.c.l.b16 %v4523
      %v4561 = vunpack.c.l.b16 %v4524
      %v4562 = vunpack.c.l.b16 %v4525
      %v4563 = vunpack.c.l.b16 %v4526
      %v4564 = vunpack.c.l.b16 %v4527
      %v4565 = vunpack.c.l.b16 %v4528
      %v4566 = vunpack.c.l.b16 %v4529
      %v4567 = vunpack.c.l.b16 %v4530
      %v4568 = vunpack.c.l.b16 %v4531
      %v4569 = vunpack.c.l.b16 %v4532
      %v4570 = vunpack.c.l.b16 %v4533
      %v4571 = vunpack.c.l.b16 %v4534
      %v4572 = vpack.c.b16 %v4557, %v4556
      %v4573 = vpack.c.b16 %v4559, %v4558
      %v4574 = vpack.c.b16 %v4561, %v4560
      %v4575 = vpack.c.b16 %v4563, %v4562
      %v4576 = vpack.c.b16 %v4565, %v4564
      %v4577 = vpack.c.b16 %v4567, %v4566
      %v4578 = vpack.c.b16 %v4569, %v4568
      %v4579 = vpack.c.b16 %v4571, %v4570
      %v4585 = vunpack.c.l.b16 %v4535
      %v4586 = vunpack.c.l.b16 %v4536
      %v4587 = vunpack.c.l.b16 %v4537
      %v4588 = vunpack.c.l.b16 %v4538
      %v4589 = vunpack.c.l.b16 %v4539
      %v4590 = vpack.c.b16 %v4586, %v4585
      %v4591 = vpack.c.b16 %v4588, %v4587
      %v4592 = vpack.c.b16 %v4589, %v4589
      %v4596 = vsel %vm2714, %v4572, 0
      %v4599 = vsel %vm2714, %v4573, 0
      %v4602 = vsel %vm2714, %v4574, 0
      %v4605 = vsel %vm2714, %v4575, 0
      %v4608 = vsel %vm2714, %v4576, 0
      %v4611 = vsel %vm2714, %v4577, 0
      %v4614 = vsel %vm2714, %v4578, 0
      %v4617 = vsel %vm2714, %v4579, 0
      %v4620 = vsel %vm2739, %v4592, 0
      %4622 = vmatprep.subr.bf16.mxu0 0
      %4623 = vmatpush1.bf16.msra.mxu0 0
      %4624 = vmatprep.subr.bf16.mxu0 0
      %4625 = vmatpush1.bf16.msra.mxu0 0
      %4626 = vmatprep.subr.bf16.mxu0 0
      %4627 = vmatpush1.bf16.msra.mxu0 0
      %4628 = vmatprep.subr.bf16.mxu0 0
      %4629 = vmatpush1.bf16.msra.mxu0 0
      %4630 = vmatprep.subr.bf16.mxu0 0
      %4631 = vmatpush1.bf16.msra.mxu0 0
      %4632 = vmatprep.subr.bf16.mxu0 0
      %4633 = vmatpush1.bf16.msra.mxu0 %v4620
      %4634 = vmatprep.subr.bf16.mxu0 0
      %4635 = vmatpush1.bf16.msra.mxu0 %v4591
      %4636 = vmatprep.subr.bf16.mxu0 0
      %4637 = vmatpush1.bf16.msra.mxu0 %v4590
      %4638 = vmatprep.subr.bf16.mxu0 0
      %4639 = vmatpush2.bf16.msra.mxu0 0
      %4640 = vmatprep.subr.bf16.mxu0 0
      %4641 = vmatpush2.bf16.msra.mxu0 0
      %4642 = vmatprep.subr.bf16.mxu0 0
      %4643 = vmatpush2.bf16.msra.mxu0 0
      %4644 = vmatprep.subr.bf16.mxu0 0
      %4645 = vmatpush2.bf16.msra.mxu0 0
      %4646 = vmatprep.subr.bf16.mxu0 0
      %4647 = vmatpush2.bf16.msra.mxu0 0
      %4648 = vmatprep.subr.bf16.mxu0 0
      %4649 = vmatpush2.bf16.msra.mxu0 0
      %4650 = vmatprep.subr.bf16.mxu0 0
      %4651 = vmatpush2.bf16.msra.mxu0 0
      %4652 = vmatprep.subr.bf16.mxu0 0
      %4653 = vmatpush2.bf16.msra.mxu0 0
      %4654 = vmatprep.mubr.bf16.mxu0 0
      %4655 = vmatmul.mubr.bf16.gmra.mxu0 %v4596
      %v4656 = vpop.f32.mrf.mxu0
      %v4657 = vadd.f32 0.0, %v4656
      %v4658 = vpop.f32.mrf.mxu0
      %v4659 = vpop.f32.mrf.mxu0
      %v4660 = vadd.f32 0.0, %v4659
      %v4661 = vpop.f32.mrf.mxu0
      %4662 = vmatprep.mubr.bf16.mxu0 0
      %4663 = vmatmul.mubr.bf16.gmra.mxu0 %v4599
      %v4664 = vpop.f32.mrf.mxu0
      %v4665 = vadd.f32 0.0, %v4664
      %v4666 = vpop.f32.mrf.mxu0
      %v4667 = vpop.f32.mrf.mxu0
      %v4668 = vadd.f32 0.0, %v4667
      %v4669 = vpop.f32.mrf.mxu0
      %4670 = vmatprep.mubr.bf16.mxu0 0
      %4671 = vmatmul.mubr.bf16.gmra.mxu0 %v4602
      %v4672 = vpop.f32.mrf.mxu0
      %v4673 = vadd.f32 0.0, %v4672
      %v4674 = vpop.f32.mrf.mxu0
      %v4675 = vpop.f32.mrf.mxu0
      %v4676 = vadd.f32 0.0, %v4675
      %v4677 = vpop.f32.mrf.mxu0
      %4678 = vmatprep.mubr.bf16.mxu0 0
      %4679 = vmatmul.mubr.bf16.gmra.mxu0 %v4605
      %v4680 = vpop.f32.mrf.mxu0
      %v4681 = vadd.f32 0.0, %v4680
      %v4682 = vpop.f32.mrf.mxu0
      %v4683 = vpop.f32.mrf.mxu0
      %v4684 = vadd.f32 0.0, %v4683
      %v4685 = vpop.f32.mrf.mxu0
      %4686 = vmatprep.mubr.bf16.mxu0 0
      %4687 = vmatmul.mubr.bf16.gmra.mxu0 %v4608
      %v4688 = vpop.f32.mrf.mxu0
      %v4689 = vadd.f32 0.0, %v4688
      %v4690 = vpop.f32.mrf.mxu0
      %v4691 = vpop.f32.mrf.mxu0
      %v4692 = vadd.f32 0.0, %v4691
      %v4693 = vpop.f32.mrf.mxu0
      %4694 = vmatprep.mubr.bf16.mxu0 0
      %4695 = vmatmul.mubr.bf16.gmra.mxu0 %v4611
      %v4696 = vpop.f32.mrf.mxu0
      %v4697 = vadd.f32 0.0, %v4696
      %v4698 = vpop.f32.mrf.mxu0
      %v4699 = vpop.f32.mrf.mxu0
      %v4700 = vadd.f32 0.0, %v4699
      %v4701 = vpop.f32.mrf.mxu0
      %4702 = vmatprep.mubr.bf16.mxu0 0
      %4703 = vmatmul.mubr.bf16.gmra.mxu0 %v4614
      %v4704 = vpop.f32.mrf.mxu0
      %v4705 = vadd.f32 0.0, %v4704
      %v4706 = vpop.f32.mrf.mxu0
      %v4707 = vpop.f32.mrf.mxu0
      %v4708 = vadd.f32 0.0, %v4707
      %v4709 = vpop.f32.mrf.mxu0
      %4710 = vmatprep.mubr.bf16.mxu0 0
      %4711 = vmatmul.mubr.bf16.gmra.mxu0 %v4617
      %v4712 = vpop.f32.mrf.mxu0
      %v4713 = vadd.f32 0.0, %v4712
      %v4714 = vpop.f32.mrf.mxu0
      %v4715 = vpop.f32.mrf.mxu0
      %v4716 = vadd.f32 0.0, %v4715
      %v4717 = vpop.f32.mrf.mxu0
      %4718 = vdwg.mxu0
      %4719 = vst.msk [vmem:[#allocation4 + $0x80] sm:$0xff] %vm2840, %v4657
      %4720 = vst.msk [vmem:[#allocation4 + $0x88] sm:$0xff] %vm2840, %v4660
      %4721 = vst.msk [vmem:[#allocation4 + $0x90] sm:$0xff] %vm2840, %v4665
      %4722 = vst.msk [vmem:[#allocation4 + $0x98] sm:$0xff] %vm2840, %v4668
      %4723 = vst.msk [vmem:[#allocation4 + $0xa0] sm:$0xff] %vm2840, %v4673
      %4724 = vst.msk [vmem:[#allocation4 + $0xa8] sm:$0xff] %vm2840, %v4676
      %4725 = vst.msk [vmem:[#allocation4 + $0xb0] sm:$0xff] %vm2840, %v4681
      %4726 = vst.msk [vmem:[#allocation4 + $0xb8] sm:$0xff] %vm2840, %v4684
      %4727 = vst.msk [vmem:[#allocation4 + $0xc0] sm:$0xff] %vm2840, %v4689
      %4728 = vst.msk [vmem:[#allocation4 + $0xc8] sm:$0xff] %vm2840, %v4692
      %4729 = vst.msk [vmem:[#allocation4 + $0xd0] sm:$0xff] %vm2840, %v4697
      %4730 = vst.msk [vmem:[#allocation4 + $0xd8] sm:$0xff] %vm2840, %v4700
      %4731 = vst.msk [vmem:[#allocation4 + $0xe0] sm:$0xff] %vm2840, %v4705
      %4732 = vst.msk [vmem:[#allocation4 + $0xe8] sm:$0xff] %vm2840, %v4708
      %4733 = vst.msk [vmem:[#allocation4 + $0xf0] sm:$0xff] %vm2840, %v4713
      %4734 = vst.msk [vmem:[#allocation4 + $0xf8] sm:$0xff] %vm2840, %v4716
      %v4735 = vsel %vm2840, %v4657, 0.0
      %v4736 = vsel %vm2840, %v4660, 0.0
      %v4737 = vadd.f32 %v4735, %v4736
      %v4738 = vsel %vm2840, %v4665, 0.0
      %v4739 = vadd.f32 %v4737, %v4738
      %v4740 = vsel %vm2840, %v4668, 0.0
      %v4741 = vadd.f32 %v4739, %v4740
      %v4742 = vsel %vm2840, %v4673, 0.0
      %v4743 = vadd.f32 %v4741, %v4742
      %v4744 = vsel %vm2840, %v4676, 0.0
      %v4745 = vadd.f32 %v4743, %v4744
      %v4746 = vsel %vm2840, %v4681, 0.0
      %v4747 = vadd.f32 %v4745, %v4746
      %v4748 = vsel %vm2840, %v4684, 0.0
      %v4749 = vadd.f32 %v4747, %v4748
      %v4750 = vsel %vm2840, %v4689, 0.0
      %v4751 = vadd.f32 %v4749, %v4750
      %v4752 = vsel %vm2840, %v4692, 0.0
      %v4753 = vadd.f32 %v4751, %v4752
      %v4754 = vsel %vm2840, %v4697, 0.0
      %v4755 = vadd.f32 %v4753, %v4754
      %v4756 = vsel %vm2840, %v4700, 0.0
      %v4757 = vadd.f32 %v4755, %v4756
      %v4758 = vsel %vm2840, %v4705, 0.0
      %v4759 = vadd.f32 %v4757, %v4758
      %v4760 = vsel %vm2840, %v4708, 0.0
      %v4761 = vadd.f32 %v4759, %v4760
      %v4762 = vsel %vm2840, %v4713, 0.0
      %v4763 = vadd.f32 %v4761, %v4762
      %v4764 = vsel %vm2840, %v4716, 0.0
      %v4765 = vadd.f32 %v4763, %v4764
      %v4766 = vrot.slane %v4765, 4
      %v4767 = vadd.f32 %v4765, %v4766
      %v4768 = vrot.slane %v4767, 2
      %v4769 = vadd.f32 %v4767, %v4768
      %v4770 = vrot.slane %v4769, 1
      %v4771 = vadd.f32 %v4769, %v4770
      %v4772 = vadd.f32 %v2894, %v4771
      %v4773 = vmul.f32 %v4657, %v4657
      %v4774 = vmul.f32 %v4660, %v4660
      %v4775 = vmul.f32 %v4665, %v4665
      %v4776 = vmul.f32 %v4668, %v4668
      %v4777 = vmul.f32 %v4673, %v4673
      %v4778 = vmul.f32 %v4676, %v4676
      %v4779 = vmul.f32 %v4681, %v4681
      %v4780 = vmul.f32 %v4684, %v4684
      %v4781 = vmul.f32 %v4689, %v4689
      %v4782 = vmul.f32 %v4692, %v4692
      %v4783 = vmul.f32 %v4697, %v4697
      %v4784 = vmul.f32 %v4700, %v4700
      %v4785 = vmul.f32 %v4705, %v4705
      %v4786 = vmul.f32 %v4708, %v4708
      %v4787 = vmul.f32 %v4713, %v4713
      %v4788 = vmul.f32 %v4716, %v4716
      %v4789 = vsel %vm2840, %v4773, 0.0
      %v4790 = vsel %vm2840, %v4774, 0.0
      %v4791 = vadd.f32 %v4789, %v4790
      %v4792 = vsel %vm2840, %v4775, 0.0
      %v4793 = vadd.f32 %v4791, %v4792
      %v4794 = vsel %vm2840, %v4776, 0.0
      %v4795 = vadd.f32 %v4793, %v4794
      %v4796 = vsel %vm2840, %v4777, 0.0
      %v4797 = vadd.f32 %v4795, %v4796
      %v4798 = vsel %vm2840, %v4778, 0.0
      %v4799 = vadd.f32 %v4797, %v4798
      %v4800 = vsel %vm2840, %v4779, 0.0
      %v4801 = vadd.f32 %v4799, %v4800
      %v4802 = vsel %vm2840, %v4780, 0.0
      %v4803 = vadd.f32 %v4801, %v4802
      %v4804 = vsel %vm2840, %v4781, 0.0
      %v4805 = vadd.f32 %v4803, %v4804
      %v4806 = vsel %vm2840, %v4782, 0.0
      %v4807 = vadd.f32 %v4805, %v4806
      %v4808 = vsel %vm2840, %v4783, 0.0
      %v4809 = vadd.f32 %v4807, %v4808
      %v4810 = vsel %vm2840, %v4784, 0.0
      %v4811 = vadd.f32 %v4809, %v4810
      %v4812 = vsel %vm2840, %v4785, 0.0
      %v4813 = vadd.f32 %v4811, %v4812
      %v4814 = vsel %vm2840, %v4786, 0.0
      %v4815 = vadd.f32 %v4813, %v4814
      %v4816 = vsel %vm2840, %v4787, 0.0
      %v4817 = vadd.f32 %v4815, %v4816
      %v4818 = vsel %vm2840, %v4788, 0.0
      %v4819 = vadd.f32 %v4817, %v4818
      %v4820 = vrot.slane %v4819, 4
      %v4821 = vadd.f32 %v4819, %v4820
      %v4822 = vrot.slane %v4821, 2
      %v4823 = vadd.f32 %v4821, %v4822
      %v4824 = vrot.slane %v4823, 1
      %v4825 = vadd.f32 %v4823, %v4824
      %v4826 = vadd.f32 %v2948, %v4825
      %v4827 = vmul.f32 %v4772, 0.00390625
      %v4828 = vmul.f32 %v4826, 0.00390625
      %v4829 = vmul.f32 %v4827, %v4827
      %v4830 = vsub.f32 %v4828, %v4829
      %v4831 = vadd.f32 %v4830, 1e-05
      %v4832 = vrsqrt.pop %v4831
      %v4833 = vld [vmem:[#allocation4] sm:$0xff]
      %v4834 = vld [vmem:[#allocation4 + $0x8] sm:$0xff]
      %v4835 = vld [vmem:[#allocation4 + $0x10] sm:$0xff]
      %v4836 = vld [vmem:[#allocation4 + $0x18] sm:$0xff]
      %v4837 = vld [vmem:[#allocation4 + $0x20] sm:$0xff]
      %v4838 = vld [vmem:[#allocation4 + $0x28] sm:$0xff]
      %v4839 = vld [vmem:[#allocation4 + $0x30] sm:$0xff]
      %v4840 = vld [vmem:[#allocation4 + $0x38] sm:$0xff]
      %v4841 = vld [vmem:[#allocation4 + $0x40] sm:$0xff]
      %v4842 = vld [vmem:[#allocation4 + $0x48] sm:$0xff]
      %v4843 = vld [vmem:[#allocation4 + $0x50] sm:$0xff]
      %v4844 = vld [vmem:[#allocation4 + $0x58] sm:$0xff]
      %v4845 = vld [vmem:[#allocation4 + $0x60] sm:$0xff]
      %v4846 = vld [vmem:[#allocation4 + $0x68] sm:$0xff]
      %v4847 = vld [vmem:[#allocation4 + $0x70] sm:$0xff]
      %v4848 = vld [vmem:[#allocation4 + $0x78] sm:$0xff]
      %v4849 = vsub.f32 %v4833, %v4827
      %v4850 = vsub.f32 %v4834, %v4827
      %v4851 = vsub.f32 %v4835, %v4827
      %v4852 = vsub.f32 %v4836, %v4827
      %v4853 = vsub.f32 %v4837, %v4827
      %v4854 = vsub.f32 %v4838, %v4827
      %v4855 = vsub.f32 %v4839, %v4827
      %v4856 = vsub.f32 %v4840, %v4827
      %v4857 = vsub.f32 %v4841, %v4827
      %v4858 = vsub.f32 %v4842, %v4827
      %v4859 = vsub.f32 %v4843, %v4827
      %v4860 = vsub.f32 %v4844, %v4827
      %v4861 = vsub.f32 %v4845, %v4827
      %v4862 = vsub.f32 %v4846, %v4827
      %v4863 = vsub.f32 %v4847, %v4827
      %v4864 = vsub.f32 %v4848, %v4827
      %v4865 = vmul.f32 %v4849, %v4832
      %v4866 = vmul.f32 %v4850, %v4832
      %v4867 = vmul.f32 %v4851, %v4832
      %v4868 = vmul.f32 %v4852, %v4832
      %v4869 = vmul.f32 %v4853, %v4832
      %v4870 = vmul.f32 %v4854, %v4832
      %v4871 = vmul.f32 %v4855, %v4832
      %v4872 = vmul.f32 %v4856, %v4832
      %v4873 = vmul.f32 %v4857, %v4832
      %v4874 = vmul.f32 %v4858, %v4832
      %v4875 = vmul.f32 %v4859, %v4832
      %v4876 = vmul.f32 %v4860, %v4832
      %v4877 = vmul.f32 %v4861, %v4832
      %v4878 = vmul.f32 %v4862, %v4832
      %v4879 = vmul.f32 %v4863, %v4832
      %v4880 = vmul.f32 %v4864, %v4832
      %v4881 = vmax.f32 %v4865, 0.0
      %v4882 = vmax.f32 %v4866, 0.0
      %v4883 = vmax.f32 %v4867, 0.0
      %v4884 = vmax.f32 %v4868, 0.0
      %v4885 = vmax.f32 %v4869, 0.0
      %v4886 = vmax.f32 %v4870, 0.0
      %v4887 = vmax.f32 %v4871, 0.0
      %v4888 = vmax.f32 %v4872, 0.0
      %v4889 = vmax.f32 %v4873, 0.0
      %v4890 = vmax.f32 %v4874, 0.0
      %v4891 = vmax.f32 %v4875, 0.0
      %v4892 = vmax.f32 %v4876, 0.0
      %v4893 = vmax.f32 %v4877, 0.0
      %v4894 = vmax.f32 %v4878, 0.0
      %v4895 = vmax.f32 %v4879, 0.0
      %v4896 = vmax.f32 %v4880, 0.0
      %v4897 = vpack.c.bf16 %v4882, %v4881
      %v4898 = vpack.c.bf16 %v4884, %v4883
      %v4899 = vpack.c.bf16 %v4886, %v4885
      %v4900 = vpack.c.bf16 %v4888, %v4887
      %v4901 = vpack.c.bf16 %v4890, %v4889
      %v4902 = vpack.c.bf16 %v4892, %v4891
      %v4903 = vpack.c.bf16 %v4894, %v4893
      %v4904 = vpack.c.bf16 %v4896, %v4895
      %v4913 = vunpack.c.l.b16 %v4897
      %v4914 = vunpack.c.h.b16 %v4897
      %v4915 = vunpack.c.l.b16 %v4898
      %v4916 = vunpack.c.h.b16 %v4898
      %v4917 = vunpack.c.l.b16 %v4899
      %v4918 = vunpack.c.h.b16 %v4899
      %v4919 = vunpack.c.l.b16 %v4900
      %v4920 = vunpack.c.h.b16 %v4900
      %v4921 = vunpack.c.l.b16 %v4901
      %v4922 = vunpack.c.h.b16 %v4901
      %v4923 = vunpack.c.l.b16 %v4902
      %v4924 = vunpack.c.h.b16 %v4902
      %v4925 = vunpack.c.l.b16 %v4903
      %v4926 = vunpack.c.h.b16 %v4903
      %v4927 = vunpack.c.l.b16 %v4904
      %v4928 = vunpack.c.h.b16 %v4904
      %v4929 = vpack.c.b16 %v4913, %v4913
      %v4930 = vpack.c.b16 %v4914, %v4914
      %v4931 = vpack.c.b16 %v4915, %v4915
      %v4932 = vpack.c.b16 %v4916, %v4916
      %v4933 = vpack.c.b16 %v4917, %v4917
      %v4934 = vpack.c.b16 %v4918, %v4918
      %v4935 = vpack.c.b16 %v4919, %v4919
      %v4936 = vpack.c.b16 %v4920, %v4920
      %v4937 = vpack.c.b16 %v4921, %v4921
      %v4938 = vpack.c.b16 %v4922, %v4922
      %v4939 = vpack.c.b16 %v4923, %v4923
      %v4940 = vpack.c.b16 %v4924, %v4924
      %v4941 = vpack.c.b16 %v4925, %v4925
      %v4942 = vpack.c.b16 %v4926, %v4926
      %v4943 = vpack.c.b16 %v4927, %v4927
      %v4944 = vpack.c.b16 %v4928, %v4928
      %v4946 = vshrl.u32 %v4929, 16
      %v4948 = vrot.slane %v4946, 7
      %v4949 = vshll.u32 %v4929, 16
      %v4951 = vor.u32 %v4948, %v4949
      %v4952 = vrot.slane %v4948, 4
      %v4954 = vshrl.u32 %v4930, 16
      %v4956 = vrot.slane %v4954, 7
      %v4957 = vshll.u32 %v4930, 16
      %v4959 = vor.u32 %v4956, %v4957
      %v4960 = vsel %vm238, %v4952, %v4959
      %v4961 = vrot.slane %v4956, 4
      %v4963 = vshrl.u32 %v4931, 16
      %v4965 = vrot.slane %v4963, 7
      %v4966 = vshll.u32 %v4931, 16
      %v4968 = vor.u32 %v4965, %v4966
      %v4969 = vrot.slane %v4965, 4
      %v4971 = vshrl.u32 %v4932, 16
      %v4973 = vrot.slane %v4971, 7
      %v4974 = vshll.u32 %v4932, 16
      %v4976 = vor.u32 %v4973, %v4974
      %v4977 = vsel %vm238, %v4969, %v4976
      %v4978 = vrot.slane %v4973, 4
      %v4980 = vshrl.u32 %v4933, 16
      %v4982 = vrot.slane %v4980, 7
      %v4983 = vshll.u32 %v4933, 16
      %v4985 = vor.u32 %v4982, %v4983
      %v4986 = vrot.slane %v4982, 4
      %v4988 = vshrl.u32 %v4934, 16
      %v4990 = vrot.slane %v4988, 7
      %v4991 = vshll.u32 %v4934, 16
      %v4993 = vor.u32 %v4990, %v4991
      %v4994 = vsel %vm238, %v4986, %v4993
      %v4995 = vrot.slane %v4990, 4
      %v4997 = vshrl.u32 %v4935, 16
      %v4999 = vrot.slane %v4997, 7
      %v5000 = vshll.u32 %v4935, 16
      %v5002 = vor.u32 %v4999, %v5000
      %v5003 = vrot.slane %v4999, 4
      %v5005 = vshrl.u32 %v4936, 16
      %v5007 = vrot.slane %v5005, 7
      %v5008 = vshll.u32 %v4936, 16
      %v5010 = vor.u32 %v5007, %v5008
      %v5011 = vsel %vm238, %v5003, %v5010
      %v5012 = vrot.slane %v5007, 4
      %v5014 = vshrl.u32 %v4937, 16
      %v5016 = vrot.slane %v5014, 7
      %v5017 = vshll.u32 %v4937, 16
      %v5019 = vor.u32 %v5016, %v5017
      %v5020 = vrot.slane %v5016, 4
      %v5022 = vshrl.u32 %v4938, 16
      %v5024 = vrot.slane %v5022, 7
      %v5025 = vshll.u32 %v4938, 16
      %v5027 = vor.u32 %v5024, %v5025
      %v5028 = vsel %vm238, %v5020, %v5027
      %v5029 = vrot.slane %v5024, 4
      %v5031 = vshrl.u32 %v4939, 16
      %v5033 = vrot.slane %v5031, 7
      %v5034 = vshll.u32 %v4939, 16
      %v5036 = vor.u32 %v5033, %v5034
      %v5037 = vrot.slane %v5033, 4
      %v5039 = vshrl.u32 %v4940, 16
      %v5041 = vrot.slane %v5039, 7
      %v5042 = vshll.u32 %v4940, 16
      %v5044 = vor.u32 %v5041, %v5042
      %v5045 = vsel %vm238, %v5037, %v5044
      %v5046 = vrot.slane %v5041, 4
      %v5048 = vshrl.u32 %v4941, 16
      %v5050 = vrot.slane %v5048, 7
      %v5051 = vshll.u32 %v4941, 16
      %v5053 = vor.u32 %v5050, %v5051
      %v5054 = vrot.slane %v5050, 4
      %v5056 = vshrl.u32 %v4942, 16
      %v5058 = vrot.slane %v5056, 7
      %v5059 = vshll.u32 %v4942, 16
      %v5061 = vor.u32 %v5058, %v5059
      %v5062 = vsel %vm238, %v5054, %v5061
      %v5063 = vrot.slane %v5058, 4
      %v5065 = vshrl.u32 %v4943, 16
      %v5067 = vrot.slane %v5065, 7
      %v5068 = vshll.u32 %v4943, 16
      %v5070 = vor.u32 %v5067, %v5068
      %v5071 = vrot.slane %v5067, 4
      %v5073 = vshrl.u32 %v4944, 16
      %v5075 = vrot.slane %v5073, 7
      %v5076 = vshll.u32 %v4944, 16
      %v5078 = vor.u32 %v5075, %v5076
      %v5079 = vsel %vm238, %v5071, %v5078
      %v5080 = vrot.slane %v5075, 4
      %v5105 = vld [vmem:[%s399] sm:$0xf]
      %v5106 = vsel %vm402, %v4951, %v5105
      %5107 = vst [vmem:[%s399] sm:$0xf] %v5106
      %5108 = vst.msk [vmem:[%s399 + $0x4] sm:$0xf] %vm406, %v4960
      %v5109 = vld [vmem:[%s399 + $0x8] sm:$0x1]
      %v5110 = vsel %vm409, %v4961, %v5109
      %5111 = vst [vmem:[%s399 + $0x8] sm:$0x1] %v5110
      %v5112 = vld [vmem:[%s399 + $0xc] sm:$0xf]
      %v5113 = vsel %vm402, %v4968, %v5112
      %5114 = vst [vmem:[%s399 + $0xc] sm:$0xf] %v5113
      %5115 = vst.msk [vmem:[%s399 + $0x10] sm:$0xf] %vm406, %v4977
      %v5116 = vld [vmem:[%s399 + $0x14] sm:$0x1]
      %v5117 = vsel %vm409, %v4978, %v5116
      %5118 = vst [vmem:[%s399 + $0x14] sm:$0x1] %v5117
      %v5119 = vld [vmem:[%s399 + $0x18] sm:$0xf]
      %v5120 = vsel %vm402, %v4985, %v5119
      %5121 = vst [vmem:[%s399 + $0x18] sm:$0xf] %v5120
      %5122 = vst.msk [vmem:[%s399 + $0x1c] sm:$0xf] %vm406, %v4994
      %v5123 = vld [vmem:[%s399 + $0x20] sm:$0x1]
      %v5124 = vsel %vm409, %v4995, %v5123
      %5125 = vst [vmem:[%s399 + $0x20] sm:$0x1] %v5124
      %v5126 = vld [vmem:[%s399 + $0x24] sm:$0xf]
      %v5127 = vsel %vm402, %v5002, %v5126
      %5128 = vst [vmem:[%s399 + $0x24] sm:$0xf] %v5127
      %5129 = vst.msk [vmem:[%s399 + $0x28] sm:$0xf] %vm406, %v5011
      %v5130 = vld [vmem:[%s399 + $0x2c] sm:$0x1]
      %v5131 = vsel %vm409, %v5012, %v5130
      %5132 = vst [vmem:[%s399 + $0x2c] sm:$0x1] %v5131
      %v5133 = vld [vmem:[%s399 + $0x30] sm:$0xf]
      %v5134 = vsel %vm402, %v5019, %v5133
      %5135 = vst [vmem:[%s399 + $0x30] sm:$0xf] %v5134
      %5136 = vst.msk [vmem:[%s399 + $0x34] sm:$0xf] %vm406, %v5028
      %v5137 = vld [vmem:[%s399 + $0x38] sm:$0x1]
      %v5138 = vsel %vm409, %v5029, %v5137
      %5139 = vst [vmem:[%s399 + $0x38] sm:$0x1] %v5138
      %v5140 = vld [vmem:[%s399 + $0x3c] sm:$0xf]
      %v5141 = vsel %vm402, %v5036, %v5140
      %5142 = vst [vmem:[%s399 + $0x3c] sm:$0xf] %v5141
      %5143 = vst.msk [vmem:[%s399 + $0x40] sm:$0xf] %vm406, %v5045
      %v5144 = vld [vmem:[%s399 + $0x44] sm:$0x1]
      %v5145 = vsel %vm409, %v5046, %v5144
      %5146 = vst [vmem:[%s399 + $0x44] sm:$0x1] %v5145
      %v5147 = vld [vmem:[%s399 + $0x48] sm:$0xf]
      %v5148 = vsel %vm402, %v5053, %v5147
      %5149 = vst [vmem:[%s399 + $0x48] sm:$0xf] %v5148
      %5150 = vst.msk [vmem:[%s399 + $0x4c] sm:$0xf] %vm406, %v5062
      %v5151 = vld [vmem:[%s399 + $0x50] sm:$0x1]
      %v5152 = vsel %vm409, %v5063, %v5151
      %5153 = vst [vmem:[%s399 + $0x50] sm:$0x1] %v5152
      %v5154 = vld [vmem:[%s399 + $0x54] sm:$0xf]
      %v5155 = vsel %vm402, %v5070, %v5154
      %5156 = vst [vmem:[%s399 + $0x54] sm:$0xf] %v5155
      %5157 = vst.msk [vmem:[%s399 + $0x58] sm:$0xf] %vm406, %v5079
      %v5158 = vld [vmem:[%s399 + $0x5c] sm:$0x1]
      %v5159 = vsel %vm409, %v5080, %v5158
      %5160 = vst [vmem:[%s399 + $0x5c] sm:$0x1] %v5159
      %v5161 = vld [vmem:[#allocation4 + $0x80] sm:$0xff]
      %v5162 = vld [vmem:[#allocation4 + $0x88] sm:$0xff]
      %v5163 = vld [vmem:[#allocation4 + $0x90] sm:$0xff]
      %v5164 = vld [vmem:[#allocation4 + $0x98] sm:$0xff]
      %v5165 = vld [vmem:[#allocation4 + $0xa0] sm:$0xff]
      %v5166 = vld [vmem:[#allocation4 + $0xa8] sm:$0xff]
      %v5167 = vld [vmem:[#allocation4 + $0xb0] sm:$0xff]
      %v5168 = vld [vmem:[#allocation4 + $0xb8] sm:$0xff]
      %v5169 = vld [vmem:[#allocation4 + $0xc0] sm:$0xff]
      %v5170 = vld [vmem:[#allocation4 + $0xc8] sm:$0xff]
      %v5171 = vld [vmem:[#allocation4 + $0xd0] sm:$0xff]
      %v5172 = vld [vmem:[#allocation4 + $0xd8] sm:$0xff]
      %v5173 = vld [vmem:[#allocation4 + $0xe0] sm:$0xff]
      %v5174 = vld [vmem:[#allocation4 + $0xe8] sm:$0xff]
      %v5175 = vld [vmem:[#allocation4 + $0xf0] sm:$0xff]
      %v5176 = vld [vmem:[#allocation4 + $0xf8] sm:$0xff]
      %v5177 = vsub.f32 %v5161, %v4827
      %v5178 = vsub.f32 %v5162, %v4827
      %v5179 = vsub.f32 %v5163, %v4827
      %v5180 = vsub.f32 %v5164, %v4827
      %v5181 = vsub.f32 %v5165, %v4827
      %v5182 = vsub.f32 %v5166, %v4827
      %v5183 = vsub.f32 %v5167, %v4827
      %v5184 = vsub.f32 %v5168, %v4827
      %v5185 = vsub.f32 %v5169, %v4827
      %v5186 = vsub.f32 %v5170, %v4827
      %v5187 = vsub.f32 %v5171, %v4827
      %v5188 = vsub.f32 %v5172, %v4827
      %v5189 = vsub.f32 %v5173, %v4827
      %v5190 = vsub.f32 %v5174, %v4827
      %v5191 = vsub.f32 %v5175, %v4827
      %v5192 = vsub.f32 %v5176, %v4827
      %v5193 = vmul.f32 %v5177, %v4832
      %v5194 = vmul.f32 %v5178, %v4832
      %v5195 = vmul.f32 %v5179, %v4832
      %v5196 = vmul.f32 %v5180, %v4832
      %v5197 = vmul.f32 %v5181, %v4832
      %v5198 = vmul.f32 %v5182, %v4832
      %v5199 = vmul.f32 %v5183, %v4832
      %v5200 = vmul.f32 %v5184, %v4832
      %v5201 = vmul.f32 %v5185, %v4832
      %v5202 = vmul.f32 %v5186, %v4832
      %v5203 = vmul.f32 %v5187, %v4832
      %v5204 = vmul.f32 %v5188, %v4832
      %v5205 = vmul.f32 %v5189, %v4832
      %v5206 = vmul.f32 %v5190, %v4832
      %v5207 = vmul.f32 %v5191, %v4832
      %v5208 = vmul.f32 %v5192, %v4832
      %v5209 = vmax.f32 %v5193, 0.0
      %v5210 = vmax.f32 %v5194, 0.0
      %v5211 = vmax.f32 %v5195, 0.0
      %v5212 = vmax.f32 %v5196, 0.0
      %v5213 = vmax.f32 %v5197, 0.0
      %v5214 = vmax.f32 %v5198, 0.0
      %v5215 = vmax.f32 %v5199, 0.0
      %v5216 = vmax.f32 %v5200, 0.0
      %v5217 = vmax.f32 %v5201, 0.0
      %v5218 = vmax.f32 %v5202, 0.0
      %v5219 = vmax.f32 %v5203, 0.0
      %v5220 = vmax.f32 %v5204, 0.0
      %v5221 = vmax.f32 %v5205, 0.0
      %v5222 = vmax.f32 %v5206, 0.0
      %v5223 = vmax.f32 %v5207, 0.0
      %v5224 = vmax.f32 %v5208, 0.0
      %v5225 = vpack.c.bf16 %v5210, %v5209
      %v5226 = vpack.c.bf16 %v5212, %v5211
      %v5227 = vpack.c.bf16 %v5214, %v5213
      %v5228 = vpack.c.bf16 %v5216, %v5215
      %v5229 = vpack.c.bf16 %v5218, %v5217
      %v5230 = vpack.c.bf16 %v5220, %v5219
      %v5231 = vpack.c.bf16 %v5222, %v5221
      %v5232 = vpack.c.bf16 %v5224, %v5223
      %v5241 = vunpack.c.l.b16 %v5225
      %v5242 = vunpack.c.h.b16 %v5225
      %v5243 = vunpack.c.l.b16 %v5226
      %v5244 = vunpack.c.h.b16 %v5226
      %v5245 = vunpack.c.l.b16 %v5227
      %v5246 = vunpack.c.h.b16 %v5227
      %v5247 = vunpack.c.l.b16 %v5228
      %v5248 = vunpack.c.h.b16 %v5228
      %v5249 = vunpack.c.l.b16 %v5229
      %v5250 = vunpack.c.h.b16 %v5229
      %v5251 = vunpack.c.l.b16 %v5230
      %v5252 = vunpack.c.h.b16 %v5230
      %v5253 = vunpack.c.l.b16 %v5231
      %v5254 = vunpack.c.h.b16 %v5231
      %v5255 = vunpack.c.l.b16 %v5232
      %v5256 = vunpack.c.h.b16 %v5232
      %v5257 = vpack.c.b16 %v5241, %v5241
      %v5258 = vpack.c.b16 %v5242, %v5242
      %v5259 = vpack.c.b16 %v5243, %v5243
      %v5260 = vpack.c.b16 %v5244, %v5244
      %v5261 = vpack.c.b16 %v5245, %v5245
      %v5262 = vpack.c.b16 %v5246, %v5246
      %v5263 = vpack.c.b16 %v5247, %v5247
      %v5264 = vpack.c.b16 %v5248, %v5248
      %v5265 = vpack.c.b16 %v5249, %v5249
      %v5266 = vpack.c.b16 %v5250, %v5250
      %v5267 = vpack.c.b16 %v5251, %v5251
      %v5268 = vpack.c.b16 %v5252, %v5252
      %v5269 = vpack.c.b16 %v5253, %v5253
      %v5270 = vpack.c.b16 %v5254, %v5254
      %v5271 = vpack.c.b16 %v5255, %v5255
      %v5272 = vpack.c.b16 %v5256, %v5256
      %v5274 = vshrl.u32 %v5257, 16
      %v5276 = vrot.slane %v5274, 7
      %v5277 = vshll.u32 %v5257, 16
      %v5279 = vor.u32 %v5276, %v5277
      %v5280 = vrot.slane %v5276, 4
      %v5282 = vshrl.u32 %v5258, 16
      %v5284 = vrot.slane %v5282, 7
      %v5285 = vshll.u32 %v5258, 16
      %v5287 = vor.u32 %v5284, %v5285
      %v5288 = vsel %vm238, %v5280, %v5287
      %v5289 = vrot.slane %v5284, 4
      %v5291 = vshrl.u32 %v5259, 16
      %v5293 = vrot.slane %v5291, 7
      %v5294 = vshll.u32 %v5259, 16
      %v5296 = vor.u32 %v5293, %v5294
      %v5297 = vrot.slane %v5293, 4
      %v5299 = vshrl.u32 %v5260, 16
      %v5301 = vrot.slane %v5299, 7
      %v5302 = vshll.u32 %v5260, 16
      %v5304 = vor.u32 %v5301, %v5302
      %v5305 = vsel %vm238, %v5297, %v5304
      %v5306 = vrot.slane %v5301, 4
      %v5308 = vshrl.u32 %v5261, 16
      %v5310 = vrot.slane %v5308, 7
      %v5311 = vshll.u32 %v5261, 16
      %v5313 = vor.u32 %v5310, %v5311
      %v5314 = vrot.slane %v5310, 4
      %v5316 = vshrl.u32 %v5262, 16
      %v5318 = vrot.slane %v5316, 7
      %v5319 = vshll.u32 %v5262, 16
      %v5321 = vor.u32 %v5318, %v5319
      %v5322 = vsel %vm238, %v5314, %v5321
      %v5323 = vrot.slane %v5318, 4
      %v5325 = vshrl.u32 %v5263, 16
      %v5327 = vrot.slane %v5325, 7
      %v5328 = vshll.u32 %v5263, 16
      %v5330 = vor.u32 %v5327, %v5328
      %v5331 = vrot.slane %v5327, 4
      %v5333 = vshrl.u32 %v5264, 16
      %v5335 = vrot.slane %v5333, 7
      %v5336 = vshll.u32 %v5264, 16
      %v5338 = vor.u32 %v5335, %v5336
      %v5339 = vsel %vm238, %v5331, %v5338
      %v5340 = vrot.slane %v5335, 4
      %v5342 = vshrl.u32 %v5265, 16
      %v5344 = vrot.slane %v5342, 7
      %v5345 = vshll.u32 %v5265, 16
      %v5347 = vor.u32 %v5344, %v5345
      %v5348 = vrot.slane %v5344, 4
      %v5350 = vshrl.u32 %v5266, 16
      %v5352 = vrot.slane %v5350, 7
      %v5353 = vshll.u32 %v5266, 16
      %v5355 = vor.u32 %v5352, %v5353
      %v5356 = vsel %vm238, %v5348, %v5355
      %v5357 = vrot.slane %v5352, 4
      %v5359 = vshrl.u32 %v5267, 16
      %v5361 = vrot.slane %v5359, 7
      %v5362 = vshll.u32 %v5267, 16
      %v5364 = vor.u32 %v5361, %v5362
      %v5365 = vrot.slane %v5361, 4
      %v5367 = vshrl.u32 %v5268, 16
      %v5369 = vrot.slane %v5367, 7
      %v5370 = vshll.u32 %v5268, 16
      %v5372 = vor.u32 %v5369, %v5370
      %v5373 = vsel %vm238, %v5365, %v5372
      %v5374 = vrot.slane %v5369, 4
      %v5376 = vshrl.u32 %v5269, 16
      %v5378 = vrot.slane %v5376, 7
      %v5379 = vshll.u32 %v5269, 16
      %v5381 = vor.u32 %v5378, %v5379
      %v5382 = vrot.slane %v5378, 4
      %v5384 = vshrl.u32 %v5270, 16
      %v5386 = vrot.slane %v5384, 7
      %v5387 = vshll.u32 %v5270, 16
      %v5389 = vor.u32 %v5386, %v5387
      %v5390 = vsel %vm238, %v5382, %v5389
      %v5391 = vrot.slane %v5386, 4
      %v5393 = vshrl.u32 %v5271, 16
      %v5395 = vrot.slane %v5393, 7
      %v5396 = vshll.u32 %v5271, 16
      %v5398 = vor.u32 %v5395, %v5396
      %v5399 = vrot.slane %v5395, 4
      %v5401 = vshrl.u32 %v5272, 16
      %v5403 = vrot.slane %v5401, 7
      %v5404 = vshll.u32 %v5272, 16
      %v5406 = vor.u32 %v5403, %v5404
      %v5407 = vsel %vm238, %v5399, %v5406
      %v5408 = vrot.slane %v5403, 4
      %v5433 = vld [vmem:[%s687] sm:$0xf]
      %v5434 = vsel %vm402, %v5279, %v5433
      %5435 = vst [vmem:[%s687] sm:$0xf] %v5434
      %5436 = vst.msk [vmem:[%s687 + $0x4] sm:$0xf] %vm406, %v5288
      %v5437 = vld [vmem:[%s687 + $0x8] sm:$0x1]
      %v5438 = vsel %vm409, %v5289, %v5437
      %5439 = vst [vmem:[%s687 + $0x8] sm:$0x1] %v5438
      %v5440 = vld [vmem:[%s687 + $0xc] sm:$0xf]
      %v5441 = vsel %vm402, %v5296, %v5440
      %5442 = vst [vmem:[%s687 + $0xc] sm:$0xf] %v5441
      %5443 = vst.msk [vmem:[%s687 + $0x10] sm:$0xf] %vm406, %v5305
      %v5444 = vld [vmem:[%s687 + $0x14] sm:$0x1]
      %v5445 = vsel %vm409, %v5306, %v5444
      %5446 = vst [vmem:[%s687 + $0x14] sm:$0x1] %v5445
      %v5447 = vld [vmem:[%s687 + $0x18] sm:$0xf]
      %v5448 = vsel %vm402, %v5313, %v5447
      %5449 = vst [vmem:[%s687 + $0x18] sm:$0xf] %v5448
      %5450 = vst.msk [vmem:[%s687 + $0x1c] sm:$0xf] %vm406, %v5322
      %v5451 = vld [vmem:[%s687 + $0x20] sm:$0x1]
      %v5452 = vsel %vm409, %v5323, %v5451
      %5453 = vst [vmem:[%s687 + $0x20] sm:$0x1] %v5452
      %v5454 = vld [vmem:[%s687 + $0x24] sm:$0xf]
      %v5455 = vsel %vm402, %v5330, %v5454
      %5456 = vst [vmem:[%s687 + $0x24] sm:$0xf] %v5455
      %5457 = vst.msk [vmem:[%s687 + $0x28] sm:$0xf] %vm406, %v5339
      %v5458 = vld [vmem:[%s687 + $0x2c] sm:$0x1]
      %v5459 = vsel %vm409, %v5340, %v5458
      %5460 = vst [vmem:[%s687 + $0x2c] sm:$0x1] %v5459
      %v5461 = vld [vmem:[%s687 + $0x30] sm:$0xf]
      %v5462 = vsel %vm402, %v5347, %v5461
      %5463 = vst [vmem:[%s687 + $0x30] sm:$0xf] %v5462
      %5464 = vst.msk [vmem:[%s687 + $0x34] sm:$0xf] %vm406, %v5356
      %v5465 = vld [vmem:[%s687 + $0x38] sm:$0x1]
      %v5466 = vsel %vm409, %v5357, %v5465
      %5467 = vst [vmem:[%s687 + $0x38] sm:$0x1] %v5466
      %v5468 = vld [vmem:[%s687 + $0x3c] sm:$0xf]
      %v5469 = vsel %vm402, %v5364, %v5468
      %5470 = vst [vmem:[%s687 + $0x3c] sm:$0xf] %v5469
      %5471 = vst.msk [vmem:[%s687 + $0x40] sm:$0xf] %vm406, %v5373
      %v5472 = vld [vmem:[%s687 + $0x44] sm:$0x1]
      %v5473 = vsel %vm409, %v5374, %v5472
      %5474 = vst [vmem:[%s687 + $0x44] sm:$0x1] %v5473
      %v5475 = vld [vmem:[%s687 + $0x48] sm:$0xf]
      %v5476 = vsel %vm402, %v5381, %v5475
      %5477 = vst [vmem:[%s687 + $0x48] sm:$0xf] %v5476
      %5478 = vst.msk [vmem:[%s687 + $0x4c] sm:$0xf] %vm406, %v5390
      %v5479 = vld [vmem:[%s687 + $0x50] sm:$0x1]
      %v5480 = vsel %vm409, %v5391, %v5479
      %5481 = vst [vmem:[%s687 + $0x50] sm:$0x1] %v5480
      %v5482 = vld [vmem:[%s687 + $0x54] sm:$0xf]
      %v5483 = vsel %vm402, %v5398, %v5482
      %5484 = vst [vmem:[%s687 + $0x54] sm:$0xf] %v5483
      %5485 = vst.msk [vmem:[%s687 + $0x58] sm:$0xf] %vm406, %v5407
      %v5486 = vld [vmem:[%s687 + $0x5c] sm:$0x1]
      %v5487 = vsel %vm409, %v5408, %v5486
      %5488 = vst [vmem:[%s687 + $0x5c] sm:$0x1] %v5487
      %v5489 = vld [vmem:[%s744] sm:$0xf]
      %v5490 = vld [vmem:[%s744 + $0x4] sm:$0xf]
      %v5491 = vld [vmem:[%s744 + $0x8] sm:$0x1]
      %v5492 = vld [vmem:[#allocation2] sm:$0xf]
      %v5493 = vsel %vm402, %v5489, %v5492
      %5494 = vst [vmem:[#allocation2] sm:$0xf] %v5493
      %5495 = vst.msk [vmem:[#allocation2 + $0x4] sm:$0xf] %vm406, %v5490
      %v5496 = vld [vmem:[#allocation2 + $0x8] sm:$0x1]
      %v5497 = vsel %vm409, %v5491, %v5496
      %5498 = vst [vmem:[#allocation2 + $0x8] sm:$0x1] %v5497
      %v5499 = vld [vmem:[%s755] sm:$0xf]
      %v5500 = vld [vmem:[%s755 + $0x4] sm:$0xf]
      %v5501 = vld [vmem:[%s755 + $0x8] sm:$0x1]
      %v5502 = vld [vmem:[%s759] sm:$0xf]
      %v5503 = vsel %vm402, %v5499, %v5502
      %5504 = vst [vmem:[%s759] sm:$0xf] %v5503
      %5505 = vst.msk [vmem:[%s759 + $0x4] sm:$0xf] %vm406, %v5500
      %v5506 = vld [vmem:[%s759 + $0x8] sm:$0x1]
      %v5507 = vsel %vm409, %v5501, %v5506
      %5508 = vst [vmem:[%s759 + $0x8] sm:$0x1] %v5507
      %v5509 = vld [vmem:[#allocation2] sm:$0x2]
      %v5510 = vld [vmem:[#allocation2 + $0xc] sm:$0x2]
      %v5511 = vld [vmem:[#allocation2 + $0x18] sm:$0x2]
      %v5512 = vld [vmem:[#allocation2 + $0x24] sm:$0x2]
      %v5513 = vld [vmem:[#allocation2 + $0x30] sm:$0x2]
      %v5514 = vld [vmem:[#allocation2 + $0x3c] sm:$0x2]
      %v5515 = vld [vmem:[#allocation2 + $0x48] sm:$0x2]
      %v5516 = vld [vmem:[#allocation2 + $0x54] sm:$0x2]
      %v5517 = vld [vmem:[#allocation2 + $0x60] sm:$0x2]
      %v5518 = vld [vmem:[#allocation2 + $0x6c] sm:$0x2]
      %v5519 = vld [vmem:[#allocation2 + $0x78] sm:$0x2]
      %v5520 = vld [vmem:[#allocation2 + $0x84] sm:$0x2]
      %v5521 = vld [vmem:[#allocation2 + $0x90] sm:$0x2]
      %v5522 = vld [vmem:[#allocation2 + $0x9c] sm:$0x2]
      %v5523 = vld [vmem:[#allocation2 + $0xa8] sm:$0x2]
      %v5524 = vld [vmem:[#allocation2 + $0xb4] sm:$0x2]
      %v5525 = vld [vmem:[#allocation2 + $0xc0] sm:$0x2]
      %v5526 = vld [vmem:[#allocation2 + $0xcc] sm:$0x2]
      %v5545 = vrot.slane %v5509, 5
      %v5546 = vrot.slane %v5545, 4
      %v5547 = vrot.slane %v5510, 5
      %v5548 = vrot.slane %v5547, 4
      %v5549 = vrot.slane %v5511, 5
      %v5550 = vrot.slane %v5549, 4
      %v5551 = vrot.slane %v5512, 5
      %v5552 = vrot.slane %v5551, 4
      %v5553 = vrot.slane %v5513, 5
      %v5554 = vrot.slane %v5553, 4
      %v5555 = vrot.slane %v5514, 5
      %v5556 = vrot.slane %v5555, 4
      %v5557 = vrot.slane %v5515, 5
      %v5558 = vrot.slane %v5557, 4
      %v5559 = vrot.slane %v5516, 5
      %v5560 = vrot.slane %v5559, 4
      %v5561 = vrot.slane %v5517, 5
      %v5562 = vrot.slane %v5561, 4
      %v5563 = vrot.slane %v5518, 5
      %v5564 = vrot.slane %v5563, 4
      %v5565 = vrot.slane %v5519, 5
      %v5566 = vrot.slane %v5565, 4
      %v5567 = vrot.slane %v5520, 5
      %v5568 = vrot.slane %v5567, 4
      %v5569 = vrot.slane %v5521, 5
      %v5570 = vrot.slane %v5569, 4
      %v5571 = vrot.slane %v5522, 5
      %v5572 = vrot.slane %v5571, 4
      %v5573 = vrot.slane %v5523, 5
      %v5574 = vrot.slane %v5573, 4
      %v5575 = vrot.slane %v5524, 5
      %v5576 = vrot.slane %v5575, 4
      %v5577 = vrot.slane %v5525, 5
      %v5578 = vrot.slane %v5577, 4
      %v5579 = vrot.slane %v5526, 5
      %v5580 = vrot.slane %v5579, 4
      %v5599 = vld [vmem:[#allocation2] sm:$0x1]
      %v5600 = vsel %vm409, %v5546, %v5599
      %5601 = vst [vmem:[#allocation2] sm:$0x1] %v5600
      %v5602 = vld [vmem:[#allocation2 + $0xc] sm:$0x1]
      %v5603 = vsel %vm409, %v5548, %v5602
      %5604 = vst [vmem:[#allocation2 + $0xc] sm:$0x1] %v5603
      %v5605 = vld [vmem:[#allocation2 + $0x18] sm:$0x1]
      %v5606 = vsel %vm409, %v5550, %v5605
      %5607 = vst [vmem:[#allocation2 + $0x18] sm:$0x1] %v5606
      %v5608 = vld [vmem:[#allocation2 + $0x24] sm:$0x1]
      %v5609 = vsel %vm409, %v5552, %v5608
      %5610 = vst [vmem:[#allocation2 + $0x24] sm:$0x1] %v5609
      %v5611 = vld [vmem:[#allocation2 + $0x30] sm:$0x1]
      %v5612 = vsel %vm409, %v5554, %v5611
      %5613 = vst [vmem:[#allocation2 + $0x30] sm:$0x1] %v5612
      %v5614 = vld [vmem:[#allocation2 + $0x3c] sm:$0x1]
      %v5615 = vsel %vm409, %v5556, %v5614
      %5616 = vst [vmem:[#allocation2 + $0x3c] sm:$0x1] %v5615
      %v5617 = vld [vmem:[#allocation2 + $0x48] sm:$0x1]
      %v5618 = vsel %vm409, %v5558, %v5617
      %5619 = vst [vmem:[#allocation2 + $0x48] sm:$0x1] %v5618
      %v5620 = vld [vmem:[#allocation2 + $0x54] sm:$0x1]
      %v5621 = vsel %vm409, %v5560, %v5620
      %5622 = vst [vmem:[#allocation2 + $0x54] sm:$0x1] %v5621
      %v5623 = vld [vmem:[#allocation2 + $0x60] sm:$0x1]
      %v5624 = vsel %vm409, %v5562, %v5623
      %5625 = vst [vmem:[#allocation2 + $0x60] sm:$0x1] %v5624
      %v5626 = vld [vmem:[#allocation2 + $0x6c] sm:$0x1]
      %v5627 = vsel %vm409, %v5564, %v5626
      %5628 = vst [vmem:[#allocation2 + $0x6c] sm:$0x1] %v5627
      %v5629 = vld [vmem:[#allocation2 + $0x78] sm:$0x1]
      %v5630 = vsel %vm409, %v5566, %v5629
      %5631 = vst [vmem:[#allocation2 + $0x78] sm:$0x1] %v5630
      %v5632 = vld [vmem:[#allocation2 + $0x84] sm:$0x1]
      %v5633 = vsel %vm409, %v5568, %v5632
      %5634 = vst [vmem:[#allocation2 + $0x84] sm:$0x1] %v5633
      %v5635 = vld [vmem:[#allocation2 + $0x90] sm:$0x1]
      %v5636 = vsel %vm409, %v5570, %v5635
      %5637 = vst [vmem:[#allocation2 + $0x90] sm:$0x1] %v5636
      %v5638 = vld [vmem:[#allocation2 + $0x9c] sm:$0x1]
      %v5639 = vsel %vm409, %v5572, %v5638
      %5640 = vst [vmem:[#allocation2 + $0x9c] sm:$0x1] %v5639
      %v5641 = vld [vmem:[#allocation2 + $0xa8] sm:$0x1]
      %v5642 = vsel %vm409, %v5574, %v5641
      %5643 = vst [vmem:[#allocation2 + $0xa8] sm:$0x1] %v5642
      %v5644 = vld [vmem:[#allocation2 + $0xb4] sm:$0x1]
      %v5645 = vsel %vm409, %v5576, %v5644
      %5646 = vst [vmem:[#allocation2 + $0xb4] sm:$0x1] %v5645
      %v5647 = vld [vmem:[#allocation2 + $0xc0] sm:$0x1]
      %v5648 = vsel %vm409, %v5578, %v5647
      %5649 = vst [vmem:[#allocation2 + $0xc0] sm:$0x1] %v5648
      %v5650 = vld [vmem:[#allocation2 + $0xcc] sm:$0x1]
      %v5651 = vsel %vm409, %v5580, %v5650
      %5652 = vst [vmem:[#allocation2 + $0xcc] sm:$0x1] %v5651
      %v5653 = vld [vmem:[#allocation2 + $0x4] sm:$0x8]
      %v5654 = vld [vmem:[#allocation2 + $0x10] sm:$0x8]
      %v5655 = vld [vmem:[#allocation2 + $0x1c] sm:$0x8]
      %v5656 = vld [vmem:[#allocation2 + $0x28] sm:$0x8]
      %v5657 = vld [vmem:[#allocation2 + $0x34] sm:$0x8]
      %v5658 = vld [vmem:[#allocation2 + $0x40] sm:$0x8]
      %v5659 = vld [vmem:[#allocation2 + $0x4c] sm:$0x8]
      %v5660 = vld [vmem:[#allocation2 + $0x58] sm:$0x8]
      %v5661 = vld [vmem:[#allocation2 + $0x64] sm:$0x8]
      %v5662 = vld [vmem:[#allocation2 + $0x70] sm:$0x8]
      %v5663 = vld [vmem:[#allocation2 + $0x7c] sm:$0x8]
      %v5664 = vld [vmem:[#allocation2 + $0x88] sm:$0x8]
      %v5665 = vld [vmem:[#allocation2 + $0x94] sm:$0x8]
      %v5666 = vld [vmem:[#allocation2 + $0xa0] sm:$0x8]
      %v5667 = vld [vmem:[#allocation2 + $0xac] sm:$0x8]
      %v5668 = vld [vmem:[#allocation2 + $0xb8] sm:$0x8]
      %v5669 = vld [vmem:[#allocation2 + $0xc4] sm:$0x8]
      %v5670 = vld [vmem:[#allocation2 + $0xd0] sm:$0x8]
      %v5689 = vrot.slane %v5653, 7
      %v5690 = vrot.slane %v5689, 4
      %v5691 = vrot.slane %v5654, 7
      %v5692 = vrot.slane %v5691, 4
      %v5693 = vrot.slane %v5655, 7
      %v5694 = vrot.slane %v5693, 4
      %v5695 = vrot.slane %v5656, 7
      %v5696 = vrot.slane %v5695, 4
      %v5697 = vrot.slane %v5657, 7
      %v5698 = vrot.slane %v5697, 4
      %v5699 = vrot.slane %v5658, 7
      %v5700 = vrot.slane %v5699, 4
      %v5701 = vrot.slane %v5659, 7
      %v5702 = vrot.slane %v5701, 4
      %v5703 = vrot.slane %v5660, 7
      %v5704 = vrot.slane %v5703, 4
      %v5705 = vrot.slane %v5661, 7
      %v5706 = vrot.slane %v5705, 4
      %v5707 = vrot.slane %v5662, 7
      %v5708 = vrot.slane %v5707, 4
      %v5709 = vrot.slane %v5663, 7
      %v5710 = vrot.slane %v5709, 4
      %v5711 = vrot.slane %v5664, 7
      %v5712 = vrot.slane %v5711, 4
      %v5713 = vrot.slane %v5665, 7
      %v5714 = vrot.slane %v5713, 4
      %v5715 = vrot.slane %v5666, 7
      %v5716 = vrot.slane %v5715, 4
      %v5717 = vrot.slane %v5667, 7
      %v5718 = vrot.slane %v5717, 4
      %v5719 = vrot.slane %v5668, 7
      %v5720 = vrot.slane %v5719, 4
      %v5721 = vrot.slane %v5669, 7
      %v5722 = vrot.slane %v5721, 4
      %v5723 = vrot.slane %v5670, 7
      %v5724 = vrot.slane %v5723, 4
      %v5743 = vld [vmem:[#allocation2 + $0x8] sm:$0x1]
      %v5744 = vsel %vm1001, %v5690, %v5743
      %5745 = vst [vmem:[#allocation2 + $0x8] sm:$0x1] %v5744
      %v5746 = vld [vmem:[#allocation2 + $0x14] sm:$0x1]
      %v5747 = vsel %vm1001, %v5692, %v5746
      %5748 = vst [vmem:[#allocation2 + $0x14] sm:$0x1] %v5747
      %v5749 = vld [vmem:[#allocation2 + $0x20] sm:$0x1]
      %v5750 = vsel %vm1001, %v5694, %v5749
      %5751 = vst [vmem:[#allocation2 + $0x20] sm:$0x1] %v5750
      %v5752 = vld [vmem:[#allocation2 + $0x2c] sm:$0x1]
      %v5753 = vsel %vm1001, %v5696, %v5752
      %5754 = vst [vmem:[#allocation2 + $0x2c] sm:$0x1] %v5753
      %v5755 = vld [vmem:[#allocation2 + $0x38] sm:$0x1]
      %v5756 = vsel %vm1001, %v5698, %v5755
      %5757 = vst [vmem:[#allocation2 + $0x38] sm:$0x1] %v5756
      %v5758 = vld [vmem:[#allocation2 + $0x44] sm:$0x1]
      %v5759 = vsel %vm1001, %v5700, %v5758
      %5760 = vst [vmem:[#allocation2 + $0x44] sm:$0x1] %v5759
      %v5761 = vld [vmem:[#allocation2 + $0x50] sm:$0x1]
      %v5762 = vsel %vm1001, %v5702, %v5761
      %5763 = vst [vmem:[#allocation2 + $0x50] sm:$0x1] %v5762
      %v5764 = vld [vmem:[#allocation2 + $0x5c] sm:$0x1]
      %v5765 = vsel %vm1001, %v5704, %v5764
      %5766 = vst [vmem:[#allocation2 + $0x5c] sm:$0x1] %v5765
      %v5767 = vld [vmem:[#allocation2 + $0x68] sm:$0x1]
      %v5768 = vsel %vm1001, %v5706, %v5767
      %5769 = vst [vmem:[#allocation2 + $0x68] sm:$0x1] %v5768
      %v5770 = vld [vmem:[#allocation2 + $0x74] sm:$0x1]
      %v5771 = vsel %vm1001, %v5708, %v5770
      %5772 = vst [vmem:[#allocation2 + $0x74] sm:$0x1] %v5771
      %v5773 = vld [vmem:[#allocation2 + $0x80] sm:$0x1]
      %v5774 = vsel %vm1001, %v5710, %v5773
      %5775 = vst [vmem:[#allocation2 + $0x80] sm:$0x1] %v5774
      %v5776 = vld [vmem:[#allocation2 + $0x8c] sm:$0x1]
      %v5777 = vsel %vm1001, %v5712, %v5776
      %5778 = vst [vmem:[#allocation2 + $0x8c] sm:$0x1] %v5777
      %v5779 = vld [vmem:[#allocation2 + $0x98] sm:$0x1]
      %v5780 = vsel %vm1001, %v5714, %v5779
      %5781 = vst [vmem:[#allocation2 + $0x98] sm:$0x1] %v5780
      %v5782 = vld [vmem:[#allocation2 + $0xa4] sm:$0x1]
      %v5783 = vsel %vm1001, %v5716, %v5782
      %5784 = vst [vmem:[#allocation2 + $0xa4] sm:$0x1] %v5783
      %v5785 = vld [vmem:[#allocation2 + $0xb0] sm:$0x1]
      %v5786 = vsel %vm1001, %v5718, %v5785
      %5787 = vst [vmem:[#allocation2 + $0xb0] sm:$0x1] %v5786
      %v5788 = vld [vmem:[#allocation2 + $0xbc] sm:$0x1]
      %v5789 = vsel %vm1001, %v5720, %v5788
      %5790 = vst [vmem:[#allocation2 + $0xbc] sm:$0x1] %v5789
      %v5791 = vld [vmem:[#allocation2 + $0xc8] sm:$0x1]
      %v5792 = vsel %vm1001, %v5722, %v5791
      %5793 = vst [vmem:[#allocation2 + $0xc8] sm:$0x1] %v5792
      %v5794 = vld [vmem:[#allocation2 + $0xd4] sm:$0x1]
      %v5795 = vsel %vm1001, %v5724, %v5794
      %5796 = vst [vmem:[#allocation2 + $0xd4] sm:$0x1] %v5795
      %v5797 = vld [vmem:[#allocation2] sm:$0xf]
      %v5798 = vld [vmem:[#allocation2 + $0x4] sm:$0xf]
      %v5799 = vld [vmem:[#allocation2 + $0xc] sm:$0xf]
      %v5800 = vld [vmem:[#allocation2 + $0x10] sm:$0xf]
      %v5801 = vld [vmem:[#allocation2 + $0x18] sm:$0xf]
      %v5802 = vld [vmem:[#allocation2 + $0x1c] sm:$0xf]
      %v5803 = vld [vmem:[#allocation2 + $0x24] sm:$0xf]
      %v5804 = vld [vmem:[#allocation2 + $0x28] sm:$0xf]
      %v5805 = vld [vmem:[#allocation2 + $0x30] sm:$0xf]
      %v5806 = vld [vmem:[#allocation2 + $0x34] sm:$0xf]
      %v5807 = vld [vmem:[#allocation2 + $0x3c] sm:$0xf]
      %v5808 = vld [vmem:[#allocation2 + $0x40] sm:$0xf]
      %v5809 = vld [vmem:[#allocation2 + $0x48] sm:$0xf]
      %v5810 = vld [vmem:[#allocation2 + $0x4c] sm:$0xf]
      %v5811 = vld [vmem:[#allocation2 + $0x54] sm:$0xf]
      %v5812 = vld [vmem:[#allocation2 + $0x58] sm:$0xf]
      %5813 = vst.msk [vmem:[#allocation3] sm:$0xf] %vm406, %v5797
      %5814 = vst.msk [vmem:[#allocation3 + $0x4] sm:$0xf] %vm406, %v5798
      %5815 = vst.msk [vmem:[#allocation3 + $0x8] sm:$0xf] %vm406, %v5799
      %5816 = vst.msk [vmem:[#allocation3 + $0xc] sm:$0xf] %vm406, %v5800
      %5817 = vst.msk [vmem:[#allocation3 + $0x10] sm:$0xf] %vm406, %v5801
      %5818 = vst.msk [vmem:[#allocation3 + $0x14] sm:$0xf] %vm406, %v5802
      %5819 = vst.msk [vmem:[#allocation3 + $0x18] sm:$0xf] %vm406, %v5803
      %5820 = vst.msk [vmem:[#allocation3 + $0x1c] sm:$0xf] %vm406, %v5804
      %5821 = vst.msk [vmem:[#allocation3 + $0x20] sm:$0xf] %vm406, %v5805
      %5822 = vst.msk [vmem:[#allocation3 + $0x24] sm:$0xf] %vm406, %v5806
      %5823 = vst.msk [vmem:[#allocation3 + $0x28] sm:$0xf] %vm406, %v5807
      %5824 = vst.msk [vmem:[#allocation3 + $0x2c] sm:$0xf] %vm406, %v5808
      %5825 = vst.msk [vmem:[#allocation3 + $0x30] sm:$0xf] %vm406, %v5809
      %5826 = vst.msk [vmem:[#allocation3 + $0x34] sm:$0xf] %vm406, %v5810
      %5827 = vst.msk [vmem:[#allocation3 + $0x38] sm:$0xf] %vm406, %v5811
      %5828 = vst.msk [vmem:[#allocation3 + $0x3c] sm:$0xf] %vm406, %v5812
      %v5829 = vld [vmem:[#allocation2] sm:$0xf]
      %v5830 = vld [vmem:[#allocation2 + $0x4] sm:$0xf]
      %v5831 = vld [vmem:[#allocation2 + $0x8] sm:$0x1]
      %v5832 = vld [vmem:[#allocation2 + $0xc] sm:$0xf]
      %v5833 = vld [vmem:[#allocation2 + $0x10] sm:$0xf]
      %v5834 = vld [vmem:[#allocation2 + $0x14] sm:$0x1]
      %v5835 = vld [vmem:[#allocation2 + $0x18] sm:$0xf]
      %v5836 = vld [vmem:[#allocation2 + $0x1c] sm:$0xf]
      %v5837 = vld [vmem:[#allocation2 + $0x20] sm:$0x1]
      %v5838 = vld [vmem:[#allocation2 + $0x24] sm:$0xf]
      %v5839 = vld [vmem:[#allocation2 + $0x28] sm:$0xf]
      %v5840 = vld [vmem:[#allocation2 + $0x2c] sm:$0x1]
      %v5841 = vld [vmem:[#allocation2 + $0x30] sm:$0xf]
      %v5842 = vld [vmem:[#allocation2 + $0x34] sm:$0xf]
      %v5843 = vld [vmem:[#allocation2 + $0x38] sm:$0x1]
      %v5844 = vld [vmem:[#allocation2 + $0x3c] sm:$0xf]
      %v5845 = vld [vmem:[#allocation2 + $0x40] sm:$0xf]
      %v5846 = vld [vmem:[#allocation2 + $0x44] sm:$0x1]
      %v5847 = vld [vmem:[#allocation2 + $0x48] sm:$0xf]
      %v5848 = vld [vmem:[#allocation2 + $0x4c] sm:$0xf]
      %v5849 = vld [vmem:[#allocation2 + $0x50] sm:$0x1]
      %v5850 = vld [vmem:[#allocation2 + $0x54] sm:$0xf]
      %v5851 = vld [vmem:[#allocation2 + $0x58] sm:$0xf]
      %v5852 = vld [vmem:[#allocation2 + $0x5c] sm:$0x1]
      %v5854 = vshrl.u32 %v5829, 16
      %v5856 = vrot.slane %v5854, 4
      %v5857 = vshll.u32 %v5829, 16
      %v5859 = vrot.slane %v5857, 5
      %v5860 = vor.u32 %v5856, %v5859
      %v5861 = vrot.slane %v5860, 4
      %v5863 = vshll.u32 %v5830, 16
      %v5865 = vrot.slane %v5863, 5
      %v5866 = vsel %vm1114, %v5861, %v5865
      %v5867 = vshrl.u32 %v5830, 16
      %v5869 = vrot.slane %v5867, 4
      %v5870 = vor.u32 %v5869, %v5865
      %v5871 = vrot.slane %v5870, 4
      %v5873 = vshll.u32 %v5831, 16
      %v5875 = vrot.slane %v5873, 5
      %v5876 = vsel %vm1114, %v5871, %v5875
      %v5878 = vshrl.u32 %v5832, 16
      %v5880 = vrot.slane %v5878, 4
      %v5881 = vshll.u32 %v5832, 16
      %v5883 = vrot.slane %v5881, 5
      %v5884 = vor.u32 %v5880, %v5883
      %v5885 = vrot.slane %v5884, 4
      %v5887 = vshll.u32 %v5833, 16
      %v5889 = vrot.slane %v5887, 5
      %v5890 = vsel %vm1114, %v5885, %v5889
      %v5891 = vshrl.u32 %v5833, 16
      %v5893 = vrot.slane %v5891, 4
      %v5894 = vor.u32 %v5893, %v5889
      %v5895 = vrot.slane %v5894, 4
      %v5897 = vshll.u32 %v5834, 16
      %v5899 = vrot.slane %v5897, 5
      %v5900 = vsel %vm1114, %v5895, %v5899
      %v5902 = vshrl.u32 %v5835, 16
      %v5904 = vrot.slane %v5902, 4
      %v5905 = vshll.u32 %v5835, 16
      %v5907 = vrot.slane %v5905, 5
      %v5908 = vor.u32 %v5904, %v5907
      %v5909 = vrot.slane %v5908, 4
      %v5911 = vshll.u32 %v5836, 16
      %v5913 = vrot.slane %v5911, 5
      %v5914 = vsel %vm1114, %v5909, %v5913
      %v5915 = vshrl.u32 %v5836, 16
      %v5917 = vrot.slane %v5915, 4
      %v5918 = vor.u32 %v5917, %v5913
      %v5919 = vrot.slane %v5918, 4
      %v5921 = vshll.u32 %v5837, 16
      %v5923 = vrot.slane %v5921, 5
      %v5924 = vsel %vm1114, %v5919, %v5923
      %v5926 = vshrl.u32 %v5838, 16
      %v5928 = vrot.slane %v5926, 4
      %v5929 = vshll.u32 %v5838, 16
      %v5931 = vrot.slane %v5929, 5
      %v5932 = vor.u32 %v5928, %v5931
      %v5933 = vrot.slane %v5932, 4
      %v5935 = vshll.u32 %v5839, 16
      %v5937 = vrot.slane %v5935, 5
      %v5938 = vsel %vm1114, %v5933, %v5937
      %v5939 = vshrl.u32 %v5839, 16
      %v5941 = vrot.slane %v5939, 4
      %v5942 = vor.u32 %v5941, %v5937
      %v5943 = vrot.slane %v5942, 4
      %v5945 = vshll.u32 %v5840, 16
      %v5947 = vrot.slane %v5945, 5
      %v5948 = vsel %vm1114, %v5943, %v5947
      %v5950 = vshrl.u32 %v5841, 16
      %v5952 = vrot.slane %v5950, 4
      %v5953 = vshll.u32 %v5841, 16
      %v5955 = vrot.slane %v5953, 5
      %v5956 = vor.u32 %v5952, %v5955
      %v5957 = vrot.slane %v5956, 4
      %v5959 = vshll.u32 %v5842, 16
      %v5961 = vrot.slane %v5959, 5
      %v5962 = vsel %vm1114, %v5957, %v5961
      %v5963 = vshrl.u32 %v5842, 16
      %v5965 = vrot.slane %v5963, 4
      %v5966 = vor.u32 %v5965, %v5961
      %v5967 = vrot.slane %v5966, 4
      %v5969 = vshll.u32 %v5843, 16
      %v5971 = vrot.slane %v5969, 5
      %v5972 = vsel %vm1114, %v5967, %v5971
      %v5974 = vshrl.u32 %v5844, 16
      %v5976 = vrot.slane %v5974, 4
      %v5977 = vshll.u32 %v5844, 16
      %v5979 = vrot.slane %v5977, 5
      %v5980 = vor.u32 %v5976, %v5979
      %v5981 = vrot.slane %v5980, 4
      %v5983 = vshll.u32 %v5845, 16
      %v5985 = vrot.slane %v5983, 5
      %v5986 = vsel %vm1114, %v5981, %v5985
      %v5987 = vshrl.u32 %v5845, 16
      %v5989 = vrot.slane %v5987, 4
      %v5990 = vor.u32 %v5989, %v5985
      %v5991 = vrot.slane %v5990, 4
      %v5993 = vshll.u32 %v5846, 16
      %v5995 = vrot.slane %v5993, 5
      %v5996 = vsel %vm1114, %v5991, %v5995
      %v5998 = vshrl.u32 %v5847, 16
      %v6000 = vrot.slane %v5998, 4
      %v6001 = vshll.u32 %v5847, 16
      %v6003 = vrot.slane %v6001, 5
      %v6004 = vor.u32 %v6000, %v6003
      %v6005 = vrot.slane %v6004, 4
      %v6007 = vshll.u32 %v5848, 16
      %v6009 = vrot.slane %v6007, 5
      %v6010 = vsel %vm1114, %v6005, %v6009
      %v6011 = vshrl.u32 %v5848, 16
      %v6013 = vrot.slane %v6011, 4
      %v6014 = vor.u32 %v6013, %v6009
      %v6015 = vrot.slane %v6014, 4
      %v6017 = vshll.u32 %v5849, 16
      %v6019 = vrot.slane %v6017, 5
      %v6020 = vsel %vm1114, %v6015, %v6019
      %v6022 = vshrl.u32 %v5850, 16
      %v6024 = vrot.slane %v6022, 4
      %v6025 = vshll.u32 %v5850, 16
      %v6027 = vrot.slane %v6025, 5
      %v6028 = vor.u32 %v6024, %v6027
      %v6029 = vrot.slane %v6028, 4
      %v6031 = vshll.u32 %v5851, 16
      %v6033 = vrot.slane %v6031, 5
      %v6034 = vsel %vm1114, %v6029, %v6033
      %v6035 = vshrl.u32 %v5851, 16
      %v6037 = vrot.slane %v6035, 4
      %v6038 = vor.u32 %v6037, %v6033
      %v6039 = vrot.slane %v6038, 4
      %v6041 = vshll.u32 %v5852, 16
      %v6043 = vrot.slane %v6041, 5
      %v6044 = vsel %vm1114, %v6039, %v6043
      %6045 = vrot.lane.b32.xlu0 %v5866, 4
      %v6046 = vpop.permute.xlu0 %6045
      %6047 = vrot.lane.b32.xlu0 %v5876, 4
      %v6048 = vpop.permute.xlu0 %6047
      %6049 = vrot.lane.b32.xlu0 %v5890, 4
      %v6050 = vpop.permute.xlu0 %6049
      %6051 = vrot.lane.b32.xlu0 %v5900, 4
      %v6052 = vpop.permute.xlu0 %6051
      %6053 = vrot.lane.b32.xlu0 %v5914, 4
      %v6054 = vpop.permute.xlu0 %6053
      %6055 = vrot.lane.b32.xlu0 %v5924, 4
      %v6056 = vpop.permute.xlu0 %6055
      %6057 = vrot.lane.b32.xlu0 %v5938, 4
      %v6058 = vpop.permute.xlu0 %6057
      %6059 = vrot.lane.b32.xlu0 %v5948, 4
      %v6060 = vpop.permute.xlu0 %6059
      %6061 = vrot.lane.b32.xlu0 %v5962, 4
      %v6062 = vpop.permute.xlu0 %6061
      %6063 = vrot.lane.b32.xlu0 %v5972, 4
      %v6064 = vpop.permute.xlu0 %6063
      %6065 = vrot.lane.b32.xlu0 %v5986, 4
      %v6066 = vpop.permute.xlu0 %6065
      %6067 = vrot.lane.b32.xlu0 %v5996, 4
      %v6068 = vpop.permute.xlu0 %6067
      %6069 = vrot.lane.b32.xlu0 %v6010, 4
      %v6070 = vpop.permute.xlu0 %6069
      %6071 = vrot.lane.b32.xlu0 %v6020, 4
      %v6072 = vpop.permute.xlu0 %6071
      %6073 = vrot.lane.b32.xlu0 %v6034, 4
      %v6074 = vpop.permute.xlu0 %6073
      %6075 = vrot.lane.b32.xlu0 %v6044, 4
      %v6076 = vpop.permute.xlu0 %6075
      %6093 = vst.msk [vmem:[#allocation3] sm:$0xf] %vm1355, %v6046
      %6094 = vst.msk [vmem:[#allocation3 + $0x4] sm:$0xf] %vm1355, %v6048
      %6095 = vst.msk [vmem:[#allocation3 + $0x8] sm:$0xf] %vm1355, %v6050
      %6096 = vst.msk [vmem:[#allocation3 + $0xc] sm:$0xf] %vm1355, %v6052
      %6097 = vst.msk [vmem:[#allocation3 + $0x10] sm:$0xf] %vm1355, %v6054
      %6098 = vst.msk [vmem:[#allocation3 + $0x14] sm:$0xf] %vm1355, %v6056
      %6099 = vst.msk [vmem:[#allocation3 + $0x18] sm:$0xf] %vm1355, %v6058
      %6100 = vst.msk [vmem:[#allocation3 + $0x1c] sm:$0xf] %vm1355, %v6060
      %6101 = vst.msk [vmem:[#allocation3 + $0x20] sm:$0xf] %vm1355, %v6062
      %6102 = vst.msk [vmem:[#allocation3 + $0x24] sm:$0xf] %vm1355, %v6064
      %6103 = vst.msk [vmem:[#allocation3 + $0x28] sm:$0xf] %vm1355, %v6066
      %6104 = vst.msk [vmem:[#allocation3 + $0x2c] sm:$0xf] %vm1355, %v6068
      %6105 = vst.msk [vmem:[#allocation3 + $0x30] sm:$0xf] %vm1355, %v6070
      %6106 = vst.msk [vmem:[#allocation3 + $0x34] sm:$0xf] %vm1355, %v6072
      %6107 = vst.msk [vmem:[#allocation3 + $0x38] sm:$0xf] %vm1355, %v6074
      %6108 = vst.msk [vmem:[#allocation3 + $0x3c] sm:$0xf] %vm1355, %v6076
      %v6109 = vld [vmem:[#allocation2] sm:$0xe]
      %v6110 = vld [vmem:[#allocation2 + $0x4] sm:$0xf]
      %v6111 = vld [vmem:[#allocation2 + $0x8] sm:$0x1]
      %v6112 = vld [vmem:[#allocation2 + $0xc] sm:$0xe]
      %v6113 = vld [vmem:[#allocation2 + $0x10] sm:$0xf]
      %v6114 = vld [vmem:[#allocation2 + $0x14] sm:$0x1]
      %v6115 = vld [vmem:[#allocation2 + $0x18] sm:$0xe]
      %v6116 = vld [vmem:[#allocation2 + $0x1c] sm:$0xf]
      %v6117 = vld [vmem:[#allocation2 + $0x20] sm:$0x1]
      %v6118 = vld [vmem:[#allocation2 + $0x24] sm:$0xe]
      %v6119 = vld [vmem:[#allocation2 + $0x28] sm:$0xf]
      %v6120 = vld [vmem:[#allocation2 + $0x2c] sm:$0x1]
      %v6121 = vld [vmem:[#allocation2 + $0x30] sm:$0xe]
      %v6122 = vld [vmem:[#allocation2 + $0x34] sm:$0xf]
      %v6123 = vld [vmem:[#allocation2 + $0x38] sm:$0x1]
      %v6124 = vld [vmem:[#allocation2 + $0x3c] sm:$0xe]
      %v6125 = vld [vmem:[#allocation2 + $0x40] sm:$0xf]
      %v6126 = vld [vmem:[#allocation2 + $0x44] sm:$0x1]
      %v6127 = vld [vmem:[#allocation2 + $0x48] sm:$0xe]
      %v6128 = vld [vmem:[#allocation2 + $0x4c] sm:$0xf]
      %v6129 = vld [vmem:[#allocation2 + $0x50] sm:$0x1]
      %v6130 = vld [vmem:[#allocation2 + $0x54] sm:$0xe]
      %v6131 = vld [vmem:[#allocation2 + $0x58] sm:$0xf]
      %v6132 = vld [vmem:[#allocation2 + $0x5c] sm:$0x1]
      %v6157 = vrot.slane %v6109, 5
      %v6158 = vrot.slane %v6157, 4
      %v6159 = vrot.slane %v6110, 5
      %v6160 = vsel %vm1422, %v6158, %v6159
      %v6161 = vrot.slane %v6159, 4
      %v6162 = vrot.slane %v6111, 5
      %v6163 = vsel %vm1422, %v6161, %v6162
      %v6164 = vrot.slane %v6112, 5
      %v6165 = vrot.slane %v6164, 4
      %v6166 = vrot.slane %v6113, 5
      %v6167 = vsel %vm1422, %v6165, %v6166
      %v6168 = vrot.slane %v6166, 4
      %v6169 = vrot.slane %v6114, 5
      %v6170 = vsel %vm1422, %v6168, %v6169
      %v6171 = vrot.slane %v6115, 5
      %v6172 = vrot.slane %v6171, 4
      %v6173 = vrot.slane %v6116, 5
      %v6174 = vsel %vm1422, %v6172, %v6173
      %v6175 = vrot.slane %v6173, 4
      %v6176 = vrot.slane %v6117, 5
      %v6177 = vsel %vm1422, %v6175, %v6176
      %v6178 = vrot.slane %v6118, 5
      %v6179 = vrot.slane %v6178, 4
      %v6180 = vrot.slane %v6119, 5
      %v6181 = vsel %vm1422, %v6179, %v6180
      %v6182 = vrot.slane %v6180, 4
      %v6183 = vrot.slane %v6120, 5
      %v6184 = vsel %vm1422, %v6182, %v6183
      %v6185 = vrot.slane %v6121, 5
      %v6186 = vrot.slane %v6185, 4
      %v6187 = vrot.slane %v6122, 5
      %v6188 = vsel %vm1422, %v6186, %v6187
      %v6189 = vrot.slane %v6187, 4
      %v6190 = vrot.slane %v6123, 5
      %v6191 = vsel %vm1422, %v6189, %v6190
      %v6192 = vrot.slane %v6124, 5
      %v6193 = vrot.slane %v6192, 4
      %v6194 = vrot.slane %v6125, 5
      %v6195 = vsel %vm1422, %v6193, %v6194
      %v6196 = vrot.slane %v6194, 4
      %v6197 = vrot.slane %v6126, 5
      %v6198 = vsel %vm1422, %v6196, %v6197
      %v6199 = vrot.slane %v6127, 5
      %v6200 = vrot.slane %v6199, 4
      %v6201 = vrot.slane %v6128, 5
      %v6202 = vsel %vm1422, %v6200, %v6201
      %v6203 = vrot.slane %v6201, 4
      %v6204 = vrot.slane %v6129, 5
      %v6205 = vsel %vm1422, %v6203, %v6204
      %v6206 = vrot.slane %v6130, 5
      %v6207 = vrot.slane %v6206, 4
      %v6208 = vrot.slane %v6131, 5
      %v6209 = vsel %vm1422, %v6207, %v6208
      %v6210 = vrot.slane %v6208, 4
      %v6211 = vrot.slane %v6132, 5
      %v6212 = vsel %vm1422, %v6210, %v6211
      %6213 = vrot.lane.b32.xlu0 %v6160, 8
      %v6214 = vpop.permute.xlu0 %6213
      %6215 = vrot.lane.b32.xlu0 %v6163, 8
      %v6216 = vpop.permute.xlu0 %6215
      %6217 = vrot.lane.b32.xlu0 %v6167, 8
      %v6218 = vpop.permute.xlu0 %6217
      %6219 = vrot.lane.b32.xlu0 %v6170, 8
      %v6220 = vpop.permute.xlu0 %6219
      %6221 = vrot.lane.b32.xlu0 %v6174, 8
      %v6222 = vpop.permute.xlu0 %6221
      %6223 = vrot.lane.b32.xlu0 %v6177, 8
      %v6224 = vpop.permute.xlu0 %6223
      %6225 = vrot.lane.b32.xlu0 %v6181, 8
      %v6226 = vpop.permute.xlu0 %6225
      %6227 = vrot.lane.b32.xlu0 %v6184, 8
      %v6228 = vpop.permute.xlu0 %6227
      %6229 = vrot.lane.b32.xlu0 %v6188, 8
      %v6230 = vpop.permute.xlu0 %6229
      %6231 = vrot.lane.b32.xlu0 %v6191, 8
      %v6232 = vpop.permute.xlu0 %6231
      %6233 = vrot.lane.b32.xlu0 %v6195, 8
      %v6234 = vpop.permute.xlu0 %6233
      %6235 = vrot.lane.b32.xlu0 %v6198, 8
      %v6236 = vpop.permute.xlu0 %6235
      %6237 = vrot.lane.b32.xlu0 %v6202, 8
      %v6238 = vpop.permute.xlu0 %6237
      %6239 = vrot.lane.b32.xlu0 %v6205, 8
      %v6240 = vpop.permute.xlu0 %6239
      %6241 = vrot.lane.b32.xlu0 %v6209, 8
      %v6242 = vpop.permute.xlu0 %6241
      %6243 = vrot.lane.b32.xlu0 %v6212, 8
      %v6244 = vpop.permute.xlu0 %6243
      %6261 = vst.msk [vmem:[#allocation3] sm:$0xf] %vm1527, %v6214
      %6262 = vst.msk [vmem:[#allocation3 + $0x4] sm:$0xf] %vm1527, %v6216
      %6263 = vst.msk [vmem:[#allocation3 + $0x8] sm:$0xf] %vm1527, %v6218
      %6264 = vst.msk [vmem:[#allocation3 + $0xc] sm:$0xf] %vm1527, %v6220
      %6265 = vst.msk [vmem:[#allocation3 + $0x10] sm:$0xf] %vm1527, %v6222
      %6266 = vst.msk [vmem:[#allocation3 + $0x14] sm:$0xf] %vm1527, %v6224
      %6267 = vst.msk [vmem:[#allocation3 + $0x18] sm:$0xf] %vm1527, %v6226
      %6268 = vst.msk [vmem:[#allocation3 + $0x1c] sm:$0xf] %vm1527, %v6228
      %6269 = vst.msk [vmem:[#allocation3 + $0x20] sm:$0xf] %vm1527, %v6230
      %6270 = vst.msk [vmem:[#allocation3 + $0x24] sm:$0xf] %vm1527, %v6232
      %6271 = vst.msk [vmem:[#allocation3 + $0x28] sm:$0xf] %vm1527, %v6234
      %6272 = vst.msk [vmem:[#allocation3 + $0x2c] sm:$0xf] %vm1527, %v6236
      %6273 = vst.msk [vmem:[#allocation3 + $0x30] sm:$0xf] %vm1527, %v6238
      %6274 = vst.msk [vmem:[#allocation3 + $0x34] sm:$0xf] %vm1527, %v6240
      %6275 = vst.msk [vmem:[#allocation3 + $0x38] sm:$0xf] %vm1527, %v6242
      %6276 = vst.msk [vmem:[#allocation3 + $0x3c] sm:$0xf] %vm1527, %v6244
      %v6277 = vld [vmem:[%s399] sm:$0xf]
      %v6278 = vld [vmem:[%s399 + $0x4] sm:$0xf]
      %v6279 = vld [vmem:[%s399 + $0xc] sm:$0xf]
      %v6280 = vld [vmem:[%s399 + $0x10] sm:$0xf]
      %v6281 = vld [vmem:[%s399 + $0x18] sm:$0xf]
      %v6282 = vld [vmem:[%s399 + $0x1c] sm:$0xf]
      %v6283 = vld [vmem:[%s399 + $0x24] sm:$0xf]
      %v6284 = vld [vmem:[%s399 + $0x28] sm:$0xf]
      %v6285 = vld [vmem:[%s399 + $0x30] sm:$0xf]
      %v6286 = vld [vmem:[%s399 + $0x34] sm:$0xf]
      %v6287 = vld [vmem:[%s399 + $0x3c] sm:$0xf]
      %v6288 = vld [vmem:[%s399 + $0x40] sm:$0xf]
      %v6289 = vld [vmem:[%s399 + $0x48] sm:$0xf]
      %v6290 = vld [vmem:[%s399 + $0x4c] sm:$0xf]
      %v6291 = vld [vmem:[%s399 + $0x54] sm:$0xf]
      %v6292 = vld [vmem:[%s399 + $0x58] sm:$0xf]
      %6309 = vrot.lane.b32.xlu0 %v6277, 12
      %v6310 = vpop.permute.xlu0 %6309
      %6311 = vrot.lane.b32.xlu0 %v6278, 12
      %v6312 = vpop.permute.xlu0 %6311
      %6313 = vrot.lane.b32.xlu0 %v6279, 12
      %v6314 = vpop.permute.xlu0 %6313
      %6315 = vrot.lane.b32.xlu0 %v6280, 12
      %v6316 = vpop.permute.xlu0 %6315
      %6317 = vrot.lane.b32.xlu0 %v6281, 12
      %v6318 = vpop.permute.xlu0 %6317
      %6319 = vrot.lane.b32.xlu0 %v6282, 12
      %v6320 = vpop.permute.xlu0 %6319
      %6321 = vrot.lane.b32.xlu0 %v6283, 12
      %v6322 = vpop.permute.xlu0 %6321
      %6323 = vrot.lane.b32.xlu0 %v6284, 12
      %v6324 = vpop.permute.xlu0 %6323
      %6325 = vrot.lane.b32.xlu0 %v6285, 12
      %v6326 = vpop.permute.xlu0 %6325
      %6327 = vrot.lane.b32.xlu0 %v6286, 12
      %v6328 = vpop.permute.xlu0 %6327
      %6329 = vrot.lane.b32.xlu0 %v6287, 12
      %v6330 = vpop.permute.xlu0 %6329
      %6331 = vrot.lane.b32.xlu0 %v6288, 12
      %v6332 = vpop.permute.xlu0 %6331
      %6333 = vrot.lane.b32.xlu0 %v6289, 12
      %v6334 = vpop.permute.xlu0 %6333
      %6335 = vrot.lane.b32.xlu0 %v6290, 12
      %v6336 = vpop.permute.xlu0 %6335
      %6337 = vrot.lane.b32.xlu0 %v6291, 12
      %v6338 = vpop.permute.xlu0 %6337
      %6339 = vrot.lane.b32.xlu0 %v6292, 12
      %v6340 = vpop.permute.xlu0 %6339
      %6357 = vst.msk [vmem:[#allocation3] sm:$0xf] %vm1624, %v6310
      %6358 = vst.msk [vmem:[#allocation3 + $0x4] sm:$0xf] %vm1624, %v6312
      %6359 = vst.msk [vmem:[#allocation3 + $0x8] sm:$0xf] %vm1624, %v6314
      %6360 = vst.msk [vmem:[#allocation3 + $0xc] sm:$0xf] %vm1624, %v6316
      %6361 = vst.msk [vmem:[#allocation3 + $0x10] sm:$0xf] %vm1624, %v6318
      %6362 = vst.msk [vmem:[#allocation3 + $0x14] sm:$0xf] %vm1624, %v6320
      %6363 = vst.msk [vmem:[#allocation3 + $0x18] sm:$0xf] %vm1624, %v6322
      %6364 = vst.msk [vmem:[#allocation3 + $0x1c] sm:$0xf] %vm1624, %v6324
      %6365 = vst.msk [vmem:[#allocation3 + $0x20] sm:$0xf] %vm1624, %v6326
      %6366 = vst.msk [vmem:[#allocation3 + $0x24] sm:$0xf] %vm1624, %v6328
      %6367 = vst.msk [vmem:[#allocation3 + $0x28] sm:$0xf] %vm1624, %v6330
      %6368 = vst.msk [vmem:[#allocation3 + $0x2c] sm:$0xf] %vm1624, %v6332
      %6369 = vst.msk [vmem:[#allocation3 + $0x30] sm:$0xf] %vm1624, %v6334
      %6370 = vst.msk [vmem:[#allocation3 + $0x34] sm:$0xf] %vm1624, %v6336
      %6371 = vst.msk [vmem:[#allocation3 + $0x38] sm:$0xf] %vm1624, %v6338
      %6372 = vst.msk [vmem:[#allocation3 + $0x3c] sm:$0xf] %vm1624, %v6340
      %v6373 = vld [vmem:[%s399] sm:$0xf]
      %v6374 = vld [vmem:[%s399 + $0x4] sm:$0xf]
      %v6375 = vld [vmem:[%s399 + $0x8] sm:$0x1]
      %v6376 = vld [vmem:[%s399 + $0xc] sm:$0xf]
      %v6377 = vld [vmem:[%s399 + $0x10] sm:$0xf]
      %v6378 = vld [vmem:[%s399 + $0x14] sm:$0x1]
      %v6379 = vld [vmem:[%s399 + $0x18] sm:$0xf]
      %v6380 = vld [vmem:[%s399 + $0x1c] sm:$0xf]
      %v6381 = vld [vmem:[%s399 + $0x20] sm:$0x1]
      %v6382 = vld [vmem:[%s399 + $0x24] sm:$0xf]
      %v6383 = vld [vmem:[%s399 + $0x28] sm:$0xf]
      %v6384 = vld [vmem:[%s399 + $0x2c] sm:$0x1]
      %v6385 = vld [vmem:[%s399 + $0x30] sm:$0xf]
      %v6386 = vld [vmem:[%s399 + $0x34] sm:$0xf]
      %v6387 = vld [vmem:[%s399 + $0x38] sm:$0x1]
      %v6388 = vld [vmem:[%s399 + $0x3c] sm:$0xf]
      %v6389 = vld [vmem:[%s399 + $0x40] sm:$0xf]
      %v6390 = vld [vmem:[%s399 + $0x44] sm:$0x1]
      %v6391 = vld [vmem:[%s399 + $0x48] sm:$0xf]
      %v6392 = vld [vmem:[%s399 + $0x4c] sm:$0xf]
      %v6393 = vld [vmem:[%s399 + $0x50] sm:$0x1]
      %v6394 = vld [vmem:[%s399 + $0x54] sm:$0xf]
      %v6395 = vld [vmem:[%s399 + $0x58] sm:$0xf]
      %v6396 = vld [vmem:[%s399 + $0x5c] sm:$0x1]
      %v6398 = vshrl.u32 %v6373, 16
      %v6400 = vrot.slane %v6398, 4
      %v6401 = vshll.u32 %v6373, 16
      %v6403 = vrot.slane %v6401, 5
      %v6404 = vor.u32 %v6400, %v6403
      %v6405 = vrot.slane %v6404, 4
      %v6407 = vshll.u32 %v6374, 16
      %v6409 = vrot.slane %v6407, 5
      %v6410 = vsel %vm1114, %v6405, %v6409
      %v6411 = vshrl.u32 %v6374, 16
      %v6413 = vrot.slane %v6411, 4
      %v6414 = vor.u32 %v6413, %v6409
      %v6415 = vrot.slane %v6414, 4
      %v6417 = vshll.u32 %v6375, 16
      %v6419 = vrot.slane %v6417, 5
      %v6420 = vsel %vm1114, %v6415, %v6419
      %v6422 = vshrl.u32 %v6376, 16
      %v6424 = vrot.slane %v6422, 4
      %v6425 = vshll.u32 %v6376, 16
      %v6427 = vrot.slane %v6425, 5
      %v6428 = vor.u32 %v6424, %v6427
      %v6429 = vrot.slane %v6428, 4
      %v6431 = vshll.u32 %v6377, 16
      %v6433 = vrot.slane %v6431, 5
      %v6434 = vsel %vm1114, %v6429, %v6433
      %v6435 = vshrl.u32 %v6377, 16
      %v6437 = vrot.slane %v6435, 4
      %v6438 = vor.u32 %v6437, %v6433
      %v6439 = vrot.slane %v6438, 4
      %v6441 = vshll.u32 %v6378, 16
      %v6443 = vrot.slane %v6441, 5
      %v6444 = vsel %vm1114, %v6439, %v6443
      %v6446 = vshrl.u32 %v6379, 16
      %v6448 = vrot.slane %v6446, 4
      %v6449 = vshll.u32 %v6379, 16
      %v6451 = vrot.slane %v6449, 5
      %v6452 = vor.u32 %v6448, %v6451
      %v6453 = vrot.slane %v6452, 4
      %v6455 = vshll.u32 %v6380, 16
      %v6457 = vrot.slane %v6455, 5
      %v6458 = vsel %vm1114, %v6453, %v6457
      %v6459 = vshrl.u32 %v6380, 16
      %v6461 = vrot.slane %v6459, 4
      %v6462 = vor.u32 %v6461, %v6457
      %v6463 = vrot.slane %v6462, 4
      %v6465 = vshll.u32 %v6381, 16
      %v6467 = vrot.slane %v6465, 5
      %v6468 = vsel %vm1114, %v6463, %v6467
      %v6470 = vshrl.u32 %v6382, 16
      %v6472 = vrot.slane %v6470, 4
      %v6473 = vshll.u32 %v6382, 16
      %v6475 = vrot.slane %v6473, 5
      %v6476 = vor.u32 %v6472, %v6475
      %v6477 = vrot.slane %v6476, 4
      %v6479 = vshll.u32 %v6383, 16
      %v6481 = vrot.slane %v6479, 5
      %v6482 = vsel %vm1114, %v6477, %v6481
      %v6483 = vshrl.u32 %v6383, 16
      %v6485 = vrot.slane %v6483, 4
      %v6486 = vor.u32 %v6485, %v6481
      %v6487 = vrot.slane %v6486, 4
      %v6489 = vshll.u32 %v6384, 16
      %v6491 = vrot.slane %v6489, 5
      %v6492 = vsel %vm1114, %v6487, %v6491
      %v6494 = vshrl.u32 %v6385, 16
      %v6496 = vrot.slane %v6494, 4
      %v6497 = vshll.u32 %v6385, 16
      %v6499 = vrot.slane %v6497, 5
      %v6500 = vor.u32 %v6496, %v6499
      %v6501 = vrot.slane %v6500, 4
      %v6503 = vshll.u32 %v6386, 16
      %v6505 = vrot.slane %v6503, 5
      %v6506 = vsel %vm1114, %v6501, %v6505
      %v6507 = vshrl.u32 %v6386, 16
      %v6509 = vrot.slane %v6507, 4
      %v6510 = vor.u32 %v6509, %v6505
      %v6511 = vrot.slane %v6510, 4
      %v6513 = vshll.u32 %v6387, 16
      %v6515 = vrot.slane %v6513, 5
      %v6516 = vsel %vm1114, %v6511, %v6515
      %v6518 = vshrl.u32 %v6388, 16
      %v6520 = vrot.slane %v6518, 4
      %v6521 = vshll.u32 %v6388, 16
      %v6523 = vrot.slane %v6521, 5
      %v6524 = vor.u32 %v6520, %v6523
      %v6525 = vrot.slane %v6524, 4
      %v6527 = vshll.u32 %v6389, 16
      %v6529 = vrot.slane %v6527, 5
      %v6530 = vsel %vm1114, %v6525, %v6529
      %v6531 = vshrl.u32 %v6389, 16
      %v6533 = vrot.slane %v6531, 4
      %v6534 = vor.u32 %v6533, %v6529
      %v6535 = vrot.slane %v6534, 4
      %v6537 = vshll.u32 %v6390, 16
      %v6539 = vrot.slane %v6537, 5
      %v6540 = vsel %vm1114, %v6535, %v6539
      %v6542 = vshrl.u32 %v6391, 16
      %v6544 = vrot.slane %v6542, 4
      %v6545 = vshll.u32 %v6391, 16
      %v6547 = vrot.slane %v6545, 5
      %v6548 = vor.u32 %v6544, %v6547
      %v6549 = vrot.slane %v6548, 4
      %v6551 = vshll.u32 %v6392, 16
      %v6553 = vrot.slane %v6551, 5
      %v6554 = vsel %vm1114, %v6549, %v6553
      %v6555 = vshrl.u32 %v6392, 16
      %v6557 = vrot.slane %v6555, 4
      %v6558 = vor.u32 %v6557, %v6553
      %v6559 = vrot.slane %v6558, 4
      %v6561 = vshll.u32 %v6393, 16
      %v6563 = vrot.slane %v6561, 5
      %v6564 = vsel %vm1114, %v6559, %v6563
      %v6566 = vshrl.u32 %v6394, 16
      %v6568 = vrot.slane %v6566, 4
      %v6569 = vshll.u32 %v6394, 16
      %v6571 = vrot.slane %v6569, 5
      %v6572 = vor.u32 %v6568, %v6571
      %v6573 = vrot.slane %v6572, 4
      %v6575 = vshll.u32 %v6395, 16
      %v6577 = vrot.slane %v6575, 5
      %v6578 = vsel %vm1114, %v6573, %v6577
      %v6579 = vshrl.u32 %v6395, 16
      %v6581 = vrot.slane %v6579, 4
      %v6582 = vor.u32 %v6581, %v6577
      %v6583 = vrot.slane %v6582, 4
      %v6585 = vshll.u32 %v6396, 16
      %v6587 = vrot.slane %v6585, 5
      %v6588 = vsel %vm1114, %v6583, %v6587
      %6589 = vrot.lane.b32.xlu0 %v6410, 16
      %v6590 = vpop.permute.xlu0 %6589
      %6591 = vrot.lane.b32.xlu0 %v6420, 16
      %v6592 = vpop.permute.xlu0 %6591
      %6593 = vrot.lane.b32.xlu0 %v6434, 16
      %v6594 = vpop.permute.xlu0 %6593
      %6595 = vrot.lane.b32.xlu0 %v6444, 16
      %v6596 = vpop.permute.xlu0 %6595
      %6597 = vrot.lane.b32.xlu0 %v6458, 16
      %v6598 = vpop.permute.xlu0 %6597
      %6599 = vrot.lane.b32.xlu0 %v6468, 16
      %v6600 = vpop.permute.xlu0 %6599
      %6601 = vrot.lane.b32.xlu0 %v6482, 16
      %v6602 = vpop.permute.xlu0 %6601
      %6603 = vrot.lane.b32.xlu0 %v6492, 16
      %v6604 = vpop.permute.xlu0 %6603
      %6605 = vrot.lane.b32.xlu0 %v6506, 16
      %v6606 = vpop.permute.xlu0 %6605
      %6607 = vrot.lane.b32.xlu0 %v6516, 16
      %v6608 = vpop.permute.xlu0 %6607
      %6609 = vrot.lane.b32.xlu0 %v6530, 16
      %v6610 = vpop.permute.xlu0 %6609
      %6611 = vrot.lane.b32.xlu0 %v6540, 16
      %v6612 = vpop.permute.xlu0 %6611
      %6613 = vrot.lane.b32.xlu0 %v6554, 16
      %v6614 = vpop.permute.xlu0 %6613
      %6615 = vrot.lane.b32.xlu0 %v6564, 16
      %v6616 = vpop.permute.xlu0 %6615
      %6617 = vrot.lane.b32.xlu0 %v6578, 16
      %v6618 = vpop.permute.xlu0 %6617
      %6619 = vrot.lane.b32.xlu0 %v6588, 16
      %v6620 = vpop.permute.xlu0 %6619
      %6637 = vst.msk [vmem:[#allocation3] sm:$0xf] %vm1905, %v6590
      %6638 = vst.msk [vmem:[#allocation3 + $0x4] sm:$0xf] %vm1905, %v6592
      %6639 = vst.msk [vmem:[#allocation3 + $0x8] sm:$0xf] %vm1905, %v6594
      %6640 = vst.msk [vmem:[#allocation3 + $0xc] sm:$0xf] %vm1905, %v6596
      %6641 = vst.msk [vmem:[#allocation3 + $0x10] sm:$0xf] %vm1905, %v6598
      %6642 = vst.msk [vmem:[#allocation3 + $0x14] sm:$0xf] %vm1905, %v6600
      %6643 = vst.msk [vmem:[#allocation3 + $0x18] sm:$0xf] %vm1905, %v6602
      %6644 = vst.msk [vmem:[#allocation3 + $0x1c] sm:$0xf] %vm1905, %v6604
      %6645 = vst.msk [vmem:[#allocation3 + $0x20] sm:$0xf] %vm1905, %v6606
      %6646 = vst.msk [vmem:[#allocation3 + $0x24] sm:$0xf] %vm1905, %v6608
      %6647 = vst.msk [vmem:[#allocation3 + $0x28] sm:$0xf] %vm1905, %v6610
      %6648 = vst.msk [vmem:[#allocation3 + $0x2c] sm:$0xf] %vm1905, %v6612
      %6649 = vst.msk [vmem:[#allocation3 + $0x30] sm:$0xf] %vm1905, %v6614
      %6650 = vst.msk [vmem:[#allocation3 + $0x34] sm:$0xf] %vm1905, %v6616
      %6651 = vst.msk [vmem:[#allocation3 + $0x38] sm:$0xf] %vm1905, %v6618
      %6652 = vst.msk [vmem:[#allocation3 + $0x3c] sm:$0xf] %vm1905, %v6620
      %v6653 = vld [vmem:[%s399] sm:$0xe]
      %v6654 = vld [vmem:[%s399 + $0x4] sm:$0xf]
      %v6655 = vld [vmem:[%s399 + $0x8] sm:$0x1]
      %v6656 = vld [vmem:[%s399 + $0xc] sm:$0xe]
      %v6657 = vld [vmem:[%s399 + $0x10] sm:$0xf]
      %v6658 = vld [vmem:[%s399 + $0x14] sm:$0x1]
      %v6659 = vld [vmem:[%s399 + $0x18] sm:$0xe]
      %v6660 = vld [vmem:[%s399 + $0x1c] sm:$0xf]
      %v6661 = vld [vmem:[%s399 + $0x20] sm:$0x1]
      %v6662 = vld [vmem:[%s399 + $0x24] sm:$0xe]
      %v6663 = vld [vmem:[%s399 + $0x28] sm:$0xf]
      %v6664 = vld [vmem:[%s399 + $0x2c] sm:$0x1]
      %v6665 = vld [vmem:[%s399 + $0x30] sm:$0xe]
      %v6666 = vld [vmem:[%s399 + $0x34] sm:$0xf]
      %v6667 = vld [vmem:[%s399 + $0x38] sm:$0x1]
      %v6668 = vld [vmem:[%s399 + $0x3c] sm:$0xe]
      %v6669 = vld [vmem:[%s399 + $0x40] sm:$0xf]
      %v6670 = vld [vmem:[%s399 + $0x44] sm:$0x1]
      %v6671 = vld [vmem:[%s399 + $0x48] sm:$0xe]
      %v6672 = vld [vmem:[%s399 + $0x4c] sm:$0xf]
      %v6673 = vld [vmem:[%s399 + $0x50] sm:$0x1]
      %v6674 = vld [vmem:[%s399 + $0x54] sm:$0xe]
      %v6675 = vld [vmem:[%s399 + $0x58] sm:$0xf]
      %v6676 = vld [vmem:[%s399 + $0x5c] sm:$0x1]
      %v6701 = vrot.slane %v6653, 5
      %v6702 = vrot.slane %v6701, 4
      %v6703 = vrot.slane %v6654, 5
      %v6704 = vsel %vm1422, %v6702, %v6703
      %v6705 = vrot.slane %v6703, 4
      %v6706 = vrot.slane %v6655, 5
      %v6707 = vsel %vm1422, %v6705, %v6706
      %v6708 = vrot.slane %v6656, 5
      %v6709 = vrot.slane %v6708, 4
      %v6710 = vrot.slane %v6657, 5
      %v6711 = vsel %vm1422, %v6709, %v6710
      %v6712 = vrot.slane %v6710, 4
      %v6713 = vrot.slane %v6658, 5
      %v6714 = vsel %vm1422, %v6712, %v6713
      %v6715 = vrot.slane %v6659, 5
      %v6716 = vrot.slane %v6715, 4
      %v6717 = vrot.slane %v6660, 5
      %v6718 = vsel %vm1422, %v6716, %v6717
      %v6719 = vrot.slane %v6717, 4
      %v6720 = vrot.slane %v6661, 5
      %v6721 = vsel %vm1422, %v6719, %v6720
      %v6722 = vrot.slane %v6662, 5
      %v6723 = vrot.slane %v6722, 4
      %v6724 = vrot.slane %v6663, 5
      %v6725 = vsel %vm1422, %v6723, %v6724
      %v6726 = vrot.slane %v6724, 4
      %v6727 = vrot.slane %v6664, 5
      %v6728 = vsel %vm1422, %v6726, %v6727
      %v6729 = vrot.slane %v6665, 5
      %v6730 = vrot.slane %v6729, 4
      %v6731 = vrot.slane %v6666, 5
      %v6732 = vsel %vm1422, %v6730, %v6731
      %v6733 = vrot.slane %v6731, 4
      %v6734 = vrot.slane %v6667, 5
      %v6735 = vsel %vm1422, %v6733, %v6734
      %v6736 = vrot.slane %v6668, 5
      %v6737 = vrot.slane %v6736, 4
      %v6738 = vrot.slane %v6669, 5
      %v6739 = vsel %vm1422, %v6737, %v6738
      %v6740 = vrot.slane %v6738, 4
      %v6741 = vrot.slane %v6670, 5
      %v6742 = vsel %vm1422, %v6740, %v6741
      %v6743 = vrot.slane %v6671, 5
      %v6744 = vrot.slane %v6743, 4
      %v6745 = vrot.slane %v6672, 5
      %v6746 = vsel %vm1422, %v6744, %v6745
      %v6747 = vrot.slane %v6745, 4
      %v6748 = vrot.slane %v6673, 5
      %v6749 = vsel %vm1422, %v6747, %v6748
      %v6750 = vrot.slane %v6674, 5
      %v6751 = vrot.slane %v6750, 4
      %v6752 = vrot.slane %v6675, 5
      %v6753 = vsel %vm1422, %v6751, %v6752
      %v6754 = vrot.slane %v6752, 4
      %v6755 = vrot.slane %v6676, 5
      %v6756 = vsel %vm1422, %v6754, %v6755
      %6757 = vrot.lane.b32.xlu0 %v6704, 20
      %v6758 = vpop.permute.xlu0 %6757
      %6759 = vrot.lane.b32.xlu0 %v6707, 20
      %v6760 = vpop.permute.xlu0 %6759
      %6761 = vrot.lane.b32.xlu0 %v6711, 20
      %v6762 = vpop.permute.xlu0 %6761
      %6763 = vrot.lane.b32.xlu0 %v6714, 20
      %v6764 = vpop.permute.xlu0 %6763
      %6765 = vrot.lane.b32.xlu0 %v6718, 20
      %v6766 = vpop.permute.xlu0 %6765
      %6767 = vrot.lane.b32.xlu0 %v6721, 20
      %v6768 = vpop.permute.xlu0 %6767
      %6769 = vrot.lane.b32.xlu0 %v6725, 20
      %v6770 = vpop.permute.xlu0 %6769
      %6771 = vrot.lane.b32.xlu0 %v6728, 20
      %v6772 = vpop.permute.xlu0 %6771
      %6773 = vrot.lane.b32.xlu0 %v6732, 20
      %v6774 = vpop.permute.xlu0 %6773
      %6775 = vrot.lane.b32.xlu0 %v6735, 20
      %v6776 = vpop.permute.xlu0 %6775
      %6777 = vrot.lane.b32.xlu0 %v6739, 20
      %v6778 = vpop.permute.xlu0 %6777
      %6779 = vrot.lane.b32.xlu0 %v6742, 20
      %v6780 = vpop.permute.xlu0 %6779
      %6781 = vrot.lane.b32.xlu0 %v6746, 20
      %v6782 = vpop.permute.xlu0 %6781
      %6783 = vrot.lane.b32.xlu0 %v6749, 20
      %v6784 = vpop.permute.xlu0 %6783
      %6785 = vrot.lane.b32.xlu0 %v6753, 20
      %v6786 = vpop.permute.xlu0 %6785
      %6787 = vrot.lane.b32.xlu0 %v6756, 20
      %v6788 = vpop.permute.xlu0 %6787
      %6805 = vst.msk [vmem:[#allocation3] sm:$0xf] %vm2074, %v6758
      %6806 = vst.msk [vmem:[#allocation3 + $0x4] sm:$0xf] %vm2074, %v6760
      %6807 = vst.msk [vmem:[#allocation3 + $0x8] sm:$0xf] %vm2074, %v6762
      %6808 = vst.msk [vmem:[#allocation3 + $0xc] sm:$0xf] %vm2074, %v6764
      %6809 = vst.msk [vmem:[#allocation3 + $0x10] sm:$0xf] %vm2074, %v6766
      %6810 = vst.msk [vmem:[#allocation3 + $0x14] sm:$0xf] %vm2074, %v6768
      %6811 = vst.msk [vmem:[#allocation3 + $0x18] sm:$0xf] %vm2074, %v6770
      %6812 = vst.msk [vmem:[#allocation3 + $0x1c] sm:$0xf] %vm2074, %v6772
      %6813 = vst.msk [vmem:[#allocation3 + $0x20] sm:$0xf] %vm2074, %v6774
      %6814 = vst.msk [vmem:[#allocation3 + $0x24] sm:$0xf] %vm2074, %v6776
      %6815 = vst.msk [vmem:[#allocation3 + $0x28] sm:$0xf] %vm2074, %v6778
      %6816 = vst.msk [vmem:[#allocation3 + $0x2c] sm:$0xf] %vm2074, %v6780
      %6817 = vst.msk [vmem:[#allocation3 + $0x30] sm:$0xf] %vm2074, %v6782
      %6818 = vst.msk [vmem:[#allocation3 + $0x34] sm:$0xf] %vm2074, %v6784
      %6819 = vst.msk [vmem:[#allocation3 + $0x38] sm:$0xf] %vm2074, %v6786
      %6820 = vst.msk [vmem:[#allocation3 + $0x3c] sm:$0xf] %vm2074, %v6788
      %v6821 = vld [vmem:[%s744] sm:$0xf]
      %v6822 = vld [vmem:[%s744 + $0x4] sm:$0xf]
      %v6823 = vld [vmem:[%s744 + $0xc] sm:$0xf]
      %v6824 = vld [vmem:[%s744 + $0x10] sm:$0xf]
      %v6825 = vld [vmem:[%s744 + $0x18] sm:$0xf]
      %v6826 = vld [vmem:[%s744 + $0x1c] sm:$0xf]
      %v6827 = vld [vmem:[%s744 + $0x24] sm:$0xf]
      %v6828 = vld [vmem:[%s744 + $0x28] sm:$0xf]
      %v6829 = vld [vmem:[%s744 + $0x30] sm:$0xf]
      %v6830 = vld [vmem:[%s744 + $0x34] sm:$0xf]
      %v6831 = vld [vmem:[%s744 + $0x3c] sm:$0xf]
      %v6832 = vld [vmem:[%s744 + $0x40] sm:$0xf]
      %v6833 = vld [vmem:[%s744 + $0x48] sm:$0xf]
      %v6834 = vld [vmem:[%s744 + $0x4c] sm:$0xf]
      %v6835 = vld [vmem:[%s744 + $0x54] sm:$0xf]
      %v6836 = vld [vmem:[%s744 + $0x58] sm:$0xf]
      %6853 = vrot.lane.b32.xlu0 %v6821, 24
      %v6854 = vpop.permute.xlu0 %6853
      %6855 = vrot.lane.b32.xlu0 %v6822, 24
      %v6856 = vpop.permute.xlu0 %6855
      %6857 = vrot.lane.b32.xlu0 %v6823, 24
      %v6858 = vpop.permute.xlu0 %6857
      %6859 = vrot.lane.b32.xlu0 %v6824, 24
      %v6860 = vpop.permute.xlu0 %6859
      %6861 = vrot.lane.b32.xlu0 %v6825, 24
      %v6862 = vpop.permute.xlu0 %6861
      %6863 = vrot.lane.b32.xlu0 %v6826, 24
      %v6864 = vpop.permute.xlu0 %6863
      %6865 = vrot.lane.b32.xlu0 %v6827, 24
      %v6866 = vpop.permute.xlu0 %6865
      %6867 = vrot.lane.b32.xlu0 %v6828, 24
      %v6868 = vpop.permute.xlu0 %6867
      %6869 = vrot.lane.b32.xlu0 %v6829, 24
      %v6870 = vpop.permute.xlu0 %6869
      %6871 = vrot.lane.b32.xlu0 %v6830, 24
      %v6872 = vpop.permute.xlu0 %6871
      %6873 = vrot.lane.b32.xlu0 %v6831, 24
      %v6874 = vpop.permute.xlu0 %6873
      %6875 = vrot.lane.b32.xlu0 %v6832, 24
      %v6876 = vpop.permute.xlu0 %6875
      %6877 = vrot.lane.b32.xlu0 %v6833, 24
      %v6878 = vpop.permute.xlu0 %6877
      %6879 = vrot.lane.b32.xlu0 %v6834, 24
      %v6880 = vpop.permute.xlu0 %6879
      %6881 = vrot.lane.b32.xlu0 %v6835, 24
      %v6882 = vpop.permute.xlu0 %6881
      %6883 = vrot.lane.b32.xlu0 %v6836, 24
      %v6884 = vpop.permute.xlu0 %6883
      %6901 = vst.msk [vmem:[#allocation3] sm:$0xf] %vm2171, %v6854
      %6902 = vst.msk [vmem:[#allocation3 + $0x4] sm:$0xf] %vm2171, %v6856
      %6903 = vst.msk [vmem:[#allocation3 + $0x8] sm:$0xf] %vm2171, %v6858
      %6904 = vst.msk [vmem:[#allocation3 + $0xc] sm:$0xf] %vm2171, %v6860
      %6905 = vst.msk [vmem:[#allocation3 + $0x10] sm:$0xf] %vm2171, %v6862
      %6906 = vst.msk [vmem:[#allocation3 + $0x14] sm:$0xf] %vm2171, %v6864
      %6907 = vst.msk [vmem:[#allocation3 + $0x18] sm:$0xf] %vm2171, %v6866
      %6908 = vst.msk [vmem:[#allocation3 + $0x1c] sm:$0xf] %vm2171, %v6868
      %6909 = vst.msk [vmem:[#allocation3 + $0x20] sm:$0xf] %vm2171, %v6870
      %6910 = vst.msk [vmem:[#allocation3 + $0x24] sm:$0xf] %vm2171, %v6872
      %6911 = vst.msk [vmem:[#allocation3 + $0x28] sm:$0xf] %vm2171, %v6874
      %6912 = vst.msk [vmem:[#allocation3 + $0x2c] sm:$0xf] %vm2171, %v6876
      %6913 = vst.msk [vmem:[#allocation3 + $0x30] sm:$0xf] %vm2171, %v6878
      %6914 = vst.msk [vmem:[#allocation3 + $0x34] sm:$0xf] %vm2171, %v6880
      %6915 = vst.msk [vmem:[#allocation3 + $0x38] sm:$0xf] %vm2171, %v6882
      %6916 = vst.msk [vmem:[#allocation3 + $0x3c] sm:$0xf] %vm2171, %v6884
      %v6917 = vld [vmem:[%s744] sm:$0xf]
      %v6918 = vld [vmem:[%s744 + $0x4] sm:$0xf]
      %v6919 = vld [vmem:[%s744 + $0x8] sm:$0x1]
      %v6920 = vld [vmem:[%s744 + $0xc] sm:$0xf]
      %v6921 = vld [vmem:[%s744 + $0x10] sm:$0xf]
      %v6922 = vld [vmem:[%s744 + $0x14] sm:$0x1]
      %v6923 = vld [vmem:[%s744 + $0x18] sm:$0xf]
      %v6924 = vld [vmem:[%s744 + $0x1c] sm:$0xf]
      %v6925 = vld [vmem:[%s744 + $0x20] sm:$0x1]
      %v6926 = vld [vmem:[%s744 + $0x24] sm:$0xf]
      %v6927 = vld [vmem:[%s744 + $0x28] sm:$0xf]
      %v6928 = vld [vmem:[%s744 + $0x2c] sm:$0x1]
      %v6929 = vld [vmem:[%s744 + $0x30] sm:$0xf]
      %v6930 = vld [vmem:[%s744 + $0x34] sm:$0xf]
      %v6931 = vld [vmem:[%s744 + $0x38] sm:$0x1]
      %v6932 = vld [vmem:[%s744 + $0x3c] sm:$0xf]
      %v6933 = vld [vmem:[%s744 + $0x40] sm:$0xf]
      %v6934 = vld [vmem:[%s744 + $0x44] sm:$0x1]
      %v6935 = vld [vmem:[%s744 + $0x48] sm:$0xf]
      %v6936 = vld [vmem:[%s744 + $0x4c] sm:$0xf]
      %v6937 = vld [vmem:[%s744 + $0x50] sm:$0x1]
      %v6938 = vld [vmem:[%s744 + $0x54] sm:$0xf]
      %v6939 = vld [vmem:[%s744 + $0x58] sm:$0xf]
      %v6940 = vld [vmem:[%s744 + $0x5c] sm:$0x1]
      %v6942 = vshrl.u32 %v6917, 16
      %v6944 = vrot.slane %v6942, 4
      %v6945 = vshll.u32 %v6917, 16
      %v6947 = vrot.slane %v6945, 5
      %v6948 = vor.u32 %v6944, %v6947
      %v6949 = vrot.slane %v6948, 4
      %v6951 = vshll.u32 %v6918, 16
      %v6953 = vrot.slane %v6951, 5
      %v6954 = vsel %vm1114, %v6949, %v6953
      %v6955 = vshrl.u32 %v6918, 16
      %v6957 = vrot.slane %v6955, 4
      %v6958 = vor.u32 %v6957, %v6953
      %v6959 = vrot.slane %v6958, 4
      %v6961 = vshll.u32 %v6919, 16
      %v6963 = vrot.slane %v6961, 5
      %v6964 = vsel %vm1114, %v6959, %v6963
      %v6966 = vshrl.u32 %v6920, 16
      %v6968 = vrot.slane %v6966, 4
      %v6969 = vshll.u32 %v6920, 16
      %v6971 = vrot.slane %v6969, 5
      %v6972 = vor.u32 %v6968, %v6971
      %v6973 = vrot.slane %v6972, 4
      %v6975 = vshll.u32 %v6921, 16
      %v6977 = vrot.slane %v6975, 5
      %v6978 = vsel %vm1114, %v6973, %v6977
      %v6979 = vshrl.u32 %v6921, 16
      %v6981 = vrot.slane %v6979, 4
      %v6982 = vor.u32 %v6981, %v6977
      %v6983 = vrot.slane %v6982, 4
      %v6985 = vshll.u32 %v6922, 16
      %v6987 = vrot.slane %v6985, 5
      %v6988 = vsel %vm1114, %v6983, %v6987
      %v6990 = vshrl.u32 %v6923, 16
      %v6992 = vrot.slane %v6990, 4
      %v6993 = vshll.u32 %v6923, 16
      %v6995 = vrot.slane %v6993, 5
      %v6996 = vor.u32 %v6992, %v6995
      %v6997 = vrot.slane %v6996, 4
      %v6999 = vshll.u32 %v6924, 16
      %v7001 = vrot.slane %v6999, 5
      %v7002 = vsel %vm1114, %v6997, %v7001
      %v7003 = vshrl.u32 %v6924, 16
      %v7005 = vrot.slane %v7003, 4
      %v7006 = vor.u32 %v7005, %v7001
      %v7007 = vrot.slane %v7006, 4
      %v7009 = vshll.u32 %v6925, 16
      %v7011 = vrot.slane %v7009, 5
      %v7012 = vsel %vm1114, %v7007, %v7011
      %v7014 = vshrl.u32 %v6926, 16
      %v7016 = vrot.slane %v7014, 4
      %v7017 = vshll.u32 %v6926, 16
      %v7019 = vrot.slane %v7017, 5
      %v7020 = vor.u32 %v7016, %v7019
      %v7021 = vrot.slane %v7020, 4
      %v7023 = vshll.u32 %v6927, 16
      %v7025 = vrot.slane %v7023, 5
      %v7026 = vsel %vm1114, %v7021, %v7025
      %v7027 = vshrl.u32 %v6927, 16
      %v7029 = vrot.slane %v7027, 4
      %v7030 = vor.u32 %v7029, %v7025
      %v7031 = vrot.slane %v7030, 4
      %v7033 = vshll.u32 %v6928, 16
      %v7035 = vrot.slane %v7033, 5
      %v7036 = vsel %vm1114, %v7031, %v7035
      %v7038 = vshrl.u32 %v6929, 16
      %v7040 = vrot.slane %v7038, 4
      %v7041 = vshll.u32 %v6929, 16
      %v7043 = vrot.slane %v7041, 5
      %v7044 = vor.u32 %v7040, %v7043
      %v7045 = vrot.slane %v7044, 4
      %v7047 = vshll.u32 %v6930, 16
      %v7049 = vrot.slane %v7047, 5
      %v7050 = vsel %vm1114, %v7045, %v7049
      %v7051 = vshrl.u32 %v6930, 16
      %v7053 = vrot.slane %v7051, 4
      %v7054 = vor.u32 %v7053, %v7049
      %v7055 = vrot.slane %v7054, 4
      %v7057 = vshll.u32 %v6931, 16
      %v7059 = vrot.slane %v7057, 5
      %v7060 = vsel %vm1114, %v7055, %v7059
      %v7062 = vshrl.u32 %v6932, 16
      %v7064 = vrot.slane %v7062, 4
      %v7065 = vshll.u32 %v6932, 16
      %v7067 = vrot.slane %v7065, 5
      %v7068 = vor.u32 %v7064, %v7067
      %v7069 = vrot.slane %v7068, 4
      %v7071 = vshll.u32 %v6933, 16
      %v7073 = vrot.slane %v7071, 5
      %v7074 = vsel %vm1114, %v7069, %v7073
      %v7075 = vshrl.u32 %v6933, 16
      %v7077 = vrot.slane %v7075, 4
      %v7078 = vor.u32 %v7077, %v7073
      %v7079 = vrot.slane %v7078, 4
      %v7081 = vshll.u32 %v6934, 16
      %v7083 = vrot.slane %v7081, 5
      %v7084 = vsel %vm1114, %v7079, %v7083
      %v7086 = vshrl.u32 %v6935, 16
      %v7088 = vrot.slane %v7086, 4
      %v7089 = vshll.u32 %v6935, 16
      %v7091 = vrot.slane %v7089, 5
      %v7092 = vor.u32 %v7088, %v7091
      %v7093 = vrot.slane %v7092, 4
      %v7095 = vshll.u32 %v6936, 16
      %v7097 = vrot.slane %v7095, 5
      %v7098 = vsel %vm1114, %v7093, %v7097
      %v7099 = vshrl.u32 %v6936, 16
      %v7101 = vrot.slane %v7099, 4
      %v7102 = vor.u32 %v7101, %v7097
      %v7103 = vrot.slane %v7102, 4
      %v7105 = vshll.u32 %v6937, 16
      %v7107 = vrot.slane %v7105, 5
      %v7108 = vsel %vm1114, %v7103, %v7107
      %v7110 = vshrl.u32 %v6938, 16
      %v7112 = vrot.slane %v7110, 4
      %v7113 = vshll.u32 %v6938, 16
      %v7115 = vrot.slane %v7113, 5
      %v7116 = vor.u32 %v7112, %v7115
      %v7117 = vrot.slane %v7116, 4
      %v7119 = vshll.u32 %v6939, 16
      %v7121 = vrot.slane %v7119, 5
      %v7122 = vsel %vm1114, %v7117, %v7121
      %v7123 = vshrl.u32 %v6939, 16
      %v7125 = vrot.slane %v7123, 4
      %v7126 = vor.u32 %v7125, %v7121
      %v7127 = vrot.slane %v7126, 4
      %v7129 = vshll.u32 %v6940, 16
      %v7131 = vrot.slane %v7129, 5
      %v7132 = vsel %vm1114, %v7127, %v7131
      %7133 = vrot.lane.b32.xlu0 %v6954, 28
      %v7134 = vpop.permute.xlu0 %7133
      %7135 = vrot.lane.b32.xlu0 %v6964, 28
      %v7136 = vpop.permute.xlu0 %7135
      %7137 = vrot.lane.b32.xlu0 %v6978, 28
      %v7138 = vpop.permute.xlu0 %7137
      %7139 = vrot.lane.b32.xlu0 %v6988, 28
      %v7140 = vpop.permute.xlu0 %7139
      %7141 = vrot.lane.b32.xlu0 %v7002, 28
      %v7142 = vpop.permute.xlu0 %7141
      %7143 = vrot.lane.b32.xlu0 %v7012, 28
      %v7144 = vpop.permute.xlu0 %7143
      %7145 = vrot.lane.b32.xlu0 %v7026, 28
      %v7146 = vpop.permute.xlu0 %7145
      %7147 = vrot.lane.b32.xlu0 %v7036, 28
      %v7148 = vpop.permute.xlu0 %7147
      %7149 = vrot.lane.b32.xlu0 %v7050, 28
      %v7150 = vpop.permute.xlu0 %7149
      %7151 = vrot.lane.b32.xlu0 %v7060, 28
      %v7152 = vpop.permute.xlu0 %7151
      %7153 = vrot.lane.b32.xlu0 %v7074, 28
      %v7154 = vpop.permute.xlu0 %7153
      %7155 = vrot.lane.b32.xlu0 %v7084, 28
      %v7156 = vpop.permute.xlu0 %7155
      %7157 = vrot.lane.b32.xlu0 %v7098, 28
      %v7158 = vpop.permute.xlu0 %7157
      %7159 = vrot.lane.b32.xlu0 %v7108, 28
      %v7160 = vpop.permute.xlu0 %7159
      %7161 = vrot.lane.b32.xlu0 %v7122, 28
      %v7162 = vpop.permute.xlu0 %7161
      %7163 = vrot.lane.b32.xlu0 %v7132, 28
      %v7164 = vpop.permute.xlu0 %7163
      %7181 = vst.msk [vmem:[#allocation3] sm:$0xf] %vm2452, %v7134
      %7182 = vst.msk [vmem:[#allocation3 + $0x4] sm:$0xf] %vm2452, %v7136
      %7183 = vst.msk [vmem:[#allocation3 + $0x8] sm:$0xf] %vm2452, %v7138
      %7184 = vst.msk [vmem:[#allocation3 + $0xc] sm:$0xf] %vm2452, %v7140
      %7185 = vst.msk [vmem:[#allocation3 + $0x10] sm:$0xf] %vm2452, %v7142
      %7186 = vst.msk [vmem:[#allocation3 + $0x14] sm:$0xf] %vm2452, %v7144
      %7187 = vst.msk [vmem:[#allocation3 + $0x18] sm:$0xf] %vm2452, %v7146
      %7188 = vst.msk [vmem:[#allocation3 + $0x1c] sm:$0xf] %vm2452, %v7148
      %7189 = vst.msk [vmem:[#allocation3 + $0x20] sm:$0xf] %vm2452, %v7150
      %7190 = vst.msk [vmem:[#allocation3 + $0x24] sm:$0xf] %vm2452, %v7152
      %7191 = vst.msk [vmem:[#allocation3 + $0x28] sm:$0xf] %vm2452, %v7154
      %7192 = vst.msk [vmem:[#allocation3 + $0x2c] sm:$0xf] %vm2452, %v7156
      %7193 = vst.msk [vmem:[#allocation3 + $0x30] sm:$0xf] %vm2452, %v7158
      %7194 = vst.msk [vmem:[#allocation3 + $0x34] sm:$0xf] %vm2452, %v7160
      %7195 = vst.msk [vmem:[#allocation3 + $0x38] sm:$0xf] %vm2452, %v7162
      %7196 = vst.msk [vmem:[#allocation3 + $0x3c] sm:$0xf] %vm2452, %v7164
      %v7197 = vld [vmem:[%s744] sm:$0xe]
      %v7198 = vld [vmem:[%s744 + $0x4] sm:$0xf]
      %v7199 = vld [vmem:[%s744 + $0x8] sm:$0x1]
      %v7200 = vld [vmem:[%s744 + $0xc] sm:$0xe]
      %v7201 = vld [vmem:[%s744 + $0x10] sm:$0xf]
      %v7202 = vld [vmem:[%s744 + $0x14] sm:$0x1]
      %v7203 = vld [vmem:[%s744 + $0x18] sm:$0xe]
      %v7204 = vld [vmem:[%s744 + $0x1c] sm:$0xf]
      %v7205 = vld [vmem:[%s744 + $0x20] sm:$0x1]
      %v7206 = vld [vmem:[%s744 + $0x24] sm:$0xe]
      %v7207 = vld [vmem:[%s744 + $0x28] sm:$0xf]
      %v7208 = vld [vmem:[%s744 + $0x2c] sm:$0x1]
      %v7209 = vld [vmem:[%s744 + $0x30] sm:$0xe]
      %v7210 = vld [vmem:[%s744 + $0x34] sm:$0xf]
      %v7211 = vld [vmem:[%s744 + $0x38] sm:$0x1]
      %v7212 = vld [vmem:[%s744 + $0x3c] sm:$0xe]
      %v7213 = vld [vmem:[%s744 + $0x40] sm:$0xf]
      %v7214 = vld [vmem:[%s744 + $0x44] sm:$0x1]
      %v7215 = vld [vmem:[%s744 + $0x48] sm:$0xe]
      %v7216 = vld [vmem:[%s744 + $0x4c] sm:$0xf]
      %v7217 = vld [vmem:[%s744 + $0x50] sm:$0x1]
      %v7218 = vld [vmem:[%s744 + $0x54] sm:$0xe]
      %v7219 = vld [vmem:[%s744 + $0x58] sm:$0xf]
      %v7220 = vld [vmem:[%s744 + $0x5c] sm:$0x1]
      %v7245 = vrot.slane %v7197, 5
      %v7246 = vrot.slane %v7245, 4
      %v7247 = vrot.slane %v7198, 5
      %v7248 = vsel %vm1422, %v7246, %v7247
      %v7249 = vrot.slane %v7247, 4
      %v7250 = vrot.slane %v7199, 5
      %v7251 = vsel %vm1422, %v7249, %v7250
      %v7252 = vrot.slane %v7200, 5
      %v7253 = vrot.slane %v7252, 4
      %v7254 = vrot.slane %v7201, 5
      %v7255 = vsel %vm1422, %v7253, %v7254
      %v7256 = vrot.slane %v7254, 4
      %v7257 = vrot.slane %v7202, 5
      %v7258 = vsel %vm1422, %v7256, %v7257
      %v7259 = vrot.slane %v7203, 5
      %v7260 = vrot.slane %v7259, 4
      %v7261 = vrot.slane %v7204, 5
      %v7262 = vsel %vm1422, %v7260, %v7261
      %v7263 = vrot.slane %v7261, 4
      %v7264 = vrot.slane %v7205, 5
      %v7265 = vsel %vm1422, %v7263, %v7264
      %v7266 = vrot.slane %v7206, 5
      %v7267 = vrot.slane %v7266, 4
      %v7268 = vrot.slane %v7207, 5
      %v7269 = vsel %vm1422, %v7267, %v7268
      %v7270 = vrot.slane %v7268, 4
      %v7271 = vrot.slane %v7208, 5
      %v7272 = vsel %vm1422, %v7270, %v7271
      %v7273 = vrot.slane %v7209, 5
      %v7274 = vrot.slane %v7273, 4
      %v7275 = vrot.slane %v7210, 5
      %v7276 = vsel %vm1422, %v7274, %v7275
      %v7277 = vrot.slane %v7275, 4
      %v7278 = vrot.slane %v7211, 5
      %v7279 = vsel %vm1422, %v7277, %v7278
      %v7280 = vrot.slane %v7212, 5
      %v7281 = vrot.slane %v7280, 4
      %v7282 = vrot.slane %v7213, 5
      %v7283 = vsel %vm1422, %v7281, %v7282
      %v7284 = vrot.slane %v7282, 4
      %v7285 = vrot.slane %v7214, 5
      %v7286 = vsel %vm1422, %v7284, %v7285
      %v7287 = vrot.slane %v7215, 5
      %v7288 = vrot.slane %v7287, 4
      %v7289 = vrot.slane %v7216, 5
      %v7290 = vsel %vm1422, %v7288, %v7289
      %v7291 = vrot.slane %v7289, 4
      %v7292 = vrot.slane %v7217, 5
      %v7293 = vsel %vm1422, %v7291, %v7292
      %v7294 = vrot.slane %v7218, 5
      %v7295 = vrot.slane %v7294, 4
      %v7296 = vrot.slane %v7219, 5
      %v7297 = vsel %vm1422, %v7295, %v7296
      %v7298 = vrot.slane %v7296, 4
      %v7299 = vrot.slane %v7220, 5
      %v7300 = vsel %vm1422, %v7298, %v7299
      %7301 = vrot.lane.b32.xlu0 %v7248, 32
      %v7302 = vpop.permute.xlu0 %7301
      %7303 = vrot.lane.b32.xlu0 %v7251, 32
      %v7304 = vpop.permute.xlu0 %7303
      %7305 = vrot.lane.b32.xlu0 %v7255, 32
      %v7306 = vpop.permute.xlu0 %7305
      %7307 = vrot.lane.b32.xlu0 %v7258, 32
      %v7308 = vpop.permute.xlu0 %7307
      %7309 = vrot.lane.b32.xlu0 %v7262, 32
      %v7310 = vpop.permute.xlu0 %7309
      %7311 = vrot.lane.b32.xlu0 %v7265, 32
      %v7312 = vpop.permute.xlu0 %7311
      %7313 = vrot.lane.b32.xlu0 %v7269, 32
      %v7314 = vpop.permute.xlu0 %7313
      %7315 = vrot.lane.b32.xlu0 %v7272, 32
      %v7316 = vpop.permute.xlu0 %7315
      %7317 = vrot.lane.b32.xlu0 %v7276, 32
      %v7318 = vpop.permute.xlu0 %7317
      %7319 = vrot.lane.b32.xlu0 %v7279, 32
      %v7320 = vpop.permute.xlu0 %7319
      %7321 = vrot.lane.b32.xlu0 %v7283, 32
      %v7322 = vpop.permute.xlu0 %7321
      %7323 = vrot.lane.b32.xlu0 %v7286, 32
      %v7324 = vpop.permute.xlu0 %7323
      %7325 = vrot.lane.b32.xlu0 %v7290, 32
      %v7326 = vpop.permute.xlu0 %7325
      %7327 = vrot.lane.b32.xlu0 %v7293, 32
      %v7328 = vpop.permute.xlu0 %7327
      %7329 = vrot.lane.b32.xlu0 %v7297, 32
      %v7330 = vpop.permute.xlu0 %7329
      %7331 = vrot.lane.b32.xlu0 %v7300, 32
      %v7332 = vpop.permute.xlu0 %7331
      %7349 = vst.msk [vmem:[#allocation3] sm:$0xf] %vm2621, %v7302
      %7350 = vst.msk [vmem:[#allocation3 + $0x4] sm:$0xf] %vm2621, %v7304
      %7351 = vst.msk [vmem:[#allocation3 + $0x8] sm:$0xf] %vm2621, %v7306
      %7352 = vst.msk [vmem:[#allocation3 + $0xc] sm:$0xf] %vm2621, %v7308
      %7353 = vst.msk [vmem:[#allocation3 + $0x10] sm:$0xf] %vm2621, %v7310
      %7354 = vst.msk [vmem:[#allocation3 + $0x14] sm:$0xf] %vm2621, %v7312
      %7355 = vst.msk [vmem:[#allocation3 + $0x18] sm:$0xf] %vm2621, %v7314
      %7356 = vst.msk [vmem:[#allocation3 + $0x1c] sm:$0xf] %vm2621, %v7316
      %7357 = vst.msk [vmem:[#allocation3 + $0x20] sm:$0xf] %vm2621, %v7318
      %7358 = vst.msk [vmem:[#allocation3 + $0x24] sm:$0xf] %vm2621, %v7320
      %7359 = vst.msk [vmem:[#allocation3 + $0x28] sm:$0xf] %vm2621, %v7322
      %7360 = vst.msk [vmem:[#allocation3 + $0x2c] sm:$0xf] %vm2621, %v7324
      %7361 = vst.msk [vmem:[#allocation3 + $0x30] sm:$0xf] %vm2621, %v7326
      %7362 = vst.msk [vmem:[#allocation3 + $0x34] sm:$0xf] %vm2621, %v7328
      %7363 = vst.msk [vmem:[#allocation3 + $0x38] sm:$0xf] %vm2621, %v7330
      %7364 = vst.msk [vmem:[#allocation3 + $0x3c] sm:$0xf] %vm2621, %v7332
      %v7365 = vld [vmem:[#allocation3] sm:$0xf]
      %v7366 = vld [vmem:[#allocation3 + $0x4] sm:$0xf]
      %v7367 = vld [vmem:[#allocation3 + $0x8] sm:$0xf]
      %v7368 = vld [vmem:[#allocation3 + $0xc] sm:$0xf]
      %v7369 = vld [vmem:[#allocation3 + $0x10] sm:$0xf]
      %v7370 = vld [vmem:[#allocation3 + $0x14] sm:$0xf]
      %v7371 = vld [vmem:[#allocation3 + $0x18] sm:$0xf]
      %v7372 = vld [vmem:[#allocation3 + $0x1c] sm:$0xf]
      %v7373 = vld [vmem:[#allocation3 + $0x20] sm:$0xf]
      %v7374 = vld [vmem:[#allocation3 + $0x24] sm:$0xf]
      %v7375 = vld [vmem:[#allocation3 + $0x28] sm:$0xf]
      %v7376 = vld [vmem:[#allocation3 + $0x2c] sm:$0xf]
      %v7377 = vld [vmem:[#allocation3 + $0x30] sm:$0xf]
      %v7378 = vld [vmem:[#allocation3 + $0x34] sm:$0xf]
      %v7379 = vld [vmem:[#allocation3 + $0x38] sm:$0xf]
      %v7380 = vld [vmem:[#allocation3 + $0x3c] sm:$0xf]
      %v7381 = vld [vmem:[%s2] sm:$0xf]
      %v7382 = vld [vmem:[%s2 + $0x4] sm:$0xf]
      %v7383 = vld [vmem:[%s2 + $0x8] sm:$0xf]
      %v7384 = vld [vmem:[%s2 + $0xc] sm:$0xf]
      %v7385 = vld [vmem:[%s2 + $0x10] sm:$0x3]
      %v7402 = vunpack.c.l.b16 %v7365
      %v7403 = vunpack.c.l.b16 %v7366
      %v7404 = vunpack.c.l.b16 %v7367
      %v7405 = vunpack.c.l.b16 %v7368
      %v7406 = vunpack.c.l.b16 %v7369
      %v7407 = vunpack.c.l.b16 %v7370
      %v7408 = vunpack.c.l.b16 %v7371
      %v7409 = vunpack.c.l.b16 %v7372
      %v7410 = vunpack.c.l.b16 %v7373
      %v7411 = vunpack.c.l.b16 %v7374
      %v7412 = vunpack.c.l.b16 %v7375
      %v7413 = vunpack.c.l.b16 %v7376
      %v7414 = vunpack.c.l.b16 %v7377
      %v7415 = vunpack.c.l.b16 %v7378
      %v7416 = vunpack.c.l.b16 %v7379
      %v7417 = vunpack.c.l.b16 %v7380
      %v7418 = vpack.c.b16 %v7403, %v7402
      %v7419 = vpack.c.b16 %v7405, %v7404
      %v7420 = vpack.c.b16 %v7407, %v7406
      %v7421 = vpack.c.b16 %v7409, %v7408
      %v7422 = vpack.c.b16 %v7411, %v7410
      %v7423 = vpack.c.b16 %v7413, %v7412
      %v7424 = vpack.c.b16 %v7415, %v7414
      %v7425 = vpack.c.b16 %v7417, %v7416
      %v7431 = vunpack.c.l.b16 %v7381
      %v7432 = vunpack.c.l.b16 %v7382
      %v7433 = vunpack.c.l.b16 %v7383
      %v7434 = vunpack.c.l.b16 %v7384
      %v7435 = vunpack.c.l.b16 %v7385
      %v7436 = vpack.c.b16 %v7432, %v7431
      %v7437 = vpack.c.b16 %v7434, %v7433
      %v7438 = vpack.c.b16 %v7435, %v7435
      %v7442 = vsel %vm2714, %v7418, 0
      %v7445 = vsel %vm2714, %v7419, 0
      %v7448 = vsel %vm2714, %v7420, 0
      %v7451 = vsel %vm2714, %v7421, 0
      %v7454 = vsel %vm2714, %v7422, 0
      %v7457 = vsel %vm2714, %v7423, 0
      %v7460 = vsel %vm2714, %v7424, 0
      %v7463 = vsel %vm2714, %v7425, 0
      %v7466 = vsel %vm2739, %v7438, 0
      %7468 = vmatprep.subr.bf16.mxu0 0
      %7469 = vmatpush1.bf16.msra.mxu0 0
      %7470 = vmatprep.subr.bf16.mxu0 0
      %7471 = vmatpush1.bf16.msra.mxu0 0
      %7472 = vmatprep.subr.bf16.mxu0 0
      %7473 = vmatpush1.bf16.msra.mxu0 0
      %7474 = vmatprep.subr.bf16.mxu0 0
      %7475 = vmatpush1.bf16.msra.mxu0 0
      %7476 = vmatprep.subr.bf16.mxu0 0
      %7477 = vmatpush1.bf16.msra.mxu0 0
      %7478 = vmatprep.subr.bf16.mxu0 0
      %7479 = vmatpush1.bf16.msra.mxu0 %v7466
      %7480 = vmatprep.subr.bf16.mxu0 0
      %7481 = vmatpush1.bf16.msra.mxu0 %v7437
      %7482 = vmatprep.subr.bf16.mxu0 0
      %7483 = vmatpush1.bf16.msra.mxu0 %v7436
      %7484 = vmatprep.subr.bf16.mxu0 0
      %7485 = vmatpush2.bf16.msra.mxu0 0
      %7486 = vmatprep.subr.bf16.mxu0 0
      %7487 = vmatpush2.bf16.msra.mxu0 0
      %7488 = vmatprep.subr.bf16.mxu0 0
      %7489 = vmatpush2.bf16.msra.mxu0 0
      %7490 = vmatprep.subr.bf16.mxu0 0
      %7491 = vmatpush2.bf16.msra.mxu0 0
      %7492 = vmatprep.subr.bf16.mxu0 0
      %7493 = vmatpush2.bf16.msra.mxu0 0
      %7494 = vmatprep.subr.bf16.mxu0 0
      %7495 = vmatpush2.bf16.msra.mxu0 0
      %7496 = vmatprep.subr.bf16.mxu0 0
      %7497 = vmatpush2.bf16.msra.mxu0 0
      %7498 = vmatprep.subr.bf16.mxu0 0
      %7499 = vmatpush2.bf16.msra.mxu0 0
      %7500 = vmatprep.mubr.bf16.mxu0 0
      %7501 = vmatmul.mubr.bf16.gmra.mxu0 %v7442
      %v7502 = vpop.f32.mrf.mxu0
      %v7503 = vadd.f32 0.0, %v7502
      %v7504 = vpop.f32.mrf.mxu0
      %v7505 = vpop.f32.mrf.mxu0
      %v7506 = vadd.f32 0.0, %v7505
      %v7507 = vpop.f32.mrf.mxu0
      %7508 = vmatprep.mubr.bf16.mxu0 0
      %7509 = vmatmul.mubr.bf16.gmra.mxu0 %v7445
      %v7510 = vpop.f32.mrf.mxu0
      %v7511 = vadd.f32 0.0, %v7510
      %v7512 = vpop.f32.mrf.mxu0
      %v7513 = vpop.f32.mrf.mxu0
      %v7514 = vadd.f32 0.0, %v7513
      %v7515 = vpop.f32.mrf.mxu0
      %7516 = vmatprep.mubr.bf16.mxu0 0
      %7517 = vmatmul.mubr.bf16.gmra.mxu0 %v7448
      %v7518 = vpop.f32.mrf.mxu0
      %v7519 = vadd.f32 0.0, %v7518
      %v7520 = vpop.f32.mrf.mxu0
      %v7521 = vpop.f32.mrf.mxu0
      %v7522 = vadd.f32 0.0, %v7521
      %v7523 = vpop.f32.mrf.mxu0
      %7524 = vmatprep.mubr.bf16.mxu0 0
      %7525 = vmatmul.mubr.bf16.gmra.mxu0 %v7451
      %v7526 = vpop.f32.mrf.mxu0
      %v7527 = vadd.f32 0.0, %v7526
      %v7528 = vpop.f32.mrf.mxu0
      %v7529 = vpop.f32.mrf.mxu0
      %v7530 = vadd.f32 0.0, %v7529
      %v7531 = vpop.f32.mrf.mxu0
      %7532 = vmatprep.mubr.bf16.mxu0 0
      %7533 = vmatmul.mubr.bf16.gmra.mxu0 %v7454
      %v7534 = vpop.f32.mrf.mxu0
      %v7535 = vadd.f32 0.0, %v7534
      %v7536 = vpop.f32.mrf.mxu0
      %v7537 = vpop.f32.mrf.mxu0
      %v7538 = vadd.f32 0.0, %v7537
      %v7539 = vpop.f32.mrf.mxu0
      %7540 = vmatprep.mubr.bf16.mxu0 0
      %7541 = vmatmul.mubr.bf16.gmra.mxu0 %v7457
      %v7542 = vpop.f32.mrf.mxu0
      %v7543 = vadd.f32 0.0, %v7542
      %v7544 = vpop.f32.mrf.mxu0
      %v7545 = vpop.f32.mrf.mxu0
      %v7546 = vadd.f32 0.0, %v7545
      %v7547 = vpop.f32.mrf.mxu0
      %7548 = vmatprep.mubr.bf16.mxu0 0
      %7549 = vmatmul.mubr.bf16.gmra.mxu0 %v7460
      %v7550 = vpop.f32.mrf.mxu0
      %v7551 = vadd.f32 0.0, %v7550
      %v7552 = vpop.f32.mrf.mxu0
      %v7553 = vpop.f32.mrf.mxu0
      %v7554 = vadd.f32 0.0, %v7553
      %v7555 = vpop.f32.mrf.mxu0
      %7556 = vmatprep.mubr.bf16.mxu0 0
      %7557 = vmatmul.mubr.bf16.gmra.mxu0 %v7463
      %v7558 = vpop.f32.mrf.mxu0
      %v7559 = vadd.f32 0.0, %v7558
      %v7560 = vpop.f32.mrf.mxu0
      %v7561 = vpop.f32.mrf.mxu0
      %v7562 = vadd.f32 0.0, %v7561
      %v7563 = vpop.f32.mrf.mxu0
      %7564 = vdwg.mxu0
      %7565 = vst.msk [vmem:[#allocation4] sm:$0xff] %vm2840, %v7503
      %7566 = vst.msk [vmem:[#allocation4 + $0x8] sm:$0xff] %vm2840, %v7506
      %7567 = vst.msk [vmem:[#allocation4 + $0x10] sm:$0xff] %vm2840, %v7511
      %7568 = vst.msk [vmem:[#allocation4 + $0x18] sm:$0xff] %vm2840, %v7514
      %7569 = vst.msk [vmem:[#allocation4 + $0x20] sm:$0xff] %vm2840, %v7519
      %7570 = vst.msk [vmem:[#allocation4 + $0x28] sm:$0xff] %vm2840, %v7522
      %7571 = vst.msk [vmem:[#allocation4 + $0x30] sm:$0xff] %vm2840, %v7527
      %7572 = vst.msk [vmem:[#allocation4 + $0x38] sm:$0xff] %vm2840, %v7530
      %7573 = vst.msk [vmem:[#allocation4 + $0x40] sm:$0xff] %vm2840, %v7535
      %7574 = vst.msk [vmem:[#allocation4 + $0x48] sm:$0xff] %vm2840, %v7538
      %7575 = vst.msk [vmem:[#allocation4 + $0x50] sm:$0xff] %vm2840, %v7543
      %7576 = vst.msk [vmem:[#allocation4 + $0x58] sm:$0xff] %vm2840, %v7546
      %7577 = vst.msk [vmem:[#allocation4 + $0x60] sm:$0xff] %vm2840, %v7551
      %7578 = vst.msk [vmem:[#allocation4 + $0x68] sm:$0xff] %vm2840, %v7554
      %7579 = vst.msk [vmem:[#allocation4 + $0x70] sm:$0xff] %vm2840, %v7559
      %7580 = vst.msk [vmem:[#allocation4 + $0x78] sm:$0xff] %vm2840, %v7562
      %v7581 = vsel %vm2840, %v7503, 0.0
      %v7582 = vsel %vm2840, %v7506, 0.0
      %v7583 = vadd.f32 %v7581, %v7582
      %v7584 = vsel %vm2840, %v7511, 0.0
      %v7585 = vadd.f32 %v7583, %v7584
      %v7586 = vsel %vm2840, %v7514, 0.0
      %v7587 = vadd.f32 %v7585, %v7586
      %v7588 = vsel %vm2840, %v7519, 0.0
      %v7589 = vadd.f32 %v7587, %v7588
      %v7590 = vsel %vm2840, %v7522, 0.0
      %v7591 = vadd.f32 %v7589, %v7590
      %v7592 = vsel %vm2840, %v7527, 0.0
      %v7593 = vadd.f32 %v7591, %v7592
      %v7594 = vsel %vm2840, %v7530, 0.0
      %v7595 = vadd.f32 %v7593, %v7594
      %v7596 = vsel %vm2840, %v7535, 0.0
      %v7597 = vadd.f32 %v7595, %v7596
      %v7598 = vsel %vm2840, %v7538, 0.0
      %v7599 = vadd.f32 %v7597, %v7598
      %v7600 = vsel %vm2840, %v7543, 0.0
      %v7601 = vadd.f32 %v7599, %v7600
      %v7602 = vsel %vm2840, %v7546, 0.0
      %v7603 = vadd.f32 %v7601, %v7602
      %v7604 = vsel %vm2840, %v7551, 0.0
      %v7605 = vadd.f32 %v7603, %v7604
      %v7606 = vsel %vm2840, %v7554, 0.0
      %v7607 = vadd.f32 %v7605, %v7606
      %v7608 = vsel %vm2840, %v7559, 0.0
      %v7609 = vadd.f32 %v7607, %v7608
      %v7610 = vsel %vm2840, %v7562, 0.0
      %v7611 = vadd.f32 %v7609, %v7610
      %v7612 = vrot.slane %v7611, 4
      %v7613 = vadd.f32 %v7611, %v7612
      %v7614 = vrot.slane %v7613, 2
      %v7615 = vadd.f32 %v7613, %v7614
      %v7616 = vrot.slane %v7615, 1
      %v7617 = vadd.f32 %v7615, %v7616
      %v7618 = vadd.f32 %v7617, 0.0
      %v7619 = vmul.f32 %v7503, %v7503
      %v7620 = vmul.f32 %v7506, %v7506
      %v7621 = vmul.f32 %v7511, %v7511
      %v7622 = vmul.f32 %v7514, %v7514
      %v7623 = vmul.f32 %v7519, %v7519
      %v7624 = vmul.f32 %v7522, %v7522
      %v7625 = vmul.f32 %v7527, %v7527
      %v7626 = vmul.f32 %v7530, %v7530
      %v7627 = vmul.f32 %v7535, %v7535
      %v7628 = vmul.f32 %v7538, %v7538
      %v7629 = vmul.f32 %v7543, %v7543
      %v7630 = vmul.f32 %v7546, %v7546
      %v7631 = vmul.f32 %v7551, %v7551
      %v7632 = vmul.f32 %v7554, %v7554
      %v7633 = vmul.f32 %v7559, %v7559
      %v7634 = vmul.f32 %v7562, %v7562
      %v7635 = vsel %vm2840, %v7619, 0.0
      %v7636 = vsel %vm2840, %v7620, 0.0
      %v7637 = vadd.f32 %v7635, %v7636
      %v7638 = vsel %vm2840, %v7621, 0.0
      %v7639 = vadd.f32 %v7637, %v7638
      %v7640 = vsel %vm2840, %v7622, 0.0
      %v7641 = vadd.f32 %v7639, %v7640
      %v7642 = vsel %vm2840, %v7623, 0.0
      %v7643 = vadd.f32 %v7641, %v7642
      %v7644 = vsel %vm2840, %v7624, 0.0
      %v7645 = vadd.f32 %v7643, %v7644
      %v7646 = vsel %vm2840, %v7625, 0.0
      %v7647 = vadd.f32 %v7645, %v7646
      %v7648 = vsel %vm2840, %v7626, 0.0
      %v7649 = vadd.f32 %v7647, %v7648
      %v7650 = vsel %vm2840, %v7627, 0.0
      %v7651 = vadd.f32 %v7649, %v7650
      %v7652 = vsel %vm2840, %v7628, 0.0
      %v7653 = vadd.f32 %v7651, %v7652
      %v7654 = vsel %vm2840, %v7629, 0.0
      %v7655 = vadd.f32 %v7653, %v7654
      %v7656 = vsel %vm2840, %v7630, 0.0
      %v7657 = vadd.f32 %v7655, %v7656
      %v7658 = vsel %vm2840, %v7631, 0.0
      %v7659 = vadd.f32 %v7657, %v7658
      %v7660 = vsel %vm2840, %v7632, 0.0
      %v7661 = vadd.f32 %v7659, %v7660
      %v7662 = vsel %vm2840, %v7633, 0.0
      %v7663 = vadd.f32 %v7661, %v7662
      %v7664 = vsel %vm2840, %v7634, 0.0
      %v7665 = vadd.f32 %v7663, %v7664
      %v7666 = vrot.slane %v7665, 4
      %v7667 = vadd.f32 %v7665, %v7666
      %v7668 = vrot.slane %v7667, 2
      %v7669 = vadd.f32 %v7667, %v7668
      %v7670 = vrot.slane %v7669, 1
      %v7671 = vadd.f32 %v7669, %v7670
      %v7672 = vadd.f32 %v7671, 0.0
      %v7673 = vld [vmem:[%s2949] sm:$0xf]
      %v7674 = vld [vmem:[%s2949 + $0x4] sm:$0xf]
      %v7675 = vld [vmem:[%s2949 + $0xc] sm:$0xf]
      %v7676 = vld [vmem:[%s2949 + $0x10] sm:$0xf]
      %v7677 = vld [vmem:[%s2949 + $0x18] sm:$0xf]
      %v7678 = vld [vmem:[%s2949 + $0x1c] sm:$0xf]
      %v7679 = vld [vmem:[%s2949 + $0x24] sm:$0xf]
      %v7680 = vld [vmem:[%s2949 + $0x28] sm:$0xf]
      %v7681 = vld [vmem:[%s2949 + $0x30] sm:$0xf]
      %v7682 = vld [vmem:[%s2949 + $0x34] sm:$0xf]
      %v7683 = vld [vmem:[%s2949 + $0x3c] sm:$0xf]
      %v7684 = vld [vmem:[%s2949 + $0x40] sm:$0xf]
      %v7685 = vld [vmem:[%s2949 + $0x48] sm:$0xf]
      %v7686 = vld [vmem:[%s2949 + $0x4c] sm:$0xf]
      %v7687 = vld [vmem:[%s2949 + $0x54] sm:$0xf]
      %v7688 = vld [vmem:[%s2949 + $0x58] sm:$0xf]
      %7689 = vst.msk [vmem:[#allocation3] sm:$0xf] %vm406, %v7673
      %7690 = vst.msk [vmem:[#allocation3 + $0x4] sm:$0xf] %vm406, %v7674
      %7691 = vst.msk [vmem:[#allocation3 + $0x8] sm:$0xf] %vm406, %v7675
      %7692 = vst.msk [vmem:[#allocation3 + $0xc] sm:$0xf] %vm406, %v7676
      %7693 = vst.msk [vmem:[#allocation3 + $0x10] sm:$0xf] %vm406, %v7677
      %7694 = vst.msk [vmem:[#allocation3 + $0x14] sm:$0xf] %vm406, %v7678
      %7695 = vst.msk [vmem:[#allocation3 + $0x18] sm:$0xf] %vm406, %v7679
      %7696 = vst.msk [vmem:[#allocation3 + $0x1c] sm:$0xf] %vm406, %v7680
      %7697 = vst.msk [vmem:[#allocation3 + $0x20] sm:$0xf] %vm406, %v7681
      %7698 = vst.msk [vmem:[#allocation3 + $0x24] sm:$0xf] %vm406, %v7682
      %7699 = vst.msk [vmem:[#allocation3 + $0x28] sm:$0xf] %vm406, %v7683
      %7700 = vst.msk [vmem:[#allocation3 + $0x2c] sm:$0xf] %vm406, %v7684
      %7701 = vst.msk [vmem:[#allocation3 + $0x30] sm:$0xf] %vm406, %v7685
      %7702 = vst.msk [vmem:[#allocation3 + $0x34] sm:$0xf] %vm406, %v7686
      %7703 = vst.msk [vmem:[#allocation3 + $0x38] sm:$0xf] %vm406, %v7687
      %7704 = vst.msk [vmem:[#allocation3 + $0x3c] sm:$0xf] %vm406, %v7688
      %v7705 = vld [vmem:[%s2949] sm:$0xf]
      %v7706 = vld [vmem:[%s2949 + $0x4] sm:$0xf]
      %v7707 = vld [vmem:[%s2949 + $0x8] sm:$0x1]
      %v7708 = vld [vmem:[%s2949 + $0xc] sm:$0xf]
      %v7709 = vld [vmem:[%s2949 + $0x10] sm:$0xf]
      %v7710 = vld [vmem:[%s2949 + $0x14] sm:$0x1]
      %v7711 = vld [vmem:[%s2949 + $0x18] sm:$0xf]
      %v7712 = vld [vmem:[%s2949 + $0x1c] sm:$0xf]
      %v7713 = vld [vmem:[%s2949 + $0x20] sm:$0x1]
      %v7714 = vld [vmem:[%s2949 + $0x24] sm:$0xf]
      %v7715 = vld [vmem:[%s2949 + $0x28] sm:$0xf]
      %v7716 = vld [vmem:[%s2949 + $0x2c] sm:$0x1]
      %v7717 = vld [vmem:[%s2949 + $0x30] sm:$0xf]
      %v7718 = vld [vmem:[%s2949 + $0x34] sm:$0xf]
      %v7719 = vld [vmem:[%s2949 + $0x38] sm:$0x1]
      %v7720 = vld [vmem:[%s2949 + $0x3c] sm:$0xf]
      %v7721 = vld [vmem:[%s2949 + $0x40] sm:$0xf]
      %v7722 = vld [vmem:[%s2949 + $0x44] sm:$0x1]
      %v7723 = vld [vmem:[%s2949 + $0x48] sm:$0xf]
      %v7724 = vld [vmem:[%s2949 + $0x4c] sm:$0xf]
      %v7725 = vld [vmem:[%s2949 + $0x50] sm:$0x1]
      %v7726 = vld [vmem:[%s2949 + $0x54] sm:$0xf]
      %v7727 = vld [vmem:[%s2949 + $0x58] sm:$0xf]
      %v7728 = vld [vmem:[%s2949 + $0x5c] sm:$0x1]
      %v7730 = vshrl.u32 %v7705, 16
      %v7732 = vrot.slane %v7730, 4
      %v7733 = vshll.u32 %v7705, 16
      %v7735 = vrot.slane %v7733, 5
      %v7736 = vor.u32 %v7732, %v7735
      %v7737 = vrot.slane %v7736, 4
      %v7739 = vshll.u32 %v7706, 16
      %v7741 = vrot.slane %v7739, 5
      %v7742 = vsel %vm1114, %v7737, %v7741
      %v7743 = vshrl.u32 %v7706, 16
      %v7745 = vrot.slane %v7743, 4
      %v7746 = vor.u32 %v7745, %v7741
      %v7747 = vrot.slane %v7746, 4
      %v7749 = vshll.u32 %v7707, 16
      %v7751 = vrot.slane %v7749, 5
      %v7752 = vsel %vm1114, %v7747, %v7751
      %v7754 = vshrl.u32 %v7708, 16
      %v7756 = vrot.slane %v7754, 4
      %v7757 = vshll.u32 %v7708, 16
      %v7759 = vrot.slane %v7757, 5
      %v7760 = vor.u32 %v7756, %v7759
      %v7761 = vrot.slane %v7760, 4
      %v7763 = vshll.u32 %v7709, 16
      %v7765 = vrot.slane %v7763, 5
      %v7766 = vsel %vm1114, %v7761, %v7765
      %v7767 = vshrl.u32 %v7709, 16
      %v7769 = vrot.slane %v7767, 4
      %v7770 = vor.u32 %v7769, %v7765
      %v7771 = vrot.slane %v7770, 4
      %v7773 = vshll.u32 %v7710, 16
      %v7775 = vrot.slane %v7773, 5
      %v7776 = vsel %vm1114, %v7771, %v7775
      %v7778 = vshrl.u32 %v7711, 16
      %v7780 = vrot.slane %v7778, 4
      %v7781 = vshll.u32 %v7711, 16
      %v7783 = vrot.slane %v7781, 5
      %v7784 = vor.u32 %v7780, %v7783
      %v7785 = vrot.slane %v7784, 4
      %v7787 = vshll.u32 %v7712, 16
      %v7789 = vrot.slane %v7787, 5
      %v7790 = vsel %vm1114, %v7785, %v7789
      %v7791 = vshrl.u32 %v7712, 16
      %v7793 = vrot.slane %v7791, 4
      %v7794 = vor.u32 %v7793, %v7789
      %v7795 = vrot.slane %v7794, 4
      %v7797 = vshll.u32 %v7713, 16
      %v7799 = vrot.slane %v7797, 5
      %v7800 = vsel %vm1114, %v7795, %v7799
      %v7802 = vshrl.u32 %v7714, 16
      %v7804 = vrot.slane %v7802, 4
      %v7805 = vshll.u32 %v7714, 16
      %v7807 = vrot.slane %v7805, 5
      %v7808 = vor.u32 %v7804, %v7807
      %v7809 = vrot.slane %v7808, 4
      %v7811 = vshll.u32 %v7715, 16
      %v7813 = vrot.slane %v7811, 5
      %v7814 = vsel %vm1114, %v7809, %v7813
      %v7815 = vshrl.u32 %v7715, 16
      %v7817 = vrot.slane %v7815, 4
      %v7818 = vor.u32 %v7817, %v7813
      %v7819 = vrot.slane %v7818, 4
      %v7821 = vshll.u32 %v7716, 16
      %v7823 = vrot.slane %v7821, 5
      %v7824 = vsel %vm1114, %v7819, %v7823
      %v7826 = vshrl.u32 %v7717, 16
      %v7828 = vrot.slane %v7826, 4
      %v7829 = vshll.u32 %v7717, 16
      %v7831 = vrot.slane %v7829, 5
      %v7832 = vor.u32 %v7828, %v7831
      %v7833 = vrot.slane %v7832, 4
      %v7835 = vshll.u32 %v7718, 16
      %v7837 = vrot.slane %v7835, 5
      %v7838 = vsel %vm1114, %v7833, %v7837
      %v7839 = vshrl.u32 %v7718, 16
      %v7841 = vrot.slane %v7839, 4
      %v7842 = vor.u32 %v7841, %v7837
      %v7843 = vrot.slane %v7842, 4
      %v7845 = vshll.u32 %v7719, 16
      %v7847 = vrot.slane %v7845, 5
      %v7848 = vsel %vm1114, %v7843, %v7847
      %v7850 = vshrl.u32 %v7720, 16
      %v7852 = vrot.slane %v7850, 4
      %v7853 = vshll.u32 %v7720, 16
      %v7855 = vrot.slane %v7853, 5
      %v7856 = vor.u32 %v7852, %v7855
      %v7857 = vrot.slane %v7856, 4
      %v7859 = vshll.u32 %v7721, 16
      %v7861 = vrot.slane %v7859, 5
      %v7862 = vsel %vm1114, %v7857, %v7861
      %v7863 = vshrl.u32 %v7721, 16
      %v7865 = vrot.slane %v7863, 4
      %v7866 = vor.u32 %v7865, %v7861
      %v7867 = vrot.slane %v7866, 4
      %v7869 = vshll.u32 %v7722, 16
      %v7871 = vrot.slane %v7869, 5
      %v7872 = vsel %vm1114, %v7867, %v7871
      %v7874 = vshrl.u32 %v7723, 16
      %v7876 = vrot.slane %v7874, 4
      %v7877 = vshll.u32 %v7723, 16
      %v7879 = vrot.slane %v7877, 5
      %v7880 = vor.u32 %v7876, %v7879
      %v7881 = vrot.slane %v7880, 4
      %v7883 = vshll.u32 %v7724, 16
      %v7885 = vrot.slane %v7883, 5
      %v7886 = vsel %vm1114, %v7881, %v7885
      %v7887 = vshrl.u32 %v7724, 16
      %v7889 = vrot.slane %v7887, 4
      %v7890 = vor.u32 %v7889, %v7885
      %v7891 = vrot.slane %v7890, 4
      %v7893 = vshll.u32 %v7725, 16
      %v7895 = vrot.slane %v7893, 5
      %v7896 = vsel %vm1114, %v7891, %v7895
      %v7898 = vshrl.u32 %v7726, 16
      %v7900 = vrot.slane %v7898, 4
      %v7901 = vshll.u32 %v7726, 16
      %v7903 = vrot.slane %v7901, 5
      %v7904 = vor.u32 %v7900, %v7903
      %v7905 = vrot.slane %v7904, 4
      %v7907 = vshll.u32 %v7727, 16
      %v7909 = vrot.slane %v7907, 5
      %v7910 = vsel %vm1114, %v7905, %v7909
      %v7911 = vshrl.u32 %v7727, 16
      %v7913 = vrot.slane %v7911, 4
      %v7914 = vor.u32 %v7913, %v7909
      %v7915 = vrot.slane %v7914, 4
      %v7917 = vshll.u32 %v7728, 16
      %v7919 = vrot.slane %v7917, 5
      %v7920 = vsel %vm1114, %v7915, %v7919
      %7921 = vrot.lane.b32.xlu0 %v7742, 4
      %v7922 = vpop.permute.xlu0 %7921
      %7923 = vrot.lane.b32.xlu0 %v7752, 4
      %v7924 = vpop.permute.xlu0 %7923
      %7925 = vrot.lane.b32.xlu0 %v7766, 4
      %v7926 = vpop.permute.xlu0 %7925
      %7927 = vrot.lane.b32.xlu0 %v7776, 4
      %v7928 = vpop.permute.xlu0 %7927
      %7929 = vrot.lane.b32.xlu0 %v7790, 4
      %v7930 = vpop.permute.xlu0 %7929
      %7931 = vrot.lane.b32.xlu0 %v7800, 4
      %v7932 = vpop.permute.xlu0 %7931
      %7933 = vrot.lane.b32.xlu0 %v7814, 4
      %v7934 = vpop.permute.xlu0 %7933
      %7935 = vrot.lane.b32.xlu0 %v7824, 4
      %v7936 = vpop.permute.xlu0 %7935
      %7937 = vrot.lane.b32.xlu0 %v7838, 4
      %v7938 = vpop.permute.xlu0 %7937
      %7939 = vrot.lane.b32.xlu0 %v7848, 4
      %v7940 = vpop.permute.xlu0 %7939
      %7941 = vrot.lane.b32.xlu0 %v7862, 4
      %v7942 = vpop.permute.xlu0 %7941
      %7943 = vrot.lane.b32.xlu0 %v7872, 4
      %v7944 = vpop.permute.xlu0 %7943
      %7945 = vrot.lane.b32.xlu0 %v7886, 4
      %v7946 = vpop.permute.xlu0 %7945
      %7947 = vrot.lane.b32.xlu0 %v7896, 4
      %v7948 = vpop.permute.xlu0 %7947
      %7949 = vrot.lane.b32.xlu0 %v7910, 4
      %v7950 = vpop.permute.xlu0 %7949
      %7951 = vrot.lane.b32.xlu0 %v7920, 4
      %v7952 = vpop.permute.xlu0 %7951
      %7969 = vst.msk [vmem:[#allocation3] sm:$0xf] %vm1355, %v7922
      %7970 = vst.msk [vmem:[#allocation3 + $0x4] sm:$0xf] %vm1355, %v7924
      %7971 = vst.msk [vmem:[#allocation3 + $0x8] sm:$0xf] %vm1355, %v7926
      %7972 = vst.msk [vmem:[#allocation3 + $0xc] sm:$0xf] %vm1355, %v7928
      %7973 = vst.msk [vmem:[#allocation3 + $0x10] sm:$0xf] %vm1355, %v7930
      %7974 = vst.msk [vmem:[#allocation3 + $0x14] sm:$0xf] %vm1355, %v7932
      %7975 = vst.msk [vmem:[#allocation3 + $0x18] sm:$0xf] %vm1355, %v7934
      %7976 = vst.msk [vmem:[#allocation3 + $0x1c] sm:$0xf] %vm1355, %v7936
      %7977 = vst.msk [vmem:[#allocation3 + $0x20] sm:$0xf] %vm1355, %v7938
      %7978 = vst.msk [vmem:[#allocation3 + $0x24] sm:$0xf] %vm1355, %v7940
      %7979 = vst.msk [vmem:[#allocation3 + $0x28] sm:$0xf] %vm1355, %v7942
      %7980 = vst.msk [vmem:[#allocation3 + $0x2c] sm:$0xf] %vm1355, %v7944
      %7981 = vst.msk [vmem:[#allocation3 + $0x30] sm:$0xf] %vm1355, %v7946
      %7982 = vst.msk [vmem:[#allocation3 + $0x34] sm:$0xf] %vm1355, %v7948
      %7983 = vst.msk [vmem:[#allocation3 + $0x38] sm:$0xf] %vm1355, %v7950
      %7984 = vst.msk [vmem:[#allocation3 + $0x3c] sm:$0xf] %vm1355, %v7952
      %v7985 = vld [vmem:[%s2949] sm:$0xe]
      %v7986 = vld [vmem:[%s2949 + $0x4] sm:$0xf]
      %v7987 = vld [vmem:[%s2949 + $0x8] sm:$0x1]
      %v7988 = vld [vmem:[%s2949 + $0xc] sm:$0xe]
      %v7989 = vld [vmem:[%s2949 + $0x10] sm:$0xf]
      %v7990 = vld [vmem:[%s2949 + $0x14] sm:$0x1]
      %v7991 = vld [vmem:[%s2949 + $0x18] sm:$0xe]
      %v7992 = vld [vmem:[%s2949 + $0x1c] sm:$0xf]
      %v7993 = vld [vmem:[%s2949 + $0x20] sm:$0x1]
      %v7994 = vld [vmem:[%s2949 + $0x24] sm:$0xe]
      %v7995 = vld [vmem:[%s2949 + $0x28] sm:$0xf]
      %v7996 = vld [vmem:[%s2949 + $0x2c] sm:$0x1]
      %v7997 = vld [vmem:[%s2949 + $0x30] sm:$0xe]
      %v7998 = vld [vmem:[%s2949 + $0x34] sm:$0xf]
      %v7999 = vld [vmem:[%s2949 + $0x38] sm:$0x1]
      %v8000 = vld [vmem:[%s2949 + $0x3c] sm:$0xe]
      %v8001 = vld [vmem:[%s2949 + $0x40] sm:$0xf]
      %v8002 = vld [vmem:[%s2949 + $0x44] sm:$0x1]
      %v8003 = vld [vmem:[%s2949 + $0x48] sm:$0xe]
      %v8004 = vld [vmem:[%s2949 + $0x4c] sm:$0xf]
      %v8005 = vld [vmem:[%s2949 + $0x50] sm:$0x1]
      %v8006 = vld [vmem:[%s2949 + $0x54] sm:$0xe]
      %v8007 = vld [vmem:[%s2949 + $0x58] sm:$0xf]
      %v8008 = vld [vmem:[%s2949 + $0x5c] sm:$0x1]
      %v8033 = vrot.slane %v7985, 5
      %v8034 = vrot.slane %v8033, 4
      %v8035 = vrot.slane %v7986, 5
      %v8036 = vsel %vm1422, %v8034, %v8035
      %v8037 = vrot.slane %v8035, 4
      %v8038 = vrot.slane %v7987, 5
      %v8039 = vsel %vm1422, %v8037, %v8038
      %v8040 = vrot.slane %v7988, 5
      %v8041 = vrot.slane %v8040, 4
      %v8042 = vrot.slane %v7989, 5
      %v8043 = vsel %vm1422, %v8041, %v8042
      %v8044 = vrot.slane %v8042, 4
      %v8045 = vrot.slane %v7990, 5
      %v8046 = vsel %vm1422, %v8044, %v8045
      %v8047 = vrot.slane %v7991, 5
      %v8048 = vrot.slane %v8047, 4
      %v8049 = vrot.slane %v7992, 5
      %v8050 = vsel %vm1422, %v8048, %v8049
      %v8051 = vrot.slane %v8049, 4
      %v8052 = vrot.slane %v7993, 5
      %v8053 = vsel %vm1422, %v8051, %v8052
      %v8054 = vrot.slane %v7994, 5
      %v8055 = vrot.slane %v8054, 4
      %v8056 = vrot.slane %v7995, 5
      %v8057 = vsel %vm1422, %v8055, %v8056
      %v8058 = vrot.slane %v8056, 4
      %v8059 = vrot.slane %v7996, 5
      %v8060 = vsel %vm1422, %v8058, %v8059
      %v8061 = vrot.slane %v7997, 5
      %v8062 = vrot.slane %v8061, 4
      %v8063 = vrot.slane %v7998, 5
      %v8064 = vsel %vm1422, %v8062, %v8063
      %v8065 = vrot.slane %v8063, 4
      %v8066 = vrot.slane %v7999, 5
      %v8067 = vsel %vm1422, %v8065, %v8066
      %v8068 = vrot.slane %v8000, 5
      %v8069 = vrot.slane %v8068, 4
      %v8070 = vrot.slane %v8001, 5
      %v8071 = vsel %vm1422, %v8069, %v8070
      %v8072 = vrot.slane %v8070, 4
      %v8073 = vrot.slane %v8002, 5
      %v8074 = vsel %vm1422, %v8072, %v8073
      %v8075 = vrot.slane %v8003, 5
      %v8076 = vrot.slane %v8075, 4
      %v8077 = vrot.slane %v8004, 5
      %v8078 = vsel %vm1422, %v8076, %v8077
      %v8079 = vrot.slane %v8077, 4
      %v8080 = vrot.slane %v8005, 5
      %v8081 = vsel %vm1422, %v8079, %v8080
      %v8082 = vrot.slane %v8006, 5
      %v8083 = vrot.slane %v8082, 4
      %v8084 = vrot.slane %v8007, 5
      %v8085 = vsel %vm1422, %v8083, %v8084
      %v8086 = vrot.slane %v8084, 4
      %v8087 = vrot.slane %v8008, 5
      %v8088 = vsel %vm1422, %v8086, %v8087
      %8089 = vrot.lane.b32.xlu0 %v8036, 8
      %v8090 = vpop.permute.xlu0 %8089
      %8091 = vrot.lane.b32.xlu0 %v8039, 8
      %v8092 = vpop.permute.xlu0 %8091
      %8093 = vrot.lane.b32.xlu0 %v8043, 8
      %v8094 = vpop.permute.xlu0 %8093
      %8095 = vrot.lane.b32.xlu0 %v8046, 8
      %v8096 = vpop.permute.xlu0 %8095
      %8097 = vrot.lane.b32.xlu0 %v8050, 8
      %v8098 = vpop.permute.xlu0 %8097
      %8099 = vrot.lane.b32.xlu0 %v8053, 8
      %v8100 = vpop.permute.xlu0 %8099
      %8101 = vrot.lane.b32.xlu0 %v8057, 8
      %v8102 = vpop.permute.xlu0 %8101
      %8103 = vrot.lane.b32.xlu0 %v8060, 8
      %v8104 = vpop.permute.xlu0 %8103
      %8105 = vrot.lane.b32.xlu0 %v8064, 8
      %v8106 = vpop.permute.xlu0 %8105
      %8107 = vrot.lane.b32.xlu0 %v8067, 8
      %v8108 = vpop.permute.xlu0 %8107
      %8109 = vrot.lane.b32.xlu0 %v8071, 8
      %v8110 = vpop.permute.xlu0 %8109
      %8111 = vrot.lane.b32.xlu0 %v8074, 8
      %v8112 = vpop.permute.xlu0 %8111
      %8113 = vrot.lane.b32.xlu0 %v8078, 8
      %v8114 = vpop.permute.xlu0 %8113
      %8115 = vrot.lane.b32.xlu0 %v8081, 8
      %v8116 = vpop.permute.xlu0 %8115
      %8117 = vrot.lane.b32.xlu0 %v8085, 8
      %v8118 = vpop.permute.xlu0 %8117
      %8119 = vrot.lane.b32.xlu0 %v8088, 8
      %v8120 = vpop.permute.xlu0 %8119
      %8137 = vst.msk [vmem:[#allocation3] sm:$0xf] %vm1527, %v8090
      %8138 = vst.msk [vmem:[#allocation3 + $0x4] sm:$0xf] %vm1527, %v8092
      %8139 = vst.msk [vmem:[#allocation3 + $0x8] sm:$0xf] %vm1527, %v8094
      %8140 = vst.msk [vmem:[#allocation3 + $0xc] sm:$0xf] %vm1527, %v8096
      %8141 = vst.msk [vmem:[#allocation3 + $0x10] sm:$0xf] %vm1527, %v8098
      %8142 = vst.msk [vmem:[#allocation3 + $0x14] sm:$0xf] %vm1527, %v8100
      %8143 = vst.msk [vmem:[#allocation3 + $0x18] sm:$0xf] %vm1527, %v8102
      %8144 = vst.msk [vmem:[#allocation3 + $0x1c] sm:$0xf] %vm1527, %v8104
      %8145 = vst.msk [vmem:[#allocation3 + $0x20] sm:$0xf] %vm1527, %v8106
      %8146 = vst.msk [vmem:[#allocation3 + $0x24] sm:$0xf] %vm1527, %v8108
      %8147 = vst.msk [vmem:[#allocation3 + $0x28] sm:$0xf] %vm1527, %v8110
      %8148 = vst.msk [vmem:[#allocation3 + $0x2c] sm:$0xf] %vm1527, %v8112
      %8149 = vst.msk [vmem:[#allocation3 + $0x30] sm:$0xf] %vm1527, %v8114
      %8150 = vst.msk [vmem:[#allocation3 + $0x34] sm:$0xf] %vm1527, %v8116
      %8151 = vst.msk [vmem:[#allocation3 + $0x38] sm:$0xf] %vm1527, %v8118
      %8152 = vst.msk [vmem:[#allocation3 + $0x3c] sm:$0xf] %vm1527, %v8120
      %v8153 = vld [vmem:[%s687] sm:$0xf]
      %v8154 = vld [vmem:[%s687 + $0x4] sm:$0xf]
      %v8155 = vld [vmem:[%s687 + $0xc] sm:$0xf]
      %v8156 = vld [vmem:[%s687 + $0x10] sm:$0xf]
      %v8157 = vld [vmem:[%s687 + $0x18] sm:$0xf]
      %v8158 = vld [vmem:[%s687 + $0x1c] sm:$0xf]
      %v8159 = vld [vmem:[%s687 + $0x24] sm:$0xf]
      %v8160 = vld [vmem:[%s687 + $0x28] sm:$0xf]
      %v8161 = vld [vmem:[%s687 + $0x30] sm:$0xf]
      %v8162 = vld [vmem:[%s687 + $0x34] sm:$0xf]
      %v8163 = vld [vmem:[%s687 + $0x3c] sm:$0xf]
      %v8164 = vld [vmem:[%s687 + $0x40] sm:$0xf]
      %v8165 = vld [vmem:[%s687 + $0x48] sm:$0xf]
      %v8166 = vld [vmem:[%s687 + $0x4c] sm:$0xf]
      %v8167 = vld [vmem:[%s687 + $0x54] sm:$0xf]
      %v8168 = vld [vmem:[%s687 + $0x58] sm:$0xf]
      %8185 = vrot.lane.b32.xlu0 %v8153, 12
      %v8186 = vpop.permute.xlu0 %8185
      %8187 = vrot.lane.b32.xlu0 %v8154, 12
      %v8188 = vpop.permute.xlu0 %8187
      %8189 = vrot.lane.b32.xlu0 %v8155, 12
      %v8190 = vpop.permute.xlu0 %8189
      %8191 = vrot.lane.b32.xlu0 %v8156, 12
      %v8192 = vpop.permute.xlu0 %8191
      %8193 = vrot.lane.b32.xlu0 %v8157, 12
      %v8194 = vpop.permute.xlu0 %8193
      %8195 = vrot.lane.b32.xlu0 %v8158, 12
      %v8196 = vpop.permute.xlu0 %8195
      %8197 = vrot.lane.b32.xlu0 %v8159, 12
      %v8198 = vpop.permute.xlu0 %8197
      %8199 = vrot.lane.b32.xlu0 %v8160, 12
      %v8200 = vpop.permute.xlu0 %8199
      %8201 = vrot.lane.b32.xlu0 %v8161, 12
      %v8202 = vpop.permute.xlu0 %8201
      %8203 = vrot.lane.b32.xlu0 %v8162, 12
      %v8204 = vpop.permute.xlu0 %8203
      %8205 = vrot.lane.b32.xlu0 %v8163, 12
      %v8206 = vpop.permute.xlu0 %8205
      %8207 = vrot.lane.b32.xlu0 %v8164, 12
      %v8208 = vpop.permute.xlu0 %8207
      %8209 = vrot.lane.b32.xlu0 %v8165, 12
      %v8210 = vpop.permute.xlu0 %8209
      %8211 = vrot.lane.b32.xlu0 %v8166, 12
      %v8212 = vpop.permute.xlu0 %8211
      %8213 = vrot.lane.b32.xlu0 %v8167, 12
      %v8214 = vpop.permute.xlu0 %8213
      %8215 = vrot.lane.b32.xlu0 %v8168, 12
      %v8216 = vpop.permute.xlu0 %8215
      %8233 = vst.msk [vmem:[#allocation3] sm:$0xf] %vm1624, %v8186
      %8234 = vst.msk [vmem:[#allocation3 + $0x4] sm:$0xf] %vm1624, %v8188
      %8235 = vst.msk [vmem:[#allocation3 + $0x8] sm:$0xf] %vm1624, %v8190
      %8236 = vst.msk [vmem:[#allocation3 + $0xc] sm:$0xf] %vm1624, %v8192
      %8237 = vst.msk [vmem:[#allocation3 + $0x10] sm:$0xf] %vm1624, %v8194
      %8238 = vst.msk [vmem:[#allocation3 + $0x14] sm:$0xf] %vm1624, %v8196
      %8239 = vst.msk [vmem:[#allocation3 + $0x18] sm:$0xf] %vm1624, %v8198
      %8240 = vst.msk [vmem:[#allocation3 + $0x1c] sm:$0xf] %vm1624, %v8200
      %8241 = vst.msk [vmem:[#allocation3 + $0x20] sm:$0xf] %vm1624, %v8202
      %8242 = vst.msk [vmem:[#allocation3 + $0x24] sm:$0xf] %vm1624, %v8204
      %8243 = vst.msk [vmem:[#allocation3 + $0x28] sm:$0xf] %vm1624, %v8206
      %8244 = vst.msk [vmem:[#allocation3 + $0x2c] sm:$0xf] %vm1624, %v8208
      %8245 = vst.msk [vmem:[#allocation3 + $0x30] sm:$0xf] %vm1624, %v8210
      %8246 = vst.msk [vmem:[#allocation3 + $0x34] sm:$0xf] %vm1624, %v8212
      %8247 = vst.msk [vmem:[#allocation3 + $0x38] sm:$0xf] %vm1624, %v8214
      %8248 = vst.msk [vmem:[#allocation3 + $0x3c] sm:$0xf] %vm1624, %v8216
      %v8249 = vld [vmem:[%s687] sm:$0xf]
      %v8250 = vld [vmem:[%s687 + $0x4] sm:$0xf]
      %v8251 = vld [vmem:[%s687 + $0x8] sm:$0x1]
      %v8252 = vld [vmem:[%s687 + $0xc] sm:$0xf]
      %v8253 = vld [vmem:[%s687 + $0x10] sm:$0xf]
      %v8254 = vld [vmem:[%s687 + $0x14] sm:$0x1]
      %v8255 = vld [vmem:[%s687 + $0x18] sm:$0xf]
      %v8256 = vld [vmem:[%s687 + $0x1c] sm:$0xf]
      %v8257 = vld [vmem:[%s687 + $0x20] sm:$0x1]
      %v8258 = vld [vmem:[%s687 + $0x24] sm:$0xf]
      %v8259 = vld [vmem:[%s687 + $0x28] sm:$0xf]
      %v8260 = vld [vmem:[%s687 + $0x2c] sm:$0x1]
      %v8261 = vld [vmem:[%s687 + $0x30] sm:$0xf]
      %v8262 = vld [vmem:[%s687 + $0x34] sm:$0xf]
      %v8263 = vld [vmem:[%s687 + $0x38] sm:$0x1]
      %v8264 = vld [vmem:[%s687 + $0x3c] sm:$0xf]
      %v8265 = vld [vmem:[%s687 + $0x40] sm:$0xf]
      %v8266 = vld [vmem:[%s687 + $0x44] sm:$0x1]
      %v8267 = vld [vmem:[%s687 + $0x48] sm:$0xf]
      %v8268 = vld [vmem:[%s687 + $0x4c] sm:$0xf]
      %v8269 = vld [vmem:[%s687 + $0x50] sm:$0x1]
      %v8270 = vld [vmem:[%s687 + $0x54] sm:$0xf]
      %v8271 = vld [vmem:[%s687 + $0x58] sm:$0xf]
      %v8272 = vld [vmem:[%s687 + $0x5c] sm:$0x1]
      %v8274 = vshrl.u32 %v8249, 16
      %v8276 = vrot.slane %v8274, 4
      %v8277 = vshll.u32 %v8249, 16
      %v8279 = vrot.slane %v8277, 5
      %v8280 = vor.u32 %v8276, %v8279
      %v8281 = vrot.slane %v8280, 4
      %v8283 = vshll.u32 %v8250, 16
      %v8285 = vrot.slane %v8283, 5
      %v8286 = vsel %vm1114, %v8281, %v8285
      %v8287 = vshrl.u32 %v8250, 16
      %v8289 = vrot.slane %v8287, 4
      %v8290 = vor.u32 %v8289, %v8285
      %v8291 = vrot.slane %v8290, 4
      %v8293 = vshll.u32 %v8251, 16
      %v8295 = vrot.slane %v8293, 5
      %v8296 = vsel %vm1114, %v8291, %v8295
      %v8298 = vshrl.u32 %v8252, 16
      %v8300 = vrot.slane %v8298, 4
      %v8301 = vshll.u32 %v8252, 16
      %v8303 = vrot.slane %v8301, 5
      %v8304 = vor.u32 %v8300, %v8303
      %v8305 = vrot.slane %v8304, 4
      %v8307 = vshll.u32 %v8253, 16
      %v8309 = vrot.slane %v8307, 5
      %v8310 = vsel %vm1114, %v8305, %v8309
      %v8311 = vshrl.u32 %v8253, 16
      %v8313 = vrot.slane %v8311, 4
      %v8314 = vor.u32 %v8313, %v8309
      %v8315 = vrot.slane %v8314, 4
      %v8317 = vshll.u32 %v8254, 16
      %v8319 = vrot.slane %v8317, 5
      %v8320 = vsel %vm1114, %v8315, %v8319
      %v8322 = vshrl.u32 %v8255, 16
      %v8324 = vrot.slane %v8322, 4
      %v8325 = vshll.u32 %v8255, 16
      %v8327 = vrot.slane %v8325, 5
      %v8328 = vor.u32 %v8324, %v8327
      %v8329 = vrot.slane %v8328, 4
      %v8331 = vshll.u32 %v8256, 16
      %v8333 = vrot.slane %v8331, 5
      %v8334 = vsel %vm1114, %v8329, %v8333
      %v8335 = vshrl.u32 %v8256, 16
      %v8337 = vrot.slane %v8335, 4
      %v8338 = vor.u32 %v8337, %v8333
      %v8339 = vrot.slane %v8338, 4
      %v8341 = vshll.u32 %v8257, 16
      %v8343 = vrot.slane %v8341, 5
      %v8344 = vsel %vm1114, %v8339, %v8343
      %v8346 = vshrl.u32 %v8258, 16
      %v8348 = vrot.slane %v8346, 4
      %v8349 = vshll.u32 %v8258, 16
      %v8351 = vrot.slane %v8349, 5
      %v8352 = vor.u32 %v8348, %v8351
      %v8353 = vrot.slane %v8352, 4
      %v8355 = vshll.u32 %v8259, 16
      %v8357 = vrot.slane %v8355, 5
      %v8358 = vsel %vm1114, %v8353, %v8357
      %v8359 = vshrl.u32 %v8259, 16
      %v8361 = vrot.slane %v8359, 4
      %v8362 = vor.u32 %v8361, %v8357
      %v8363 = vrot.slane %v8362, 4
      %v8365 = vshll.u32 %v8260, 16
      %v8367 = vrot.slane %v8365, 5
      %v8368 = vsel %vm1114, %v8363, %v8367
      %v8370 = vshrl.u32 %v8261, 16
      %v8372 = vrot.slane %v8370, 4
      %v8373 = vshll.u32 %v8261, 16
      %v8375 = vrot.slane %v8373, 5
      %v8376 = vor.u32 %v8372, %v8375
      %v8377 = vrot.slane %v8376, 4
      %v8379 = vshll.u32 %v8262, 16
      %v8381 = vrot.slane %v8379, 5
      %v8382 = vsel %vm1114, %v8377, %v8381
      %v8383 = vshrl.u32 %v8262, 16
      %v8385 = vrot.slane %v8383, 4
      %v8386 = vor.u32 %v8385, %v8381
      %v8387 = vrot.slane %v8386, 4
      %v8389 = vshll.u32 %v8263, 16
      %v8391 = vrot.slane %v8389, 5
      %v8392 = vsel %vm1114, %v8387, %v8391
      %v8394 = vshrl.u32 %v8264, 16
      %v8396 = vrot.slane %v8394, 4
      %v8397 = vshll.u32 %v8264, 16
      %v8399 = vrot.slane %v8397, 5
      %v8400 = vor.u32 %v8396, %v8399
      %v8401 = vrot.slane %v8400, 4
      %v8403 = vshll.u32 %v8265, 16
      %v8405 = vrot.slane %v8403, 5
      %v8406 = vsel %vm1114, %v8401, %v8405
      %v8407 = vshrl.u32 %v8265, 16
      %v8409 = vrot.slane %v8407, 4
      %v8410 = vor.u32 %v8409, %v8405
      %v8411 = vrot.slane %v8410, 4
      %v8413 = vshll.u32 %v8266, 16
      %v8415 = vrot.slane %v8413, 5
      %v8416 = vsel %vm1114, %v8411, %v8415
      %v8418 = vshrl.u32 %v8267, 16
      %v8420 = vrot.slane %v8418, 4
      %v8421 = vshll.u32 %v8267, 16
      %v8423 = vrot.slane %v8421, 5
      %v8424 = vor.u32 %v8420, %v8423
      %v8425 = vrot.slane %v8424, 4
      %v8427 = vshll.u32 %v8268, 16
      %v8429 = vrot.slane %v8427, 5
      %v8430 = vsel %vm1114, %v8425, %v8429
      %v8431 = vshrl.u32 %v8268, 16
      %v8433 = vrot.slane %v8431, 4
      %v8434 = vor.u32 %v8433, %v8429
      %v8435 = vrot.slane %v8434, 4
      %v8437 = vshll.u32 %v8269, 16
      %v8439 = vrot.slane %v8437, 5
      %v8440 = vsel %vm1114, %v8435, %v8439
      %v8442 = vshrl.u32 %v8270, 16
      %v8444 = vrot.slane %v8442, 4
      %v8445 = vshll.u32 %v8270, 16
      %v8447 = vrot.slane %v8445, 5
      %v8448 = vor.u32 %v8444, %v8447
      %v8449 = vrot.slane %v8448, 4
      %v8451 = vshll.u32 %v8271, 16
      %v8453 = vrot.slane %v8451, 5
      %v8454 = vsel %vm1114, %v8449, %v8453
      %v8455 = vshrl.u32 %v8271, 16
      %v8457 = vrot.slane %v8455, 4
      %v8458 = vor.u32 %v8457, %v8453
      %v8459 = vrot.slane %v8458, 4
      %v8461 = vshll.u32 %v8272, 16
      %v8463 = vrot.slane %v8461, 5
      %v8464 = vsel %vm1114, %v8459, %v8463
      %8465 = vrot.lane.b32.xlu0 %v8286, 16
      %v8466 = vpop.permute.xlu0 %8465
      %8467 = vrot.lane.b32.xlu0 %v8296, 16
      %v8468 = vpop.permute.xlu0 %8467
      %8469 = vrot.lane.b32.xlu0 %v8310, 16
      %v8470 = vpop.permute.xlu0 %8469
      %8471 = vrot.lane.b32.xlu0 %v8320, 16
      %v8472 = vpop.permute.xlu0 %8471
      %8473 = vrot.lane.b32.xlu0 %v8334, 16
      %v8474 = vpop.permute.xlu0 %8473
      %8475 = vrot.lane.b32.xlu0 %v8344, 16
      %v8476 = vpop.permute.xlu0 %8475
      %8477 = vrot.lane.b32.xlu0 %v8358, 16
      %v8478 = vpop.permute.xlu0 %8477
      %8479 = vrot.lane.b32.xlu0 %v8368, 16
      %v8480 = vpop.permute.xlu0 %8479
      %8481 = vrot.lane.b32.xlu0 %v8382, 16
      %v8482 = vpop.permute.xlu0 %8481
      %8483 = vrot.lane.b32.xlu0 %v8392, 16
      %v8484 = vpop.permute.xlu0 %8483
      %8485 = vrot.lane.b32.xlu0 %v8406, 16
      %v8486 = vpop.permute.xlu0 %8485
      %8487 = vrot.lane.b32.xlu0 %v8416, 16
      %v8488 = vpop.permute.xlu0 %8487
      %8489 = vrot.lane.b32.xlu0 %v8430, 16
      %v8490 = vpop.permute.xlu0 %8489
      %8491 = vrot.lane.b32.xlu0 %v8440, 16
      %v8492 = vpop.permute.xlu0 %8491
      %8493 = vrot.lane.b32.xlu0 %v8454, 16
      %v8494 = vpop.permute.xlu0 %8493
      %8495 = vrot.lane.b32.xlu0 %v8464, 16
      %v8496 = vpop.permute.xlu0 %8495
      %8513 = vst.msk [vmem:[#allocation3] sm:$0xf] %vm1905, %v8466
      %8514 = vst.msk [vmem:[#allocation3 + $0x4] sm:$0xf] %vm1905, %v8468
      %8515 = vst.msk [vmem:[#allocation3 + $0x8] sm:$0xf] %vm1905, %v8470
      %8516 = vst.msk [vmem:[#allocation3 + $0xc] sm:$0xf] %vm1905, %v8472
      %8517 = vst.msk [vmem:[#allocation3 + $0x10] sm:$0xf] %vm1905, %v8474
      %8518 = vst.msk [vmem:[#allocation3 + $0x14] sm:$0xf] %vm1905, %v8476
      %8519 = vst.msk [vmem:[#allocation3 + $0x18] sm:$0xf] %vm1905, %v8478
      %8520 = vst.msk [vmem:[#allocation3 + $0x1c] sm:$0xf] %vm1905, %v8480
      %8521 = vst.msk [vmem:[#allocation3 + $0x20] sm:$0xf] %vm1905, %v8482
      %8522 = vst.msk [vmem:[#allocation3 + $0x24] sm:$0xf] %vm1905, %v8484
      %8523 = vst.msk [vmem:[#allocation3 + $0x28] sm:$0xf] %vm1905, %v8486
      %8524 = vst.msk [vmem:[#allocation3 + $0x2c] sm:$0xf] %vm1905, %v8488
      %8525 = vst.msk [vmem:[#allocation3 + $0x30] sm:$0xf] %vm1905, %v8490
      %8526 = vst.msk [vmem:[#allocation3 + $0x34] sm:$0xf] %vm1905, %v8492
      %8527 = vst.msk [vmem:[#allocation3 + $0x38] sm:$0xf] %vm1905, %v8494
      %8528 = vst.msk [vmem:[#allocation3 + $0x3c] sm:$0xf] %vm1905, %v8496
      %v8529 = vld [vmem:[%s687] sm:$0xe]
      %v8530 = vld [vmem:[%s687 + $0x4] sm:$0xf]
      %v8531 = vld [vmem:[%s687 + $0x8] sm:$0x1]
      %v8532 = vld [vmem:[%s687 + $0xc] sm:$0xe]
      %v8533 = vld [vmem:[%s687 + $0x10] sm:$0xf]
      %v8534 = vld [vmem:[%s687 + $0x14] sm:$0x1]
      %v8535 = vld [vmem:[%s687 + $0x18] sm:$0xe]
      %v8536 = vld [vmem:[%s687 + $0x1c] sm:$0xf]
      %v8537 = vld [vmem:[%s687 + $0x20] sm:$0x1]
      %v8538 = vld [vmem:[%s687 + $0x24] sm:$0xe]
      %v8539 = vld [vmem:[%s687 + $0x28] sm:$0xf]
      %v8540 = vld [vmem:[%s687 + $0x2c] sm:$0x1]
      %v8541 = vld [vmem:[%s687 + $0x30] sm:$0xe]
      %v8542 = vld [vmem:[%s687 + $0x34] sm:$0xf]
      %v8543 = vld [vmem:[%s687 + $0x38] sm:$0x1]
      %v8544 = vld [vmem:[%s687 + $0x3c] sm:$0xe]
      %v8545 = vld [vmem:[%s687 + $0x40] sm:$0xf]
      %v8546 = vld [vmem:[%s687 + $0x44] sm:$0x1]
      %v8547 = vld [vmem:[%s687 + $0x48] sm:$0xe]
      %v8548 = vld [vmem:[%s687 + $0x4c] sm:$0xf]
      %v8549 = vld [vmem:[%s687 + $0x50] sm:$0x1]
      %v8550 = vld [vmem:[%s687 + $0x54] sm:$0xe]
      %v8551 = vld [vmem:[%s687 + $0x58] sm:$0xf]
      %v8552 = vld [vmem:[%s687 + $0x5c] sm:$0x1]
      %v8577 = vrot.slane %v8529, 5
      %v8578 = vrot.slane %v8577, 4
      %v8579 = vrot.slane %v8530, 5
      %v8580 = vsel %vm1422, %v8578, %v8579
      %v8581 = vrot.slane %v8579, 4
      %v8582 = vrot.slane %v8531, 5
      %v8583 = vsel %vm1422, %v8581, %v8582
      %v8584 = vrot.slane %v8532, 5
      %v8585 = vrot.slane %v8584, 4
      %v8586 = vrot.slane %v8533, 5
      %v8587 = vsel %vm1422, %v8585, %v8586
      %v8588 = vrot.slane %v8586, 4
      %v8589 = vrot.slane %v8534, 5
      %v8590 = vsel %vm1422, %v8588, %v8589
      %v8591 = vrot.slane %v8535, 5
      %v8592 = vrot.slane %v8591, 4
      %v8593 = vrot.slane %v8536, 5
      %v8594 = vsel %vm1422, %v8592, %v8593
      %v8595 = vrot.slane %v8593, 4
      %v8596 = vrot.slane %v8537, 5
      %v8597 = vsel %vm1422, %v8595, %v8596
      %v8598 = vrot.slane %v8538, 5
      %v8599 = vrot.slane %v8598, 4
      %v8600 = vrot.slane %v8539, 5
      %v8601 = vsel %vm1422, %v8599, %v8600
      %v8602 = vrot.slane %v8600, 4
      %v8603 = vrot.slane %v8540, 5
      %v8604 = vsel %vm1422, %v8602, %v8603
      %v8605 = vrot.slane %v8541, 5
      %v8606 = vrot.slane %v8605, 4
      %v8607 = vrot.slane %v8542, 5
      %v8608 = vsel %vm1422, %v8606, %v8607
      %v8609 = vrot.slane %v8607, 4
      %v8610 = vrot.slane %v8543, 5
      %v8611 = vsel %vm1422, %v8609, %v8610
      %v8612 = vrot.slane %v8544, 5
      %v8613 = vrot.slane %v8612, 4
      %v8614 = vrot.slane %v8545, 5
      %v8615 = vsel %vm1422, %v8613, %v8614
      %v8616 = vrot.slane %v8614, 4
      %v8617 = vrot.slane %v8546, 5
      %v8618 = vsel %vm1422, %v8616, %v8617
      %v8619 = vrot.slane %v8547, 5
      %v8620 = vrot.slane %v8619, 4
      %v8621 = vrot.slane %v8548, 5
      %v8622 = vsel %vm1422, %v8620, %v8621
      %v8623 = vrot.slane %v8621, 4
      %v8624 = vrot.slane %v8549, 5
      %v8625 = vsel %vm1422, %v8623, %v8624
      %v8626 = vrot.slane %v8550, 5
      %v8627 = vrot.slane %v8626, 4
      %v8628 = vrot.slane %v8551, 5
      %v8629 = vsel %vm1422, %v8627, %v8628
      %v8630 = vrot.slane %v8628, 4
      %v8631 = vrot.slane %v8552, 5
      %v8632 = vsel %vm1422, %v8630, %v8631
      %8633 = vrot.lane.b32.xlu0 %v8580, 20
      %v8634 = vpop.permute.xlu0 %8633
      %8635 = vrot.lane.b32.xlu0 %v8583, 20
      %v8636 = vpop.permute.xlu0 %8635
      %8637 = vrot.lane.b32.xlu0 %v8587, 20
      %v8638 = vpop.permute.xlu0 %8637
      %8639 = vrot.lane.b32.xlu0 %v8590, 20
      %v8640 = vpop.permute.xlu0 %8639
      %8641 = vrot.lane.b32.xlu0 %v8594, 20
      %v8642 = vpop.permute.xlu0 %8641
      %8643 = vrot.lane.b32.xlu0 %v8597, 20
      %v8644 = vpop.permute.xlu0 %8643
      %8645 = vrot.lane.b32.xlu0 %v8601, 20
      %v8646 = vpop.permute.xlu0 %8645
      %8647 = vrot.lane.b32.xlu0 %v8604, 20
      %v8648 = vpop.permute.xlu0 %8647
      %8649 = vrot.lane.b32.xlu0 %v8608, 20
      %v8650 = vpop.permute.xlu0 %8649
      %8651 = vrot.lane.b32.xlu0 %v8611, 20
      %v8652 = vpop.permute.xlu0 %8651
      %8653 = vrot.lane.b32.xlu0 %v8615, 20
      %v8654 = vpop.permute.xlu0 %8653
      %8655 = vrot.lane.b32.xlu0 %v8618, 20
      %v8656 = vpop.permute.xlu0 %8655
      %8657 = vrot.lane.b32.xlu0 %v8622, 20
      %v8658 = vpop.permute.xlu0 %8657
      %8659 = vrot.lane.b32.xlu0 %v8625, 20
      %v8660 = vpop.permute.xlu0 %8659
      %8661 = vrot.lane.b32.xlu0 %v8629, 20
      %v8662 = vpop.permute.xlu0 %8661
      %8663 = vrot.lane.b32.xlu0 %v8632, 20
      %v8664 = vpop.permute.xlu0 %8663
      %8681 = vst.msk [vmem:[#allocation3] sm:$0xf] %vm2074, %v8634
      %8682 = vst.msk [vmem:[#allocation3 + $0x4] sm:$0xf] %vm2074, %v8636
      %8683 = vst.msk [vmem:[#allocation3 + $0x8] sm:$0xf] %vm2074, %v8638
      %8684 = vst.msk [vmem:[#allocation3 + $0xc] sm:$0xf] %vm2074, %v8640
      %8685 = vst.msk [vmem:[#allocation3 + $0x10] sm:$0xf] %vm2074, %v8642
      %8686 = vst.msk [vmem:[#allocation3 + $0x14] sm:$0xf] %vm2074, %v8644
      %8687 = vst.msk [vmem:[#allocation3 + $0x18] sm:$0xf] %vm2074, %v8646
      %8688 = vst.msk [vmem:[#allocation3 + $0x1c] sm:$0xf] %vm2074, %v8648
      %8689 = vst.msk [vmem:[#allocation3 + $0x20] sm:$0xf] %vm2074, %v8650
      %8690 = vst.msk [vmem:[#allocation3 + $0x24] sm:$0xf] %vm2074, %v8652
      %8691 = vst.msk [vmem:[#allocation3 + $0x28] sm:$0xf] %vm2074, %v8654
      %8692 = vst.msk [vmem:[#allocation3 + $0x2c] sm:$0xf] %vm2074, %v8656
      %8693 = vst.msk [vmem:[#allocation3 + $0x30] sm:$0xf] %vm2074, %v8658
      %8694 = vst.msk [vmem:[#allocation3 + $0x34] sm:$0xf] %vm2074, %v8660
      %8695 = vst.msk [vmem:[#allocation3 + $0x38] sm:$0xf] %vm2074, %v8662
      %8696 = vst.msk [vmem:[#allocation3 + $0x3c] sm:$0xf] %vm2074, %v8664
      %v8697 = vld [vmem:[%s3974] sm:$0xf]
      %v8698 = vld [vmem:[%s3974 + $0x4] sm:$0xf]
      %v8699 = vld [vmem:[%s3974 + $0xc] sm:$0xf]
      %v8700 = vld [vmem:[%s3974 + $0x10] sm:$0xf]
      %v8701 = vld [vmem:[%s3974 + $0x18] sm:$0xf]
      %v8702 = vld [vmem:[%s3974 + $0x1c] sm:$0xf]
      %v8703 = vld [vmem:[%s3974 + $0x24] sm:$0xf]
      %v8704 = vld [vmem:[%s3974 + $0x28] sm:$0xf]
      %v8705 = vld [vmem:[%s3974 + $0x30] sm:$0xf]
      %v8706 = vld [vmem:[%s3974 + $0x34] sm:$0xf]
      %v8707 = vld [vmem:[%s3974 + $0x3c] sm:$0xf]
      %v8708 = vld [vmem:[%s3974 + $0x40] sm:$0xf]
      %v8709 = vld [vmem:[%s3974 + $0x48] sm:$0xf]
      %v8710 = vld [vmem:[%s3974 + $0x4c] sm:$0xf]
      %v8711 = vld [vmem:[%s3974 + $0x54] sm:$0xf]
      %v8712 = vld [vmem:[%s3974 + $0x58] sm:$0xf]
      %8729 = vrot.lane.b32.xlu0 %v8697, 24
      %v8730 = vpop.permute.xlu0 %8729
      %8731 = vrot.lane.b32.xlu0 %v8698, 24
      %v8732 = vpop.permute.xlu0 %8731
      %8733 = vrot.lane.b32.xlu0 %v8699, 24
      %v8734 = vpop.permute.xlu0 %8733
      %8735 = vrot.lane.b32.xlu0 %v8700, 24
      %v8736 = vpop.permute.xlu0 %8735
      %8737 = vrot.lane.b32.xlu0 %v8701, 24
      %v8738 = vpop.permute.xlu0 %8737
      %8739 = vrot.lane.b32.xlu0 %v8702, 24
      %v8740 = vpop.permute.xlu0 %8739
      %8741 = vrot.lane.b32.xlu0 %v8703, 24
      %v8742 = vpop.permute.xlu0 %8741
      %8743 = vrot.lane.b32.xlu0 %v8704, 24
      %v8744 = vpop.permute.xlu0 %8743
      %8745 = vrot.lane.b32.xlu0 %v8705, 24
      %v8746 = vpop.permute.xlu0 %8745
      %8747 = vrot.lane.b32.xlu0 %v8706, 24
      %v8748 = vpop.permute.xlu0 %8747
      %8749 = vrot.lane.b32.xlu0 %v8707, 24
      %v8750 = vpop.permute.xlu0 %8749
      %8751 = vrot.lane.b32.xlu0 %v8708, 24
      %v8752 = vpop.permute.xlu0 %8751
      %8753 = vrot.lane.b32.xlu0 %v8709, 24
      %v8754 = vpop.permute.xlu0 %8753
      %8755 = vrot.lane.b32.xlu0 %v8710, 24
      %v8756 = vpop.permute.xlu0 %8755
      %8757 = vrot.lane.b32.xlu0 %v8711, 24
      %v8758 = vpop.permute.xlu0 %8757
      %8759 = vrot.lane.b32.xlu0 %v8712, 24
      %v8760 = vpop.permute.xlu0 %8759
      %8777 = vst.msk [vmem:[#allocation3] sm:$0xf] %vm2171, %v8730
      %8778 = vst.msk [vmem:[#allocation3 + $0x4] sm:$0xf] %vm2171, %v8732
      %8779 = vst.msk [vmem:[#allocation3 + $0x8] sm:$0xf] %vm2171, %v8734
      %8780 = vst.msk [vmem:[#allocation3 + $0xc] sm:$0xf] %vm2171, %v8736
      %8781 = vst.msk [vmem:[#allocation3 + $0x10] sm:$0xf] %vm2171, %v8738
      %8782 = vst.msk [vmem:[#allocation3 + $0x14] sm:$0xf] %vm2171, %v8740
      %8783 = vst.msk [vmem:[#allocation3 + $0x18] sm:$0xf] %vm2171, %v8742
      %8784 = vst.msk [vmem:[#allocation3 + $0x1c] sm:$0xf] %vm2171, %v8744
      %8785 = vst.msk [vmem:[#allocation3 + $0x20] sm:$0xf] %vm2171, %v8746
      %8786 = vst.msk [vmem:[#allocation3 + $0x24] sm:$0xf] %vm2171, %v8748
      %8787 = vst.msk [vmem:[#allocation3 + $0x28] sm:$0xf] %vm2171, %v8750
      %8788 = vst.msk [vmem:[#allocation3 + $0x2c] sm:$0xf] %vm2171, %v8752
      %8789 = vst.msk [vmem:[#allocation3 + $0x30] sm:$0xf] %vm2171, %v8754
      %8790 = vst.msk [vmem:[#allocation3 + $0x34] sm:$0xf] %vm2171, %v8756
      %8791 = vst.msk [vmem:[#allocation3 + $0x38] sm:$0xf] %vm2171, %v8758
      %8792 = vst.msk [vmem:[#allocation3 + $0x3c] sm:$0xf] %vm2171, %v8760
      %v8793 = vld [vmem:[%s3974] sm:$0xf]
      %v8794 = vld [vmem:[%s3974 + $0x4] sm:$0xf]
      %v8795 = vld [vmem:[%s3974 + $0x8] sm:$0x1]
      %v8796 = vld [vmem:[%s3974 + $0xc] sm:$0xf]
      %v8797 = vld [vmem:[%s3974 + $0x10] sm:$0xf]
      %v8798 = vld [vmem:[%s3974 + $0x14] sm:$0x1]
      %v8799 = vld [vmem:[%s3974 + $0x18] sm:$0xf]
      %v8800 = vld [vmem:[%s3974 + $0x1c] sm:$0xf]
      %v8801 = vld [vmem:[%s3974 + $0x20] sm:$0x1]
      %v8802 = vld [vmem:[%s3974 + $0x24] sm:$0xf]
      %v8803 = vld [vmem:[%s3974 + $0x28] sm:$0xf]
      %v8804 = vld [vmem:[%s3974 + $0x2c] sm:$0x1]
      %v8805 = vld [vmem:[%s3974 + $0x30] sm:$0xf]
      %v8806 = vld [vmem:[%s3974 + $0x34] sm:$0xf]
      %v8807 = vld [vmem:[%s3974 + $0x38] sm:$0x1]
      %v8808 = vld [vmem:[%s3974 + $0x3c] sm:$0xf]
      %v8809 = vld [vmem:[%s3974 + $0x40] sm:$0xf]
      %v8810 = vld [vmem:[%s3974 + $0x44] sm:$0x1]
      %v8811 = vld [vmem:[%s3974 + $0x48] sm:$0xf]
      %v8812 = vld [vmem:[%s3974 + $0x4c] sm:$0xf]
      %v8813 = vld [vmem:[%s3974 + $0x50] sm:$0x1]
      %v8814 = vld [vmem:[%s3974 + $0x54] sm:$0xf]
      %v8815 = vld [vmem:[%s3974 + $0x58] sm:$0xf]
      %v8816 = vld [vmem:[%s3974 + $0x5c] sm:$0x1]
      %v8818 = vshrl.u32 %v8793, 16
      %v8820 = vrot.slane %v8818, 4
      %v8821 = vshll.u32 %v8793, 16
      %v8823 = vrot.slane %v8821, 5
      %v8824 = vor.u32 %v8820, %v8823
      %v8825 = vrot.slane %v8824, 4
      %v8827 = vshll.u32 %v8794, 16
      %v8829 = vrot.slane %v8827, 5
      %v8830 = vsel %vm1114, %v8825, %v8829
      %v8831 = vshrl.u32 %v8794, 16
      %v8833 = vrot.slane %v8831, 4
      %v8834 = vor.u32 %v8833, %v8829
      %v8835 = vrot.slane %v8834, 4
      %v8837 = vshll.u32 %v8795, 16
      %v8839 = vrot.slane %v8837, 5
      %v8840 = vsel %vm1114, %v8835, %v8839
      %v8842 = vshrl.u32 %v8796, 16
      %v8844 = vrot.slane %v8842, 4
      %v8845 = vshll.u32 %v8796, 16
      %v8847 = vrot.slane %v8845, 5
      %v8848 = vor.u32 %v8844, %v8847
      %v8849 = vrot.slane %v8848, 4
      %v8851 = vshll.u32 %v8797, 16
      %v8853 = vrot.slane %v8851, 5
      %v8854 = vsel %vm1114, %v8849, %v8853
      %v8855 = vshrl.u32 %v8797, 16
      %v8857 = vrot.slane %v8855, 4
      %v8858 = vor.u32 %v8857, %v8853
      %v8859 = vrot.slane %v8858, 4
      %v8861 = vshll.u32 %v8798, 16
      %v8863 = vrot.slane %v8861, 5
      %v8864 = vsel %vm1114, %v8859, %v8863
      %v8866 = vshrl.u32 %v8799, 16
      %v8868 = vrot.slane %v8866, 4
      %v8869 = vshll.u32 %v8799, 16
      %v8871 = vrot.slane %v8869, 5
      %v8872 = vor.u32 %v8868, %v8871
      %v8873 = vrot.slane %v8872, 4
      %v8875 = vshll.u32 %v8800, 16
      %v8877 = vrot.slane %v8875, 5
      %v8878 = vsel %vm1114, %v8873, %v8877
      %v8879 = vshrl.u32 %v8800, 16
      %v8881 = vrot.slane %v8879, 4
      %v8882 = vor.u32 %v8881, %v8877
      %v8883 = vrot.slane %v8882, 4
      %v8885 = vshll.u32 %v8801, 16
      %v8887 = vrot.slane %v8885, 5
      %v8888 = vsel %vm1114, %v8883, %v8887
      %v8890 = vshrl.u32 %v8802, 16
      %v8892 = vrot.slane %v8890, 4
      %v8893 = vshll.u32 %v8802, 16
      %v8895 = vrot.slane %v8893, 5
      %v8896 = vor.u32 %v8892, %v8895
      %v8897 = vrot.slane %v8896, 4
      %v8899 = vshll.u32 %v8803, 16
      %v8901 = vrot.slane %v8899, 5
      %v8902 = vsel %vm1114, %v8897, %v8901
      %v8903 = vshrl.u32 %v8803, 16
      %v8905 = vrot.slane %v8903, 4
      %v8906 = vor.u32 %v8905, %v8901
      %v8907 = vrot.slane %v8906, 4
      %v8909 = vshll.u32 %v8804, 16
      %v8911 = vrot.slane %v8909, 5
      %v8912 = vsel %vm1114, %v8907, %v8911
      %v8914 = vshrl.u32 %v8805, 16
      %v8916 = vrot.slane %v8914, 4
      %v8917 = vshll.u32 %v8805, 16
      %v8919 = vrot.slane %v8917, 5
      %v8920 = vor.u32 %v8916, %v8919
      %v8921 = vrot.slane %v8920, 4
      %v8923 = vshll.u32 %v8806, 16
      %v8925 = vrot.slane %v8923, 5
      %v8926 = vsel %vm1114, %v8921, %v8925
      %v8927 = vshrl.u32 %v8806, 16
      %v8929 = vrot.slane %v8927, 4
      %v8930 = vor.u32 %v8929, %v8925
      %v8931 = vrot.slane %v8930, 4
      %v8933 = vshll.u32 %v8807, 16
      %v8935 = vrot.slane %v8933, 5
      %v8936 = vsel %vm1114, %v8931, %v8935
      %v8938 = vshrl.u32 %v8808, 16
      %v8940 = vrot.slane %v8938, 4
      %v8941 = vshll.u32 %v8808, 16
      %v8943 = vrot.slane %v8941, 5
      %v8944 = vor.u32 %v8940, %v8943
      %v8945 = vrot.slane %v8944, 4
      %v8947 = vshll.u32 %v8809, 16
      %v8949 = vrot.slane %v8947, 5
      %v8950 = vsel %vm1114, %v8945, %v8949
      %v8951 = vshrl.u32 %v8809, 16
      %v8953 = vrot.slane %v8951, 4
      %v8954 = vor.u32 %v8953, %v8949
      %v8955 = vrot.slane %v8954, 4
      %v8957 = vshll.u32 %v8810, 16
      %v8959 = vrot.slane %v8957, 5
      %v8960 = vsel %vm1114, %v8955, %v8959
      %v8962 = vshrl.u32 %v8811, 16
      %v8964 = vrot.slane %v8962, 4
      %v8965 = vshll.u32 %v8811, 16
      %v8967 = vrot.slane %v8965, 5
      %v8968 = vor.u32 %v8964, %v8967
      %v8969 = vrot.slane %v8968, 4
      %v8971 = vshll.u32 %v8812, 16
      %v8973 = vrot.slane %v8971, 5
      %v8974 = vsel %vm1114, %v8969, %v8973
      %v8975 = vshrl.u32 %v8812, 16
      %v8977 = vrot.slane %v8975, 4
      %v8978 = vor.u32 %v8977, %v8973
      %v8979 = vrot.slane %v8978, 4
      %v8981 = vshll.u32 %v8813, 16
      %v8983 = vrot.slane %v8981, 5
      %v8984 = vsel %vm1114, %v8979, %v8983
      %v8986 = vshrl.u32 %v8814, 16
      %v8988 = vrot.slane %v8986, 4
      %v8989 = vshll.u32 %v8814, 16
      %v8991 = vrot.slane %v8989, 5
      %v8992 = vor.u32 %v8988, %v8991
      %v8993 = vrot.slane %v8992, 4
      %v8995 = vshll.u32 %v8815, 16
      %v8997 = vrot.slane %v8995, 5
      %v8998 = vsel %vm1114, %v8993, %v8997
      %v8999 = vshrl.u32 %v8815, 16
      %v9001 = vrot.slane %v8999, 4
      %v9002 = vor.u32 %v9001, %v8997
      %v9003 = vrot.slane %v9002, 4
      %v9005 = vshll.u32 %v8816, 16
      %v9007 = vrot.slane %v9005, 5
      %v9008 = vsel %vm1114, %v9003, %v9007
      %9009 = vrot.lane.b32.xlu0 %v8830, 28
      %v9010 = vpop.permute.xlu0 %9009
      %9011 = vrot.lane.b32.xlu0 %v8840, 28
      %v9012 = vpop.permute.xlu0 %9011
      %9013 = vrot.lane.b32.xlu0 %v8854, 28
      %v9014 = vpop.permute.xlu0 %9013
      %9015 = vrot.lane.b32.xlu0 %v8864, 28
      %v9016 = vpop.permute.xlu0 %9015
      %9017 = vrot.lane.b32.xlu0 %v8878, 28
      %v9018 = vpop.permute.xlu0 %9017
      %9019 = vrot.lane.b32.xlu0 %v8888, 28
      %v9020 = vpop.permute.xlu0 %9019
      %9021 = vrot.lane.b32.xlu0 %v8902, 28
      %v9022 = vpop.permute.xlu0 %9021
      %9023 = vrot.lane.b32.xlu0 %v8912, 28
      %v9024 = vpop.permute.xlu0 %9023
      %9025 = vrot.lane.b32.xlu0 %v8926, 28
      %v9026 = vpop.permute.xlu0 %9025
      %9027 = vrot.lane.b32.xlu0 %v8936, 28
      %v9028 = vpop.permute.xlu0 %9027
      %9029 = vrot.lane.b32.xlu0 %v8950, 28
      %v9030 = vpop.permute.xlu0 %9029
      %9031 = vrot.lane.b32.xlu0 %v8960, 28
      %v9032 = vpop.permute.xlu0 %9031
      %9033 = vrot.lane.b32.xlu0 %v8974, 28
      %v9034 = vpop.permute.xlu0 %9033
      %9035 = vrot.lane.b32.xlu0 %v8984, 28
      %v9036 = vpop.permute.xlu0 %9035
      %9037 = vrot.lane.b32.xlu0 %v8998, 28
      %v9038 = vpop.permute.xlu0 %9037
      %9039 = vrot.lane.b32.xlu0 %v9008, 28
      %v9040 = vpop.permute.xlu0 %9039
      %9057 = vst.msk [vmem:[#allocation3] sm:$0xf] %vm2452, %v9010
      %9058 = vst.msk [vmem:[#allocation3 + $0x4] sm:$0xf] %vm2452, %v9012
      %9059 = vst.msk [vmem:[#allocation3 + $0x8] sm:$0xf] %vm2452, %v9014
      %9060 = vst.msk [vmem:[#allocation3 + $0xc] sm:$0xf] %vm2452, %v9016
      %9061 = vst.msk [vmem:[#allocation3 + $0x10] sm:$0xf] %vm2452, %v9018
      %9062 = vst.msk [vmem:[#allocation3 + $0x14] sm:$0xf] %vm2452, %v9020
      %9063 = vst.msk [vmem:[#allocation3 + $0x18] sm:$0xf] %vm2452, %v9022
      %9064 = vst.msk [vmem:[#allocation3 + $0x1c] sm:$0xf] %vm2452, %v9024
      %9065 = vst.msk [vmem:[#allocation3 + $0x20] sm:$0xf] %vm2452, %v9026
      %9066 = vst.msk [vmem:[#allocation3 + $0x24] sm:$0xf] %vm2452, %v9028
      %9067 = vst.msk [vmem:[#allocation3 + $0x28] sm:$0xf] %vm2452, %v9030
      %9068 = vst.msk [vmem:[#allocation3 + $0x2c] sm:$0xf] %vm2452, %v9032
      %9069 = vst.msk [vmem:[#allocation3 + $0x30] sm:$0xf] %vm2452, %v9034
      %9070 = vst.msk [vmem:[#allocation3 + $0x34] sm:$0xf] %vm2452, %v9036
      %9071 = vst.msk [vmem:[#allocation3 + $0x38] sm:$0xf] %vm2452, %v9038
      %9072 = vst.msk [vmem:[#allocation3 + $0x3c] sm:$0xf] %vm2452, %v9040
      %v9073 = vld [vmem:[%s3974] sm:$0xe]
      %v9074 = vld [vmem:[%s3974 + $0x4] sm:$0xf]
      %v9075 = vld [vmem:[%s3974 + $0x8] sm:$0x1]
      %v9076 = vld [vmem:[%s3974 + $0xc] sm:$0xe]
      %v9077 = vld [vmem:[%s3974 + $0x10] sm:$0xf]
      %v9078 = vld [vmem:[%s3974 + $0x14] sm:$0x1]
      %v9079 = vld [vmem:[%s3974 + $0x18] sm:$0xe]
      %v9080 = vld [vmem:[%s3974 + $0x1c] sm:$0xf]
      %v9081 = vld [vmem:[%s3974 + $0x20] sm:$0x1]
      %v9082 = vld [vmem:[%s3974 + $0x24] sm:$0xe]
      %v9083 = vld [vmem:[%s3974 + $0x28] sm:$0xf]
      %v9084 = vld [vmem:[%s3974 + $0x2c] sm:$0x1]
      %v9085 = vld [vmem:[%s3974 + $0x30] sm:$0xe]
      %v9086 = vld [vmem:[%s3974 + $0x34] sm:$0xf]
      %v9087 = vld [vmem:[%s3974 + $0x38] sm:$0x1]
      %v9088 = vld [vmem:[%s3974 + $0x3c] sm:$0xe]
      %v9089 = vld [vmem:[%s3974 + $0x40] sm:$0xf]
      %v9090 = vld [vmem:[%s3974 + $0x44] sm:$0x1]
      %v9091 = vld [vmem:[%s3974 + $0x48] sm:$0xe]
      %v9092 = vld [vmem:[%s3974 + $0x4c] sm:$0xf]
      %v9093 = vld [vmem:[%s3974 + $0x50] sm:$0x1]
      %v9094 = vld [vmem:[%s3974 + $0x54] sm:$0xe]
      %v9095 = vld [vmem:[%s3974 + $0x58] sm:$0xf]
      %v9096 = vld [vmem:[%s3974 + $0x5c] sm:$0x1]
      %v9121 = vrot.slane %v9073, 5
      %v9122 = vrot.slane %v9121, 4
      %v9123 = vrot.slane %v9074, 5
      %v9124 = vsel %vm1422, %v9122, %v9123
      %v9125 = vrot.slane %v9123, 4
      %v9126 = vrot.slane %v9075, 5
      %v9127 = vsel %vm1422, %v9125, %v9126
      %v9128 = vrot.slane %v9076, 5
      %v9129 = vrot.slane %v9128, 4
      %v9130 = vrot.slane %v9077, 5
      %v9131 = vsel %vm1422, %v9129, %v9130
      %v9132 = vrot.slane %v9130, 4
      %v9133 = vrot.slane %v9078, 5
      %v9134 = vsel %vm1422, %v9132, %v9133
      %v9135 = vrot.slane %v9079, 5
      %v9136 = vrot.slane %v9135, 4
      %v9137 = vrot.slane %v9080, 5
      %v9138 = vsel %vm1422, %v9136, %v9137
      %v9139 = vrot.slane %v9137, 4
      %v9140 = vrot.slane %v9081, 5
      %v9141 = vsel %vm1422, %v9139, %v9140
      %v9142 = vrot.slane %v9082, 5
      %v9143 = vrot.slane %v9142, 4
      %v9144 = vrot.slane %v9083, 5
      %v9145 = vsel %vm1422, %v9143, %v9144
      %v9146 = vrot.slane %v9144, 4
      %v9147 = vrot.slane %v9084, 5
      %v9148 = vsel %vm1422, %v9146, %v9147
      %v9149 = vrot.slane %v9085, 5
      %v9150 = vrot.slane %v9149, 4
      %v9151 = vrot.slane %v9086, 5
      %v9152 = vsel %vm1422, %v9150, %v9151
      %v9153 = vrot.slane %v9151, 4
      %v9154 = vrot.slane %v9087, 5
      %v9155 = vsel %vm1422, %v9153, %v9154
      %v9156 = vrot.slane %v9088, 5
      %v9157 = vrot.slane %v9156, 4
      %v9158 = vrot.slane %v9089, 5
      %v9159 = vsel %vm1422, %v9157, %v9158
      %v9160 = vrot.slane %v9158, 4
      %v9161 = vrot.slane %v9090, 5
      %v9162 = vsel %vm1422, %v9160, %v9161
      %v9163 = vrot.slane %v9091, 5
      %v9164 = vrot.slane %v9163, 4
      %v9165 = vrot.slane %v9092, 5
      %v9166 = vsel %vm1422, %v9164, %v9165
      %v9167 = vrot.slane %v9165, 4
      %v9168 = vrot.slane %v9093, 5
      %v9169 = vsel %vm1422, %v9167, %v9168
      %v9170 = vrot.slane %v9094, 5
      %v9171 = vrot.slane %v9170, 4
      %v9172 = vrot.slane %v9095, 5
      %v9173 = vsel %vm1422, %v9171, %v9172
      %v9174 = vrot.slane %v9172, 4
      %v9175 = vrot.slane %v9096, 5
      %v9176 = vsel %vm1422, %v9174, %v9175
      %9177 = vrot.lane.b32.xlu0 %v9124, 32
      %v9178 = vpop.permute.xlu0 %9177
      %9179 = vrot.lane.b32.xlu0 %v9127, 32
      %v9180 = vpop.permute.xlu0 %9179
      %9181 = vrot.lane.b32.xlu0 %v9131, 32
      %v9182 = vpop.permute.xlu0 %9181
      %9183 = vrot.lane.b32.xlu0 %v9134, 32
      %v9184 = vpop.permute.xlu0 %9183
      %9185 = vrot.lane.b32.xlu0 %v9138, 32
      %v9186 = vpop.permute.xlu0 %9185
      %9187 = vrot.lane.b32.xlu0 %v9141, 32
      %v9188 = vpop.permute.xlu0 %9187
      %9189 = vrot.lane.b32.xlu0 %v9145, 32
      %v9190 = vpop.permute.xlu0 %9189
      %9191 = vrot.lane.b32.xlu0 %v9148, 32
      %v9192 = vpop.permute.xlu0 %9191
      %9193 = vrot.lane.b32.xlu0 %v9152, 32
      %v9194 = vpop.permute.xlu0 %9193
      %9195 = vrot.lane.b32.xlu0 %v9155, 32
      %v9196 = vpop.permute.xlu0 %9195
      %9197 = vrot.lane.b32.xlu0 %v9159, 32
      %v9198 = vpop.permute.xlu0 %9197
      %9199 = vrot.lane.b32.xlu0 %v9162, 32
      %v9200 = vpop.permute.xlu0 %9199
      %9201 = vrot.lane.b32.xlu0 %v9166, 32
      %v9202 = vpop.permute.xlu0 %9201
      %9203 = vrot.lane.b32.xlu0 %v9169, 32
      %v9204 = vpop.permute.xlu0 %9203
      %9205 = vrot.lane.b32.xlu0 %v9173, 32
      %v9206 = vpop.permute.xlu0 %9205
      %9207 = vrot.lane.b32.xlu0 %v9176, 32
      %v9208 = vpop.permute.xlu0 %9207
      %9225 = vst.msk [vmem:[#allocation3] sm:$0xf] %vm2621, %v9178
      %9226 = vst.msk [vmem:[#allocation3 + $0x4] sm:$0xf] %vm2621, %v9180
      %9227 = vst.msk [vmem:[#allocation3 + $0x8] sm:$0xf] %vm2621, %v9182
      %9228 = vst.msk [vmem:[#allocation3 + $0xc] sm:$0xf] %vm2621, %v9184
      %9229 = vst.msk [vmem:[#allocation3 + $0x10] sm:$0xf] %vm2621, %v9186
      %9230 = vst.msk [vmem:[#allocation3 + $0x14] sm:$0xf] %vm2621, %v9188
      %9231 = vst.msk [vmem:[#allocation3 + $0x18] sm:$0xf] %vm2621, %v9190
      %9232 = vst.msk [vmem:[#allocation3 + $0x1c] sm:$0xf] %vm2621, %v9192
      %9233 = vst.msk [vmem:[#allocation3 + $0x20] sm:$0xf] %vm2621, %v9194
      %9234 = vst.msk [vmem:[#allocation3 + $0x24] sm:$0xf] %vm2621, %v9196
      %9235 = vst.msk [vmem:[#allocation3 + $0x28] sm:$0xf] %vm2621, %v9198
      %9236 = vst.msk [vmem:[#allocation3 + $0x2c] sm:$0xf] %vm2621, %v9200
      %9237 = vst.msk [vmem:[#allocation3 + $0x30] sm:$0xf] %vm2621, %v9202
      %9238 = vst.msk [vmem:[#allocation3 + $0x34] sm:$0xf] %vm2621, %v9204
      %9239 = vst.msk [vmem:[#allocation3 + $0x38] sm:$0xf] %vm2621, %v9206
      %9240 = vst.msk [vmem:[#allocation3 + $0x3c] sm:$0xf] %vm2621, %v9208
      %v9241 = vld [vmem:[#allocation3] sm:$0xf]
      %v9242 = vld [vmem:[#allocation3 + $0x4] sm:$0xf]
      %v9243 = vld [vmem:[#allocation3 + $0x8] sm:$0xf]
      %v9244 = vld [vmem:[#allocation3 + $0xc] sm:$0xf]
      %v9245 = vld [vmem:[#allocation3 + $0x10] sm:$0xf]
      %v9246 = vld [vmem:[#allocation3 + $0x14] sm:$0xf]
      %v9247 = vld [vmem:[#allocation3 + $0x18] sm:$0xf]
      %v9248 = vld [vmem:[#allocation3 + $0x1c] sm:$0xf]
      %v9249 = vld [vmem:[#allocation3 + $0x20] sm:$0xf]
      %v9250 = vld [vmem:[#allocation3 + $0x24] sm:$0xf]
      %v9251 = vld [vmem:[#allocation3 + $0x28] sm:$0xf]
      %v9252 = vld [vmem:[#allocation3 + $0x2c] sm:$0xf]
      %v9253 = vld [vmem:[#allocation3 + $0x30] sm:$0xf]
      %v9254 = vld [vmem:[#allocation3 + $0x34] sm:$0xf]
      %v9255 = vld [vmem:[#allocation3 + $0x38] sm:$0xf]
      %v9256 = vld [vmem:[#allocation3 + $0x3c] sm:$0xf]
      %v9257 = vld [vmem:[%s2] sm:$0xf]
      %v9258 = vld [vmem:[%s2 + $0x4] sm:$0xf]
      %v9259 = vld [vmem:[%s2 + $0x8] sm:$0xf]
      %v9260 = vld [vmem:[%s2 + $0xc] sm:$0xf]
      %v9261 = vld [vmem:[%s2 + $0x10] sm:$0x3]
      %v9278 = vunpack.c.l.b16 %v9241
      %v9279 = vunpack.c.l.b16 %v9242
      %v9280 = vunpack.c.l.b16 %v9243
      %v9281 = vunpack.c.l.b16 %v9244
      %v9282 = vunpack.c.l.b16 %v9245
      %v9283 = vunpack.c.l.b16 %v9246
      %v9284 = vunpack.c.l.b16 %v9247
      %v9285 = vunpack.c.l.b16 %v9248
      %v9286 = vunpack.c.l.b16 %v9249
      %v9287 = vunpack.c.l.b16 %v9250
      %v9288 = vunpack.c.l.b16 %v9251
      %v9289 = vunpack.c.l.b16 %v9252
      %v9290 = vunpack.c.l.b16 %v9253
      %v9291 = vunpack.c.l.b16 %v9254
      %v9292 = vunpack.c.l.b16 %v9255
      %v9293 = vunpack.c.l.b16 %v9256
      %v9294 = vpack.c.b16 %v9279, %v9278
      %v9295 = vpack.c.b16 %v9281, %v9280
      %v9296 = vpack.c.b16 %v9283, %v9282
      %v9297 = vpack.c.b16 %v9285, %v9284
      %v9298 = vpack.c.b16 %v9287, %v9286
      %v9299 = vpack.c.b16 %v9289, %v9288
      %v9300 = vpack.c.b16 %v9291, %v9290
      %v9301 = vpack.c.b16 %v9293, %v9292
      %v9307 = vunpack.c.l.b16 %v9257
      %v9308 = vunpack.c.l.b16 %v9258
      %v9309 = vunpack.c.l.b16 %v9259
      %v9310 = vunpack.c.l.b16 %v9260
      %v9311 = vunpack.c.l.b16 %v9261
      %v9312 = vpack.c.b16 %v9308, %v9307
      %v9313 = vpack.c.b16 %v9310, %v9309
      %v9314 = vpack.c.b16 %v9311, %v9311
      %v9318 = vsel %vm2714, %v9294, 0
      %v9321 = vsel %vm2714, %v9295, 0
      %v9324 = vsel %vm2714, %v9296, 0
      %v9327 = vsel %vm2714, %v9297, 0
      %v9330 = vsel %vm2714, %v9298, 0
      %v9333 = vsel %vm2714, %v9299, 0
      %v9336 = vsel %vm2714, %v9300, 0
      %v9339 = vsel %vm2714, %v9301, 0
      %v9342 = vsel %vm2739, %v9314, 0
      %9344 = vmatprep.subr.bf16.mxu0 0
      %9345 = vmatpush1.bf16.msra.mxu0 0
      %9346 = vmatprep.subr.bf16.mxu0 0
      %9347 = vmatpush1.bf16.msra.mxu0 0
      %9348 = vmatprep.subr.bf16.mxu0 0
      %9349 = vmatpush1.bf16.msra.mxu0 0
      %9350 = vmatprep.subr.bf16.mxu0 0
      %9351 = vmatpush1.bf16.msra.mxu0 0
      %9352 = vmatprep.subr.bf16.mxu0 0
      %9353 = vmatpush1.bf16.msra.mxu0 0
      %9354 = vmatprep.subr.bf16.mxu0 0
      %9355 = vmatpush1.bf16.msra.mxu0 %v9342
      %9356 = vmatprep.subr.bf16.mxu0 0
      %9357 = vmatpush1.bf16.msra.mxu0 %v9313
      %9358 = vmatprep.subr.bf16.mxu0 0
      %9359 = vmatpush1.bf16.msra.mxu0 %v9312
      %9360 = vmatprep.subr.bf16.mxu0 0
      %9361 = vmatpush2.bf16.msra.mxu0 0
      %9362 = vmatprep.subr.bf16.mxu0 0
      %9363 = vmatpush2.bf16.msra.mxu0 0
      %9364 = vmatprep.subr.bf16.mxu0 0
      %9365 = vmatpush2.bf16.msra.mxu0 0
      %9366 = vmatprep.subr.bf16.mxu0 0
      %9367 = vmatpush2.bf16.msra.mxu0 0
      %9368 = vmatprep.subr.bf16.mxu0 0
      %9369 = vmatpush2.bf16.msra.mxu0 0
      %9370 = vmatprep.subr.bf16.mxu0 0
      %9371 = vmatpush2.bf16.msra.mxu0 0
      %9372 = vmatprep.subr.bf16.mxu0 0
      %9373 = vmatpush2.bf16.msra.mxu0 0
      %9374 = vmatprep.subr.bf16.mxu0 0
      %9375 = vmatpush2.bf16.msra.mxu0 0
      %9376 = vmatprep.mubr.bf16.mxu0 0
      %9377 = vmatmul.mubr.bf16.gmra.mxu0 %v9318
      %v9378 = vpop.f32.mrf.mxu0
      %v9379 = vadd.f32 0.0, %v9378
      %v9380 = vpop.f32.mrf.mxu0
      %v9381 = vpop.f32.mrf.mxu0
      %v9382 = vadd.f32 0.0, %v9381
      %v9383 = vpop.f32.mrf.mxu0
      %9384 = vmatprep.mubr.bf16.mxu0 0
      %9385 = vmatmul.mubr.bf16.gmra.mxu0 %v9321
      %v9386 = vpop.f32.mrf.mxu0
      %v9387 = vadd.f32 0.0, %v9386
      %v9388 = vpop.f32.mrf.mxu0
      %v9389 = vpop.f32.mrf.mxu0
      %v9390 = vadd.f32 0.0, %v9389
      %v9391 = vpop.f32.mrf.mxu0
      %9392 = vmatprep.mubr.bf16.mxu0 0
      %9393 = vmatmul.mubr.bf16.gmra.mxu0 %v9324
      %v9394 = vpop.f32.mrf.mxu0
      %v9395 = vadd.f32 0.0, %v9394
      %v9396 = vpop.f32.mrf.mxu0
      %v9397 = vpop.f32.mrf.mxu0
      %v9398 = vadd.f32 0.0, %v9397
      %v9399 = vpop.f32.mrf.mxu0
      %9400 = vmatprep.mubr.bf16.mxu0 0
      %9401 = vmatmul.mubr.bf16.gmra.mxu0 %v9327
      %v9402 = vpop.f32.mrf.mxu0
      %v9403 = vadd.f32 0.0, %v9402
      %v9404 = vpop.f32.mrf.mxu0
      %v9405 = vpop.f32.mrf.mxu0
      %v9406 = vadd.f32 0.0, %v9405
      %v9407 = vpop.f32.mrf.mxu0
      %9408 = vmatprep.mubr.bf16.mxu0 0
      %9409 = vmatmul.mubr.bf16.gmra.mxu0 %v9330
      %v9410 = vpop.f32.mrf.mxu0
      %v9411 = vadd.f32 0.0, %v9410
      %v9412 = vpop.f32.mrf.mxu0
      %v9413 = vpop.f32.mrf.mxu0
      %v9414 = vadd.f32 0.0, %v9413
      %v9415 = vpop.f32.mrf.mxu0
      %9416 = vmatprep.mubr.bf16.mxu0 0
      %9417 = vmatmul.mubr.bf16.gmra.mxu0 %v9333
      %v9418 = vpop.f32.mrf.mxu0
      %v9419 = vadd.f32 0.0, %v9418
      %v9420 = vpop.f32.mrf.mxu0
      %v9421 = vpop.f32.mrf.mxu0
      %v9422 = vadd.f32 0.0, %v9421
      %v9423 = vpop.f32.mrf.mxu0
      %9424 = vmatprep.mubr.bf16.mxu0 0
      %9425 = vmatmul.mubr.bf16.gmra.mxu0 %v9336
      %v9426 = vpop.f32.mrf.mxu0
      %v9427 = vadd.f32 0.0, %v9426
      %v9428 = vpop.f32.mrf.mxu0
      %v9429 = vpop.f32.mrf.mxu0
      %v9430 = vadd.f32 0.0, %v9429
      %v9431 = vpop.f32.mrf.mxu0
      %9432 = vmatprep.mubr.bf16.mxu0 0
      %9433 = vmatmul.mubr.bf16.gmra.mxu0 %v9339
      %v9434 = vpop.f32.mrf.mxu0
      %v9435 = vadd.f32 0.0, %v9434
      %v9436 = vpop.f32.mrf.mxu0
      %v9437 = vpop.f32.mrf.mxu0
      %v9438 = vadd.f32 0.0, %v9437
      %v9439 = vpop.f32.mrf.mxu0
      %9440 = vdwg.mxu0
      %9441 = vst.msk [vmem:[#allocation4 + $0x80] sm:$0xff] %vm2840, %v9379
      %9442 = vst.msk [vmem:[#allocation4 + $0x88] sm:$0xff] %vm2840, %v9382
      %9443 = vst.msk [vmem:[#allocation4 + $0x90] sm:$0xff] %vm2840, %v9387
      %9444 = vst.msk [vmem:[#allocation4 + $0x98] sm:$0xff] %vm2840, %v9390
      %9445 = vst.msk [vmem:[#allocation4 + $0xa0] sm:$0xff] %vm2840, %v9395
      %9446 = vst.msk [vmem:[#allocation4 + $0xa8] sm:$0xff] %vm2840, %v9398
      %9447 = vst.msk [vmem:[#allocation4 + $0xb0] sm:$0xff] %vm2840, %v9403
      %9448 = vst.msk [vmem:[#allocation4 + $0xb8] sm:$0xff] %vm2840, %v9406
      %9449 = vst.msk [vmem:[#allocation4 + $0xc0] sm:$0xff] %vm2840, %v9411
      %9450 = vst.msk [vmem:[#allocation4 + $0xc8] sm:$0xff] %vm2840, %v9414
      %9451 = vst.msk [vmem:[#allocation4 + $0xd0] sm:$0xff] %vm2840, %v9419
      %9452 = vst.msk [vmem:[#allocation4 + $0xd8] sm:$0xff] %vm2840, %v9422
      %9453 = vst.msk [vmem:[#allocation4 + $0xe0] sm:$0xff] %vm2840, %v9427
      %9454 = vst.msk [vmem:[#allocation4 + $0xe8] sm:$0xff] %vm2840, %v9430
      %9455 = vst.msk [vmem:[#allocation4 + $0xf0] sm:$0xff] %vm2840, %v9435
      %9456 = vst.msk [vmem:[#allocation4 + $0xf8] sm:$0xff] %vm2840, %v9438
      %v9457 = vsel %vm2840, %v9379, 0.0
      %v9458 = vsel %vm2840, %v9382, 0.0
      %v9459 = vadd.f32 %v9457, %v9458
      %v9460 = vsel %vm2840, %v9387, 0.0
      %v9461 = vadd.f32 %v9459, %v9460
      %v9462 = vsel %vm2840, %v9390, 0.0
      %v9463 = vadd.f32 %v9461, %v9462
      %v9464 = vsel %vm2840, %v9395, 0.0
      %v9465 = vadd.f32 %v9463, %v9464
      %v9466 = vsel %vm2840, %v9398, 0.0
      %v9467 = vadd.f32 %v9465, %v9466
      %v9468 = vsel %vm2840, %v9403, 0.0
      %v9469 = vadd.f32 %v9467, %v9468
      %v9470 = vsel %vm2840, %v9406, 0.0
      %v9471 = vadd.f32 %v9469, %v9470
      %v9472 = vsel %vm2840, %v9411, 0.0
      %v9473 = vadd.f32 %v9471, %v9472
      %v9474 = vsel %vm2840, %v9414, 0.0
      %v9475 = vadd.f32 %v9473, %v9474
      %v9476 = vsel %vm2840, %v9419, 0.0
      %v9477 = vadd.f32 %v9475, %v9476
      %v9478 = vsel %vm2840, %v9422, 0.0
      %v9479 = vadd.f32 %v9477, %v9478
      %v9480 = vsel %vm2840, %v9427, 0.0
      %v9481 = vadd.f32 %v9479, %v9480
      %v9482 = vsel %vm2840, %v9430, 0.0
      %v9483 = vadd.f32 %v9481, %v9482
      %v9484 = vsel %vm2840, %v9435, 0.0
      %v9485 = vadd.f32 %v9483, %v9484
      %v9486 = vsel %vm2840, %v9438, 0.0
      %v9487 = vadd.f32 %v9485, %v9486
      %v9488 = vrot.slane %v9487, 4
      %v9489 = vadd.f32 %v9487, %v9488
      %v9490 = vrot.slane %v9489, 2
      %v9491 = vadd.f32 %v9489, %v9490
      %v9492 = vrot.slane %v9491, 1
      %v9493 = vadd.f32 %v9491, %v9492
      %v9494 = vadd.f32 %v7618, %v9493
      %v9495 = vmul.f32 %v9379, %v9379
      %v9496 = vmul.f32 %v9382, %v9382
      %v9497 = vmul.f32 %v9387, %v9387
      %v9498 = vmul.f32 %v9390, %v9390
      %v9499 = vmul.f32 %v9395, %v9395
      %v9500 = vmul.f32 %v9398, %v9398
      %v9501 = vmul.f32 %v9403, %v9403
      %v9502 = vmul.f32 %v9406, %v9406
      %v9503 = vmul.f32 %v9411, %v9411
      %v9504 = vmul.f32 %v9414, %v9414
      %v9505 = vmul.f32 %v9419, %v9419
      %v9506 = vmul.f32 %v9422, %v9422
      %v9507 = vmul.f32 %v9427, %v9427
      %v9508 = vmul.f32 %v9430, %v9430
      %v9509 = vmul.f32 %v9435, %v9435
      %v9510 = vmul.f32 %v9438, %v9438
      %v9511 = vsel %vm2840, %v9495, 0.0
      %v9512 = vsel %vm2840, %v9496, 0.0
      %v9513 = vadd.f32 %v9511, %v9512
      %v9514 = vsel %vm2840, %v9497, 0.0
      %v9515 = vadd.f32 %v9513, %v9514
      %v9516 = vsel %vm2840, %v9498, 0.0
      %v9517 = vadd.f32 %v9515, %v9516
      %v9518 = vsel %vm2840, %v9499, 0.0
      %v9519 = vadd.f32 %v9517, %v9518
      %v9520 = vsel %vm2840, %v9500, 0.0
      %v9521 = vadd.f32 %v9519, %v9520
      %v9522 = vsel %vm2840, %v9501, 0.0
      %v9523 = vadd.f32 %v9521, %v9522
      %v9524 = vsel %vm2840, %v9502, 0.0
      %v9525 = vadd.f32 %v9523, %v9524
      %v9526 = vsel %vm2840, %v9503, 0.0
      %v9527 = vadd.f32 %v9525, %v9526
      %v9528 = vsel %vm2840, %v9504, 0.0
      %v9529 = vadd.f32 %v9527, %v9528
      %v9530 = vsel %vm2840, %v9505, 0.0
      %v9531 = vadd.f32 %v9529, %v9530
      %v9532 = vsel %vm2840, %v9506, 0.0
      %v9533 = vadd.f32 %v9531, %v9532
      %v9534 = vsel %vm2840, %v9507, 0.0
      %v9535 = vadd.f32 %v9533, %v9534
      %v9536 = vsel %vm2840, %v9508, 0.0
      %v9537 = vadd.f32 %v9535, %v9536
      %v9538 = vsel %vm2840, %v9509, 0.0
      %v9539 = vadd.f32 %v9537, %v9538
      %v9540 = vsel %vm2840, %v9510, 0.0
      %v9541 = vadd.f32 %v9539, %v9540
      %v9542 = vrot.slane %v9541, 4
      %v9543 = vadd.f32 %v9541, %v9542
      %v9544 = vrot.slane %v9543, 2
      %v9545 = vadd.f32 %v9543, %v9544
      %v9546 = vrot.slane %v9545, 1
      %v9547 = vadd.f32 %v9545, %v9546
      %v9548 = vadd.f32 %v7672, %v9547
      %v9549 = vmul.f32 %v9494, 0.00390625
      %v9550 = vmul.f32 %v9548, 0.00390625
      %v9551 = vmul.f32 %v9549, %v9549
      %v9552 = vsub.f32 %v9550, %v9551
      %v9553 = vadd.f32 %v9552, 1e-05
      %v9554 = vrsqrt.pop %v9553
      %v9555 = vld [vmem:[#allocation4] sm:$0xff]
      %v9556 = vld [vmem:[#allocation4 + $0x8] sm:$0xff]
      %v9557 = vld [vmem:[#allocation4 + $0x10] sm:$0xff]
      %v9558 = vld [vmem:[#allocation4 + $0x18] sm:$0xff]
      %v9559 = vld [vmem:[#allocation4 + $0x20] sm:$0xff]
      %v9560 = vld [vmem:[#allocation4 + $0x28] sm:$0xff]
      %v9561 = vld [vmem:[#allocation4 + $0x30] sm:$0xff]
      %v9562 = vld [vmem:[#allocation4 + $0x38] sm:$0xff]
      %v9563 = vld [vmem:[#allocation4 + $0x40] sm:$0xff]
      %v9564 = vld [vmem:[#allocation4 + $0x48] sm:$0xff]
      %v9565 = vld [vmem:[#allocation4 + $0x50] sm:$0xff]
      %v9566 = vld [vmem:[#allocation4 + $0x58] sm:$0xff]
      %v9567 = vld [vmem:[#allocation4 + $0x60] sm:$0xff]
      %v9568 = vld [vmem:[#allocation4 + $0x68] sm:$0xff]
      %v9569 = vld [vmem:[#allocation4 + $0x70] sm:$0xff]
      %v9570 = vld [vmem:[#allocation4 + $0x78] sm:$0xff]
      %v9571 = vsub.f32 %v9555, %v9549
      %v9572 = vsub.f32 %v9556, %v9549
      %v9573 = vsub.f32 %v9557, %v9549
      %v9574 = vsub.f32 %v9558, %v9549
      %v9575 = vsub.f32 %v9559, %v9549
      %v9576 = vsub.f32 %v9560, %v9549
      %v9577 = vsub.f32 %v9561, %v9549
      %v9578 = vsub.f32 %v9562, %v9549
      %v9579 = vsub.f32 %v9563, %v9549
      %v9580 = vsub.f32 %v9564, %v9549
      %v9581 = vsub.f32 %v9565, %v9549
      %v9582 = vsub.f32 %v9566, %v9549
      %v9583 = vsub.f32 %v9567, %v9549
      %v9584 = vsub.f32 %v9568, %v9549
      %v9585 = vsub.f32 %v9569, %v9549
      %v9586 = vsub.f32 %v9570, %v9549
      %v9587 = vmul.f32 %v9571, %v9554
      %v9588 = vmul.f32 %v9572, %v9554
      %v9589 = vmul.f32 %v9573, %v9554
      %v9590 = vmul.f32 %v9574, %v9554
      %v9591 = vmul.f32 %v9575, %v9554
      %v9592 = vmul.f32 %v9576, %v9554
      %v9593 = vmul.f32 %v9577, %v9554
      %v9594 = vmul.f32 %v9578, %v9554
      %v9595 = vmul.f32 %v9579, %v9554
      %v9596 = vmul.f32 %v9580, %v9554
      %v9597 = vmul.f32 %v9581, %v9554
      %v9598 = vmul.f32 %v9582, %v9554
      %v9599 = vmul.f32 %v9583, %v9554
      %v9600 = vmul.f32 %v9584, %v9554
      %v9601 = vmul.f32 %v9585, %v9554
      %v9602 = vmul.f32 %v9586, %v9554
      %v9603 = vld [vmem:[%s165] sm:$0xff]
      %v9604 = vld [vmem:[%s165 + $0x8] sm:$0xff]
      %v9605 = vld [vmem:[%s165 + $0x10] sm:$0xff]
      %v9606 = vld [vmem:[%s165 + $0x18] sm:$0xff]
      %v9607 = vld [vmem:[%s165 + $0x20] sm:$0xff]
      %v9608 = vld [vmem:[%s165 + $0x28] sm:$0xff]
      %v9609 = vld [vmem:[%s165 + $0x30] sm:$0xff]
      %v9610 = vld [vmem:[%s165 + $0x38] sm:$0xff]
      %v9611 = vld [vmem:[%s165 + $0x40] sm:$0xff]
      %v9612 = vld [vmem:[%s165 + $0x48] sm:$0xff]
      %v9613 = vld [vmem:[%s165 + $0x50] sm:$0xff]
      %v9614 = vld [vmem:[%s165 + $0x58] sm:$0xff]
      %v9615 = vld [vmem:[%s165 + $0x60] sm:$0xff]
      %v9616 = vld [vmem:[%s165 + $0x68] sm:$0xff]
      %v9617 = vld [vmem:[%s165 + $0x70] sm:$0xff]
      %v9618 = vld [vmem:[%s165 + $0x78] sm:$0xff]
      %v9619 = vadd.f32 %v9587, %v9603
      %v9620 = vadd.f32 %v9588, %v9604
      %v9621 = vadd.f32 %v9589, %v9605
      %v9622 = vadd.f32 %v9590, %v9606
      %v9623 = vadd.f32 %v9591, %v9607
      %v9624 = vadd.f32 %v9592, %v9608
      %v9625 = vadd.f32 %v9593, %v9609
      %v9626 = vadd.f32 %v9594, %v9610
      %v9627 = vadd.f32 %v9595, %v9611
      %v9628 = vadd.f32 %v9596, %v9612
      %v9629 = vadd.f32 %v9597, %v9613
      %v9630 = vadd.f32 %v9598, %v9614
      %v9631 = vadd.f32 %v9599, %v9615
      %v9632 = vadd.f32 %v9600, %v9616
      %v9633 = vadd.f32 %v9601, %v9617
      %v9634 = vadd.f32 %v9602, %v9618
      %9635 = vst.msk [vmem:[%s170] sm:$0xff] %vm2840, %v9619
      %9636 = vst.msk [vmem:[%s170 + $0x8] sm:$0xff] %vm2840, %v9620
      %9637 = vst.msk [vmem:[%s170 + $0x10] sm:$0xff] %vm2840, %v9621
      %9638 = vst.msk [vmem:[%s170 + $0x18] sm:$0xff] %vm2840, %v9622
      %9639 = vst.msk [vmem:[%s170 + $0x20] sm:$0xff] %vm2840, %v9623
      %9640 = vst.msk [vmem:[%s170 + $0x28] sm:$0xff] %vm2840, %v9624
      %9641 = vst.msk [vmem:[%s170 + $0x30] sm:$0xff] %vm2840, %v9625
      %9642 = vst.msk [vmem:[%s170 + $0x38] sm:$0xff] %vm2840, %v9626
      %9643 = vst.msk [vmem:[%s170 + $0x40] sm:$0xff] %vm2840, %v9627
      %9644 = vst.msk [vmem:[%s170 + $0x48] sm:$0xff] %vm2840, %v9628
      %9645 = vst.msk [vmem:[%s170 + $0x50] sm:$0xff] %vm2840, %v9629
      %9646 = vst.msk [vmem:[%s170 + $0x58] sm:$0xff] %vm2840, %v9630
      %9647 = vst.msk [vmem:[%s170 + $0x60] sm:$0xff] %vm2840, %v9631
      %9648 = vst.msk [vmem:[%s170 + $0x68] sm:$0xff] %vm2840, %v9632
      %9649 = vst.msk [vmem:[%s170 + $0x70] sm:$0xff] %vm2840, %v9633
      %9650 = vst.msk [vmem:[%s170 + $0x78] sm:$0xff] %vm2840, %v9634
      %v9651 = vld [vmem:[#allocation4 + $0x80] sm:$0xff]
      %v9652 = vld [vmem:[#allocation4 + $0x88] sm:$0xff]
      %v9653 = vld [vmem:[#allocation4 + $0x90] sm:$0xff]
      %v9654 = vld [vmem:[#allocation4 + $0x98] sm:$0xff]
      %v9655 = vld [vmem:[#allocation4 + $0xa0] sm:$0xff]
      %v9656 = vld [vmem:[#allocation4 + $0xa8] sm:$0xff]
      %v9657 = vld [vmem:[#allocation4 + $0xb0] sm:$0xff]
      %v9658 = vld [vmem:[#allocation4 + $0xb8] sm:$0xff]
      %v9659 = vld [vmem:[#allocation4 + $0xc0] sm:$0xff]
      %v9660 = vld [vmem:[#allocation4 + $0xc8] sm:$0xff]
      %v9661 = vld [vmem:[#allocation4 + $0xd0] sm:$0xff]
      %v9662 = vld [vmem:[#allocation4 + $0xd8] sm:$0xff]
      %v9663 = vld [vmem:[#allocation4 + $0xe0] sm:$0xff]
      %v9664 = vld [vmem:[#allocation4 + $0xe8] sm:$0xff]
      %v9665 = vld [vmem:[#allocation4 + $0xf0] sm:$0xff]
      %v9666 = vld [vmem:[#allocation4 + $0xf8] sm:$0xff]
      %v9667 = vsub.f32 %v9651, %v9549
      %v9668 = vsub.f32 %v9652, %v9549
      %v9669 = vsub.f32 %v9653, %v9549
      %v9670 = vsub.f32 %v9654, %v9549
      %v9671 = vsub.f32 %v9655, %v9549
      %v9672 = vsub.f32 %v9656, %v9549
      %v9673 = vsub.f32 %v9657, %v9549
      %v9674 = vsub.f32 %v9658, %v9549
      %v9675 = vsub.f32 %v9659, %v9549
      %v9676 = vsub.f32 %v9660, %v9549
      %v9677 = vsub.f32 %v9661, %v9549
      %v9678 = vsub.f32 %v9662, %v9549
      %v9679 = vsub.f32 %v9663, %v9549
      %v9680 = vsub.f32 %v9664, %v9549
      %v9681 = vsub.f32 %v9665, %v9549
      %v9682 = vsub.f32 %v9666, %v9549
      %v9683 = vmul.f32 %v9667, %v9554
      %v9684 = vmul.f32 %v9668, %v9554
      %v9685 = vmul.f32 %v9669, %v9554
      %v9686 = vmul.f32 %v9670, %v9554
      %v9687 = vmul.f32 %v9671, %v9554
      %v9688 = vmul.f32 %v9672, %v9554
      %v9689 = vmul.f32 %v9673, %v9554
      %v9690 = vmul.f32 %v9674, %v9554
      %v9691 = vmul.f32 %v9675, %v9554
      %v9692 = vmul.f32 %v9676, %v9554
      %v9693 = vmul.f32 %v9677, %v9554
      %v9694 = vmul.f32 %v9678, %v9554
      %v9695 = vmul.f32 %v9679, %v9554
      %v9696 = vmul.f32 %v9680, %v9554
      %v9697 = vmul.f32 %v9681, %v9554
      %v9698 = vmul.f32 %v9682, %v9554
      %v9699 = vld [vmem:[%s462] sm:$0xff]
      %v9700 = vld [vmem:[%s462 + $0x8] sm:$0xff]
      %v9701 = vld [vmem:[%s462 + $0x10] sm:$0xff]
      %v9702 = vld [vmem:[%s462 + $0x18] sm:$0xff]
      %v9703 = vld [vmem:[%s462 + $0x20] sm:$0xff]
      %v9704 = vld [vmem:[%s462 + $0x28] sm:$0xff]
      %v9705 = vld [vmem:[%s462 + $0x30] sm:$0xff]
      %v9706 = vld [vmem:[%s462 + $0x38] sm:$0xff]
      %v9707 = vld [vmem:[%s462 + $0x40] sm:$0xff]
      %v9708 = vld [vmem:[%s462 + $0x48] sm:$0xff]
      %v9709 = vld [vmem:[%s462 + $0x50] sm:$0xff]
      %v9710 = vld [vmem:[%s462 + $0x58] sm:$0xff]
      %v9711 = vld [vmem:[%s462 + $0x60] sm:$0xff]
      %v9712 = vld [vmem:[%s462 + $0x68] sm:$0xff]
      %v9713 = vld [vmem:[%s462 + $0x70] sm:$0xff]
      %v9714 = vld [vmem:[%s462 + $0x78] sm:$0xff]
      %v9715 = vadd.f32 %v9683, %v9699
      %v9716 = vadd.f32 %v9684, %v9700
      %v9717 = vadd.f32 %v9685, %v9701
      %v9718 = vadd.f32 %v9686, %v9702
      %v9719 = vadd.f32 %v9687, %v9703
      %v9720 = vadd.f32 %v9688, %v9704
      %v9721 = vadd.f32 %v9689, %v9705
      %v9722 = vadd.f32 %v9690, %v9706
      %v9723 = vadd.f32 %v9691, %v9707
      %v9724 = vadd.f32 %v9692, %v9708
      %v9725 = vadd.f32 %v9693, %v9709
      %v9726 = vadd.f32 %v9694, %v9710
      %v9727 = vadd.f32 %v9695, %v9711
      %v9728 = vadd.f32 %v9696, %v9712
      %v9729 = vadd.f32 %v9697, %v9713
      %v9730 = vadd.f32 %v9698, %v9714
      %s9731 = scalar_lea.vmem %s170, 128
      %9732 = vst.msk [vmem:[%s9731] sm:$0xff] %vm2840, %v9715
      %9733 = vst.msk [vmem:[%s9731 + $0x8] sm:$0xff] %vm2840, %v9716
      %9734 = vst.msk [vmem:[%s9731 + $0x10] sm:$0xff] %vm2840, %v9717
      %9735 = vst.msk [vmem:[%s9731 + $0x18] sm:$0xff] %vm2840, %v9718
      %9736 = vst.msk [vmem:[%s9731 + $0x20] sm:$0xff] %vm2840, %v9719
      %9737 = vst.msk [vmem:[%s9731 + $0x28] sm:$0xff] %vm2840, %v9720
      %9738 = vst.msk [vmem:[%s9731 + $0x30] sm:$0xff] %vm2840, %v9721
      %9739 = vst.msk [vmem:[%s9731 + $0x38] sm:$0xff] %vm2840, %v9722
      %9740 = vst.msk [vmem:[%s9731 + $0x40] sm:$0xff] %vm2840, %v9723
      %9741 = vst.msk [vmem:[%s9731 + $0x48] sm:$0xff] %vm2840, %v9724
      %9742 = vst.msk [vmem:[%s9731 + $0x50] sm:$0xff] %vm2840, %v9725
      %9743 = vst.msk [vmem:[%s9731 + $0x58] sm:$0xff] %vm2840, %v9726
      %9744 = vst.msk [vmem:[%s9731 + $0x60] sm:$0xff] %vm2840, %v9727
      %9745 = vst.msk [vmem:[%s9731 + $0x68] sm:$0xff] %vm2840, %v9728
      %9746 = vst.msk [vmem:[%s9731 + $0x70] sm:$0xff] %vm2840, %v9729
      %9747 = vst.msk [vmem:[%s9731 + $0x78] sm:$0xff] %vm2840, %v9730
      %p9748 = scmp.lt.s32.totalorder %s14, 1
      %s9749 = scalar_select %p9748, %s14, 1
      %s9750 = smul.addr %s9749, 32
      %s9751 = smul.addr %s9750, 8
      %s9752 = scalar_lea.vmem %s3, %s9751
      // Predicated region
      $region33: #{resblocks_forward.2} parent=31 // pred_check
        %p9753 = pneg %p100
      $region34: #{resblocks_forward.2} parent=31 // pred_check_branch
        %9755 = sbr.rel (%p9753) target = $region36
      $region35: #{resblocks_forward.2} parent=31 // pred_region
        _
      $region36: #{resblocks_forward.2} parent=31 // pred_fallthru
        _
    $region32: #{resblocks_forward.2} parent=5 // pred_fallthru
      _
    %p9756 = scmp.le.s32.totalorder 2, %s9
    // Predicated region
    $region37: #{resblocks_forward.2} parent=5 // pred_check
      %p9757 = pneg %p9756
    $region38: #{resblocks_forward.2} parent=5 // pred_check_branch
      %9759 = sbr.rel (%p9757) target = $region40
    $region39: #{resblocks_forward.2} parent=5 // pred_region
      %s9760 = ssub.s32 %s9, 2
      // Predicated region
      $region41: #{resblocks_forward.2} parent=39 // pred_check
        %p9761 = pneg %p106
      $region42: #{resblocks_forward.2} parent=39 // pred_check_branch
        %9763 = sbr.rel (%p9761) target = $region44
      $region43: #{resblocks_forward.2} parent=39 // pred_region
        %p9764 = scmp.lt.s32.totalorder %s15, 1
        %s9765 = scalar_select %p9764, %s15, 1
        %s9766 = smul.addr %s9765, 32
        %s9767 = smul.addr %s9766, 8
        %s9768 = scalar_lea.vmem %s3, %s9767
      $region44: #{resblocks_forward.2} parent=39 // pred_fallthru
        _
    $region40: #{resblocks_forward.2} parent=5 // pred_fallthru
      _
  $region6: #{resblocks_forward.2} parent=0 // loop_footer
    %s13 = sadd.s32 1, %s9
  $region7: #{resblocks_forward.2} parent=0 // loop_footer_branch
    %8 = sbr.rel target = $region3
  $region8: #{resblocks_forward.2} parent=0 // loop_exit
    _

</llo_original>
